<compile_context>
chip_gen: v7x
topology: tpu7x:2x2x1
jax: 0.10.0
libtpu: 0.0.40
codegen_flags: <defaults>
</compile_context>

<pallas_src>
import math

import numpy as np
import jax
import jax.numpy as jnp
from jax.experimental import pallas as pl
from jax.experimental.pallas import tpu as pltpu


# Matmul operand dtype.  Kept f32 to stay numerically close to the torch
# reference at these toy sizes; set to jnp.bfloat16 for realistic dims to hit
# the MXU's native bf16 rate and halve weight VMEM/HBM traffic.
MATMUL_DTYPE = jnp.float32


# ----------------------------- in-kernel helpers ----------------------------

def _mm(a, b):
    """2-D matmul with f32 accumulation (operands cast to MATMUL_DTYPE)."""
    return jax.lax.dot_general(
        a.astype(MATMUL_DTYPE), b.astype(MATMUL_DTYPE),
        (((1,), (0,)), ((), ())), preferred_element_type=jnp.float32)


def _bmm(a, b, b_contract):
    """Batched matmul over leading dim 0: contract a dim 2 with b dim `b_contract`."""
    return jax.lax.dot_general(
        a.astype(MATMUL_DTYPE), b.astype(MATMUL_DTYPE),
        (((2,), (b_contract,)), ((0,), (0,))), preferred_element_type=jnp.float32)


def _erf(x):
    # Abramowitz & Stegun 7.1.26, |err| < 1.5e-7 (only exp/mul/add/where).
    # TODO(synk): exact nn.GELU uses erf; this approximation is within f32 noise.
    a1, a2, a3, a4, a5 = (0.254829592, -0.284496736, 1.421413741,
                          -1.453152027, 1.061405429)
    pc = 0.3275911
    ax = jnp.abs(x)
    t = 1.0 / (1.0 + pc * ax)
    poly = ((((a5 * t + a4) * t + a3) * t + a2) * t + a1) * t
    y = 1.0 - poly * jnp.exp(-ax * ax)
    return jnp.where(x >= 0, y, -y)


def _gelu_exact(x):
    return 0.5 * x * (1.0 + _erf(x * 0.7071067811865476))


def _layernorm(x, g, b):
    mu = jnp.mean(x, axis=-1, keepdims=True)
    var = jnp.mean(jnp.square(x - mu), axis=-1, keepdims=True)
    return (x - mu) * jax.lax.rsqrt(var + 1e-5) * g + b       # nn.LayerNorm eps=1e-5


def _sum_all(a):
    """Sum of all elements of a 2-D array as a (1, 1) array (lanes, then sublanes)."""
    return jnp.sum(jnp.sum(a, axis=1, keepdims=True), axis=0, keepdims=True)


def _block_body(x, B, N, H, hd,
                n1g, n1b, wq, wk, wv, wp, bp,
                n2g, n2b, w1, b1, w2, b2):
    """One pre-LN transformer Block on a (B*N, D) slab (batch packed on sublanes)."""
    D = H * hd
    scale = float(hd) ** -0.5

    # ---- attention: LN1 + Q/K/V + per-head softmax(QK^T)V + one output proj ----
    h = _layernorm(x, n1g, n1b)
    q = _mm(h, wq) * scale                                    # (B*N, D)
    k = _mm(h, wk)
    v = _mm(h, wv)
    q3 = q.reshape(B, N, D)                                   # tile-aligned split (N = 8)
    k3 = k.reshape(B, N, D)
    v3 = v.reshape(B, N, D)
    heads = []
    for hi in range(H):
        lo = hi * hd
        qh = q3[:, :, lo:lo + hd]
        kh = k3[:, :, lo:lo + hd]
        vh = v3[:, :, lo:lo + hd]
        s = _bmm(qh, kh, 2)                                   # (B, N, N), batched over B
        s = s - jnp.max(s, axis=-1, keepdims=True)
        ps = jnp.exp(s)
        ps = ps / jnp.sum(ps, axis=-1, keepdims=True)         # exact division
        oh = _bmm(ps, vh, 1)                                  # (B, N, hd)
        heads.append(oh.reshape(B * N, hd))
    attn = jnp.concatenate(heads, axis=-1)                    # (B*N, D) concat heads
    x = x + _mm(attn, wp) + bp                                # single output projection

    # ---- MLP: LN2 + FC1 + GELU(exact erf) + FC2 ----
    h = _layernorm(x, n2g, n2b)
    h = _mm(h, w1) + b1
    h = _gelu_exact(h)
    h = _mm(h, w2) + b2
    return x + h


# ----------------------------- Pallas kernels ------------------------------

def _make_encoder_kernel(B, N, K, E, Dd, C, tpp, H, hd, L):
    """stats + normalize + patch-embed + pos (step 0), one block per step,
    final LN + encoder_to_decoder (last step)."""

    def kernel(xb_ref, pw_ref, pb_ref, pos_ref,
               n1g_ref, n1b_ref, wq_ref, wk_ref, wv_ref, wp_ref, bp_ref,
               n2g_ref, n2b_ref, w1_ref, b1_ref, w2_ref, b2_ref,
               encnw_ref, encnb_ref, e2d_ref,
               out_ref, mean_ref, std_ref,
               x_scr):
        l = pl.program_id(0)

        # ---- step 0: per-(b,c) torch.std_mean, normalize, Conv3d matmul, pos ----
        @pl.when(l == 0)
        def _prologue():
            cnt = float(N * tpp)                              # = T*H*W per (b, c)
            lane_c = jax.lax.broadcasted_iota(jnp.int32, (1, C), 1)
            for b in range(B):
                acc = jnp.zeros((N, E), jnp.float32)
                mean_row = jnp.zeros((1, C), jnp.float32)
                std_row = jnp.zeros((1, C), jnp.float32)
                for c in range(C):
                    blk = xb_ref[b, :, c * tpp:(c + 1) * tpp].astype(jnp.float32)
                    mu = _sum_all(blk) * (1.0 / cnt)
                    diff = blk - mu
                    var = _sum_all(diff * diff) * (1.0 / (cnt - 1.0))  # unbiased
                    std = jnp.sqrt(var) + 1e-7
                    xn = diff * (1.0 / std)
                    acc = acc + _mm(xn, pw_ref[c * tpp:(c + 1) * tpp, :])
                    sel = (lane_c == c).astype(jnp.float32)
                    mean_row = mean_row + mu * sel
                    std_row = std_row + std * sel
                x_scr[b * N:(b + 1) * N, :] = acc + pb_ref[...] + pos_ref[...]
                mean_ref[b] = mean_row
                std_ref[b] = std_row

        # ---- one transformer block per grid step (weights indexed by l) ----
        x = _block_body(x_scr[...], B, N, H, hd,
                        n1g_ref[0], n1b_ref[0], wq_ref[0], wk_ref[0], wv_ref[0],
                        wp_ref[0], bp_ref[0], n2g_ref[0], n2b_ref[0],
                        w1_ref[0], b1_ref[0], w2_ref[0], b2_ref[0])
        x_scr[...] = x

        # ---- last step: encoder final LayerNorm + encoder_to_decoder (no bias) ----
        @pl.when(l == L - 1)
        def _epilogue():
            z = _layernorm(x, encnw_ref[...], encnb_ref[...])
            out_ref[...] = _mm(z, e2d_ref[...]).astype(out_ref.dtype)

    return kernel


def _make_decoder_kernel(B, N, H, hd, NC, L):
    """one block per step; last step fuses LN + head(last-frame cols) + y*std+mean."""

    def kernel(x0_ref,
               n1g_ref, n1b_ref, wq_ref, wk_ref, wv_ref, wp_ref, bp_ref,
               n2g_ref, n2b_ref, w1_ref, b1_ref, w2_ref, b2_ref,
               dnw_ref, dnb_ref, hw_ref, hb_ref, scale_ref, shift_ref,
               y_ref, x_scr):
        l = pl.program_id(0)

        @pl.when(l == 0)
        def _prologue():
            x_scr[...] = x0_ref[...].astype(jnp.float32)

        x = _block_body(x_scr[...], B, N, H, hd,
                        n1g_ref[0], n1b_ref[0], wq_ref[0], wk_ref[0], wv_ref[0],
                        wp_ref[0], bp_ref[0], n2g_ref[0], n2b_ref[0],
                        w1_ref[0], b1_ref[0], w2_ref[0], b2_ref[0])
        x_scr[...] = x

        @pl.when(l == L - 1)
        def _epilogue():
            z = _layernorm(x, dnw_ref[...], dnb_ref[...])
            y = _mm(z, hw_ref[...]) + hb_ref[...]             # (B*N, NC), NC lane-dense
            y3 = y.reshape(B, N, NC)
            y_ref[...] = (y3 * scale_ref[...] + shift_ref[...]).astype(y_ref.dtype)

    return kernel


# ----------------------------- pallas_call wrappers --------------------------

def encoder_forward(xb, params):
    cfg = params['cfg']
    B, N, K = xb.shape
    E, Dd, C = cfg['enc_dim'], cfg['dec_dim'], cfg['in_chans']
    tpp = cfg['tubelet'] * cfg['patch'] ** 2
    L, heads = cfg['enc_depth'], cfg['enc_heads']
    hd = E // heads
    hidden = int(E * cfg['mlp_ratio'])
    st = params['enc']

    kern = _make_encoder_kernel(B, N, K, E, Dd, C, tpp, heads, hd, L)
    c2 = lambda l: (0, 0)
    c3 = lambda l: (0, 0, 0)
    w3 = lambda l: (l, 0, 0)
    in_specs = [
        pl.BlockSpec((B, N, K), c3),                           # xb (constant, resident)
        pl.BlockSpec((K, E), c2),                              # patch_w
        pl.BlockSpec((1, E), c2),                              # patch_b
        pl.BlockSpec((N, E), c2),                              # pos table
        pl.BlockSpec((1, 1, E), w3), pl.BlockSpec((1, 1, E), w3),          # norm1
        pl.BlockSpec((1, E, E), w3), pl.BlockSpec((1, E, E), w3),          # wq, wk
        pl.BlockSpec((1, E, E), w3),                                       # wv
        pl.BlockSpec((1, E, E), w3), pl.BlockSpec((1, 1, E), w3),          # proj
        pl.BlockSpec((1, 1, E), w3), pl.BlockSpec((1, 1, E), w3),          # norm2
        pl.BlockSpec((1, E, hidden), w3), pl.BlockSpec((1, 1, hidden), w3),  # fc1
        pl.BlockSpec((1, hidden, E), w3), pl.BlockSpec((1, 1, E), w3),       # fc2
        pl.BlockSpec((1, E), c2), pl.BlockSpec((1, E), c2),    # encoder final LN
        pl.BlockSpec((E, Dd), c2),                             # encoder_to_decoder
    ]
    out_specs = (pl.BlockSpec((B * N, Dd), c2),
                 pl.BlockSpec((B, 1, C), c3),
                 pl.BlockSpec((B, 1, C), c3))
    out_shape = (jax.ShapeDtypeStruct((B * N, Dd), jnp.float32),
                 jax.ShapeDtypeStruct((B, 1, C), jnp.float32),
                 jax.ShapeDtypeStruct((B, 1, C), jnp.float32))
    return pl.pallas_call(
        kern, grid=(L,),
        in_specs=in_specs, out_specs=out_specs, out_shape=out_shape,
        scratch_shapes=[pltpu.VMEM((B * N, E), jnp.float32)],
        compiler_params=pltpu.CompilerParams(dimension_semantics=("arbitrary",)),
    )(xb, params['patch_w'], params['patch_b'], params['enc_pos'],
      st['n1g'], st['n1b'], st['wq'], st['wk'], st['wv'], st['wp'], st['bp'],
      st['n2g'], st['n2b'], st['fc1_w'], st['fc1_b'], st['fc2_w'], st['fc2_b'],
      params['enc_norm_w'], params['enc_norm_b'], params['enc2dec_w'])


def decoder_forward(x0, scale_out, shift_out, params):
    cfg = params['cfg']
    Dd, C, p = cfg['dec_dim'], cfg['in_chans'], cfg['patch']
    NC = p * p * C
    L, heads = cfg['dec_depth'], cfg['dec_heads']
    hd = Dd // heads
    hidden = int(Dd * cfg['mlp_ratio'])
    BN = x0.shape[0]
    B = scale_out.shape[0]
    N = BN // B
    st = params['dec']

    kern = _make_decoder_kernel(B, N, heads, hd, NC, L)
    c2 = lambda l: (0, 0)
    c3 = lambda l: (0, 0, 0)
    w3 = lambda l: (l, 0, 0)
    in_specs = [
        pl.BlockSpec((BN, Dd), c2),                            # encoder output (constant)
        pl.BlockSpec((1, 1, Dd), w3), pl.BlockSpec((1, 1, Dd), w3),
        pl.BlockSpec((1, Dd, Dd), w3), pl.BlockSpec((1, Dd, Dd), w3),
        pl.BlockSpec((1, Dd, Dd), w3),
        pl.BlockSpec((1, Dd, Dd), w3), pl.BlockSpec((1, 1, Dd), w3),
        pl.BlockSpec((1, 1, Dd), w3), pl.BlockSpec((1, 1, Dd), w3),
        pl.BlockSpec((1, Dd, hidden), w3), pl.BlockSpec((1, 1, hidden), w3),
        pl.BlockSpec((1, hidden, Dd), w3), pl.BlockSpec((1, 1, Dd), w3),
        pl.BlockSpec((1, Dd), c2), pl.BlockSpec((1, Dd), c2),  # decoder final LN
        pl.BlockSpec((Dd, NC), c2), pl.BlockSpec((1, NC), c2),  # head (last-frame cols)
        pl.BlockSpec((B, 1, NC), c3), pl.BlockSpec((B, 1, NC), c3),  # denorm scale/shift
    ]
    out_specs = pl.BlockSpec((B, N, NC), c3)
    out_shape = jax.ShapeDtypeStruct((B, N, NC), jnp.float32)
    return pl.pallas_call(
        kern, grid=(L,),
        in_specs=in_specs, out_specs=out_specs, out_shape=out_shape,
        scratch_shapes=[pltpu.VMEM((BN, Dd), jnp.float32)],
        compiler_params=pltpu.CompilerParams(dimension_semantics=("arbitrary",)),
    )(x0, st['n1g'], st['n1b'], st['wq'], st['wk'], st['wv'], st['wp'], st['bp'],
      st['n2g'], st['n2b'], st['fc1_w'], st['fc1_b'], st['fc2_w'], st['fc2_b'],
      params['dec_norm_w'], params['dec_norm_b'],
      params['head_w_last'], params['head_b_last'], scale_out, shift_out)


# ----------------------------- parameters ----------------------------------

def get_sinusoid_encoding_table(n_position, d_hid):
    def angle_vec(pos_i):
        return [pos_i / np.power(10000, 2 * (j // 2) / d_hid) for j in range(d_hid)]
    tab = np.array([angle_vec(i) for i in range(n_position)], dtype=np.float64)
    tab[:, 0::2] = np.sin(tab[:, 0::2])
    tab[:, 1::2] = np.cos(tab[:, 1::2])
    return jnp.asarray(tab, dtype=jnp.float32)                 # (N, D)


def _xavier(key, fan_in, fan_out, shape=None):
    """Weights stored pre-transposed in (K, N) = (fan_in, fan_out) layout."""
    bound = math.sqrt(6.0 / (fan_in + fan_out))
    shape = (fan_in, fan_out) if shape is None else shape
    return jax.random.uniform(key, shape, jnp.float32, -bound, bound)


def _init_stack(key, L, dim, mlp_ratio):
    """Per-stack Block weights stacked along a leading depth axis."""
    hidden = int(dim * mlp_ratio)
    ks = jax.random.split(key, 6)
    ones = lambda n: jnp.ones((L, 1, n), jnp.float32)
    zeros = lambda n: jnp.zeros((L, 1, n), jnp.float32)
    return dict(
        n1g=ones(dim), n1b=zeros(dim),
        wq=_xavier(ks[0], dim, 3 * dim, (L, dim, dim)),        # qkv Linear, bias=False
        wk=_xavier(ks[1], dim, 3 * dim, (L, dim, dim)),
        wv=_xavier(ks[2], dim, 3 * dim, (L, dim, dim)),
        wp=_xavier(ks[3], dim, dim, (L, dim, dim)), bp=zeros(dim),
        n2g=ones(dim), n2b=zeros(dim),
        fc1_w=_xavier(ks[4], dim, hidden, (L, dim, hidden)), fc1_b=zeros(hidden),
        fc2_w=_xavier(ks[5], hidden, dim, (L, hidden, dim)), fc2_b=zeros(dim),
    )


def init_params(key, cfg):
    E, Dd = cfg['enc_dim'], cfg['dec_dim']
    C, tub, p = cfg['in_chans'], cfg['tubelet'], cfg['patch']
    K = C * tub * p * p
    N = (cfg['num_frames'] // tub) * (cfg['img_size'] // p) ** 2
    nc_full = tub * p * p * C                                  # decoder_num_classes
    nc_last = p * p * C
    ks = jax.random.split(key, 6)
    bound = 1.0 / math.sqrt(K)                                 # Conv3d default init
    params = dict(cfg=cfg)
    params['patch_w'] = jax.random.uniform(ks[0], (K, E), jnp.float32, -bound, bound)
    params['patch_b'] = jax.random.uniform(ks[1], (1, E), jnp.float32, -bound, bound)
    params['enc_pos'] = get_sinusoid_encoding_table(N, E)
    params['enc'] = _init_stack(ks[2], cfg['enc_depth'], E, cfg['mlp_ratio'])
    params['enc_norm_w'] = jnp.ones((1, E), jnp.float32)
    params['enc_norm_b'] = jnp.zeros((1, E), jnp.float32)
    params['enc2dec_w'] = _xavier(ks[3], E, Dd)                # Linear(E, Dd, bias=False)
    params['dec'] = _init_stack(ks[4], cfg['dec_depth'], Dd, cfg['mlp_ratio'])
    params['dec_norm_w'] = jnp.ones((1, Dd), jnp.float32)
    params['dec_norm_b'] = jnp.zeros((1, Dd), jnp.float32)
    head_w = _xavier(ks[5], Dd, nc_full)
    params['head_w_last'] = head_w[:, (tub - 1) * nc_last:]    # only last-frame columns
    params['head_b_last'] = jnp.zeros((1, nc_last), jnp.float32)
    # TODO(synk): decoder sinusoid pos_embed + mask_token only enter the mask!=None branch.
    return params


# ------------------------------ forward pass --------------------------------

def model_forward(params, x):
    """x: (T, B, C, H, W) float32 -> (B, C, H, W) last-frame reconstruction."""
    T, B, C, H, W = x.shape
    cfg = params['cfg']
    tub, p = cfg['tubelet'], cfg['patch']
    tb, hh, ww = T // tub, H // p, W // p
    N = tb * hh * ww
    K = C * tub * p * p

    # ---- im2col: (T,B,C,H,W) -> (B, N, K); rows (t,h,w), cols (C,tub,p,p) ----
    # TODO(synk): at realistic video sizes fold this rearrange into the encoder
    # kernel via a (t,h,w)-tiled BlockSpec index_map instead of an extra HBM pass.
    xb = jnp.transpose(x, (1, 2, 0, 3, 4)).reshape(B, C, tb, tub, hh, p, ww, p)
    xb = jnp.transpose(xb, (0, 2, 4, 6, 1, 3, 5, 7)).reshape(B, N, K)

    # ---- single fused encoder call (stats + patch embed + blocks + LN + enc2dec) ----
    enc_out, mean_bc, std_bc = encoder_forward(xb, params)

    # de-normalization vectors for the decoder epilogue; column order (p1,p2,c), c fastest
    NC = p * p * C
    scale_out = jnp.tile(std_bc.reshape(B, C), (1, p * p)).reshape(B, 1, NC)
    shift_out = jnp.tile(mean_bc.reshape(B, C), (1, p * p)).reshape(B, 1, NC)

    # ---- single fused decoder call (blocks + LN + head slice + y*std+mean) ----
    y = decoder_forward(enc_out, scale_out, shift_out, params)     # (B, N, NC)

    # ---- last frame: tokens of last temporal block, 'b (h w) (p1 p2 c) -> b c H W' ----
    hw = hh * ww
    y_last = y[:, N - hw:, :].reshape(B, hh, ww, p, p, C)
    y_last = jnp.transpose(y_last, (0, 5, 1, 3, 2, 4)).reshape(B, C, H, W)
    return y_last


# --------------------------------- driver -----------------------------------

if __name__ == "__main__":
    # small config consistent with the module:
    #   img_size=16, patch=8, in_chans=2, num_frames=4, tubelet=2
    #   encoder: dim 32, depth 2, heads 4; decoder: dim 32, depth 2, heads 4
    #   decoder_num_classes = tubelet * patch^2 * in_chans = 256, num_patches = 8
    cfg = dict(img_size=16, patch=8, in_chans=2, tubelet=2, num_frames=4,
               enc_dim=32, enc_depth=2, enc_heads=4,
               dec_dim=32, dec_depth=2, dec_heads=4, mlp_ratio=4.0)

    key = jax.random.PRNGKey(0)
    k_param, k_data = jax.random.split(key)
    params = init_params(k_param, cfg)

    T, B, C, H, W = 4, 2, 2, 16, 16
    x = jax.random.normal(k_data, (T, B, C, H, W), jnp.float32)

    fwd = jax.jit(lambda inp: model_forward(params, inp))
    out = jax.block_until_ready(fwd(x))
    assert out.shape == (B, C, H, W)
    assert bool(jnp.all(jnp.isfinite(out)))
    print("KERNEL_OK")
</pallas_src>

<mosaic_0001>
module attributes {stable_mosaic.version = 11 : i64} {
  func.func @kernel(%arg0: i32, %arg1: memref<2x8x256xf32, #tpu.memory_space<vmem>>, %arg2: memref<256x32xf32, #tpu.memory_space<vmem>>, %arg3: memref<1x32xf32, #tpu.memory_space<vmem>>, %arg4: memref<8x32xf32, #tpu.memory_space<vmem>>, %arg5: memref<1x1x32xf32, #tpu.memory_space<vmem>>, %arg6: memref<1x1x32xf32, #tpu.memory_space<vmem>>, %arg7: memref<1x32x32xf32, #tpu.memory_space<vmem>>, %arg8: memref<1x32x32xf32, #tpu.memory_space<vmem>>, %arg9: memref<1x32x32xf32, #tpu.memory_space<vmem>>, %arg10: memref<1x32x32xf32, #tpu.memory_space<vmem>>, %arg11: memref<1x1x32xf32, #tpu.memory_space<vmem>>, %arg12: memref<1x1x32xf32, #tpu.memory_space<vmem>>, %arg13: memref<1x1x32xf32, #tpu.memory_space<vmem>>, %arg14: memref<1x32x128xf32, #tpu.memory_space<vmem>>, %arg15: memref<1x1x128xf32, #tpu.memory_space<vmem>>, %arg16: memref<1x128x32xf32, #tpu.memory_space<vmem>>, %arg17: memref<1x1x32xf32, #tpu.memory_space<vmem>>, %arg18: memref<1x32xf32, #tpu.memory_space<vmem>>, %arg19: memref<1x32xf32, #tpu.memory_space<vmem>>, %arg20: memref<32x32xf32, #tpu.memory_space<vmem>>, %arg21: memref<16x32xf32, #tpu.memory_space<vmem>>, %arg22: memref<2x1x2xf32, #tpu.memory_space<vmem>>, %arg23: memref<2x1x2xf32, #tpu.memory_space<vmem>>, %arg24: memref<16x32xf32, #tpu.memory_space<vmem>>) attributes {dimension_semantics = [#tpu.dimension_semantics<arbitrary>], iteration_bounds = array<i64: 2>, scalar_prefetch = 0 : i64, scratch_operands = 1 : i64, tpu.core_type = #tpu.core_type<tc>, window_params = [{pipeline_mode = #tpu.pipeline_mode<synchronous>, transform_indices = @transform_0, window_bounds = array<i64: 2, 8, 256>}, {pipeline_mode = #tpu.pipeline_mode<synchronous>, transform_indices = @transform_1, window_bounds = array<i64: 256, 32>}, {pipeline_mode = #tpu.pipeline_mode<synchronous>, transform_indices = @transform_2, window_bounds = array<i64: 1, 32>}, {pipeline_mode = #tpu.pipeline_mode<synchronous>, transform_indices = @transform_3, window_bounds = array<i64: 8, 32>}, {transform_indices = @transform_4, window_bounds = array<i64: 1, 1, 32>}, {transform_indices = @transform_5, window_bounds = array<i64: 1, 1, 32>}, {transform_indices = @transform_6, window_bounds = array<i64: 1, 32, 32>}, {transform_indices = @transform_7, window_bounds = array<i64: 1, 32, 32>}, {transform_indices = @transform_8, window_bounds = array<i64: 1, 32, 32>}, {transform_indices = @transform_9, window_bounds = array<i64: 1, 32, 32>}, {transform_indices = @transform_10, window_bounds = array<i64: 1, 1, 32>}, {transform_indices = @transform_11, window_bounds = array<i64: 1, 1, 32>}, {transform_indices = @transform_12, window_bounds = array<i64: 1, 1, 32>}, {transform_indices = @transform_13, window_bounds = array<i64: 1, 32, 128>}, {transform_indices = @transform_14, window_bounds = array<i64: 1, 1, 128>}, {transform_indices = @transform_15, window_bounds = array<i64: 1, 128, 32>}, {transform_indices = @transform_16, window_bounds = array<i64: 1, 1, 32>}, {pipeline_mode = #tpu.pipeline_mode<synchronous>, transform_indices = @transform_17, window_bounds = array<i64: 1, 32>}, {pipeline_mode = #tpu.pipeline_mode<synchronous>, transform_indices = @transform_18, window_bounds = array<i64: 1, 32>}, {pipeline_mode = #tpu.pipeline_mode<synchronous>, transform_indices = @transform_19, window_bounds = array<i64: 32, 32>}, {pipeline_mode = #tpu.pipeline_mode<synchronous>, transform_indices = @transform_20, window_bounds = array<i64: 16, 32>}, {pipeline_mode = #tpu.pipeline_mode<synchronous>, transform_indices = @transform_21, window_bounds = array<i64: 2, 1, 2>}, {pipeline_mode = #tpu.pipeline_mode<synchronous>, transform_indices = @transform_22, window_bounds = array<i64: 2, 1, 2>}]} {
    %c0_i32 = arith.constant 0 : i32
    %0 = arith.cmpi eq, %arg0, %c0_i32 : i32
    %1 = arith.extui %0 : i1 to i32
    %c0_i32_0 = arith.constant 0 : i32
    %2 = arith.cmpi ne, %1, %c0_i32_0 : i32
    scf.if %2 {
      %198 = tpu.iota {dimensions = array<i32: 1>} : vector<1x2xi32>
      %cst_91 = arith.constant 0.000000e+00 : f32
      %199 = vector.broadcast %cst_91 : f32 to vector<8x32xf32>
      %cst_92 = arith.constant 0.000000e+00 : f32
      %200 = vector.broadcast %cst_92 : f32 to vector<1x2xf32>
      %cst_93 = arith.constant 0.000000e+00 : f32
      %201 = vector.broadcast %cst_93 : f32 to vector<1x2xf32>
      %c0_94 = arith.constant 0 : index
      %c0_95 = arith.constant 0 : index
      %c0_96 = arith.constant 0 : index
      %202 = vector.load %arg1[%c0_94, %c0_95, %c0_96] : memref<2x8x256xf32, #tpu.memory_space<vmem>>, vector<1x8x128xf32>
      %203 = vector.shape_cast %202 : vector<1x8x128xf32> to vector<8x128xf32>
      %cst_97 = arith.constant dense<0.000000e+00> : vector<8xf32>
      %204 = vector.multi_reduction <add>, %203, %cst_97 [1] : vector<8x128xf32> to vector<8xf32>
      %205 = vector.shape_cast %204 : vector<8xf32> to vector<8x1xf32>
      %cst_98 = arith.constant dense<0.000000e+00> : vector<1xf32>
      %206 = vector.multi_reduction <add>, %205, %cst_98 [0] : vector<8x1xf32> to vector<1xf32>
      %207 = vector.shape_cast %206 : vector<1xf32> to vector<1x1xf32>
      %cst_99 = arith.constant 9.765625E-4 : f32
      %208 = vector.broadcast %cst_99 : f32 to vector<1x1xf32>
      %209 = arith.mulf %207, %208 : vector<1x1xf32>
      %210 = vector.broadcast %209 : vector<1x1xf32> to vector<8x128xf32>
      %211 = arith.subf %203, %210 : vector<8x128xf32>
      %212 = arith.mulf %211, %211 : vector<8x128xf32>
      %cst_100 = arith.constant dense<0.000000e+00> : vector<8xf32>
      %213 = vector.multi_reduction <add>, %212, %cst_100 [1] : vector<8x128xf32> to vector<8xf32>
      %214 = vector.shape_cast %213 : vector<8xf32> to vector<8x1xf32>
      %cst_101 = arith.constant dense<0.000000e+00> : vector<1xf32>
      %215 = vector.multi_reduction <add>, %214, %cst_101 [0] : vector<8x1xf32> to vector<1xf32>
      %216 = vector.shape_cast %215 : vector<1xf32> to vector<1x1xf32>
      %cst_102 = arith.constant 9.77517105E-4 : f32
      %217 = vector.broadcast %cst_102 : f32 to vector<1x1xf32>
      %218 = arith.mulf %216, %217 : vector<1x1xf32>
      %219 = math.sqrt %218 : vector<1x1xf32>
      %cst_103 = arith.constant 1.000000e-07 : f32
      %220 = vector.broadcast %cst_103 : f32 to vector<1x1xf32>
      %221 = arith.addf %219, %220 : vector<1x1xf32>
      %cst_104 = arith.constant 1.000000e+00 : f32
      %222 = vector.broadcast %cst_104 : f32 to vector<1x1xf32>
      %223 = arith.divf %222, %221 : vector<1x1xf32>
      %224 = vector.broadcast %223 : vector<1x1xf32> to vector<8x128xf32>
      %225 = arith.mulf %211, %224 : vector<8x128xf32>
      %c0_105 = arith.constant 0 : index
      %c0_106 = arith.constant 0 : index
      %226 = vector.load %arg2[%c0_105, %c0_106] : memref<256x32xf32, #tpu.memory_space<vmem>>, vector<128x32xf32>
      %cst_107 = arith.constant dense<0.000000e+00> : vector<8x32xf32>
      %227 = tpu.matmul %225, %226, %cst_107 {dimension_numbers = #tpu.dot_dimension_numbers<[1], [0], [0], [1], [0, 0, 1, 1], [], []>} : vector<8x128xf32>, vector<128x32xf32>, vector<8x32xf32> -> vector<8x32xf32>
      %228 = arith.addf %199, %227 : vector<8x32xf32>
      %c0_i32_108 = arith.constant 0 : i32
      %229 = vector.broadcast %c0_i32_108 : i32 to vector<1x2xi32>
      %230 = arith.cmpi eq, %198, %229 : vector<1x2xi32>
      %231 = arith.extui %230 : vector<1x2xi1> to vector<1x2xi32>
      %232 = arith.sitofp %231 : vector<1x2xi32> to vector<1x2xf32>
      %233 = vector.broadcast %209 : vector<1x1xf32> to vector<1x2xf32>
      %234 = arith.mulf %233, %232 : vector<1x2xf32>
      %235 = arith.addf %200, %234 : vector<1x2xf32>
      %236 = vector.broadcast %221 : vector<1x1xf32> to vector<1x2xf32>
      %237 = arith.mulf %236, %232 : vector<1x2xf32>
      %238 = arith.addf %201, %237 : vector<1x2xf32>
      %c0_109 = arith.constant 0 : index
      %c0_110 = arith.constant 0 : index
      %c128 = arith.constant 128 : index
      %239 = vector.load %arg1[%c0_109, %c0_110, %c128] : memref<2x8x256xf32, #tpu.memory_space<vmem>>, vector<1x8x128xf32>
      %240 = vector.shape_cast %239 : vector<1x8x128xf32> to vector<8x128xf32>
      %cst_111 = arith.constant dense<0.000000e+00> : vector<8xf32>
      %241 = vector.multi_reduction <add>, %240, %cst_111 [1] : vector<8x128xf32> to vector<8xf32>
      %242 = vector.shape_cast %241 : vector<8xf32> to vector<8x1xf32>
      %cst_112 = arith.constant dense<0.000000e+00> : vector<1xf32>
      %243 = vector.multi_reduction <add>, %242, %cst_112 [0] : vector<8x1xf32> to vector<1xf32>
      %244 = vector.shape_cast %243 : vector<1xf32> to vector<1x1xf32>
      %cst_113 = arith.constant 9.765625E-4 : f32
      %245 = vector.broadcast %cst_113 : f32 to vector<1x1xf32>
      %246 = arith.mulf %244, %245 : vector<1x1xf32>
      %247 = vector.broadcast %246 : vector<1x1xf32> to vector<8x128xf32>
      %248 = arith.subf %240, %247 : vector<8x128xf32>
      %249 = arith.mulf %248, %248 : vector<8x128xf32>
      %cst_114 = arith.constant dense<0.000000e+00> : vector<8xf32>
      %250 = vector.multi_reduction <add>, %249, %cst_114 [1] : vector<8x128xf32> to vector<8xf32>
      %251 = vector.shape_cast %250 : vector<8xf32> to vector<8x1xf32>
      %cst_115 = arith.constant dense<0.000000e+00> : vector<1xf32>
      %252 = vector.multi_reduction <add>, %251, %cst_115 [0] : vector<8x1xf32> to vector<1xf32>
      %253 = vector.shape_cast %252 : vector<1xf32> to vector<1x1xf32>
      %cst_116 = arith.constant 9.77517105E-4 : f32
      %254 = vector.broadcast %cst_116 : f32 to vector<1x1xf32>
      %255 = arith.mulf %253, %254 : vector<1x1xf32>
      %256 = math.sqrt %255 : vector<1x1xf32>
      %cst_117 = arith.constant 1.000000e-07 : f32
      %257 = vector.broadcast %cst_117 : f32 to vector<1x1xf32>
      %258 = arith.addf %256, %257 : vector<1x1xf32>
      %cst_118 = arith.constant 1.000000e+00 : f32
      %259 = vector.broadcast %cst_118 : f32 to vector<1x1xf32>
      %260 = arith.divf %259, %258 : vector<1x1xf32>
      %261 = vector.broadcast %260 : vector<1x1xf32> to vector<8x128xf32>
      %262 = arith.mulf %248, %261 : vector<8x128xf32>
      %c128_119 = arith.constant 128 : index
      %c0_120 = arith.constant 0 : index
      %263 = vector.load %arg2[%c128_119, %c0_120] : memref<256x32xf32, #tpu.memory_space<vmem>>, vector<128x32xf32>
      %cst_121 = arith.constant dense<0.000000e+00> : vector<8x32xf32>
      %264 = tpu.matmul %262, %263, %cst_121 {dimension_numbers = #tpu.dot_dimension_numbers<[1], [0], [0], [1], [0, 0, 1, 1], [], []>} : vector<8x128xf32>, vector<128x32xf32>, vector<8x32xf32> -> vector<8x32xf32>
      %265 = arith.addf %228, %264 : vector<8x32xf32>
      %c1_i32_122 = arith.constant 1 : i32
      %266 = vector.broadcast %c1_i32_122 : i32 to vector<1x2xi32>
      %267 = arith.cmpi eq, %198, %266 : vector<1x2xi32>
      %268 = arith.extui %267 : vector<1x2xi1> to vector<1x2xi32>
      %269 = arith.sitofp %268 : vector<1x2xi32> to vector<1x2xf32>
      %270 = vector.broadcast %246 : vector<1x1xf32> to vector<1x2xf32>
      %271 = arith.mulf %270, %269 : vector<1x2xf32>
      %272 = arith.addf %235, %271 : vector<1x2xf32>
      %273 = vector.broadcast %258 : vector<1x1xf32> to vector<1x2xf32>
      %274 = arith.mulf %273, %269 : vector<1x2xf32>
      %275 = arith.addf %238, %274 : vector<1x2xf32>
      %c0_123 = arith.constant 0 : index
      %c0_124 = arith.constant 0 : index
      %276 = vector.load %arg3[%c0_123, %c0_124] : memref<1x32xf32, #tpu.memory_space<vmem>>, vector<1x32xf32>
      %277 = vector.broadcast %276 : vector<1x32xf32> to vector<8x32xf32>
      %278 = arith.addf %265, %277 : vector<8x32xf32>
      %c0_125 = arith.constant 0 : index
      %c0_126 = arith.constant 0 : index
      %279 = vector.load %arg4[%c0_125, %c0_126] : memref<8x32xf32, #tpu.memory_space<vmem>>, vector<8x32xf32>
      %280 = arith.addf %278, %279 : vector<8x32xf32>
      %c0_127 = arith.constant 0 : index
      %c0_128 = arith.constant 0 : index
      %281 = vector.load %arg24[%c0_127, %c0_128] : memref<16x32xf32, #tpu.memory_space<vmem>>, vector<8x32xf32>
      tpu.vector_store %arg24[%c0_127, %c0_128], %280 {strides = array<i32>} : memref<16x32xf32, #tpu.memory_space<vmem>>, vector<8x32xf32>,
      %c0_129 = arith.constant 0 : index
      %c0_130 = arith.constant 0 : index
      %c0_131 = arith.constant 0 : index
      %282 = vector.load %arg22[%c0_129, %c0_130, %c0_131] : memref<2x1x2xf32, #tpu.memory_space<vmem>>, vector<1x1x2xf32>
      %283 = vector.shape_cast %282 : vector<1x1x2xf32> to vector<1x2xf32>
      %284 = vector.shape_cast %272 : vector<1x2xf32> to vector<1x1x2xf32>
      tpu.vector_store %arg22[%c0_129, %c0_130, %c0_131], %284 {strides = array<i32>} : memref<2x1x2xf32, #tpu.memory_space<vmem>>, vector<1x1x2xf32>,
      %c0_132 = arith.constant 0 : index
      %c0_133 = arith.constant 0 : index
      %c0_134 = arith.constant 0 : index
      %285 = vector.load %arg23[%c0_132, %c0_133, %c0_134] : memref<2x1x2xf32, #tpu.memory_space<vmem>>, vector<1x1x2xf32>
      %286 = vector.shape_cast %285 : vector<1x1x2xf32> to vector<1x2xf32>
      %287 = vector.shape_cast %275 : vector<1x2xf32> to vector<1x1x2xf32>
      tpu.vector_store %arg23[%c0_132, %c0_133, %c0_134], %287 {strides = array<i32>} : memref<2x1x2xf32, #tpu.memory_space<vmem>>, vector<1x1x2xf32>,
      %cst_135 = arith.constant 0.000000e+00 : f32
      %288 = vector.broadcast %cst_135 : f32 to vector<8x32xf32>
      %cst_136 = arith.constant 0.000000e+00 : f32
      %289 = vector.broadcast %cst_136 : f32 to vector<1x2xf32>
      %cst_137 = arith.constant 0.000000e+00 : f32
      %290 = vector.broadcast %cst_137 : f32 to vector<1x2xf32>
      %c1 = arith.constant 1 : index
      %c0_138 = arith.constant 0 : index
      %c0_139 = arith.constant 0 : index
      %291 = vector.load %arg1[%c1, %c0_138, %c0_139] : memref<2x8x256xf32, #tpu.memory_space<vmem>>, vector<1x8x128xf32>
      %292 = vector.shape_cast %291 : vector<1x8x128xf32> to vector<8x128xf32>
      %cst_140 = arith.constant dense<0.000000e+00> : vector<8xf32>
      %293 = vector.multi_reduction <add>, %292, %cst_140 [1] : vector<8x128xf32> to vector<8xf32>
      %294 = vector.shape_cast %293 : vector<8xf32> to vector<8x1xf32>
      %cst_141 = arith.constant dense<0.000000e+00> : vector<1xf32>
      %295 = vector.multi_reduction <add>, %294, %cst_141 [0] : vector<8x1xf32> to vector<1xf32>
      %296 = vector.shape_cast %295 : vector<1xf32> to vector<1x1xf32>
      %cst_142 = arith.constant 9.765625E-4 : f32
      %297 = vector.broadcast %cst_142 : f32 to vector<1x1xf32>
      %298 = arith.mulf %296, %297 : vector<1x1xf32>
      %299 = vector.broadcast %298 : vector<1x1xf32> to vector<8x128xf32>
      %300 = arith.subf %292, %299 : vector<8x128xf32>
      %301 = arith.mulf %300, %300 : vector<8x128xf32>
      %cst_143 = arith.constant dense<0.000000e+00> : vector<8xf32>
      %302 = vector.multi_reduction <add>, %301, %cst_143 [1] : vector<8x128xf32> to vector<8xf32>
      %303 = vector.shape_cast %302 : vector<8xf32> to vector<8x1xf32>
      %cst_144 = arith.constant dense<0.000000e+00> : vector<1xf32>
      %304 = vector.multi_reduction <add>, %303, %cst_144 [0] : vector<8x1xf32> to vector<1xf32>
      %305 = vector.shape_cast %304 : vector<1xf32> to vector<1x1xf32>
      %cst_145 = arith.constant 9.77517105E-4 : f32
      %306 = vector.broadcast %cst_145 : f32 to vector<1x1xf32>
      %307 = arith.mulf %305, %306 : vector<1x1xf32>
      %308 = math.sqrt %307 : vector<1x1xf32>
      %cst_146 = arith.constant 1.000000e-07 : f32
      %309 = vector.broadcast %cst_146 : f32 to vector<1x1xf32>
      %310 = arith.addf %308, %309 : vector<1x1xf32>
      %cst_147 = arith.constant 1.000000e+00 : f32
      %311 = vector.broadcast %cst_147 : f32 to vector<1x1xf32>
      %312 = arith.divf %311, %310 : vector<1x1xf32>
      %313 = vector.broadcast %312 : vector<1x1xf32> to vector<8x128xf32>
      %314 = arith.mulf %300, %313 : vector<8x128xf32>
      %c0_148 = arith.constant 0 : index
      %c0_149 = arith.constant 0 : index
      %315 = vector.load %arg2[%c0_148, %c0_149] : memref<256x32xf32, #tpu.memory_space<vmem>>, vector<128x32xf32>
      %cst_150 = arith.constant dense<0.000000e+00> : vector<8x32xf32>
      %316 = tpu.matmul %314, %315, %cst_150 {dimension_numbers = #tpu.dot_dimension_numbers<[1], [0], [0], [1], [0, 0, 1, 1], [], []>} : vector<8x128xf32>, vector<128x32xf32>, vector<8x32xf32> -> vector<8x32xf32>
      %317 = arith.addf %288, %316 : vector<8x32xf32>
      %c0_i32_151 = arith.constant 0 : i32
      %318 = vector.broadcast %c0_i32_151 : i32 to vector<1x2xi32>
      %319 = arith.cmpi eq, %198, %318 : vector<1x2xi32>
      %320 = arith.extui %319 : vector<1x2xi1> to vector<1x2xi32>
      %321 = arith.sitofp %320 : vector<1x2xi32> to vector<1x2xf32>
      %322 = vector.broadcast %298 : vector<1x1xf32> to vector<1x2xf32>
      %323 = arith.mulf %322, %321 : vector<1x2xf32>
      %324 = arith.addf %289, %323 : vector<1x2xf32>
      %325 = vector.broadcast %310 : vector<1x1xf32> to vector<1x2xf32>
      %326 = arith.mulf %325, %321 : vector<1x2xf32>
      %327 = arith.addf %290, %326 : vector<1x2xf32>
      %c1_152 = arith.constant 1 : index
      %c0_153 = arith.constant 0 : index
      %c128_154 = arith.constant 128 : index
      %328 = vector.load %arg1[%c1_152, %c0_153, %c128_154] : memref<2x8x256xf32, #tpu.memory_space<vmem>>, vector<1x8x128xf32>
      %329 = vector.shape_cast %328 : vector<1x8x128xf32> to vector<8x128xf32>
      %cst_155 = arith.constant dense<0.000000e+00> : vector<8xf32>
      %330 = vector.multi_reduction <add>, %329, %cst_155 [1] : vector<8x128xf32> to vector<8xf32>
      %331 = vector.shape_cast %330 : vector<8xf32> to vector<8x1xf32>
      %cst_156 = arith.constant dense<0.000000e+00> : vector<1xf32>
      %332 = vector.multi_reduction <add>, %331, %cst_156 [0] : vector<8x1xf32> to vector<1xf32>
      %333 = vector.shape_cast %332 : vector<1xf32> to vector<1x1xf32>
      %cst_157 = arith.constant 9.765625E-4 : f32
      %334 = vector.broadcast %cst_157 : f32 to vector<1x1xf32>
      %335 = arith.mulf %333, %334 : vector<1x1xf32>
      %336 = vector.broadcast %335 : vector<1x1xf32> to vector<8x128xf32>
      %337 = arith.subf %329, %336 : vector<8x128xf32>
      %338 = arith.mulf %337, %337 : vector<8x128xf32>
      %cst_158 = arith.constant dense<0.000000e+00> : vector<8xf32>
      %339 = vector.multi_reduction <add>, %338, %cst_158 [1] : vector<8x128xf32> to vector<8xf32>
      %340 = vector.shape_cast %339 : vector<8xf32> to vector<8x1xf32>
      %cst_159 = arith.constant dense<0.000000e+00> : vector<1xf32>
      %341 = vector.multi_reduction <add>, %340, %cst_159 [0] : vector<8x1xf32> to vector<1xf32>
      %342 = vector.shape_cast %341 : vector<1xf32> to vector<1x1xf32>
      %cst_160 = arith.constant 9.77517105E-4 : f32
      %343 = vector.broadcast %cst_160 : f32 to vector<1x1xf32>
      %344 = arith.mulf %342, %343 : vector<1x1xf32>
      %345 = math.sqrt %344 : vector<1x1xf32>
      %cst_161 = arith.constant 1.000000e-07 : f32
      %346 = vector.broadcast %cst_161 : f32 to vector<1x1xf32>
      %347 = arith.addf %345, %346 : vector<1x1xf32>
      %cst_162 = arith.constant 1.000000e+00 : f32
      %348 = vector.broadcast %cst_162 : f32 to vector<1x1xf32>
      %349 = arith.divf %348, %347 : vector<1x1xf32>
      %350 = vector.broadcast %349 : vector<1x1xf32> to vector<8x128xf32>
      %351 = arith.mulf %337, %350 : vector<8x128xf32>
      %c128_163 = arith.constant 128 : index
      %c0_164 = arith.constant 0 : index
      %352 = vector.load %arg2[%c128_163, %c0_164] : memref<256x32xf32, #tpu.memory_space<vmem>>, vector<128x32xf32>
      %cst_165 = arith.constant dense<0.000000e+00> : vector<8x32xf32>
      %353 = tpu.matmul %351, %352, %cst_165 {dimension_numbers = #tpu.dot_dimension_numbers<[1], [0], [0], [1], [0, 0, 1, 1], [], []>} : vector<8x128xf32>, vector<128x32xf32>, vector<8x32xf32> -> vector<8x32xf32>
      %354 = arith.addf %317, %353 : vector<8x32xf32>
      %c1_i32_166 = arith.constant 1 : i32
      %355 = vector.broadcast %c1_i32_166 : i32 to vector<1x2xi32>
      %356 = arith.cmpi eq, %198, %355 : vector<1x2xi32>
      %357 = arith.extui %356 : vector<1x2xi1> to vector<1x2xi32>
      %358 = arith.sitofp %357 : vector<1x2xi32> to vector<1x2xf32>
      %359 = vector.broadcast %335 : vector<1x1xf32> to vector<1x2xf32>
      %360 = arith.mulf %359, %358 : vector<1x2xf32>
      %361 = arith.addf %324, %360 : vector<1x2xf32>
      %362 = vector.broadcast %347 : vector<1x1xf32> to vector<1x2xf32>
      %363 = arith.mulf %362, %358 : vector<1x2xf32>
      %364 = arith.addf %327, %363 : vector<1x2xf32>
      %c0_167 = arith.constant 0 : index
      %c0_168 = arith.constant 0 : index
      %365 = vector.load %arg3[%c0_167, %c0_168] : memref<1x32xf32, #tpu.memory_space<vmem>>, vector<1x32xf32>
      %366 = vector.broadcast %365 : vector<1x32xf32> to vector<8x32xf32>
      %367 = arith.addf %354, %366 : vector<8x32xf32>
      %c0_169 = arith.constant 0 : index
      %c0_170 = arith.constant 0 : index
      %368 = vector.load %arg4[%c0_169, %c0_170] : memref<8x32xf32, #tpu.memory_space<vmem>>, vector<8x32xf32>
      %369 = arith.addf %367, %368 : vector<8x32xf32>
      %c8 = arith.constant 8 : index
      %c0_171 = arith.constant 0 : index
      %370 = vector.load %arg24[%c8, %c0_171] : memref<16x32xf32, #tpu.memory_space<vmem>>, vector<8x32xf32>
      tpu.vector_store %arg24[%c8, %c0_171], %369 {strides = array<i32>} : memref<16x32xf32, #tpu.memory_space<vmem>>, vector<8x32xf32>,
      %c1_172 = arith.constant 1 : index
      %c0_173 = arith.constant 0 : index
      %c0_174 = arith.constant 0 : index
      %371 = vector.load %arg22[%c1_172, %c0_173, %c0_174] : memref<2x1x2xf32, #tpu.memory_space<vmem>>, vector<1x1x2xf32>
      %372 = vector.shape_cast %371 : vector<1x1x2xf32> to vector<1x2xf32>
      %373 = vector.shape_cast %361 : vector<1x2xf32> to vector<1x1x2xf32>
      tpu.vector_store %arg22[%c1_172, %c0_173, %c0_174], %373 {strides = array<i32>} : memref<2x1x2xf32, #tpu.memory_space<vmem>>, vector<1x1x2xf32>,
      %c1_175 = arith.constant 1 : index
      %c0_176 = arith.constant 0 : index
      %c0_177 = arith.constant 0 : index
      %374 = vector.load %arg23[%c1_175, %c0_176, %c0_177] : memref<2x1x2xf32, #tpu.memory_space<vmem>>, vector<1x1x2xf32>
      %375 = vector.shape_cast %374 : vector<1x1x2xf32> to vector<1x2xf32>
      %376 = vector.shape_cast %364 : vector<1x2xf32> to vector<1x1x2xf32>
      tpu.vector_store %arg23[%c1_175, %c0_176, %c0_177], %376 {strides = array<i32>} : memref<2x1x2xf32, #tpu.memory_space<vmem>>, vector<1x1x2xf32>,
    } else {
    }
    %c0 = arith.constant 0 : index
    %c0_1 = arith.constant 0 : index
    %3 = vector.load %arg24[%c0, %c0_1] : memref<16x32xf32, #tpu.memory_space<vmem>>, vector<16x32xf32>
    %c0_2 = arith.constant 0 : index
    %c0_3 = arith.constant 0 : index
    %c0_4 = arith.constant 0 : index
    %4 = vector.load %arg5[%c0_2, %c0_3, %c0_4] : memref<1x1x32xf32, #tpu.memory_space<vmem>>, vector<1x1x32xf32>
    %5 = vector.shape_cast %4 : vector<1x1x32xf32> to vector<1x32xf32>
    %c0_5 = arith.constant 0 : index
    %c0_6 = arith.constant 0 : index
    %c0_7 = arith.constant 0 : index
    %6 = vector.load %arg6[%c0_5, %c0_6, %c0_7] : memref<1x1x32xf32, #tpu.memory_space<vmem>>, vector<1x1x32xf32>
    %7 = vector.shape_cast %6 : vector<1x1x32xf32> to vector<1x32xf32>
    %c0_8 = arith.constant 0 : index
    %c0_9 = arith.constant 0 : index
    %c0_10 = arith.constant 0 : index
    %8 = vector.load %arg7[%c0_8, %c0_9, %c0_10] : memref<1x32x32xf32, #tpu.memory_space<vmem>>, vector<1x32x32xf32>
    %9 = vector.shape_cast %8 : vector<1x32x32xf32> to vector<32x32xf32>
    %c0_11 = arith.constant 0 : index
    %c0_12 = arith.constant 0 : index
    %c0_13 = arith.constant 0 : index
    %10 = vector.load %arg8[%c0_11, %c0_12, %c0_13] : memref<1x32x32xf32, #tpu.memory_space<vmem>>, vector<1x32x32xf32>
    %11 = vector.shape_cast %10 : vector<1x32x32xf32> to vector<32x32xf32>
    %c0_14 = arith.constant 0 : index
    %c0_15 = arith.constant 0 : index
    %c0_16 = arith.constant 0 : index
    %12 = vector.load %arg9[%c0_14, %c0_15, %c0_16] : memref<1x32x32xf32, #tpu.memory_space<vmem>>, vector<1x32x32xf32>
    %13 = vector.shape_cast %12 : vector<1x32x32xf32> to vector<32x32xf32>
    %c0_17 = arith.constant 0 : index
    %c0_18 = arith.constant 0 : index
    %c0_19 = arith.constant 0 : index
    %14 = vector.load %arg10[%c0_17, %c0_18, %c0_19] : memref<1x32x32xf32, #tpu.memory_space<vmem>>, vector<1x32x32xf32>
    %15 = vector.shape_cast %14 : vector<1x32x32xf32> to vector<32x32xf32>
    %c0_20 = arith.constant 0 : index
    %c0_21 = arith.constant 0 : index
    %c0_22 = arith.constant 0 : index
    %16 = vector.load %arg11[%c0_20, %c0_21, %c0_22] : memref<1x1x32xf32, #tpu.memory_space<vmem>>, vector<1x1x32xf32>
    %17 = vector.shape_cast %16 : vector<1x1x32xf32> to vector<1x32xf32>
    %c0_23 = arith.constant 0 : index
    %c0_24 = arith.constant 0 : index
    %c0_25 = arith.constant 0 : index
    %18 = vector.load %arg12[%c0_23, %c0_24, %c0_25] : memref<1x1x32xf32, #tpu.memory_space<vmem>>, vector<1x1x32xf32>
    %19 = vector.shape_cast %18 : vector<1x1x32xf32> to vector<1x32xf32>
    %c0_26 = arith.constant 0 : index
    %c0_27 = arith.constant 0 : index
    %c0_28 = arith.constant 0 : index
    %20 = vector.load %arg13[%c0_26, %c0_27, %c0_28] : memref<1x1x32xf32, #tpu.memory_space<vmem>>, vector<1x1x32xf32>
    %21 = vector.shape_cast %20 : vector<1x1x32xf32> to vector<1x32xf32>
    %c0_29 = arith.constant 0 : index
    %c0_30 = arith.constant 0 : index
    %c0_31 = arith.constant 0 : index
    %22 = vector.load %arg14[%c0_29, %c0_30, %c0_31] : memref<1x32x128xf32, #tpu.memory_space<vmem>>, vector<1x32x128xf32>
    %23 = vector.shape_cast %22 : vector<1x32x128xf32> to vector<32x128xf32>
    %c0_32 = arith.constant 0 : index
    %c0_33 = arith.constant 0 : index
    %c0_34 = arith.constant 0 : index
    %24 = vector.load %arg15[%c0_32, %c0_33, %c0_34] : memref<1x1x128xf32, #tpu.memory_space<vmem>>, vector<1x1x128xf32>
    %25 = vector.shape_cast %24 : vector<1x1x128xf32> to vector<1x128xf32>
    %c0_35 = arith.constant 0 : index
    %c0_36 = arith.constant 0 : index
    %c0_37 = arith.constant 0 : index
    %26 = vector.load %arg16[%c0_35, %c0_36, %c0_37] : memref<1x128x32xf32, #tpu.memory_space<vmem>>, vector<1x128x32xf32>
    %27 = vector.shape_cast %26 : vector<1x128x32xf32> to vector<128x32xf32>
    %c0_38 = arith.constant 0 : index
    %c0_39 = arith.constant 0 : index
    %c0_40 = arith.constant 0 : index
    %28 = vector.load %arg17[%c0_38, %c0_39, %c0_40] : memref<1x1x32xf32, #tpu.memory_space<vmem>>, vector<1x1x32xf32>
    %29 = vector.shape_cast %28 : vector<1x1x32xf32> to vector<1x32xf32>
    %cst = arith.constant dense<0.000000e+00> : vector<16xf32>
    %30 = vector.multi_reduction <add>, %3, %cst [1] : vector<16x32xf32> to vector<16xf32>
    %31 = vector.shape_cast %30 : vector<16xf32> to vector<16x1xf32>
    %cst_41 = arith.constant 3.200000e+01 : f32
    %32 = vector.broadcast %cst_41 : f32 to vector<16x1xf32>
    %33 = arith.divf %31, %32 : vector<16x1xf32>
    %34 = vector.broadcast %33 : vector<16x1xf32> to vector<16x32xf32>
    %35 = arith.subf %3, %34 : vector<16x32xf32>
    %36 = arith.mulf %35, %35 : vector<16x32xf32>
    %cst_42 = arith.constant dense<0.000000e+00> : vector<16xf32>
    %37 = vector.multi_reduction <add>, %36, %cst_42 [1] : vector<16x32xf32> to vector<16xf32>
    %38 = vector.shape_cast %37 : vector<16xf32> to vector<16x1xf32>
    %cst_43 = arith.constant 3.200000e+01 : f32
    %39 = vector.broadcast %cst_43 : f32 to vector<16x1xf32>
    %40 = arith.divf %38, %39 : vector<16x1xf32>
    %41 = vector.broadcast %33 : vector<16x1xf32> to vector<16x32xf32>
    %42 = arith.subf %3, %41 : vector<16x32xf32>
    %cst_44 = arith.constant 9.99999974E-6 : f32
    %43 = vector.broadcast %cst_44 : f32 to vector<16x1xf32>
    %44 = arith.addf %40, %43 : vector<16x1xf32>
    %45 = math.rsqrt %44 : vector<16x1xf32>
    %46 = vector.broadcast %45 : vector<16x1xf32> to vector<16x32xf32>
    %47 = arith.mulf %42, %46 : vector<16x32xf32>
    %48 = vector.broadcast %5 : vector<1x32xf32> to vector<16x32xf32>
    %49 = arith.mulf %47, %48 : vector<16x32xf32>
    %50 = vector.broadcast %7 : vector<1x32xf32> to vector<16x32xf32>
    %51 = arith.addf %49, %50 : vector<16x32xf32>
    %cst_45 = arith.constant dense<0.000000e+00> : vector<16x32xf32>
    %52 = tpu.matmul %51, %9, %cst_45 {dimension_numbers = #tpu.dot_dimension_numbers<[1], [0], [0], [1], [0, 0, 1, 1], [], []>} : vector<16x32xf32>, vector<32x32xf32>, vector<16x32xf32> -> vector<16x32xf32>
    %cst_46 = arith.constant 0.353553385 : f32
    %53 = vector.broadcast %cst_46 : f32 to vector<16x32xf32>
    %54 = arith.mulf %52, %53 : vector<16x32xf32>
    %cst_47 = arith.constant dense<0.000000e+00> : vector<16x32xf32>
    %55 = tpu.matmul %51, %11, %cst_47 {dimension_numbers = #tpu.dot_dimension_numbers<[1], [0], [0], [1], [0, 0, 1, 1], [], []>} : vector<16x32xf32>, vector<32x32xf32>, vector<16x32xf32> -> vector<16x32xf32>
    %cst_48 = arith.constant dense<0.000000e+00> : vector<16x32xf32>
    %56 = tpu.matmul %51, %13, %cst_48 {dimension_numbers = #tpu.dot_dimension_numbers<[1], [0], [0], [1], [0, 0, 1, 1], [], []>} : vector<16x32xf32>, vector<32x32xf32>, vector<16x32xf32> -> vector<16x32xf32>
    %57 = vector.shape_cast %54 : vector<16x32xf32> to vector<2x8x32xf32>
    %58 = vector.shape_cast %55 : vector<16x32xf32> to vector<2x8x32xf32>
    %59 = vector.shape_cast %56 : vector<16x32xf32> to vector<2x8x32xf32>
    %60 = vector.extract_strided_slice %57 {offsets = [0, 0, 0], sizes = [2, 8, 8], strides = [1, 1, 1]} : vector<2x8x32xf32> to vector<2x8x8xf32>
    %61 = vector.extract_strided_slice %58 {offsets = [0, 0, 0], sizes = [2, 8, 8], strides = [1, 1, 1]} : vector<2x8x32xf32> to vector<2x8x8xf32>
    %62 = vector.extract_strided_slice %59 {offsets = [0, 0, 0], sizes = [2, 8, 8], strides = [1, 1, 1]} : vector<2x8x32xf32> to vector<2x8x8xf32>
    %cst_49 = arith.constant dense<0.000000e+00> : vector<2x8x8xf32>
    %63 = tpu.matmul %60, %61, %cst_49 {dimension_numbers = #tpu.dot_dimension_numbers<[2], [2], [1], [1], [0, 0, 0, 1, 1, 1], [0], [0]>} : vector<2x8x8xf32>, vector<2x8x8xf32>, vector<2x8x8xf32> -> vector<2x8x8xf32>
    %cst_50 = arith.constant dense<0xFF800000> : vector<2x8xf32>
    %64 = vector.multi_reduction <maximumf>, %63, %cst_50 [2] : vector<2x8x8xf32> to vector<2x8xf32>
    %65 = vector.shape_cast %64 : vector<2x8xf32> to vector<2x8x1xf32>
    %66 = vector.broadcast %65 : vector<2x8x1xf32> to vector<2x8x8xf32>
    %67 = arith.subf %63, %66 : vector<2x8x8xf32>
    %68 = math.exp %67 : vector<2x8x8xf32>
    %cst_51 = arith.constant dense<0.000000e+00> : vector<2x8xf32>
    %69 = vector.multi_reduction <add>, %68, %cst_51 [2] : vector<2x8x8xf32> to vector<2x8xf32>
    %70 = vector.shape_cast %69 : vector<2x8xf32> to vector<2x8x1xf32>
    %71 = vector.broadcast %70 : vector<2x8x1xf32> to vector<2x8x8xf32>
    %72 = arith.divf %68, %71 : vector<2x8x8xf32>
    %cst_52 = arith.constant dense<0.000000e+00> : vector<2x8x8xf32>
    %73 = tpu.matmul %72, %62, %cst_52 {dimension_numbers = #tpu.dot_dimension_numbers<[2], [1], [1], [2], [0, 0, 0, 1, 1, 2], [0], [0]>} : vector<2x8x8xf32>, vector<2x8x8xf32>, vector<2x8x8xf32> -> vector<2x8x8xf32>
    %74 = vector.shape_cast %73 : vector<2x8x8xf32> to vector<16x8xf32>
    %75 = vector.extract_strided_slice %57 {offsets = [0, 0, 8], sizes = [2, 8, 8], strides = [1, 1, 1]} : vector<2x8x32xf32> to vector<2x8x8xf32>
    %76 = vector.extract_strided_slice %58 {offsets = [0, 0, 8], sizes = [2, 8, 8], strides = [1, 1, 1]} : vector<2x8x32xf32> to vector<2x8x8xf32>
    %77 = vector.extract_strided_slice %59 {offsets = [0, 0, 8], sizes = [2, 8, 8], strides = [1, 1, 1]} : vector<2x8x32xf32> to vector<2x8x8xf32>
    %cst_53 = arith.constant dense<0.000000e+00> : vector<2x8x8xf32>
    %78 = tpu.matmul %75, %76, %cst_53 {dimension_numbers = #tpu.dot_dimension_numbers<[2], [2], [1], [1], [0, 0, 0, 1, 1, 1], [0], [0]>} : vector<2x8x8xf32>, vector<2x8x8xf32>, vector<2x8x8xf32> -> vector<2x8x8xf32>
    %cst_54 = arith.constant dense<0xFF800000> : vector<2x8xf32>
    %79 = vector.multi_reduction <maximumf>, %78, %cst_54 [2] : vector<2x8x8xf32> to vector<2x8xf32>
    %80 = vector.shape_cast %79 : vector<2x8xf32> to vector<2x8x1xf32>
    %81 = vector.broadcast %80 : vector<2x8x1xf32> to vector<2x8x8xf32>
    %82 = arith.subf %78, %81 : vector<2x8x8xf32>
    %83 = math.exp %82 : vector<2x8x8xf32>
    %cst_55 = arith.constant dense<0.000000e+00> : vector<2x8xf32>
    %84 = vector.multi_reduction <add>, %83, %cst_55 [2] : vector<2x8x8xf32> to vector<2x8xf32>
    %85 = vector.shape_cast %84 : vector<2x8xf32> to vector<2x8x1xf32>
    %86 = vector.broadcast %85 : vector<2x8x1xf32> to vector<2x8x8xf32>
    %87 = arith.divf %83, %86 : vector<2x8x8xf32>
    %cst_56 = arith.constant dense<0.000000e+00> : vector<2x8x8xf32>
    %88 = tpu.matmul %87, %77, %cst_56 {dimension_numbers = #tpu.dot_dimension_numbers<[2], [1], [1], [2], [0, 0, 0, 1, 1, 2], [0], [0]>} : vector<2x8x8xf32>, vector<2x8x8xf32>, vector<2x8x8xf32> -> vector<2x8x8xf32>
    %89 = vector.shape_cast %88 : vector<2x8x8xf32> to vector<16x8xf32>
    %90 = vector.extract_strided_slice %57 {offsets = [0, 0, 16], sizes = [2, 8, 8], strides = [1, 1, 1]} : vector<2x8x32xf32> to vector<2x8x8xf32>
    %91 = vector.extract_strided_slice %58 {offsets = [0, 0, 16], sizes = [2, 8, 8], strides = [1, 1, 1]} : vector<2x8x32xf32> to vector<2x8x8xf32>
    %92 = vector.extract_strided_slice %59 {offsets = [0, 0, 16], sizes = [2, 8, 8], strides = [1, 1, 1]} : vector<2x8x32xf32> to vector<2x8x8xf32>
    %cst_57 = arith.constant dense<0.000000e+00> : vector<2x8x8xf32>
    %93 = tpu.matmul %90, %91, %cst_57 {dimension_numbers = #tpu.dot_dimension_numbers<[2], [2], [1], [1], [0, 0, 0, 1, 1, 1], [0], [0]>} : vector<2x8x8xf32>, vector<2x8x8xf32>, vector<2x8x8xf32> -> vector<2x8x8xf32>
    %cst_58 = arith.constant dense<0xFF800000> : vector<2x8xf32>
    %94 = vector.multi_reduction <maximumf>, %93, %cst_58 [2] : vector<2x8x8xf32> to vector<2x8xf32>
    %95 = vector.shape_cast %94 : vector<2x8xf32> to vector<2x8x1xf32>
    %96 = vector.broadcast %95 : vector<2x8x1xf32> to vector<2x8x8xf32>
    %97 = arith.subf %93, %96 : vector<2x8x8xf32>
    %98 = math.exp %97 : vector<2x8x8xf32>
    %cst_59 = arith.constant dense<0.000000e+00> : vector<2x8xf32>
    %99 = vector.multi_reduction <add>, %98, %cst_59 [2] : vector<2x8x8xf32> to vector<2x8xf32>
    %100 = vector.shape_cast %99 : vector<2x8xf32> to vector<2x8x1xf32>
    %101 = vector.broadcast %100 : vector<2x8x1xf32> to vector<2x8x8xf32>
    %102 = arith.divf %98, %101 : vector<2x8x8xf32>
    %cst_60 = arith.constant dense<0.000000e+00> : vector<2x8x8xf32>
    %103 = tpu.matmul %102, %92, %cst_60 {dimension_numbers = #tpu.dot_dimension_numbers<[2], [1], [1], [2], [0, 0, 0, 1, 1, 2], [0], [0]>} : vector<2x8x8xf32>, vector<2x8x8xf32>, vector<2x8x8xf32> -> vector<2x8x8xf32>
    %104 = vector.shape_cast %103 : vector<2x8x8xf32> to vector<16x8xf32>
    %105 = vector.extract_strided_slice %57 {offsets = [0, 0, 24], sizes = [2, 8, 8], strides = [1, 1, 1]} : vector<2x8x32xf32> to vector<2x8x8xf32>
    %106 = vector.extract_strided_slice %58 {offsets = [0, 0, 24], sizes = [2, 8, 8], strides = [1, 1, 1]} : vector<2x8x32xf32> to vector<2x8x8xf32>
    %107 = vector.extract_strided_slice %59 {offsets = [0, 0, 24], sizes = [2, 8, 8], strides = [1, 1, 1]} : vector<2x8x32xf32> to vector<2x8x8xf32>
    %cst_61 = arith.constant dense<0.000000e+00> : vector<2x8x8xf32>
    %108 = tpu.matmul %105, %106, %cst_61 {dimension_numbers = #tpu.dot_dimension_numbers<[2], [2], [1], [1], [0, 0, 0, 1, 1, 1], [0], [0]>} : vector<2x8x8xf32>, vector<2x8x8xf32>, vector<2x8x8xf32> -> vector<2x8x8xf32>
    %cst_62 = arith.constant dense<0xFF800000> : vector<2x8xf32>
    %109 = vector.multi_reduction <maximumf>, %108, %cst_62 [2] : vector<2x8x8xf32> to vector<2x8xf32>
    %110 = vector.shape_cast %109 : vector<2x8xf32> to vector<2x8x1xf32>
    %111 = vector.broadcast %110 : vector<2x8x1xf32> to vector<2x8x8xf32>
    %112 = arith.subf %108, %111 : vector<2x8x8xf32>
    %113 = math.exp %112 : vector<2x8x8xf32>
    %cst_63 = arith.constant dense<0.000000e+00> : vector<2x8xf32>
    %114 = vector.multi_reduction <add>, %113, %cst_63 [2] : vector<2x8x8xf32> to vector<2x8xf32>
    %115 = vector.shape_cast %114 : vector<2x8xf32> to vector<2x8x1xf32>
    %116 = vector.broadcast %115 : vector<2x8x1xf32> to vector<2x8x8xf32>
    %117 = arith.divf %113, %116 : vector<2x8x8xf32>
    %cst_64 = arith.constant dense<0.000000e+00> : vector<2x8x8xf32>
    %118 = tpu.matmul %117, %107, %cst_64 {dimension_numbers = #tpu.dot_dimension_numbers<[2], [1], [1], [2], [0, 0, 0, 1, 1, 2], [0], [0]>} : vector<2x8x8xf32>, vector<2x8x8xf32>, vector<2x8x8xf32> -> vector<2x8x8xf32>
    %119 = vector.shape_cast %118 : vector<2x8x8xf32> to vector<16x8xf32>
    %120 = tpu.concatenate %74, %89, %104, %119 in 1 : vector<16x8xf32>, vector<16x8xf32>, vector<16x8xf32>, vector<16x8xf32> -> vector<16x32xf32>
    %cst_65 = arith.constant dense<0.000000e+00> : vector<16x32xf32>
    %121 = tpu.matmul %120, %15, %cst_65 {dimension_numbers = #tpu.dot_dimension_numbers<[1], [0], [0], [1], [0, 0, 1, 1], [], []>} : vector<16x32xf32>, vector<32x32xf32>, vector<16x32xf32> -> vector<16x32xf32>
    %122 = arith.addf %3, %121 : vector<16x32xf32>
    %123 = vector.broadcast %17 : vector<1x32xf32> to vector<16x32xf32>
    %124 = arith.addf %122, %123 : vector<16x32xf32>
    %cst_66 = arith.constant dense<0.000000e+00> : vector<16xf32>
    %125 = vector.multi_reduction <add>, %124, %cst_66 [1] : vector<16x32xf32> to vector<16xf32>
    %126 = vector.shape_cast %125 : vector<16xf32> to vector<16x1xf32>
    %cst_67 = arith.constant 3.200000e+01 : f32
    %127 = vector.broadcast %cst_67 : f32 to vector<16x1xf32>
    %128 = arith.divf %126, %127 : vector<16x1xf32>
    %129 = vector.broadcast %128 : vector<16x1xf32> to vector<16x32xf32>
    %130 = arith.subf %124, %129 : vector<16x32xf32>
    %131 = arith.mulf %130, %130 : vector<16x32xf32>
    %cst_68 = arith.constant dense<0.000000e+00> : vector<16xf32>
    %132 = vector.multi_reduction <add>, %131, %cst_68 [1] : vector<16x32xf32> to vector<16xf32>
    %133 = vector.shape_cast %132 : vector<16xf32> to vector<16x1xf32>
    %cst_69 = arith.constant 3.200000e+01 : f32
    %134 = vector.broadcast %cst_69 : f32 to vector<16x1xf32>
    %135 = arith.divf %133, %134 : vector<16x1xf32>
    %136 = vector.broadcast %128 : vector<16x1xf32> to vector<16x32xf32>
    %137 = arith.subf %124, %136 : vector<16x32xf32>
    %cst_70 = arith.constant 9.99999974E-6 : f32
    %138 = vector.broadcast %cst_70 : f32 to vector<16x1xf32>
    %139 = arith.addf %135, %138 : vector<16x1xf32>
    %140 = math.rsqrt %139 : vector<16x1xf32>
    %141 = vector.broadcast %140 : vector<16x1xf32> to vector<16x32xf32>
    %142 = arith.mulf %137, %141 : vector<16x32xf32>
    %143 = vector.broadcast %19 : vector<1x32xf32> to vector<16x32xf32>
    %144 = arith.mulf %142, %143 : vector<16x32xf32>
    %145 = vector.broadcast %21 : vector<1x32xf32> to vector<16x32xf32>
    %146 = arith.addf %144, %145 : vector<16x32xf32>
    %cst_71 = arith.constant dense<0.000000e+00> : vector<16x128xf32>
    %147 = tpu.matmul %146, %23, %cst_71 {dimension_numbers = #tpu.dot_dimension_numbers<[1], [0], [0], [1], [0, 0, 1, 1], [], []>} : vector<16x32xf32>, vector<32x128xf32>, vector<16x128xf32> -> vector<16x128xf32>
    %148 = vector.broadcast %25 : vector<1x128xf32> to vector<16x128xf32>
    %149 = arith.addf %147, %148 : vector<16x128xf32>
    %cst_72 = arith.constant 5.000000e-01 : f32
    %150 = vector.broadcast %cst_72 : f32 to vector<16x128xf32>
    %151 = arith.mulf %150, %149 : vector<16x128xf32>
    %cst_73 = arith.constant 0.707106769 : f32
    %152 = vector.broadcast %cst_73 : f32 to vector<16x128xf32>
    %153 = arith.mulf %149, %152 : vector<16x128xf32>
    %154 = math.absf %153 : vector<16x128xf32>
    %cst_74 = arith.constant 0.327591091 : f32
    %155 = vector.broadcast %cst_74 : f32 to vector<16x128xf32>
    %156 = arith.mulf %155, %154 : vector<16x128xf32>
    %cst_75 = arith.constant 1.000000e+00 : f32
    %157 = vector.broadcast %cst_75 : f32 to vector<16x128xf32>
    %158 = arith.addf %157, %156 : vector<16x128xf32>
    %cst_76 = arith.constant 1.000000e+00 : f32
    %159 = vector.broadcast %cst_76 : f32 to vector<16x128xf32>
    %160 = arith.divf %159, %158 : vector<16x128xf32>
    %cst_77 = arith.constant 1.06140542 : f32
    %161 = vector.broadcast %cst_77 : f32 to vector<16x128xf32>
    %162 = arith.mulf %161, %160 : vector<16x128xf32>
    %cst_78 = arith.constant -1.45315206 : f32
    %163 = vector.broadcast %cst_78 : f32 to vector<16x128xf32>
    %164 = arith.addf %162, %163 : vector<16x128xf32>
    %165 = arith.mulf %164, %160 : vector<16x128xf32>
    %cst_79 = arith.constant 1.42141378 : f32
    %166 = vector.broadcast %cst_79 : f32 to vector<16x128xf32>
    %167 = arith.addf %165, %166 : vector<16x128xf32>
    %168 = arith.mulf %167, %160 : vector<16x128xf32>
    %cst_80 = arith.constant -0.284496725 : f32
    %169 = vector.broadcast %cst_80 : f32 to vector<16x128xf32>
    %170 = arith.addf %168, %169 : vector<16x128xf32>
    %171 = arith.mulf %170, %160 : vector<16x128xf32>
    %cst_81 = arith.constant 0.254829586 : f32
    %172 = vector.broadcast %cst_81 : f32 to vector<16x128xf32>
    %173 = arith.addf %171, %172 : vector<16x128xf32>
    %174 = arith.mulf %173, %160 : vector<16x128xf32>
    %cst_82 = arith.constant 0.000000e+00 : f32
    %175 = vector.broadcast %cst_82 : f32 to vector<16x128xf32>
    %176 = arith.subf %175, %154 : vector<16x128xf32>
    %177 = arith.mulf %176, %154 : vector<16x128xf32>
    %178 = math.exp %177 : vector<16x128xf32>
    %179 = arith.mulf %174, %178 : vector<16x128xf32>
    %cst_83 = arith.constant 1.000000e+00 : f32
    %180 = vector.broadcast %cst_83 : f32 to vector<16x128xf32>
    %181 = arith.subf %180, %179 : vector<16x128xf32>
    %cst_84 = arith.constant 0.000000e+00 : f32
    %182 = vector.broadcast %cst_84 : f32 to vector<16x128xf32>
    %183 = arith.cmpf oge, %153, %182 : vector<16x128xf32>
    %cst_85 = arith.constant 0.000000e+00 : f32
    %184 = vector.broadcast %cst_85 : f32 to vector<16x128xf32>
    %185 = arith.subf %184, %181 : vector<16x128xf32>
    %186 = arith.select %183, %181, %185 : vector<16x128xi1>, vector<16x128xf32>
    %cst_86 = arith.constant 1.000000e+00 : f32
    %187 = vector.broadcast %cst_86 : f32 to vector<16x128xf32>
    %188 = arith.addf %187, %186 : vector<16x128xf32>
    %189 = arith.mulf %151, %188 : vector<16x128xf32>
    %cst_87 = arith.constant dense<0.000000e+00> : vector<16x32xf32>
    %190 = tpu.matmul %189, %27, %cst_87 {dimension_numbers = #tpu.dot_dimension_numbers<[1], [0], [0], [1], [0, 0, 1, 1], [], []>} : vector<16x128xf32>, vector<128x32xf32>, vector<16x32xf32> -> vector<16x32xf32>
    %191 = vector.broadcast %29 : vector<1x32xf32> to vector<16x32xf32>
    %192 = arith.addf %190, %191 : vector<16x32xf32>
    %193 = arith.addf %124, %192 : vector<16x32xf32>
    %c0_88 = arith.constant 0 : index
    %c0_89 = arith.constant 0 : index
    %194 = vector.load %arg24[%c0_88, %c0_89] : memref<16x32xf32, #tpu.memory_space<vmem>>, vector<16x32xf32>
    tpu.vector_store %arg24[%c0_88, %c0_89], %193 {strides = array<i32>} : memref<16x32xf32, #tpu.memory_space<vmem>>, vector<16x32xf32>,
    %c1_i32 = arith.constant 1 : i32
    %195 = arith.cmpi eq, %arg0, %c1_i32 : i32
    %196 = arith.extui %195 : i1 to i32
    %c0_i32_90 = arith.constant 0 : i32
    %197 = arith.cmpi ne, %196, %c0_i32_90 : i32
    scf.if %197 {
      %c0_91 = arith.constant 0 : index
      %c0_92 = arith.constant 0 : index
      %198 = vector.load %arg18[%c0_91, %c0_92] : memref<1x32xf32, #tpu.memory_space<vmem>>, vector<1x32xf32>
      %c0_93 = arith.constant 0 : index
      %c0_94 = arith.constant 0 : index
      %199 = vector.load %arg19[%c0_93, %c0_94] : memref<1x32xf32, #tpu.memory_space<vmem>>, vector<1x32xf32>
      %cst_95 = arith.constant dense<0.000000e+00> : vector<16xf32>
      %200 = vector.multi_reduction <add>, %193, %cst_95 [1] : vector<16x32xf32> to vector<16xf32>
      %201 = vector.shape_cast %200 : vector<16xf32> to vector<16x1xf32>
      %cst_96 = arith.constant 3.200000e+01 : f32
      %202 = vector.broadcast %cst_96 : f32 to vector<16x1xf32>
      %203 = arith.divf %201, %202 : vector<16x1xf32>
      %204 = vector.broadcast %203 : vector<16x1xf32> to vector<16x32xf32>
      %205 = arith.subf %193, %204 : vector<16x32xf32>
      %206 = arith.mulf %205, %205 : vector<16x32xf32>
      %cst_97 = arith.constant dense<0.000000e+00> : vector<16xf32>
      %207 = vector.multi_reduction <add>, %206, %cst_97 [1] : vector<16x32xf32> to vector<16xf32>
      %208 = vector.shape_cast %207 : vector<16xf32> to vector<16x1xf32>
      %cst_98 = arith.constant 3.200000e+01 : f32
      %209 = vector.broadcast %cst_98 : f32 to vector<16x1xf32>
      %210 = arith.divf %208, %209 : vector<16x1xf32>
      %211 = vector.broadcast %203 : vector<16x1xf32> to vector<16x32xf32>
      %212 = arith.subf %193, %211 : vector<16x32xf32>
      %cst_99 = arith.constant 9.99999974E-6 : f32
      %213 = vector.broadcast %cst_99 : f32 to vector<16x1xf32>
      %214 = arith.addf %210, %213 : vector<16x1xf32>
      %215 = math.rsqrt %214 : vector<16x1xf32>
      %216 = vector.broadcast %215 : vector<16x1xf32> to vector<16x32xf32>
      %217 = arith.mulf %212, %216 : vector<16x32xf32>
      %218 = vector.broadcast %198 : vector<1x32xf32> to vector<16x32xf32>
      %219 = arith.mulf %217, %218 : vector<16x32xf32>
      %220 = vector.broadcast %199 : vector<1x32xf32> to vector<16x32xf32>
      %221 = arith.addf %219, %220 : vector<16x32xf32>
      %c0_100 = arith.constant 0 : index
      %c0_101 = arith.constant 0 : index
      %222 = vector.load %arg20[%c0_100, %c0_101] : memref<32x32xf32, #tpu.memory_space<vmem>>, vector<32x32xf32>
      %cst_102 = arith.constant dense<0.000000e+00> : vector<16x32xf32>
      %223 = tpu.matmul %221, %222, %cst_102 {dimension_numbers = #tpu.dot_dimension_numbers<[1], [0], [0], [1], [0, 0, 1, 1], [], []>} : vector<16x32xf32>, vector<32x32xf32>, vector<16x32xf32> -> vector<16x32xf32>
      %c0_103 = arith.constant 0 : index
      %c0_104 = arith.constant 0 : index
      %224 = vector.load %arg21[%c0_103, %c0_104] : memref<16x32xf32, #tpu.memory_space<vmem>>, vector<16x32xf32>
      tpu.vector_store %arg21[%c0_103, %c0_104], %223 {strides = array<i32>} : memref<16x32xf32, #tpu.memory_space<vmem>>, vector<16x32xf32>,
    } else {
    }
    return
  }
  func.func @transform_0(%arg0: i32) -> (i32, i32, i32) {
    %c0_i32 = arith.constant 0 : i32
    %c0_i32_0 = arith.constant 0 : i32
    %c0_i32_1 = arith.constant 0 : i32
    %c0_i32_2 = arith.constant 0 : i32
    return %c0_i32, %c0_i32_0, %c0_i32_1 : i32, i32, i32
  }
  func.func @transform_1(%arg0: i32) -> (i32, i32) {
    %c0_i32 = arith.constant 0 : i32
    %c0_i32_0 = arith.constant 0 : i32
    %c0_i32_1 = arith.constant 0 : i32
    return %c0_i32, %c0_i32_0 : i32, i32
  }
  func.func @transform_2(%arg0: i32) -> (i32, i32) {
    %c0_i32 = arith.constant 0 : i32
    %c0_i32_0 = arith.constant 0 : i32
    %c0_i32_1 = arith.constant 0 : i32
    return %c0_i32, %c0_i32_0 : i32, i32
  }
  func.func @transform_3(%arg0: i32) -> (i32, i32) {
    %c0_i32 = arith.constant 0 : i32
    %c0_i32_0 = arith.constant 0 : i32
    %c0_i32_1 = arith.constant 0 : i32
    return %c0_i32, %c0_i32_0 : i32, i32
  }
  func.func @transform_4(%arg0: i32) -> (i32, i32, i32) {
    %c0_i32 = arith.constant 0 : i32
    %c0_i32_0 = arith.constant 0 : i32
    %c0_i32_1 = arith.constant 0 : i32
    return %arg0, %c0_i32, %c0_i32_0 : i32, i32, i32
  }
  func.func @transform_5(%arg0: i32) -> (i32, i32, i32) {
    %c0_i32 = arith.constant 0 : i32
    %c0_i32_0 = arith.constant 0 : i32
    %c0_i32_1 = arith.constant 0 : i32
    return %arg0, %c0_i32, %c0_i32_0 : i32, i32, i32
  }
  func.func @transform_6(%arg0: i32) -> (i32, i32, i32) {
    %c0_i32 = arith.constant 0 : i32
    %c0_i32_0 = arith.constant 0 : i32
    %c0_i32_1 = arith.constant 0 : i32
    return %arg0, %c0_i32, %c0_i32_0 : i32, i32, i32
  }
  func.func @transform_7(%arg0: i32) -> (i32, i32, i32) {
    %c0_i32 = arith.constant 0 : i32
    %c0_i32_0 = arith.constant 0 : i32
    %c0_i32_1 = arith.constant 0 : i32
    return %arg0, %c0_i32, %c0_i32_0 : i32, i32, i32
  }
  func.func @transform_8(%arg0: i32) -> (i32, i32, i32) {
    %c0_i32 = arith.constant 0 : i32
    %c0_i32_0 = arith.constant 0 : i32
    %c0_i32_1 = arith.constant 0 : i32
    return %arg0, %c0_i32, %c0_i32_0 : i32, i32, i32
  }
  func.func @transform_9(%arg0: i32) -> (i32, i32, i32) {
    %c0_i32 = arith.constant 0 : i32
    %c0_i32_0 = arith.constant 0 : i32
    %c0_i32_1 = arith.constant 0 : i32
    return %arg0, %c0_i32, %c0_i32_0 : i32, i32, i32
  }
  func.func @transform_10(%arg0: i32) -> (i32, i32, i32) {
    %c0_i32 = arith.constant 0 : i32
    %c0_i32_0 = arith.constant 0 : i32
    %c0_i32_1 = arith.constant 0 : i32
    return %arg0, %c0_i32, %c0_i32_0 : i32, i32, i32
  }
  func.func @transform_11(%arg0: i32) -> (i32, i32, i32) {
    %c0_i32 = arith.constant 0 : i32
    %c0_i32_0 = arith.constant 0 : i32
    %c0_i32_1 = arith.constant 0 : i32
    return %arg0, %c0_i32, %c0_i32_0 : i32, i32, i32
  }
  func.func @transform_12(%arg0: i32) -> (i32, i32, i32) {
    %c0_i32 = arith.constant 0 : i32
    %c0_i32_0 = arith.constant 0 : i32
    %c0_i32_1 = arith.constant 0 : i32
    return %arg0, %c0_i32, %c0_i32_0 : i32, i32, i32
  }
  func.func @transform_13(%arg0: i32) -> (i32, i32, i32) {
    %c0_i32 = arith.constant 0 : i32
    %c0_i32_0 = arith.constant 0 : i32
    %c0_i32_1 = arith.constant 0 : i32
    return %arg0, %c0_i32, %c0_i32_0 : i32, i32, i32
  }
  func.func @transform_14(%arg0: i32) -> (i32, i32, i32) {
    %c0_i32 = arith.constant 0 : i32
    %c0_i32_0 = arith.constant 0 : i32
    %c0_i32_1 = arith.constant 0 : i32
    return %arg0, %c0_i32, %c0_i32_0 : i32, i32, i32
  }
  func.func @transform_15(%arg0: i32) -> (i32, i32, i32) {
    %c0_i32 = arith.constant 0 : i32
    %c0_i32_0 = arith.constant 0 : i32
    %c0_i32_1 = arith.constant 0 : i32
    return %arg0, %c0_i32, %c0_i32_0 : i32, i32, i32
  }
  func.func @transform_16(%arg0: i32) -> (i32, i32, i32) {
    %c0_i32 = arith.constant 0 : i32
    %c0_i32_0 = arith.constant 0 : i32
    %c0_i32_1 = arith.constant 0 : i32
    return %arg0, %c0_i32, %c0_i32_0 : i32, i32, i32
  }
  func.func @transform_17(%arg0: i32) -> (i32, i32) {
    %c0_i32 = arith.constant 0 : i32
    %c0_i32_0 = arith.constant 0 : i32
    %c0_i32_1 = arith.constant 0 : i32
    return %c0_i32, %c0_i32_0 : i32, i32
  }
  func.func @transform_18(%arg0: i32) -> (i32, i32) {
    %c0_i32 = arith.constant 0 : i32
    %c0_i32_0 = arith.constant 0 : i32
    %c0_i32_1 = arith.constant 0 : i32
    return %c0_i32, %c0_i32_0 : i32, i32
  }
  func.func @transform_19(%arg0: i32) -> (i32, i32) {
    %c0_i32 = arith.constant 0 : i32
    %c0_i32_0 = arith.constant 0 : i32
    %c0_i32_1 = arith.constant 0 : i32
    return %c0_i32, %c0_i32_0 : i32, i32
  }
  func.func @transform_20(%arg0: i32) -> (i32, i32) {
    %c0_i32 = arith.constant 0 : i32
    %c0_i32_0 = arith.constant 0 : i32
    %c0_i32_1 = arith.constant 0 : i32
    return %c0_i32, %c0_i32_0 : i32, i32
  }
  func.func @transform_21(%arg0: i32) -> (i32, i32, i32) {
    %c0_i32 = arith.constant 0 : i32
    %c0_i32_0 = arith.constant 0 : i32
    %c0_i32_1 = arith.constant 0 : i32
    %c0_i32_2 = arith.constant 0 : i32
    return %c0_i32, %c0_i32_0, %c0_i32_1 : i32, i32, i32
  }
  func.func @transform_22(%arg0: i32) -> (i32, i32, i32) {
    %c0_i32 = arith.constant 0 : i32
    %c0_i32_0 = arith.constant 0 : i32
    %c0_i32_1 = arith.constant 0 : i32
    %c0_i32_2 = arith.constant 0 : i32
    return %c0_i32, %c0_i32_0, %c0_i32_1 : i32, i32, i32
  }
}

module attributes {stable_mosaic.version = 11 : i64} {
  func.func @kernel(%arg0: i32, %arg1: memref<16x32xf32, #tpu.memory_space<vmem>>, %arg2: memref<1x1x32xf32, #tpu.memory_space<vmem>>, %arg3: memref<1x1x32xf32, #tpu.memory_space<vmem>>, %arg4: memref<1x32x32xf32, #tpu.memory_space<vmem>>, %arg5: memref<1x32x32xf32, #tpu.memory_space<vmem>>, %arg6: memref<1x32x32xf32, #tpu.memory_space<vmem>>, %arg7: memref<1x32x32xf32, #tpu.memory_space<vmem>>, %arg8: memref<1x1x32xf32, #tpu.memory_space<vmem>>, %arg9: memref<1x1x32xf32, #tpu.memory_space<vmem>>, %arg10: memref<1x1x32xf32, #tpu.memory_space<vmem>>, %arg11: memref<1x32x128xf32, #tpu.memory_space<vmem>>, %arg12: memref<1x1x128xf32, #tpu.memory_space<vmem>>, %arg13: memref<1x128x32xf32, #tpu.memory_space<vmem>>, %arg14: memref<1x1x32xf32, #tpu.memory_space<vmem>>, %arg15: memref<1x32xf32, #tpu.memory_space<vmem>>, %arg16: memref<1x32xf32, #tpu.memory_space<vmem>>, %arg17: memref<32x128xf32, #tpu.memory_space<vmem>>, %arg18: memref<1x128xf32, #tpu.memory_space<vmem>>, %arg19: memref<2x1x128xf32, #tpu.memory_space<vmem>>, %arg20: memref<2x1x128xf32, #tpu.memory_space<vmem>>, %arg21: memref<2x8x128xf32, #tpu.memory_space<vmem>>, %arg22: memref<16x32xf32, #tpu.memory_space<vmem>>) attributes {dimension_semantics = [#tpu.dimension_semantics<arbitrary>], iteration_bounds = array<i64: 2>, scalar_prefetch = 0 : i64, scratch_operands = 1 : i64, tpu.core_type = #tpu.core_type<tc>, window_params = [{pipeline_mode = #tpu.pipeline_mode<synchronous>, transform_indices = @transform_0, window_bounds = array<i64: 16, 32>}, {transform_indices = @transform_1, window_bounds = array<i64: 1, 1, 32>}, {transform_indices = @transform_2, window_bounds = array<i64: 1, 1, 32>}, {transform_indices = @transform_3, window_bounds = array<i64: 1, 32, 32>}, {transform_indices = @transform_4, window_bounds = array<i64: 1, 32, 32>}, {transform_indices = @transform_5, window_bounds = array<i64: 1, 32, 32>}, {transform_indices = @transform_6, window_bounds = array<i64: 1, 32, 32>}, {transform_indices = @transform_7, window_bounds = array<i64: 1, 1, 32>}, {transform_indices = @transform_8, window_bounds = array<i64: 1, 1, 32>}, {transform_indices = @transform_9, window_bounds = array<i64: 1, 1, 32>}, {transform_indices = @transform_10, window_bounds = array<i64: 1, 32, 128>}, {transform_indices = @transform_11, window_bounds = array<i64: 1, 1, 128>}, {transform_indices = @transform_12, window_bounds = array<i64: 1, 128, 32>}, {transform_indices = @transform_13, window_bounds = array<i64: 1, 1, 32>}, {pipeline_mode = #tpu.pipeline_mode<synchronous>, transform_indices = @transform_14, window_bounds = array<i64: 1, 32>}, {pipeline_mode = #tpu.pipeline_mode<synchronous>, transform_indices = @transform_15, window_bounds = array<i64: 1, 32>}, {pipeline_mode = #tpu.pipeline_mode<synchronous>, transform_indices = @transform_16, window_bounds = array<i64: 32, 128>}, {pipeline_mode = #tpu.pipeline_mode<synchronous>, transform_indices = @transform_17, window_bounds = array<i64: 1, 128>}, {pipeline_mode = #tpu.pipeline_mode<synchronous>, transform_indices = @transform_18, window_bounds = array<i64: 2, 1, 128>}, {pipeline_mode = #tpu.pipeline_mode<synchronous>, transform_indices = @transform_19, window_bounds = array<i64: 2, 1, 128>}, {pipeline_mode = #tpu.pipeline_mode<synchronous>, transform_indices = @transform_20, window_bounds = array<i64: 2, 8, 128>}]} {
    %c0_i32 = arith.constant 0 : i32
    %0 = arith.cmpi eq, %arg0, %c0_i32 : i32
    %1 = arith.extui %0 : i1 to i32
    %c0_i32_0 = arith.constant 0 : i32
    %2 = arith.cmpi ne, %1, %c0_i32_0 : i32
    scf.if %2 {
      %c0_91 = arith.constant 0 : index
      %c0_92 = arith.constant 0 : index
      %198 = vector.load %arg1[%c0_91, %c0_92] : memref<16x32xf32, #tpu.memory_space<vmem>>, vector<16x32xf32>
      %c0_93 = arith.constant 0 : index
      %c0_94 = arith.constant 0 : index
      %199 = vector.load %arg22[%c0_93, %c0_94] : memref<16x32xf32, #tpu.memory_space<vmem>>, vector<16x32xf32>
      tpu.vector_store %arg22[%c0_93, %c0_94], %198 {strides = array<i32>} : memref<16x32xf32, #tpu.memory_space<vmem>>, vector<16x32xf32>,
    } else {
    }
    %c0 = arith.constant 0 : index
    %c0_1 = arith.constant 0 : index
    %3 = vector.load %arg22[%c0, %c0_1] : memref<16x32xf32, #tpu.memory_space<vmem>>, vector<16x32xf32>
    %c0_2 = arith.constant 0 : index
    %c0_3 = arith.constant 0 : index
    %c0_4 = arith.constant 0 : index
    %4 = vector.load %arg2[%c0_2, %c0_3, %c0_4] : memref<1x1x32xf32, #tpu.memory_space<vmem>>, vector<1x1x32xf32>
    %5 = vector.shape_cast %4 : vector<1x1x32xf32> to vector<1x32xf32>
    %c0_5 = arith.constant 0 : index
    %c0_6 = arith.constant 0 : index
    %c0_7 = arith.constant 0 : index
    %6 = vector.load %arg3[%c0_5, %c0_6, %c0_7] : memref<1x1x32xf32, #tpu.memory_space<vmem>>, vector<1x1x32xf32>
    %7 = vector.shape_cast %6 : vector<1x1x32xf32> to vector<1x32xf32>
    %c0_8 = arith.constant 0 : index
    %c0_9 = arith.constant 0 : index
    %c0_10 = arith.constant 0 : index
    %8 = vector.load %arg4[%c0_8, %c0_9, %c0_10] : memref<1x32x32xf32, #tpu.memory_space<vmem>>, vector<1x32x32xf32>
    %9 = vector.shape_cast %8 : vector<1x32x32xf32> to vector<32x32xf32>
    %c0_11 = arith.constant 0 : index
    %c0_12 = arith.constant 0 : index
    %c0_13 = arith.constant 0 : index
    %10 = vector.load %arg5[%c0_11, %c0_12, %c0_13] : memref<1x32x32xf32, #tpu.memory_space<vmem>>, vector<1x32x32xf32>
    %11 = vector.shape_cast %10 : vector<1x32x32xf32> to vector<32x32xf32>
    %c0_14 = arith.constant 0 : index
    %c0_15 = arith.constant 0 : index
    %c0_16 = arith.constant 0 : index
    %12 = vector.load %arg6[%c0_14, %c0_15, %c0_16] : memref<1x32x32xf32, #tpu.memory_space<vmem>>, vector<1x32x32xf32>
    %13 = vector.shape_cast %12 : vector<1x32x32xf32> to vector<32x32xf32>
    %c0_17 = arith.constant 0 : index
    %c0_18 = arith.constant 0 : index
    %c0_19 = arith.constant 0 : index
    %14 = vector.load %arg7[%c0_17, %c0_18, %c0_19] : memref<1x32x32xf32, #tpu.memory_space<vmem>>, vector<1x32x32xf32>
    %15 = vector.shape_cast %14 : vector<1x32x32xf32> to vector<32x32xf32>
    %c0_20 = arith.constant 0 : index
    %c0_21 = arith.constant 0 : index
    %c0_22 = arith.constant 0 : index
    %16 = vector.load %arg8[%c0_20, %c0_21, %c0_22] : memref<1x1x32xf32, #tpu.memory_space<vmem>>, vector<1x1x32xf32>
    %17 = vector.shape_cast %16 : vector<1x1x32xf32> to vector<1x32xf32>
    %c0_23 = arith.constant 0 : index
    %c0_24 = arith.constant 0 : index
    %c0_25 = arith.constant 0 : index
    %18 = vector.load %arg9[%c0_23, %c0_24, %c0_25] : memref<1x1x32xf32, #tpu.memory_space<vmem>>, vector<1x1x32xf32>
    %19 = vector.shape_cast %18 : vector<1x1x32xf32> to vector<1x32xf32>
    %c0_26 = arith.constant 0 : index
    %c0_27 = arith.constant 0 : index
    %c0_28 = arith.constant 0 : index
    %20 = vector.load %arg10[%c0_26, %c0_27, %c0_28] : memref<1x1x32xf32, #tpu.memory_space<vmem>>, vector<1x1x32xf32>
    %21 = vector.shape_cast %20 : vector<1x1x32xf32> to vector<1x32xf32>
    %c0_29 = arith.constant 0 : index
    %c0_30 = arith.constant 0 : index
    %c0_31 = arith.constant 0 : index
    %22 = vector.load %arg11[%c0_29, %c0_30, %c0_31] : memref<1x32x128xf32, #tpu.memory_space<vmem>>, vector<1x32x128xf32>
    %23 = vector.shape_cast %22 : vector<1x32x128xf32> to vector<32x128xf32>
    %c0_32 = arith.constant 0 : index
    %c0_33 = arith.constant 0 : index
    %c0_34 = arith.constant 0 : index
    %24 = vector.load %arg12[%c0_32, %c0_33, %c0_34] : memref<1x1x128xf32, #tpu.memory_space<vmem>>, vector<1x1x128xf32>
    %25 = vector.shape_cast %24 : vector<1x1x128xf32> to vector<1x128xf32>
    %c0_35 = arith.constant 0 : index
    %c0_36 = arith.constant 0 : index
    %c0_37 = arith.constant 0 : index
    %26 = vector.load %arg13[%c0_35, %c0_36, %c0_37] : memref<1x128x32xf32, #tpu.memory_space<vmem>>, vector<1x128x32xf32>
    %27 = vector.shape_cast %26 : vector<1x128x32xf32> to vector<128x32xf32>
    %c0_38 = arith.constant 0 : index
    %c0_39 = arith.constant 0 : index
    %c0_40 = arith.constant 0 : index
    %28 = vector.load %arg14[%c0_38, %c0_39, %c0_40] : memref<1x1x32xf32, #tpu.memory_space<vmem>>, vector<1x1x32xf32>
    %29 = vector.shape_cast %28 : vector<1x1x32xf32> to vector<1x32xf32>
    %cst = arith.constant dense<0.000000e+00> : vector<16xf32>
    %30 = vector.multi_reduction <add>, %3, %cst [1] : vector<16x32xf32> to vector<16xf32>
    %31 = vector.shape_cast %30 : vector<16xf32> to vector<16x1xf32>
    %cst_41 = arith.constant 3.200000e+01 : f32
    %32 = vector.broadcast %cst_41 : f32 to vector<16x1xf32>
    %33 = arith.divf %31, %32 : vector<16x1xf32>
    %34 = vector.broadcast %33 : vector<16x1xf32> to vector<16x32xf32>
    %35 = arith.subf %3, %34 : vector<16x32xf32>
    %36 = arith.mulf %35, %35 : vector<16x32xf32>
    %cst_42 = arith.constant dense<0.000000e+00> : vector<16xf32>
    %37 = vector.multi_reduction <add>, %36, %cst_42 [1] : vector<16x32xf32> to vector<16xf32>
    %38 = vector.shape_cast %37 : vector<16xf32> to vector<16x1xf32>
    %cst_43 = arith.constant 3.200000e+01 : f32
    %39 = vector.broadcast %cst_43 : f32 to vector<16x1xf32>
    %40 = arith.divf %38, %39 : vector<16x1xf32>
    %41 = vector.broadcast %33 : vector<16x1xf32> to vector<16x32xf32>
    %42 = arith.subf %3, %41 : vector<16x32xf32>
    %cst_44 = arith.constant 9.99999974E-6 : f32
    %43 = vector.broadcast %cst_44 : f32 to vector<16x1xf32>
    %44 = arith.addf %40, %43 : vector<16x1xf32>
    %45 = math.rsqrt %44 : vector<16x1xf32>
    %46 = vector.broadcast %45 : vector<16x1xf32> to vector<16x32xf32>
    %47 = arith.mulf %42, %46 : vector<16x32xf32>
    %48 = vector.broadcast %5 : vector<1x32xf32> to vector<16x32xf32>
    %49 = arith.mulf %47, %48 : vector<16x32xf32>
    %50 = vector.broadcast %7 : vector<1x32xf32> to vector<16x32xf32>
    %51 = arith.addf %49, %50 : vector<16x32xf32>
    %cst_45 = arith.constant dense<0.000000e+00> : vector<16x32xf32>
    %52 = tpu.matmul %51, %9, %cst_45 {dimension_numbers = #tpu.dot_dimension_numbers<[1], [0], [0], [1], [0, 0, 1, 1], [], []>} : vector<16x32xf32>, vector<32x32xf32>, vector<16x32xf32> -> vector<16x32xf32>
    %cst_46 = arith.constant 0.353553385 : f32
    %53 = vector.broadcast %cst_46 : f32 to vector<16x32xf32>
    %54 = arith.mulf %52, %53 : vector<16x32xf32>
    %cst_47 = arith.constant dense<0.000000e+00> : vector<16x32xf32>
    %55 = tpu.matmul %51, %11, %cst_47 {dimension_numbers = #tpu.dot_dimension_numbers<[1], [0], [0], [1], [0, 0, 1, 1], [], []>} : vector<16x32xf32>, vector<32x32xf32>, vector<16x32xf32> -> vector<16x32xf32>
    %cst_48 = arith.constant dense<0.000000e+00> : vector<16x32xf32>
    %56 = tpu.matmul %51, %13, %cst_48 {dimension_numbers = #tpu.dot_dimension_numbers<[1], [0], [0], [1], [0, 0, 1, 1], [], []>} : vector<16x32xf32>, vector<32x32xf32>, vector<16x32xf32> -> vector<16x32xf32>
    %57 = vector.shape_cast %54 : vector<16x32xf32> to vector<2x8x32xf32>
    %58 = vector.shape_cast %55 : vector<16x32xf32> to vector<2x8x32xf32>
    %59 = vector.shape_cast %56 : vector<16x32xf32> to vector<2x8x32xf32>
    %60 = vector.extract_strided_slice %57 {offsets = [0, 0, 0], sizes = [2, 8, 8], strides = [1, 1, 1]} : vector<2x8x32xf32> to vector<2x8x8xf32>
    %61 = vector.extract_strided_slice %58 {offsets = [0, 0, 0], sizes = [2, 8, 8], strides = [1, 1, 1]} : vector<2x8x32xf32> to vector<2x8x8xf32>
    %62 = vector.extract_strided_slice %59 {offsets = [0, 0, 0], sizes = [2, 8, 8], strides = [1, 1, 1]} : vector<2x8x32xf32> to vector<2x8x8xf32>
    %cst_49 = arith.constant dense<0.000000e+00> : vector<2x8x8xf32>
    %63 = tpu.matmul %60, %61, %cst_49 {dimension_numbers = #tpu.dot_dimension_numbers<[2], [2], [1], [1], [0, 0, 0, 1, 1, 1], [0], [0]>} : vector<2x8x8xf32>, vector<2x8x8xf32>, vector<2x8x8xf32> -> vector<2x8x8xf32>
    %cst_50 = arith.constant dense<0xFF800000> : vector<2x8xf32>
    %64 = vector.multi_reduction <maximumf>, %63, %cst_50 [2] : vector<2x8x8xf32> to vector<2x8xf32>
    %65 = vector.shape_cast %64 : vector<2x8xf32> to vector<2x8x1xf32>
    %66 = vector.broadcast %65 : vector<2x8x1xf32> to vector<2x8x8xf32>
    %67 = arith.subf %63, %66 : vector<2x8x8xf32>
    %68 = math.exp %67 : vector<2x8x8xf32>
    %cst_51 = arith.constant dense<0.000000e+00> : vector<2x8xf32>
    %69 = vector.multi_reduction <add>, %68, %cst_51 [2] : vector<2x8x8xf32> to vector<2x8xf32>
    %70 = vector.shape_cast %69 : vector<2x8xf32> to vector<2x8x1xf32>
    %71 = vector.broadcast %70 : vector<2x8x1xf32> to vector<2x8x8xf32>
    %72 = arith.divf %68, %71 : vector<2x8x8xf32>
    %cst_52 = arith.constant dense<0.000000e+00> : vector<2x8x8xf32>
    %73 = tpu.matmul %72, %62, %cst_52 {dimension_numbers = #tpu.dot_dimension_numbers<[2], [1], [1], [2], [0, 0, 0, 1, 1, 2], [0], [0]>} : vector<2x8x8xf32>, vector<2x8x8xf32>, vector<2x8x8xf32> -> vector<2x8x8xf32>
    %74 = vector.shape_cast %73 : vector<2x8x8xf32> to vector<16x8xf32>
    %75 = vector.extract_strided_slice %57 {offsets = [0, 0, 8], sizes = [2, 8, 8], strides = [1, 1, 1]} : vector<2x8x32xf32> to vector<2x8x8xf32>
    %76 = vector.extract_strided_slice %58 {offsets = [0, 0, 8], sizes = [2, 8, 8], strides = [1, 1, 1]} : vector<2x8x32xf32> to vector<2x8x8xf32>
    %77 = vector.extract_strided_slice %59 {offsets = [0, 0, 8], sizes = [2, 8, 8], strides = [1, 1, 1]} : vector<2x8x32xf32> to vector<2x8x8xf32>
    %cst_53 = arith.constant dense<0.000000e+00> : vector<2x8x8xf32>
    %78 = tpu.matmul %75, %76, %cst_53 {dimension_numbers = #tpu.dot_dimension_numbers<[2], [2], [1], [1], [0, 0, 0, 1, 1, 1], [0], [0]>} : vector<2x8x8xf32>, vector<2x8x8xf32>, vector<2x8x8xf32> -> vector<2x8x8xf32>
    %cst_54 = arith.constant dense<0xFF800000> : vector<2x8xf32>
    %79 = vector.multi_reduction <maximumf>, %78, %cst_54 [2] : vector<2x8x8xf32> to vector<2x8xf32>
    %80 = vector.shape_cast %79 : vector<2x8xf32> to vector<2x8x1xf32>
    %81 = vector.broadcast %80 : vector<2x8x1xf32> to vector<2x8x8xf32>
    %82 = arith.subf %78, %81 : vector<2x8x8xf32>
    %83 = math.exp %82 : vector<2x8x8xf32>
    %cst_55 = arith.constant dense<0.000000e+00> : vector<2x8xf32>
    %84 = vector.multi_reduction <add>, %83, %cst_55 [2] : vector<2x8x8xf32> to vector<2x8xf32>
    %85 = vector.shape_cast %84 : vector<2x8xf32> to vector<2x8x1xf32>
    %86 = vector.broadcast %85 : vector<2x8x1xf32> to vector<2x8x8xf32>
    %87 = arith.divf %83, %86 : vector<2x8x8xf32>
    %cst_56 = arith.constant dense<0.000000e+00> : vector<2x8x8xf32>
    %88 = tpu.matmul %87, %77, %cst_56 {dimension_numbers = #tpu.dot_dimension_numbers<[2], [1], [1], [2], [0, 0, 0, 1, 1, 2], [0], [0]>} : vector<2x8x8xf32>, vector<2x8x8xf32>, vector<2x8x8xf32> -> vector<2x8x8xf32>
    %89 = vector.shape_cast %88 : vector<2x8x8xf32> to vector<16x8xf32>
    %90 = vector.extract_strided_slice %57 {offsets = [0, 0, 16], sizes = [2, 8, 8], strides = [1, 1, 1]} : vector<2x8x32xf32> to vector<2x8x8xf32>
    %91 = vector.extract_strided_slice %58 {offsets = [0, 0, 16], sizes = [2, 8, 8], strides = [1, 1, 1]} : vector<2x8x32xf32> to vector<2x8x8xf32>
    %92 = vector.extract_strided_slice %59 {offsets = [0, 0, 16], sizes = [2, 8, 8], strides = [1, 1, 1]} : vector<2x8x32xf32> to vector<2x8x8xf32>
    %cst_57 = arith.constant dense<0.000000e+00> : vector<2x8x8xf32>
    %93 = tpu.matmul %90, %91, %cst_57 {dimension_numbers = #tpu.dot_dimension_numbers<[2], [2], [1], [1], [0, 0, 0, 1, 1, 1], [0], [0]>} : vector<2x8x8xf32>, vector<2x8x8xf32>, vector<2x8x8xf32> -> vector<2x8x8xf32>
    %cst_58 = arith.constant dense<0xFF800000> : vector<2x8xf32>
    %94 = vector.multi_reduction <maximumf>, %93, %cst_58 [2] : vector<2x8x8xf32> to vector<2x8xf32>
    %95 = vector.shape_cast %94 : vector<2x8xf32> to vector<2x8x1xf32>
    %96 = vector.broadcast %95 : vector<2x8x1xf32> to vector<2x8x8xf32>
    %97 = arith.subf %93, %96 : vector<2x8x8xf32>
    %98 = math.exp %97 : vector<2x8x8xf32>
    %cst_59 = arith.constant dense<0.000000e+00> : vector<2x8xf32>
    %99 = vector.multi_reduction <add>, %98, %cst_59 [2] : vector<2x8x8xf32> to vector<2x8xf32>
    %100 = vector.shape_cast %99 : vector<2x8xf32> to vector<2x8x1xf32>
    %101 = vector.broadcast %100 : vector<2x8x1xf32> to vector<2x8x8xf32>
    %102 = arith.divf %98, %101 : vector<2x8x8xf32>
    %cst_60 = arith.constant dense<0.000000e+00> : vector<2x8x8xf32>
    %103 = tpu.matmul %102, %92, %cst_60 {dimension_numbers = #tpu.dot_dimension_numbers<[2], [1], [1], [2], [0, 0, 0, 1, 1, 2], [0], [0]>} : vector<2x8x8xf32>, vector<2x8x8xf32>, vector<2x8x8xf32> -> vector<2x8x8xf32>
    %104 = vector.shape_cast %103 : vector<2x8x8xf32> to vector<16x8xf32>
    %105 = vector.extract_strided_slice %57 {offsets = [0, 0, 24], sizes = [2, 8, 8], strides = [1, 1, 1]} : vector<2x8x32xf32> to vector<2x8x8xf32>
    %106 = vector.extract_strided_slice %58 {offsets = [0, 0, 24], sizes = [2, 8, 8], strides = [1, 1, 1]} : vector<2x8x32xf32> to vector<2x8x8xf32>
    %107 = vector.extract_strided_slice %59 {offsets = [0, 0, 24], sizes = [2, 8, 8], strides = [1, 1, 1]} : vector<2x8x32xf32> to vector<2x8x8xf32>
    %cst_61 = arith.constant dense<0.000000e+00> : vector<2x8x8xf32>
    %108 = tpu.matmul %105, %106, %cst_61 {dimension_numbers = #tpu.dot_dimension_numbers<[2], [2], [1], [1], [0, 0, 0, 1, 1, 1], [0], [0]>} : vector<2x8x8xf32>, vector<2x8x8xf32>, vector<2x8x8xf32> -> vector<2x8x8xf32>
    %cst_62 = arith.constant dense<0xFF800000> : vector<2x8xf32>
    %109 = vector.multi_reduction <maximumf>, %108, %cst_62 [2] : vector<2x8x8xf32> to vector<2x8xf32>
    %110 = vector.shape_cast %109 : vector<2x8xf32> to vector<2x8x1xf32>
    %111 = vector.broadcast %110 : vector<2x8x1xf32> to vector<2x8x8xf32>
    %112 = arith.subf %108, %111 : vector<2x8x8xf32>
    %113 = math.exp %112 : vector<2x8x8xf32>
    %cst_63 = arith.constant dense<0.000000e+00> : vector<2x8xf32>
    %114 = vector.multi_reduction <add>, %113, %cst_63 [2] : vector<2x8x8xf32> to vector<2x8xf32>
    %115 = vector.shape_cast %114 : vector<2x8xf32> to vector<2x8x1xf32>
    %116 = vector.broadcast %115 : vector<2x8x1xf32> to vector<2x8x8xf32>
    %117 = arith.divf %113, %116 : vector<2x8x8xf32>
    %cst_64 = arith.constant dense<0.000000e+00> : vector<2x8x8xf32>
    %118 = tpu.matmul %117, %107, %cst_64 {dimension_numbers = #tpu.dot_dimension_numbers<[2], [1], [1], [2], [0, 0, 0, 1, 1, 2], [0], [0]>} : vector<2x8x8xf32>, vector<2x8x8xf32>, vector<2x8x8xf32> -> vector<2x8x8xf32>
    %119 = vector.shape_cast %118 : vector<2x8x8xf32> to vector<16x8xf32>
    %120 = tpu.concatenate %74, %89, %104, %119 in 1 : vector<16x8xf32>, vector<16x8xf32>, vector<16x8xf32>, vector<16x8xf32> -> vector<16x32xf32>
    %cst_65 = arith.constant dense<0.000000e+00> : vector<16x32xf32>
    %121 = tpu.matmul %120, %15, %cst_65 {dimension_numbers = #tpu.dot_dimension_numbers<[1], [0], [0], [1], [0, 0, 1, 1], [], []>} : vector<16x32xf32>, vector<32x32xf32>, vector<16x32xf32> -> vector<16x32xf32>
    %122 = arith.addf %3, %121 : vector<16x32xf32>
    %123 = vector.broadcast %17 : vector<1x32xf32> to vector<16x32xf32>
    %124 = arith.addf %122, %123 : vector<16x32xf32>
    %cst_66 = arith.constant dense<0.000000e+00> : vector<16xf32>
    %125 = vector.multi_reduction <add>, %124, %cst_66 [1] : vector<16x32xf32> to vector<16xf32>
    %126 = vector.shape_cast %125 : vector<16xf32> to vector<16x1xf32>
    %cst_67 = arith.constant 3.200000e+01 : f32
    %127 = vector.broadcast %cst_67 : f32 to vector<16x1xf32>
    %128 = arith.divf %126, %127 : vector<16x1xf32>
    %129 = vector.broadcast %128 : vector<16x1xf32> to vector<16x32xf32>
    %130 = arith.subf %124, %129 : vector<16x32xf32>
    %131 = arith.mulf %130, %130 : vector<16x32xf32>
    %cst_68 = arith.constant dense<0.000000e+00> : vector<16xf32>
    %132 = vector.multi_reduction <add>, %131, %cst_68 [1] : vector<16x32xf32> to vector<16xf32>
    %133 = vector.shape_cast %132 : vector<16xf32> to vector<16x1xf32>
    %cst_69 = arith.constant 3.200000e+01 : f32
    %134 = vector.broadcast %cst_69 : f32 to vector<16x1xf32>
    %135 = arith.divf %133, %134 : vector<16x1xf32>
    %136 = vector.broadcast %128 : vector<16x1xf32> to vector<16x32xf32>
    %137 = arith.subf %124, %136 : vector<16x32xf32>
    %cst_70 = arith.constant 9.99999974E-6 : f32
    %138 = vector.broadcast %cst_70 : f32 to vector<16x1xf32>
    %139 = arith.addf %135, %138 : vector<16x1xf32>
    %140 = math.rsqrt %139 : vector<16x1xf32>
    %141 = vector.broadcast %140 : vector<16x1xf32> to vector<16x32xf32>
    %142 = arith.mulf %137, %141 : vector<16x32xf32>
    %143 = vector.broadcast %19 : vector<1x32xf32> to vector<16x32xf32>
    %144 = arith.mulf %142, %143 : vector<16x32xf32>
    %145 = vector.broadcast %21 : vector<1x32xf32> to vector<16x32xf32>
    %146 = arith.addf %144, %145 : vector<16x32xf32>
    %cst_71 = arith.constant dense<0.000000e+00> : vector<16x128xf32>
    %147 = tpu.matmul %146, %23, %cst_71 {dimension_numbers = #tpu.dot_dimension_numbers<[1], [0], [0], [1], [0, 0, 1, 1], [], []>} : vector<16x32xf32>, vector<32x128xf32>, vector<16x128xf32> -> vector<16x128xf32>
    %148 = vector.broadcast %25 : vector<1x128xf32> to vector<16x128xf32>
    %149 = arith.addf %147, %148 : vector<16x128xf32>
    %cst_72 = arith.constant 5.000000e-01 : f32
    %150 = vector.broadcast %cst_72 : f32 to vector<16x128xf32>
    %151 = arith.mulf %150, %149 : vector<16x128xf32>
    %cst_73 = arith.constant 0.707106769 : f32
    %152 = vector.broadcast %cst_73 : f32 to vector<16x128xf32>
    %153 = arith.mulf %149, %152 : vector<16x128xf32>
    %154 = math.absf %153 : vector<16x128xf32>
    %cst_74 = arith.constant 0.327591091 : f32
    %155 = vector.broadcast %cst_74 : f32 to vector<16x128xf32>
    %156 = arith.mulf %155, %154 : vector<16x128xf32>
    %cst_75 = arith.constant 1.000000e+00 : f32
    %157 = vector.broadcast %cst_75 : f32 to vector<16x128xf32>
    %158 = arith.addf %157, %156 : vector<16x128xf32>
    %cst_76 = arith.constant 1.000000e+00 : f32
    %159 = vector.broadcast %cst_76 : f32 to vector<16x128xf32>
    %160 = arith.divf %159, %158 : vector<16x128xf32>
    %cst_77 = arith.constant 1.06140542 : f32
    %161 = vector.broadcast %cst_77 : f32 to vector<16x128xf32>
    %162 = arith.mulf %161, %160 : vector<16x128xf32>
    %cst_78 = arith.constant -1.45315206 : f32
    %163 = vector.broadcast %cst_78 : f32 to vector<16x128xf32>
    %164 = arith.addf %162, %163 : vector<16x128xf32>
    %165 = arith.mulf %164, %160 : vector<16x128xf32>
    %cst_79 = arith.constant 1.42141378 : f32
    %166 = vector.broadcast %cst_79 : f32 to vector<16x128xf32>
    %167 = arith.addf %165, %166 : vector<16x128xf32>
    %168 = arith.mulf %167, %160 : vector<16x128xf32>
    %cst_80 = arith.constant -0.284496725 : f32
    %169 = vector.broadcast %cst_80 : f32 to vector<16x128xf32>
    %170 = arith.addf %168, %169 : vector<16x128xf32>
    %171 = arith.mulf %170, %160 : vector<16x128xf32>
    %cst_81 = arith.constant 0.254829586 : f32
    %172 = vector.broadcast %cst_81 : f32 to vector<16x128xf32>
    %173 = arith.addf %171, %172 : vector<16x128xf32>
    %174 = arith.mulf %173, %160 : vector<16x128xf32>
    %cst_82 = arith.constant 0.000000e+00 : f32
    %175 = vector.broadcast %cst_82 : f32 to vector<16x128xf32>
    %176 = arith.subf %175, %154 : vector<16x128xf32>
    %177 = arith.mulf %176, %154 : vector<16x128xf32>
    %178 = math.exp %177 : vector<16x128xf32>
    %179 = arith.mulf %174, %178 : vector<16x128xf32>
    %cst_83 = arith.constant 1.000000e+00 : f32
    %180 = vector.broadcast %cst_83 : f32 to vector<16x128xf32>
    %181 = arith.subf %180, %179 : vector<16x128xf32>
    %cst_84 = arith.constant 0.000000e+00 : f32
    %182 = vector.broadcast %cst_84 : f32 to vector<16x128xf32>
    %183 = arith.cmpf oge, %153, %182 : vector<16x128xf32>
    %cst_85 = arith.constant 0.000000e+00 : f32
    %184 = vector.broadcast %cst_85 : f32 to vector<16x128xf32>
    %185 = arith.subf %184, %181 : vector<16x128xf32>
    %186 = arith.select %183, %181, %185 : vector<16x128xi1>, vector<16x128xf32>
    %cst_86 = arith.constant 1.000000e+00 : f32
    %187 = vector.broadcast %cst_86 : f32 to vector<16x128xf32>
    %188 = arith.addf %187, %186 : vector<16x128xf32>
    %189 = arith.mulf %151, %188 : vector<16x128xf32>
    %cst_87 = arith.constant dense<0.000000e+00> : vector<16x32xf32>
    %190 = tpu.matmul %189, %27, %cst_87 {dimension_numbers = #tpu.dot_dimension_numbers<[1], [0], [0], [1], [0, 0, 1, 1], [], []>} : vector<16x128xf32>, vector<128x32xf32>, vector<16x32xf32> -> vector<16x32xf32>
    %191 = vector.broadcast %29 : vector<1x32xf32> to vector<16x32xf32>
    %192 = arith.addf %190, %191 : vector<16x32xf32>
    %193 = arith.addf %124, %192 : vector<16x32xf32>
    %c0_88 = arith.constant 0 : index
    %c0_89 = arith.constant 0 : index
    %194 = vector.load %arg22[%c0_88, %c0_89] : memref<16x32xf32, #tpu.memory_space<vmem>>, vector<16x32xf32>
    tpu.vector_store %arg22[%c0_88, %c0_89], %193 {strides = array<i32>} : memref<16x32xf32, #tpu.memory_space<vmem>>, vector<16x32xf32>,
    %c1_i32 = arith.constant 1 : i32
    %195 = arith.cmpi eq, %arg0, %c1_i32 : i32
    %196 = arith.extui %195 : i1 to i32
    %c0_i32_90 = arith.constant 0 : i32
    %197 = arith.cmpi ne, %196, %c0_i32_90 : i32
    scf.if %197 {
      %c0_91 = arith.constant 0 : index
      %c0_92 = arith.constant 0 : index
      %198 = vector.load %arg15[%c0_91, %c0_92] : memref<1x32xf32, #tpu.memory_space<vmem>>, vector<1x32xf32>
      %c0_93 = arith.constant 0 : index
      %c0_94 = arith.constant 0 : index
      %199 = vector.load %arg16[%c0_93, %c0_94] : memref<1x32xf32, #tpu.memory_space<vmem>>, vector<1x32xf32>
      %cst_95 = arith.constant dense<0.000000e+00> : vector<16xf32>
      %200 = vector.multi_reduction <add>, %193, %cst_95 [1] : vector<16x32xf32> to vector<16xf32>
      %201 = vector.shape_cast %200 : vector<16xf32> to vector<16x1xf32>
      %cst_96 = arith.constant 3.200000e+01 : f32
      %202 = vector.broadcast %cst_96 : f32 to vector<16x1xf32>
      %203 = arith.divf %201, %202 : vector<16x1xf32>
      %204 = vector.broadcast %203 : vector<16x1xf32> to vector<16x32xf32>
      %205 = arith.subf %193, %204 : vector<16x32xf32>
      %206 = arith.mulf %205, %205 : vector<16x32xf32>
      %cst_97 = arith.constant dense<0.000000e+00> : vector<16xf32>
      %207 = vector.multi_reduction <add>, %206, %cst_97 [1] : vector<16x32xf32> to vector<16xf32>
      %208 = vector.shape_cast %207 : vector<16xf32> to vector<16x1xf32>
      %cst_98 = arith.constant 3.200000e+01 : f32
      %209 = vector.broadcast %cst_98 : f32 to vector<16x1xf32>
      %210 = arith.divf %208, %209 : vector<16x1xf32>
      %211 = vector.broadcast %203 : vector<16x1xf32> to vector<16x32xf32>
      %212 = arith.subf %193, %211 : vector<16x32xf32>
      %cst_99 = arith.constant 9.99999974E-6 : f32
      %213 = vector.broadcast %cst_99 : f32 to vector<16x1xf32>
      %214 = arith.addf %210, %213 : vector<16x1xf32>
      %215 = math.rsqrt %214 : vector<16x1xf32>
      %216 = vector.broadcast %215 : vector<16x1xf32> to vector<16x32xf32>
      %217 = arith.mulf %212, %216 : vector<16x32xf32>
      %218 = vector.broadcast %198 : vector<1x32xf32> to vector<16x32xf32>
      %219 = arith.mulf %217, %218 : vector<16x32xf32>
      %220 = vector.broadcast %199 : vector<1x32xf32> to vector<16x32xf32>
      %221 = arith.addf %219, %220 : vector<16x32xf32>
      %c0_100 = arith.constant 0 : index
      %c0_101 = arith.constant 0 : index
      %222 = vector.load %arg17[%c0_100, %c0_101] : memref<32x128xf32, #tpu.memory_space<vmem>>, vector<32x128xf32>
      %cst_102 = arith.constant dense<0.000000e+00> : vector<16x128xf32>
      %223 = tpu.matmul %221, %222, %cst_102 {dimension_numbers = #tpu.dot_dimension_numbers<[1], [0], [0], [1], [0, 0, 1, 1], [], []>} : vector<16x32xf32>, vector<32x128xf32>, vector<16x128xf32> -> vector<16x128xf32>
      %c0_103 = arith.constant 0 : index
      %c0_104 = arith.constant 0 : index
      %224 = vector.load %arg18[%c0_103, %c0_104] : memref<1x128xf32, #tpu.memory_space<vmem>>, vector<1x128xf32>
      %225 = vector.broadcast %224 : vector<1x128xf32> to vector<16x128xf32>
      %226 = arith.addf %223, %225 : vector<16x128xf32>
      %227 = vector.shape_cast %226 : vector<16x128xf32> to vector<2x8x128xf32>
      %c0_105 = arith.constant 0 : index
      %c0_106 = arith.constant 0 : index
      %c0_107 = arith.constant 0 : index
      %228 = vector.load %arg19[%c0_105, %c0_106, %c0_107] : memref<2x1x128xf32, #tpu.memory_space<vmem>>, vector<2x1x128xf32>
      %229 = vector.broadcast %228 : vector<2x1x128xf32> to vector<2x8x128xf32>
      %230 = arith.mulf %227, %229 : vector<2x8x128xf32>
      %c0_108 = arith.constant 0 : index
      %c0_109 = arith.constant 0 : index
      %c0_110 = arith.constant 0 : index
      %231 = vector.load %arg20[%c0_108, %c0_109, %c0_110] : memref<2x1x128xf32, #tpu.memory_space<vmem>>, vector<2x1x128xf32>
      %232 = vector.broadcast %231 : vector<2x1x128xf32> to vector<2x8x128xf32>
      %233 = arith.addf %230, %232 : vector<2x8x128xf32>
      %c0_111 = arith.constant 0 : index
      %c0_112 = arith.constant 0 : index
      %c0_113 = arith.constant 0 : index
      %234 = vector.load %arg21[%c0_111, %c0_112, %c0_113] : memref<2x8x128xf32, #tpu.memory_space<vmem>>, vector<2x8x128xf32>
      tpu.vector_store %arg21[%c0_111, %c0_112, %c0_113], %233 {strides = array<i32>} : memref<2x8x128xf32, #tpu.memory_space<vmem>>, vector<2x8x128xf32>,
    } else {
    }
    return
  }
  func.func @transform_0(%arg0: i32) -> (i32, i32) {
    %c0_i32 = arith.constant 0 : i32
    %c0_i32_0 = arith.constant 0 : i32
    %c0_i32_1 = arith.constant 0 : i32
    return %c0_i32, %c0_i32_0 : i32, i32
  }
  func.func @transform_1(%arg0: i32) -> (i32, i32, i32) {
    %c0_i32 = arith.constant 0 : i32
    %c0_i32_0 = arith.constant 0 : i32
    %c0_i32_1 = arith.constant 0 : i32
    return %arg0, %c0_i32, %c0_i32_0 : i32, i32, i32
  }
  func.func @transform_2(%arg0: i32) -> (i32, i32, i32) {
    %c0_i32 = arith.constant 0 : i32
    %c0_i32_0 = arith.constant 0 : i32
    %c0_i32_1 = arith.constant 0 : i32
    return %arg0, %c0_i32, %c0_i32_0 : i32, i32, i32
  }
  func.func @transform_3(%arg0: i32) -> (i32, i32, i32) {
    %c0_i32 = arith.constant 0 : i32
    %c0_i32_0 = arith.constant 0 : i32
    %c0_i32_1 = arith.constant 0 : i32
    return %arg0, %c0_i32, %c0_i32_0 : i32, i32, i32
  }
  func.func @transform_4(%arg0: i32) -> (i32, i32, i32) {
    %c0_i32 = arith.constant 0 : i32
    %c0_i32_0 = arith.constant 0 : i32
    %c0_i32_1 = arith.constant 0 : i32
    return %arg0, %c0_i32, %c0_i32_0 : i32, i32, i32
  }
  func.func @transform_5(%arg0: i32) -> (i32, i32, i32) {
    %c0_i32 = arith.constant 0 : i32
    %c0_i32_0 = arith.constant 0 : i32
    %c0_i32_1 = arith.constant 0 : i32
    return %arg0, %c0_i32, %c0_i32_0 : i32, i32, i32
  }
  func.func @transform_6(%arg0: i32) -> (i32, i32, i32) {
    %c0_i32 = arith.constant 0 : i32
    %c0_i32_0 = arith.constant 0 : i32
    %c0_i32_1 = arith.constant 0 : i32
    return %arg0, %c0_i32, %c0_i32_0 : i32, i32, i32
  }
  func.func @transform_7(%arg0: i32) -> (i32, i32, i32) {
    %c0_i32 = arith.constant 0 : i32
    %c0_i32_0 = arith.constant 0 : i32
    %c0_i32_1 = arith.constant 0 : i32
    return %arg0, %c0_i32, %c0_i32_0 : i32, i32, i32
  }
  func.func @transform_8(%arg0: i32) -> (i32, i32, i32) {
    %c0_i32 = arith.constant 0 : i32
    %c0_i32_0 = arith.constant 0 : i32
    %c0_i32_1 = arith.constant 0 : i32
    return %arg0, %c0_i32, %c0_i32_0 : i32, i32, i32
  }
  func.func @transform_9(%arg0: i32) -> (i32, i32, i32) {
    %c0_i32 = arith.constant 0 : i32
    %c0_i32_0 = arith.constant 0 : i32
    %c0_i32_1 = arith.constant 0 : i32
    return %arg0, %c0_i32, %c0_i32_0 : i32, i32, i32
  }
  func.func @transform_10(%arg0: i32) -> (i32, i32, i32) {
    %c0_i32 = arith.constant 0 : i32
    %c0_i32_0 = arith.constant 0 : i32
    %c0_i32_1 = arith.constant 0 : i32
    return %arg0, %c0_i32, %c0_i32_0 : i32, i32, i32
  }
  func.func @transform_11(%arg0: i32) -> (i32, i32, i32) {
    %c0_i32 = arith.constant 0 : i32
    %c0_i32_0 = arith.constant 0 : i32
    %c0_i32_1 = arith.constant 0 : i32
    return %arg0, %c0_i32, %c0_i32_0 : i32, i32, i32
  }
  func.func @transform_12(%arg0: i32) -> (i32, i32, i32) {
    %c0_i32 = arith.constant 0 : i32
    %c0_i32_0 = arith.constant 0 : i32
    %c0_i32_1 = arith.constant 0 : i32
    return %arg0, %c0_i32, %c0_i32_0 : i32, i32, i32
  }
  func.func @transform_13(%arg0: i32) -> (i32, i32, i32) {
    %c0_i32 = arith.constant 0 : i32
    %c0_i32_0 = arith.constant 0 : i32
    %c0_i32_1 = arith.constant 0 : i32
    return %arg0, %c0_i32, %c0_i32_0 : i32, i32, i32
  }
  func.func @transform_14(%arg0: i32) -> (i32, i32) {
    %c0_i32 = arith.constant 0 : i32
    %c0_i32_0 = arith.constant 0 : i32
    %c0_i32_1 = arith.constant 0 : i32
    return %c0_i32, %c0_i32_0 : i32, i32
  }
  func.func @transform_15(%arg0: i32) -> (i32, i32) {
    %c0_i32 = arith.constant 0 : i32
    %c0_i32_0 = arith.constant 0 : i32
    %c0_i32_1 = arith.constant 0 : i32
    return %c0_i32, %c0_i32_0 : i32, i32
  }
  func.func @transform_16(%arg0: i32) -> (i32, i32) {
    %c0_i32 = arith.constant 0 : i32
    %c0_i32_0 = arith.constant 0 : i32
    %c0_i32_1 = arith.constant 0 : i32
    return %c0_i32, %c0_i32_0 : i32, i32
  }
  func.func @transform_17(%arg0: i32) -> (i32, i32) {
    %c0_i32 = arith.constant 0 : i32
    %c0_i32_0 = arith.constant 0 : i32
    %c0_i32_1 = arith.constant 0 : i32
    return %c0_i32, %c0_i32_0 : i32, i32
  }
  func.func @transform_18(%arg0: i32) -> (i32, i32, i32) {
    %c0_i32 = arith.constant 0 : i32
    %c0_i32_0 = arith.constant 0 : i32
    %c0_i32_1 = arith.constant 0 : i32
    %c0_i32_2 = arith.constant 0 : i32
    return %c0_i32, %c0_i32_0, %c0_i32_1 : i32, i32, i32
  }
  func.func @transform_19(%arg0: i32) -> (i32, i32, i32) {
    %c0_i32 = arith.constant 0 : i32
    %c0_i32_0 = arith.constant 0 : i32
    %c0_i32_1 = arith.constant 0 : i32
    %c0_i32_2 = arith.constant 0 : i32
    return %c0_i32, %c0_i32_0, %c0_i32_1 : i32, i32, i32
  }
  func.func @transform_20(%arg0: i32) -> (i32, i32, i32) {
    %c0_i32 = arith.constant 0 : i32
    %c0_i32_0 = arith.constant 0 : i32
    %c0_i32_1 = arith.constant 0 : i32
    %c0_i32_2 = arith.constant 0 : i32
    return %c0_i32, %c0_i32_0, %c0_i32_1 : i32, i32, i32
  }
}

</mosaic_0001>

<llo_original>
// kernel: _lambda_.3
$region0: #{_lambda_.3}
  #allocation0 [shape = 'u32[]', space=smem, size = 0x4, offset = 0x4, fixed_abs, tag = 'smem constant byte address 0x4 - core index']
  #allocation1 [shape = 'u32[144,128]{1,0:T(1,128)}', space=vmem, size = 0x12000, scoped, tag = 'internal scratch']
  #allocation2 [shape = 'f32[16,32]{1,0:T(8,128)}', space=vmem, size = 0x2000, scoped, tag = 'scratch operand']
  %s0 = inlined_call_operand.vmem [shape: f32[16,32], index: 0, kind: input, shape index: {}]
  %s1 = inlined_call_operand.vmem [shape: f32[2,1,32], index: 1, kind: input, shape index: {}, may-alias: {1,8}]
  %s2 = inlined_call_operand.vmem [shape: f32[2,1,32], index: 2, kind: input, shape index: {}, may-alias: {2,7,9,13}]
  %s3 = inlined_call_operand.vmem [shape: f32[2,32,32], index: 3, kind: input, shape index: {}]
  %s4 = inlined_call_operand.vmem [shape: f32[2,32,32], index: 4, kind: input, shape index: {}]
  %s5 = inlined_call_operand.vmem [shape: f32[2,32,32], index: 5, kind: input, shape index: {}]
  %s6 = inlined_call_operand.vmem [shape: f32[2,32,32], index: 6, kind: input, shape index: {}]
  %s7 = inlined_call_operand.vmem [shape: f32[2,1,32], index: 7, kind: input, shape index: {}, may-alias: {2,7,9,13}]
  %s8 = inlined_call_operand.vmem [shape: f32[2,1,32], index: 8, kind: input, shape index: {}, may-alias: {1,8}]
  %s9 = inlined_call_operand.vmem [shape: f32[2,1,32], index: 9, kind: input, shape index: {}, may-alias: {2,7,9,13}]
  %s10 = inlined_call_operand.vmem [shape: f32[2,32,128], index: 10, kind: input, shape index: {}]
  %s11 = inlined_call_operand.vmem [shape: f32[2,1,128], index: 11, kind: input, shape index: {}]
  %s12 = inlined_call_operand.vmem [shape: f32[2,128,32], index: 12, kind: input, shape index: {}]
  %s13 = inlined_call_operand.vmem [shape: f32[2,1,32], index: 13, kind: input, shape index: {}, may-alias: {2,7,9,13}]
  %s14 = inlined_call_operand.vmem [shape: f32[1,32], index: 14, kind: input, shape index: {}]
  %s15 = inlined_call_operand.vmem [shape: f32[1,32], index: 15, kind: input, shape index: {}]
  %s16 = inlined_call_operand.vmem [shape: f32[32,128], index: 16, kind: input, shape index: {}]
  %s17 = inlined_call_operand.vmem [shape: f32[1,128], index: 17, kind: input, shape index: {}]
  %s18 = inlined_call_operand.vmem [shape: f32[2,1,128], index: 18, kind: input, shape index: {}]
  %s19 = inlined_call_operand.vmem [shape: f32[2,1,128], index: 19, kind: input, shape index: {}]
  %s20 = inlined_call_operand.vmem [shape: f32[2,8,128], index: 20, kind: output, shape index: {}]
  %s21 = sld [smem:[#allocation0]]
  $region121: #{_lambda_.3} parent=0
    _
  %s23 = ssub.s32 1, %s21
  %s24 = scalar_select 0, %s23, %s21
  loop: start=0, step=1, limit=4
  $region2: #{_lambda_.3} parent=0 // loop_pre_header
    _
  $region3: #{_lambda_.3} parent=0 // loop_header
    %s26 = sphi 0, %s30
    %p27 = scmp.ge.s32.totalorder %s26, 4
    %s34 = sphi 0, %s34
    %s36 = sphi 0, %s34
    %s37 = sphi 0, %s36
    %s51 = sphi 0, %s37
    %s57 = sphi 0, %s59
    %s60 = sphi 0, %s57
    %s61 = sphi 0, %s60
    %s77 = sphi 0, %s61
    %s83 = sphi 0, %s85
    %s86 = sphi 0, %s83
    %s87 = sphi 0, %s86
    %s103 = sphi 0, %s87
    %s109 = sphi 0, %s111
    %s112 = sphi 0, %s109
    %s113 = sphi 0, %s112
    %s129 = sphi 0, %s113
    %s135 = sphi 0, %s137
    %s138 = sphi 0, %s135
    %s139 = sphi 0, %s138
    %s155 = sphi 0, %s139
    %s161 = sphi 0, %s163
    %s164 = sphi 0, %s161
    %s165 = sphi 0, %s164
    %s181 = sphi 0, %s165
    %s187 = sphi 0, %s189
    %s190 = sphi 0, %s187
    %s191 = sphi 0, %s190
    %s207 = sphi 0, %s191
    %s213 = sphi 0, %s215
    %s216 = sphi 0, %s213
    %s217 = sphi 0, %s216
    %s233 = sphi 0, %s217
    %s239 = sphi 0, %s241
    %s242 = sphi 0, %s239
    %s243 = sphi 0, %s242
    %s259 = sphi 0, %s243
    %s265 = sphi 0, %s267
    %s268 = sphi 0, %s265
    %s269 = sphi 0, %s268
    %s285 = sphi 0, %s269
    %s291 = sphi 0, %s293
    %s294 = sphi 0, %s291
    %s295 = sphi 0, %s294
    %s311 = sphi 0, %s295
    %s317 = sphi 0, %s319
    %s320 = sphi 0, %s317
    %s321 = sphi 0, %s320
    %s337 = sphi 0, %s321
    %s343 = sphi 0, %s345
    %s346 = sphi 0, %s343
    %s347 = sphi 0, %s346
    %s363 = sphi 0, %s347
    %s369 = sphi 0, %s371
    %s372 = sphi 0, %s369
    %s373 = sphi 0, %s372
    %s389 = sphi 0, %s373
    %s393 = sphi 0, %s393
    %s395 = sphi 0, %s393
    %s396 = sphi 0, %s395
    %s410 = sphi 0, %s396
    %s414 = sphi 0, %s414
    %s416 = sphi 0, %s414
    %s417 = sphi 0, %s416
    %s431 = sphi 0, %s417
    %s435 = sphi 0, %s435
    %s437 = sphi 0, %s435
    %s438 = sphi 0, %s437
    %s452 = sphi 0, %s438
    %s456 = sphi 0, %s456
    %s458 = sphi 0, %s456
    %s459 = sphi 0, %s458
    %s473 = sphi 0, %s459
    %s477 = sphi 0, %s477
    %s479 = sphi 0, %s477
    %s480 = sphi 0, %s479
    %s494 = sphi 0, %s480
    %s498 = sphi 0, %s498
    %s500 = sphi 0, %s498
    %s501 = sphi 0, %s500
    %s515 = sphi 0, %s501
    %s519 = sphi 0, %s519
    %s521 = sphi 0, %s519
    %s522 = sphi 0, %s521
    %s536 = sphi 0, %s522
  $region4: #{_lambda_.3} parent=0 // loop_header_branch
    %29 = sbr.rel (%p27) target = $region8
  $region5: #{_lambda_.3} parent=0 // loop_body
    %s31 = ssub.s32 %s26, 1
    %s32 = ssub.s32 %s26, 2
    %s33 = sadd.s32 %s26, 1
    %s35 = sadd.s32 %s34, 1
    %p38 = scmp.eq.s32.totalorder %s26, 1
    %p39 = scmp.ne.s32.totalorder %s34, %s36
    %p40 = scmp.eq.s32.totalorder %s26, 0
    %p41 = por %p39, %p40
    %p42 = scmp.ne.s32.totalorder %s34, %s36
    %p43 = scmp.eq.s32.totalorder %s31, 1
    %p44 = por %p42, %p43
    %p45 = scmp.ne.s32.totalorder %s36, %s37
    %p46 = scmp.eq.s32.totalorder %s31, 0
    %p47 = por %p45, %p46
    %p48 = scmp.ne.s32.totalorder %s36, %s37
    %p49 = scmp.eq.s32.totalorder %s32, 1
    %p50 = por %p48, %p49
    %p52 = scmp.ne.s32.totalorder %s37, %s51
    %p53 = scmp.eq.s32.totalorder %s32, 0
    %p54 = por %p52, %p53
    %s55 = ssub.s32 %s26, %s33
    %p56 = scmp.eq.s32.totalorder %s55, 0
    %s58 = sadd.s32 %s57, 1
    %s59 = scalar_select %p56, %s57, %s58
    %p62 = pneg %p56
    %p63 = scmp.eq.s32.totalorder %s26, 1
    %p64 = por %p62, %p63
    %p65 = scmp.ne.s32.totalorder %s57, %s60
    %p66 = scmp.eq.s32.totalorder %s26, 0
    %p67 = por %p65, %p66
    %p68 = scmp.ne.s32.totalorder %s57, %s60
    %p69 = scmp.eq.s32.totalorder %s31, 1
    %p70 = por %p68, %p69
    %p71 = scmp.ne.s32.totalorder %s60, %s61
    %p72 = scmp.eq.s32.totalorder %s31, 0
    %p73 = por %p71, %p72
    %p74 = scmp.ne.s32.totalorder %s60, %s61
    %p75 = scmp.eq.s32.totalorder %s32, 1
    %p76 = por %p74, %p75
    %p78 = scmp.ne.s32.totalorder %s61, %s77
    %p79 = scmp.eq.s32.totalorder %s32, 0
    %p80 = por %p78, %p79
    %s81 = ssub.s32 %s26, %s33
    %p82 = scmp.eq.s32.totalorder %s81, 0
    %s84 = sadd.s32 %s83, 1
    %s85 = scalar_select %p82, %s83, %s84
    %p88 = pneg %p82
    %p89 = scmp.eq.s32.totalorder %s26, 1
    %p90 = por %p88, %p89
    %p91 = scmp.ne.s32.totalorder %s83, %s86
    %p92 = scmp.eq.s32.totalorder %s26, 0
    %p93 = por %p91, %p92
    %p94 = scmp.ne.s32.totalorder %s83, %s86
    %p95 = scmp.eq.s32.totalorder %s31, 1
    %p96 = por %p94, %p95
    %p97 = scmp.ne.s32.totalorder %s86, %s87
    %p98 = scmp.eq.s32.totalorder %s31, 0
    %p99 = por %p97, %p98
    %p100 = scmp.ne.s32.totalorder %s86, %s87
    %p101 = scmp.eq.s32.totalorder %s32, 1
    %p102 = por %p100, %p101
    %p104 = scmp.ne.s32.totalorder %s87, %s103
    %p105 = scmp.eq.s32.totalorder %s32, 0
    %p106 = por %p104, %p105
    %s107 = ssub.s32 %s26, %s33
    %p108 = scmp.eq.s32.totalorder %s107, 0
    %s110 = sadd.s32 %s109, 1
    %s111 = scalar_select %p108, %s109, %s110
    %p114 = pneg %p108
    %p115 = scmp.eq.s32.totalorder %s26, 1
    %p116 = por %p114, %p115
    %p117 = scmp.ne.s32.totalorder %s109, %s112
    %p118 = scmp.eq.s32.totalorder %s26, 0
    %p119 = por %p117, %p118
    %p120 = scmp.ne.s32.totalorder %s109, %s112
    %p121 = scmp.eq.s32.totalorder %s31, 1
    %p122 = por %p120, %p121
    %p123 = scmp.ne.s32.totalorder %s112, %s113
    %p124 = scmp.eq.s32.totalorder %s31, 0
    %p125 = por %p123, %p124
    %p126 = scmp.ne.s32.totalorder %s112, %s113
    %p127 = scmp.eq.s32.totalorder %s32, 1
    %p128 = por %p126, %p127
    %p130 = scmp.ne.s32.totalorder %s113, %s129
    %p131 = scmp.eq.s32.totalorder %s32, 0
    %p132 = por %p130, %p131
    %s133 = ssub.s32 %s26, %s33
    %p134 = scmp.eq.s32.totalorder %s133, 0
    %s136 = sadd.s32 %s135, 1
    %s137 = scalar_select %p134, %s135, %s136
    %p140 = pneg %p134
    %p141 = scmp.eq.s32.totalorder %s26, 1
    %p142 = por %p140, %p141
    %p143 = scmp.ne.s32.totalorder %s135, %s138
    %p144 = scmp.eq.s32.totalorder %s26, 0
    %p145 = por %p143, %p144
    %p146 = scmp.ne.s32.totalorder %s135, %s138
    %p147 = scmp.eq.s32.totalorder %s31, 1
    %p148 = por %p146, %p147
    %p149 = scmp.ne.s32.totalorder %s138, %s139
    %p150 = scmp.eq.s32.totalorder %s31, 0
    %p151 = por %p149, %p150
    %p152 = scmp.ne.s32.totalorder %s138, %s139
    %p153 = scmp.eq.s32.totalorder %s32, 1
    %p154 = por %p152, %p153
    %p156 = scmp.ne.s32.totalorder %s139, %s155
    %p157 = scmp.eq.s32.totalorder %s32, 0
    %p158 = por %p156, %p157
    %s159 = ssub.s32 %s26, %s33
    %p160 = scmp.eq.s32.totalorder %s159, 0
    %s162 = sadd.s32 %s161, 1
    %s163 = scalar_select %p160, %s161, %s162
    %p166 = pneg %p160
    %p167 = scmp.eq.s32.totalorder %s26, 1
    %p168 = por %p166, %p167
    %p169 = scmp.ne.s32.totalorder %s161, %s164
    %p170 = scmp.eq.s32.totalorder %s26, 0
    %p171 = por %p169, %p170
    %p172 = scmp.ne.s32.totalorder %s161, %s164
    %p173 = scmp.eq.s32.totalorder %s31, 1
    %p174 = por %p172, %p173
    %p175 = scmp.ne.s32.totalorder %s164, %s165
    %p176 = scmp.eq.s32.totalorder %s31, 0
    %p177 = por %p175, %p176
    %p178 = scmp.ne.s32.totalorder %s164, %s165
    %p179 = scmp.eq.s32.totalorder %s32, 1
    %p180 = por %p178, %p179
    %p182 = scmp.ne.s32.totalorder %s165, %s181
    %p183 = scmp.eq.s32.totalorder %s32, 0
    %p184 = por %p182, %p183
    %s185 = ssub.s32 %s26, %s33
    %p186 = scmp.eq.s32.totalorder %s185, 0
    %s188 = sadd.s32 %s187, 1
    %s189 = scalar_select %p186, %s187, %s188
    %p192 = pneg %p186
    %p193 = scmp.eq.s32.totalorder %s26, 1
    %p194 = por %p192, %p193
    %p195 = scmp.ne.s32.totalorder %s187, %s190
    %p196 = scmp.eq.s32.totalorder %s26, 0
    %p197 = por %p195, %p196
    %p198 = scmp.ne.s32.totalorder %s187, %s190
    %p199 = scmp.eq.s32.totalorder %s31, 1
    %p200 = por %p198, %p199
    %p201 = scmp.ne.s32.totalorder %s190, %s191
    %p202 = scmp.eq.s32.totalorder %s31, 0
    %p203 = por %p201, %p202
    %p204 = scmp.ne.s32.totalorder %s190, %s191
    %p205 = scmp.eq.s32.totalorder %s32, 1
    %p206 = por %p204, %p205
    %p208 = scmp.ne.s32.totalorder %s191, %s207
    %p209 = scmp.eq.s32.totalorder %s32, 0
    %p210 = por %p208, %p209
    %s211 = ssub.s32 %s26, %s33
    %p212 = scmp.eq.s32.totalorder %s211, 0
    %s214 = sadd.s32 %s213, 1
    %s215 = scalar_select %p212, %s213, %s214
    %p218 = pneg %p212
    %p219 = scmp.eq.s32.totalorder %s26, 1
    %p220 = por %p218, %p219
    %p221 = scmp.ne.s32.totalorder %s213, %s216
    %p222 = scmp.eq.s32.totalorder %s26, 0
    %p223 = por %p221, %p222
    %p224 = scmp.ne.s32.totalorder %s213, %s216
    %p225 = scmp.eq.s32.totalorder %s31, 1
    %p226 = por %p224, %p225
    %p227 = scmp.ne.s32.totalorder %s216, %s217
    %p228 = scmp.eq.s32.totalorder %s31, 0
    %p229 = por %p227, %p228
    %p230 = scmp.ne.s32.totalorder %s216, %s217
    %p231 = scmp.eq.s32.totalorder %s32, 1
    %p232 = por %p230, %p231
    %p234 = scmp.ne.s32.totalorder %s217, %s233
    %p235 = scmp.eq.s32.totalorder %s32, 0
    %p236 = por %p234, %p235
    %s237 = ssub.s32 %s26, %s33
    %p238 = scmp.eq.s32.totalorder %s237, 0
    %s240 = sadd.s32 %s239, 1
    %s241 = scalar_select %p238, %s239, %s240
    %p244 = pneg %p238
    %p245 = scmp.eq.s32.totalorder %s26, 1
    %p246 = por %p244, %p245
    %p247 = scmp.ne.s32.totalorder %s239, %s242
    %p248 = scmp.eq.s32.totalorder %s26, 0
    %p249 = por %p247, %p248
    %p250 = scmp.ne.s32.totalorder %s239, %s242
    %p251 = scmp.eq.s32.totalorder %s31, 1
    %p252 = por %p250, %p251
    %p253 = scmp.ne.s32.totalorder %s242, %s243
    %p254 = scmp.eq.s32.totalorder %s31, 0
    %p255 = por %p253, %p254
    %p256 = scmp.ne.s32.totalorder %s242, %s243
    %p257 = scmp.eq.s32.totalorder %s32, 1
    %p258 = por %p256, %p257
    %p260 = scmp.ne.s32.totalorder %s243, %s259
    %p261 = scmp.eq.s32.totalorder %s32, 0
    %p262 = por %p260, %p261
    %s263 = ssub.s32 %s26, %s33
    %p264 = scmp.eq.s32.totalorder %s263, 0
    %s266 = sadd.s32 %s265, 1
    %s267 = scalar_select %p264, %s265, %s266
    %p270 = pneg %p264
    %p271 = scmp.eq.s32.totalorder %s26, 1
    %p272 = por %p270, %p271
    %p273 = scmp.ne.s32.totalorder %s265, %s268
    %p274 = scmp.eq.s32.totalorder %s26, 0
    %p275 = por %p273, %p274
    %p276 = scmp.ne.s32.totalorder %s265, %s268
    %p277 = scmp.eq.s32.totalorder %s31, 1
    %p278 = por %p276, %p277
    %p279 = scmp.ne.s32.totalorder %s268, %s269
    %p280 = scmp.eq.s32.totalorder %s31, 0
    %p281 = por %p279, %p280
    %p282 = scmp.ne.s32.totalorder %s268, %s269
    %p283 = scmp.eq.s32.totalorder %s32, 1
    %p284 = por %p282, %p283
    %p286 = scmp.ne.s32.totalorder %s269, %s285
    %p287 = scmp.eq.s32.totalorder %s32, 0
    %p288 = por %p286, %p287
    %s289 = ssub.s32 %s26, %s33
    %p290 = scmp.eq.s32.totalorder %s289, 0
    %s292 = sadd.s32 %s291, 1
    %s293 = scalar_select %p290, %s291, %s292
    %p296 = pneg %p290
    %p297 = scmp.eq.s32.totalorder %s26, 1
    %p298 = por %p296, %p297
    %p299 = scmp.ne.s32.totalorder %s291, %s294
    %p300 = scmp.eq.s32.totalorder %s26, 0
    %p301 = por %p299, %p300
    %p302 = scmp.ne.s32.totalorder %s291, %s294
    %p303 = scmp.eq.s32.totalorder %s31, 1
    %p304 = por %p302, %p303
    %p305 = scmp.ne.s32.totalorder %s294, %s295
    %p306 = scmp.eq.s32.totalorder %s31, 0
    %p307 = por %p305, %p306
    %p308 = scmp.ne.s32.totalorder %s294, %s295
    %p309 = scmp.eq.s32.totalorder %s32, 1
    %p310 = por %p308, %p309
    %p312 = scmp.ne.s32.totalorder %s295, %s311
    %p313 = scmp.eq.s32.totalorder %s32, 0
    %p314 = por %p312, %p313
    %s315 = ssub.s32 %s26, %s33
    %p316 = scmp.eq.s32.totalorder %s315, 0
    %s318 = sadd.s32 %s317, 1
    %s319 = scalar_select %p316, %s317, %s318
    %p322 = pneg %p316
    %p323 = scmp.eq.s32.totalorder %s26, 1
    %p324 = por %p322, %p323
    %p325 = scmp.ne.s32.totalorder %s317, %s320
    %p326 = scmp.eq.s32.totalorder %s26, 0
    %p327 = por %p325, %p326
    %p328 = scmp.ne.s32.totalorder %s317, %s320
    %p329 = scmp.eq.s32.totalorder %s31, 1
    %p330 = por %p328, %p329
    %p331 = scmp.ne.s32.totalorder %s320, %s321
    %p332 = scmp.eq.s32.totalorder %s31, 0
    %p333 = por %p331, %p332
    %p334 = scmp.ne.s32.totalorder %s320, %s321
    %p335 = scmp.eq.s32.totalorder %s32, 1
    %p336 = por %p334, %p335
    %p338 = scmp.ne.s32.totalorder %s321, %s337
    %p339 = scmp.eq.s32.totalorder %s32, 0
    %p340 = por %p338, %p339
    %s341 = ssub.s32 %s26, %s33
    %p342 = scmp.eq.s32.totalorder %s341, 0
    %s344 = sadd.s32 %s343, 1
    %s345 = scalar_select %p342, %s343, %s344
    %p348 = pneg %p342
    %p349 = scmp.eq.s32.totalorder %s26, 1
    %p350 = por %p348, %p349
    %p351 = scmp.ne.s32.totalorder %s343, %s346
    %p352 = scmp.eq.s32.totalorder %s26, 0
    %p353 = por %p351, %p352
    %p354 = scmp.ne.s32.totalorder %s343, %s346
    %p355 = scmp.eq.s32.totalorder %s31, 1
    %p356 = por %p354, %p355
    %p357 = scmp.ne.s32.totalorder %s346, %s347
    %p358 = scmp.eq.s32.totalorder %s31, 0
    %p359 = por %p357, %p358
    %p360 = scmp.ne.s32.totalorder %s346, %s347
    %p361 = scmp.eq.s32.totalorder %s32, 1
    %p362 = por %p360, %p361
    %p364 = scmp.ne.s32.totalorder %s347, %s363
    %p365 = scmp.eq.s32.totalorder %s32, 0
    %p366 = por %p364, %p365
    %s367 = ssub.s32 %s26, %s33
    %p368 = scmp.eq.s32.totalorder %s367, 0
    %s370 = sadd.s32 %s369, 1
    %s371 = scalar_select %p368, %s369, %s370
    %p374 = pneg %p368
    %p375 = scmp.eq.s32.totalorder %s26, 1
    %p376 = por %p374, %p375
    %p377 = scmp.ne.s32.totalorder %s369, %s372
    %p378 = scmp.eq.s32.totalorder %s26, 0
    %p379 = por %p377, %p378
    %p380 = scmp.ne.s32.totalorder %s369, %s372
    %p381 = scmp.eq.s32.totalorder %s31, 1
    %p382 = por %p380, %p381
    %p383 = scmp.ne.s32.totalorder %s372, %s373
    %p384 = scmp.eq.s32.totalorder %s31, 0
    %p385 = por %p383, %p384
    %p386 = scmp.ne.s32.totalorder %s372, %s373
    %p387 = scmp.eq.s32.totalorder %s32, 1
    %p388 = por %p386, %p387
    %p390 = scmp.ne.s32.totalorder %s373, %s389
    %p391 = scmp.eq.s32.totalorder %s32, 0
    %p392 = por %p390, %p391
    %s394 = sadd.s32 %s393, 1
    %p397 = scmp.eq.s32.totalorder %s26, 1
    %p398 = scmp.ne.s32.totalorder %s393, %s395
    %p399 = scmp.eq.s32.totalorder %s26, 0
    %p400 = por %p398, %p399
    %p401 = scmp.ne.s32.totalorder %s393, %s395
    %p402 = scmp.eq.s32.totalorder %s31, 1
    %p403 = por %p401, %p402
    %p404 = scmp.ne.s32.totalorder %s395, %s396
    %p405 = scmp.eq.s32.totalorder %s31, 0
    %p406 = por %p404, %p405
    %p407 = scmp.ne.s32.totalorder %s395, %s396
    %p408 = scmp.eq.s32.totalorder %s32, 1
    %p409 = por %p407, %p408
    %p411 = scmp.ne.s32.totalorder %s396, %s410
    %p412 = scmp.eq.s32.totalorder %s32, 0
    %p413 = por %p411, %p412
    %s415 = sadd.s32 %s414, 1
    %p418 = scmp.eq.s32.totalorder %s26, 1
    %p419 = scmp.ne.s32.totalorder %s414, %s416
    %p420 = scmp.eq.s32.totalorder %s26, 0
    %p421 = por %p419, %p420
    %p422 = scmp.ne.s32.totalorder %s414, %s416
    %p423 = scmp.eq.s32.totalorder %s31, 1
    %p424 = por %p422, %p423
    %p425 = scmp.ne.s32.totalorder %s416, %s417
    %p426 = scmp.eq.s32.totalorder %s31, 0
    %p427 = por %p425, %p426
    %p428 = scmp.ne.s32.totalorder %s416, %s417
    %p429 = scmp.eq.s32.totalorder %s32, 1
    %p430 = por %p428, %p429
    %p432 = scmp.ne.s32.totalorder %s417, %s431
    %p433 = scmp.eq.s32.totalorder %s32, 0
    %p434 = por %p432, %p433
    %s436 = sadd.s32 %s435, 1
    %p439 = scmp.eq.s32.totalorder %s26, 1
    %p440 = scmp.ne.s32.totalorder %s435, %s437
    %p441 = scmp.eq.s32.totalorder %s26, 0
    %p442 = por %p440, %p441
    %p443 = scmp.ne.s32.totalorder %s435, %s437
    %p444 = scmp.eq.s32.totalorder %s31, 1
    %p445 = por %p443, %p444
    %p446 = scmp.ne.s32.totalorder %s437, %s438
    %p447 = scmp.eq.s32.totalorder %s31, 0
    %p448 = por %p446, %p447
    %p449 = scmp.ne.s32.totalorder %s437, %s438
    %p450 = scmp.eq.s32.totalorder %s32, 1
    %p451 = por %p449, %p450
    %p453 = scmp.ne.s32.totalorder %s438, %s452
    %p454 = scmp.eq.s32.totalorder %s32, 0
    %p455 = por %p453, %p454
    %s457 = sadd.s32 %s456, 1
    %p460 = scmp.eq.s32.totalorder %s26, 1
    %p461 = scmp.ne.s32.totalorder %s456, %s458
    %p462 = scmp.eq.s32.totalorder %s26, 0
    %p463 = por %p461, %p462
    %p464 = scmp.ne.s32.totalorder %s456, %s458
    %p465 = scmp.eq.s32.totalorder %s31, 1
    %p466 = por %p464, %p465
    %p467 = scmp.ne.s32.totalorder %s458, %s459
    %p468 = scmp.eq.s32.totalorder %s31, 0
    %p469 = por %p467, %p468
    %p470 = scmp.ne.s32.totalorder %s458, %s459
    %p471 = scmp.eq.s32.totalorder %s32, 1
    %p472 = por %p470, %p471
    %p474 = scmp.ne.s32.totalorder %s459, %s473
    %p475 = scmp.eq.s32.totalorder %s32, 0
    %p476 = por %p474, %p475
    %s478 = sadd.s32 %s477, 1
    %p481 = scmp.eq.s32.totalorder %s26, 1
    %p482 = scmp.ne.s32.totalorder %s477, %s479
    %p483 = scmp.eq.s32.totalorder %s26, 0
    %p484 = por %p482, %p483
    %p485 = scmp.ne.s32.totalorder %s477, %s479
    %p486 = scmp.eq.s32.totalorder %s31, 1
    %p487 = por %p485, %p486
    %p488 = scmp.ne.s32.totalorder %s479, %s480
    %p489 = scmp.eq.s32.totalorder %s31, 0
    %p490 = por %p488, %p489
    %p491 = scmp.ne.s32.totalorder %s479, %s480
    %p492 = scmp.eq.s32.totalorder %s32, 1
    %p493 = por %p491, %p492
    %p495 = scmp.ne.s32.totalorder %s480, %s494
    %p496 = scmp.eq.s32.totalorder %s32, 0
    %p497 = por %p495, %p496
    %s499 = sadd.s32 %s498, 1
    %p502 = scmp.eq.s32.totalorder %s26, 1
    %p503 = scmp.ne.s32.totalorder %s498, %s500
    %p504 = scmp.eq.s32.totalorder %s26, 0
    %p505 = por %p503, %p504
    %p506 = scmp.ne.s32.totalorder %s498, %s500
    %p507 = scmp.eq.s32.totalorder %s31, 1
    %p508 = por %p506, %p507
    %p509 = scmp.ne.s32.totalorder %s500, %s501
    %p510 = scmp.eq.s32.totalorder %s31, 0
    %p511 = por %p509, %p510
    %p512 = scmp.ne.s32.totalorder %s500, %s501
    %p513 = scmp.eq.s32.totalorder %s32, 1
    %p514 = por %p512, %p513
    %p516 = scmp.ne.s32.totalorder %s501, %s515
    %p517 = scmp.eq.s32.totalorder %s32, 0
    %p518 = por %p516, %p517
    %s520 = sadd.s32 %s519, 1
    %p523 = scmp.eq.s32.totalorder %s26, 1
    %p524 = scmp.ne.s32.totalorder %s519, %s521
    %p525 = scmp.eq.s32.totalorder %s26, 0
    %p526 = por %p524, %p525
    %p527 = scmp.ne.s32.totalorder %s519, %s521
    %p528 = scmp.eq.s32.totalorder %s31, 1
    %p529 = por %p527, %p528
    %p530 = scmp.ne.s32.totalorder %s521, %s522
    %p531 = scmp.eq.s32.totalorder %s31, 0
    %p532 = por %p530, %p531
    %p533 = scmp.ne.s32.totalorder %s521, %s522
    %p534 = scmp.eq.s32.totalorder %s32, 1
    %p535 = por %p533, %p534
    %p537 = scmp.ne.s32.totalorder %s522, %s536
    %p538 = scmp.eq.s32.totalorder %s32, 0
    %p539 = por %p537, %p538
    %p540 = scmp.le.s32.totalorder 1, %s26
    %p541 = scmp.lt.s32.totalorder %s26, 3
    %p542 = pnand %p540, %p541
    %p543 = pneg %p542
    // Predicated region
    $region9: #{_lambda_.3} parent=5 // pred_check
      _
    $region10: #{_lambda_.3} parent=5 // pred_check_branch
      %545 = sbr.rel (%p542) target = $region12
    $region11: #{_lambda_.3} parent=5 // pred_region
      %s546 = ssub.s32 %s26, 1
      // Predicated region
      $region13: #{_lambda_.3} parent=11 // pred_check
        %p547 = pneg %p47
      $region14: #{_lambda_.3} parent=11 // pred_check_branch
        %549 = sbr.rel (%p547) target = $region16
      $region15: #{_lambda_.3} parent=11 // pred_region
        _
      $region16: #{_lambda_.3} parent=11 // pred_fallthru
        _
      // Predicated region
      $region17: #{_lambda_.3} parent=11 // pred_check
        %p550 = pneg %p406
      $region18: #{_lambda_.3} parent=11 // pred_check_branch
        %552 = sbr.rel (%p550) target = $region20
      $region19: #{_lambda_.3} parent=11 // pred_region
        _
      $region20: #{_lambda_.3} parent=11 // pred_fallthru
        _
      // Predicated region
      $region21: #{_lambda_.3} parent=11 // pred_check
        %p553 = pneg %p427
      $region22: #{_lambda_.3} parent=11 // pred_check_branch
        %555 = sbr.rel (%p553) target = $region24
      $region23: #{_lambda_.3} parent=11 // pred_region
        _
      $region24: #{_lambda_.3} parent=11 // pred_fallthru
        _
      // Predicated region
      $region25: #{_lambda_.3} parent=11 // pred_check
        %p556 = pneg %p448
      $region26: #{_lambda_.3} parent=11 // pred_check_branch
        %558 = sbr.rel (%p556) target = $region28
      $region27: #{_lambda_.3} parent=11 // pred_region
        _
      $region28: #{_lambda_.3} parent=11 // pred_fallthru
        _
      // Predicated region
      $region29: #{_lambda_.3} parent=11 // pred_check
        %p559 = pneg %p469
      $region30: #{_lambda_.3} parent=11 // pred_check_branch
        %561 = sbr.rel (%p559) target = $region32
      $region31: #{_lambda_.3} parent=11 // pred_region
        _
      $region32: #{_lambda_.3} parent=11 // pred_fallthru
        _
      // Predicated region
      $region33: #{_lambda_.3} parent=11 // pred_check
        %p562 = pneg %p490
      $region34: #{_lambda_.3} parent=11 // pred_check_branch
        %564 = sbr.rel (%p562) target = $region36
      $region35: #{_lambda_.3} parent=11 // pred_region
        _
      $region36: #{_lambda_.3} parent=11 // pred_fallthru
        _
      // Predicated region
      $region37: #{_lambda_.3} parent=11 // pred_check
        %p565 = pneg %p511
      $region38: #{_lambda_.3} parent=11 // pred_check_branch
        %567 = sbr.rel (%p565) target = $region40
      $region39: #{_lambda_.3} parent=11 // pred_region
        _
      $region40: #{_lambda_.3} parent=11 // pred_fallthru
        _
    $region12: #{_lambda_.3} parent=5 // pred_fallthru
      _
    %p568 = scmp.lt.s32.totalorder %s26, 2
    // Predicated region
    $region41: #{_lambda_.3} parent=5 // pred_check
      %p569 = pneg %p568
    $region42: #{_lambda_.3} parent=5 // pred_check_branch
      %571 = sbr.rel (%p569) target = $region44
    $region43: #{_lambda_.3} parent=5 // pred_region
      // Predicated region
      $region45: #{_lambda_.3} parent=43 // pred_check
        %p572 = pneg %p67
      $region46: #{_lambda_.3} parent=43 // pred_check_branch
        %574 = sbr.rel (%p572) target = $region48
      $region47: #{_lambda_.3} parent=43 // pred_region
        %p575 = scmp.lt.s32.totalorder %s26, 1
        %s576 = scalar_select %p575, %s26, 1
        %s577 = scalar_lea.vmem %s1, %s576
      $region48: #{_lambda_.3} parent=43 // pred_fallthru
        _
      // Predicated region
      $region49: #{_lambda_.3} parent=43 // pred_check
        %p578 = pneg %p93
      $region50: #{_lambda_.3} parent=43 // pred_check_branch
        %580 = sbr.rel (%p578) target = $region52
      $region51: #{_lambda_.3} parent=43 // pred_region
        %p581 = scmp.lt.s32.totalorder %s26, 1
        %s582 = scalar_select %p581, %s26, 1
        %s583 = scalar_lea.vmem %s2, %s582
      $region52: #{_lambda_.3} parent=43 // pred_fallthru
        _
      // Predicated region
      $region53: #{_lambda_.3} parent=43 // pred_check
        %p584 = pneg %p119
      $region54: #{_lambda_.3} parent=43 // pred_check_branch
        %586 = sbr.rel (%p584) target = $region56
      $region55: #{_lambda_.3} parent=43 // pred_region
        %p587 = scmp.lt.s32.totalorder %s26, 1
        %s588 = scalar_select %p587, %s26, 1
        %s589 = smul.addr %s588, 4
        %s590 = smul.addr %s589, 8
        %s591 = scalar_lea.vmem %s3, %s590
      $region56: #{_lambda_.3} parent=43 // pred_fallthru
        _
      // Predicated region
      $region57: #{_lambda_.3} parent=43 // pred_check
        %p592 = pneg %p145
      $region58: #{_lambda_.3} parent=43 // pred_check_branch
        %594 = sbr.rel (%p592) target = $region60
      $region59: #{_lambda_.3} parent=43 // pred_region
        %p595 = scmp.lt.s32.totalorder %s26, 1
        %s596 = scalar_select %p595, %s26, 1
        %s597 = smul.addr %s596, 4
        %s598 = smul.addr %s597, 8
        %s599 = scalar_lea.vmem %s4, %s598
      $region60: #{_lambda_.3} parent=43 // pred_fallthru
        _
      // Predicated region
      $region61: #{_lambda_.3} parent=43 // pred_check
        %p600 = pneg %p171
      $region62: #{_lambda_.3} parent=43 // pred_check_branch
        %602 = sbr.rel (%p600) target = $region64
      $region63: #{_lambda_.3} parent=43 // pred_region
        %p603 = scmp.lt.s32.totalorder %s26, 1
        %s604 = scalar_select %p603, %s26, 1
        %s605 = smul.addr %s604, 4
        %s606 = smul.addr %s605, 8
        %s607 = scalar_lea.vmem %s5, %s606
      $region64: #{_lambda_.3} parent=43 // pred_fallthru
        _
      // Predicated region
      $region65: #{_lambda_.3} parent=43 // pred_check
        %p608 = pneg %p197
      $region66: #{_lambda_.3} parent=43 // pred_check_branch
        %610 = sbr.rel (%p608) target = $region68
      $region67: #{_lambda_.3} parent=43 // pred_region
        %p611 = scmp.lt.s32.totalorder %s26, 1
        %s612 = scalar_select %p611, %s26, 1
        %s613 = smul.addr %s612, 4
        %s614 = smul.addr %s613, 8
        %s615 = scalar_lea.vmem %s6, %s614
      $region68: #{_lambda_.3} parent=43 // pred_fallthru
        _
      // Predicated region
      $region69: #{_lambda_.3} parent=43 // pred_check
        %p616 = pneg %p223
      $region70: #{_lambda_.3} parent=43 // pred_check_branch
        %618 = sbr.rel (%p616) target = $region72
      $region71: #{_lambda_.3} parent=43 // pred_region
        %p619 = scmp.lt.s32.totalorder %s26, 1
        %s620 = scalar_select %p619, %s26, 1
        %s621 = scalar_lea.vmem %s7, %s620
      $region72: #{_lambda_.3} parent=43 // pred_fallthru
        _
      // Predicated region
      $region73: #{_lambda_.3} parent=43 // pred_check
        %p622 = pneg %p249
      $region74: #{_lambda_.3} parent=43 // pred_check_branch
        %624 = sbr.rel (%p622) target = $region76
      $region75: #{_lambda_.3} parent=43 // pred_region
        %p625 = scmp.lt.s32.totalorder %s26, 1
        %s626 = scalar_select %p625, %s26, 1
        %s627 = scalar_lea.vmem %s8, %s626
      $region76: #{_lambda_.3} parent=43 // pred_fallthru
        _
      // Predicated region
      $region77: #{_lambda_.3} parent=43 // pred_check
        %p628 = pneg %p275
      $region78: #{_lambda_.3} parent=43 // pred_check_branch
        %630 = sbr.rel (%p628) target = $region80
      $region79: #{_lambda_.3} parent=43 // pred_region
        %p631 = scmp.lt.s32.totalorder %s26, 1
        %s632 = scalar_select %p631, %s26, 1
        %s633 = scalar_lea.vmem %s9, %s632
      $region80: #{_lambda_.3} parent=43 // pred_fallthru
        _
      // Predicated region
      $region81: #{_lambda_.3} parent=43 // pred_check
        %p634 = pneg %p301
      $region82: #{_lambda_.3} parent=43 // pred_check_branch
        %636 = sbr.rel (%p634) target = $region84
      $region83: #{_lambda_.3} parent=43 // pred_region
        %p637 = scmp.lt.s32.totalorder %s26, 1
        %s638 = scalar_select %p637, %s26, 1
        %s639 = smul.addr %s638, 4
        %s640 = smul.addr %s639, 8
        %s641 = scalar_lea.vmem %s10, %s640
      $region84: #{_lambda_.3} parent=43 // pred_fallthru
        _
      // Predicated region
      $region85: #{_lambda_.3} parent=43 // pred_check
        %p642 = pneg %p327
      $region86: #{_lambda_.3} parent=43 // pred_check_branch
        %644 = sbr.rel (%p642) target = $region88
      $region87: #{_lambda_.3} parent=43 // pred_region
        %p645 = scmp.lt.s32.totalorder %s26, 1
        %s646 = scalar_select %p645, %s26, 1
        %s647 = scalar_lea.vmem %s11, %s646
      $region88: #{_lambda_.3} parent=43 // pred_fallthru
        _
      // Predicated region
      $region89: #{_lambda_.3} parent=43 // pred_check
        %p648 = pneg %p353
      $region90: #{_lambda_.3} parent=43 // pred_check_branch
        %650 = sbr.rel (%p648) target = $region92
      $region91: #{_lambda_.3} parent=43 // pred_region
        %p651 = scmp.lt.s32.totalorder %s26, 1
        %s652 = scalar_select %p651, %s26, 1
        %s653 = smul.addr %s652, 16
        %s654 = smul.addr %s653, 8
        %s655 = scalar_lea.vmem %s12, %s654
      $region92: #{_lambda_.3} parent=43 // pred_fallthru
        _
      // Predicated region
      $region93: #{_lambda_.3} parent=43 // pred_check
        %p656 = pneg %p379
      $region94: #{_lambda_.3} parent=43 // pred_check_branch
        %658 = sbr.rel (%p656) target = $region96
      $region95: #{_lambda_.3} parent=43 // pred_region
        %p659 = scmp.lt.s32.totalorder %s26, 1
        %s660 = scalar_select %p659, %s26, 1
        %s661 = scalar_lea.vmem %s13, %s660
      $region96: #{_lambda_.3} parent=43 // pred_fallthru
        _
    $region44: #{_lambda_.3} parent=5 // pred_fallthru
      _
    %p662 = scmp.le.s32.totalorder 1, %s26
    %p663 = scmp.lt.s32.totalorder %s26, 3
    %p664 = pnand %p662, %p663
    %p665 = pneg %p664
    // Predicated region
    $region97: #{_lambda_.3} parent=5 // pred_check
      _
    $region98: #{_lambda_.3} parent=5 // pred_check_branch
      %667 = sbr.rel (%p664) target = $region100
    $region99: #{_lambda_.3} parent=5 // pred_region
      %s668 = ssub.s32 %s26, 1
      %p669 = pneg %p47
      %p670 = pneg %p44
      %p671 = scmp.lt.s32.totalorder %s31, 1
      %s672 = scalar_select %p671, %s31, 1
      %s673 = scalar_lea.vmem %s1, %s672
      %p674 = pneg %p73
      %p675 = pneg %p70
      %p676 = scmp.lt.s32.totalorder %s31, 1
      %s677 = scalar_select %p676, %s31, 1
      %s678 = scalar_lea.vmem %s2, %s677
      %p679 = pneg %p99
      %p680 = pneg %p96
      %p681 = scmp.lt.s32.totalorder %s31, 1
      %s682 = scalar_select %p681, %s31, 1
      %s683 = smul.addr %s682, 4
      %s684 = smul.addr %s683, 8
      %s685 = scalar_lea.vmem %s3, %s684
      %p686 = pneg %p125
      %p687 = pneg %p122
      %p688 = scmp.lt.s32.totalorder %s31, 1
      %s689 = scalar_select %p688, %s31, 1
      %s690 = smul.addr %s689, 4
      %s691 = smul.addr %s690, 8
      %s692 = scalar_lea.vmem %s4, %s691
      %p693 = pneg %p151
      %p694 = pneg %p148
      %p695 = scmp.lt.s32.totalorder %s31, 1
      %s696 = scalar_select %p695, %s31, 1
      %s697 = smul.addr %s696, 4
      %s698 = smul.addr %s697, 8
      %s699 = scalar_lea.vmem %s5, %s698
      %p700 = pneg %p177
      %p701 = pneg %p174
      %p702 = scmp.lt.s32.totalorder %s31, 1
      %s703 = scalar_select %p702, %s31, 1
      %s704 = smul.addr %s703, 4
      %s705 = smul.addr %s704, 8
      %s706 = scalar_lea.vmem %s6, %s705
      %p707 = pneg %p203
      %p708 = pneg %p200
      %p709 = scmp.lt.s32.totalorder %s31, 1
      %s710 = scalar_select %p709, %s31, 1
      %s711 = scalar_lea.vmem %s7, %s710
      %p712 = pneg %p229
      %p713 = pneg %p226
      %p714 = scmp.lt.s32.totalorder %s31, 1
      %s715 = scalar_select %p714, %s31, 1
      %s716 = scalar_lea.vmem %s8, %s715
      %p717 = pneg %p255
      %p718 = pneg %p252
      %p719 = scmp.lt.s32.totalorder %s31, 1
      %s720 = scalar_select %p719, %s31, 1
      %s721 = scalar_lea.vmem %s9, %s720
      %p722 = pneg %p281
      %p723 = pneg %p278
      %p724 = scmp.lt.s32.totalorder %s31, 1
      %s725 = scalar_select %p724, %s31, 1
      %s726 = smul.addr %s725, 4
      %s727 = smul.addr %s726, 8
      %s728 = scalar_lea.vmem %s10, %s727
      %p729 = pneg %p307
      %p730 = pneg %p304
      %p731 = scmp.lt.s32.totalorder %s31, 1
      %s732 = scalar_select %p731, %s31, 1
      %s733 = scalar_lea.vmem %s11, %s732
      %p734 = pneg %p333
      %p735 = pneg %p330
      %p736 = scmp.lt.s32.totalorder %s31, 1
      %s737 = scalar_select %p736, %s31, 1
      %s738 = smul.addr %s737, 16
      %s739 = smul.addr %s738, 8
      %s740 = scalar_lea.vmem %s12, %s739
      %p741 = pneg %p359
      %p742 = pneg %p356
      %p743 = scmp.lt.s32.totalorder %s31, 1
      %s744 = scalar_select %p743, %s31, 1
      %s745 = scalar_lea.vmem %s13, %s744
      %p746 = pneg %p385
      %p747 = pneg %p382
      %p748 = pneg %p406
      %p749 = pneg %p403
      %p750 = pneg %p427
      %p751 = pneg %p424
      %p752 = pneg %p448
      %p753 = pneg %p445
      %p754 = pneg %p469
      %p755 = pneg %p466
      %p756 = pneg %p490
      %p757 = pneg %p487
      %p758 = pneg %p511
      %p759 = pneg %p508
      %p760 = pneg %p532
      %p761 = pneg %p529
      %p762 = scmp.lt.s32.totalorder %s31, 1
      %s763 = scalar_select %p762, %s31, 1
      %s764 = scalar_lea.vmem %s1, %s763
      %p765 = scmp.lt.s32.totalorder %s31, 1
      %s766 = scalar_select %p765, %s31, 1
      %s767 = scalar_lea.vmem %s2, %s766
      %p768 = scmp.lt.s32.totalorder %s31, 1
      %s769 = scalar_select %p768, %s31, 1
      %s770 = smul.addr %s769, 4
      %s771 = smul.addr %s770, 8
      %s772 = scalar_lea.vmem %s3, %s771
      %p773 = scmp.lt.s32.totalorder %s31, 1
      %s774 = scalar_select %p773, %s31, 1
      %s775 = smul.addr %s774, 4
      %s776 = smul.addr %s775, 8
      %s777 = scalar_lea.vmem %s4, %s776
      %p778 = scmp.lt.s32.totalorder %s31, 1
      %s779 = scalar_select %p778, %s31, 1
      %s780 = smul.addr %s779, 4
      %s781 = smul.addr %s780, 8
      %s782 = scalar_lea.vmem %s5, %s781
      %p783 = scmp.lt.s32.totalorder %s31, 1
      %s784 = scalar_select %p783, %s31, 1
      %s785 = smul.addr %s784, 4
      %s786 = smul.addr %s785, 8
      %s787 = scalar_lea.vmem %s6, %s786
      %p788 = scmp.lt.s32.totalorder %s31, 1
      %s789 = scalar_select %p788, %s31, 1
      %s790 = scalar_lea.vmem %s7, %s789
      %p791 = scmp.lt.s32.totalorder %s31, 1
      %s792 = scalar_select %p791, %s31, 1
      %s793 = scalar_lea.vmem %s8, %s792
      %p794 = scmp.lt.s32.totalorder %s31, 1
      %s795 = scalar_select %p794, %s31, 1
      %s796 = scalar_lea.vmem %s9, %s795
      %p797 = scmp.lt.s32.totalorder %s31, 1
      %s798 = scalar_select %p797, %s31, 1
      %s799 = smul.addr %s798, 4
      %s800 = smul.addr %s799, 8
      %s801 = scalar_lea.vmem %s10, %s800
      %p802 = scmp.lt.s32.totalorder %s31, 1
      %s803 = scalar_select %p802, %s31, 1
      %s804 = scalar_lea.vmem %s11, %s803
      %p805 = scmp.lt.s32.totalorder %s31, 1
      %s806 = scalar_select %p805, %s31, 1
      %s807 = smul.addr %s806, 16
      %s808 = smul.addr %s807, 8
      %s809 = scalar_lea.vmem %s12, %s808
      %p810 = scmp.lt.s32.totalorder %s31, 1
      %s811 = scalar_select %p810, %s31, 1
      %s812 = scalar_lea.vmem %s13, %s811
      %p813 = scmp.eq.s32.totalorder %s31, 0
      // Predicated region
      $region101: #{_lambda_.3} parent=99 // pred_check
        %p814 = pneg %p813
      $region102: #{_lambda_.3} parent=99 // pred_check_branch
        %816 = sbr.rel (%p814) target = $region104
      $region103: #{_lambda_.3} parent=99 // pred_region
        %v817 = vld [vmem:[%s0] sm:$0xff]
        %v818 = vld [vmem:[%s0 + $0x8] sm:$0xff]
        %vm819 = vcmask 261120
        %820 = vst.msk [vmem:[#allocation2] sm:$0xff] %vm819, %v817
        %821 = vst.msk [vmem:[#allocation2 + $0x8] sm:$0xff] %vm819, %v818
      $region104: #{_lambda_.3} parent=99 // pred_fallthru
        _
      %v822 = vld [vmem:[#allocation2] sm:$0xff]
      %v823 = vld [vmem:[#allocation2 + $0x8] sm:$0xff]
      %v824 = vld [vmem:[%s764] sm:$0x1]
      %v825 = vld [vmem:[%s767] sm:$0x1]
      %v826 = vld [vmem:[%s772] sm:$0xff]
      %v827 = vld [vmem:[%s772 + $0x8] sm:$0xff]
      %v828 = vld [vmem:[%s772 + $0x10] sm:$0xff]
      %v829 = vld [vmem:[%s772 + $0x18] sm:$0xff]
      %v830 = vld [vmem:[%s777] sm:$0xff]
      %v831 = vld [vmem:[%s777 + $0x8] sm:$0xff]
      %v832 = vld [vmem:[%s777 + $0x10] sm:$0xff]
      %v833 = vld [vmem:[%s777 + $0x18] sm:$0xff]
      %v834 = vld [vmem:[%s782] sm:$0xff]
      %v835 = vld [vmem:[%s782 + $0x8] sm:$0xff]
      %v836 = vld [vmem:[%s782 + $0x10] sm:$0xff]
      %v837 = vld [vmem:[%s782 + $0x18] sm:$0xff]
      %v838 = vld [vmem:[%s787] sm:$0xff]
      %v839 = vld [vmem:[%s787 + $0x8] sm:$0xff]
      %v840 = vld [vmem:[%s787 + $0x10] sm:$0xff]
      %v841 = vld [vmem:[%s787 + $0x18] sm:$0xff]
      %v842 = vld [vmem:[%s790] sm:$0x1]
      %v843 = vld [vmem:[%s793] sm:$0x1]
      %v844 = vld [vmem:[%s796] sm:$0x1]
      %v845 = vld [vmem:[%s801] sm:$0xff]
      %v846 = vld [vmem:[%s801 + $0x8] sm:$0xff]
      %v847 = vld [vmem:[%s801 + $0x10] sm:$0xff]
      %v848 = vld [vmem:[%s801 + $0x18] sm:$0xff]
      %v849 = vld [vmem:[%s804] sm:$0x1]
      %v850 = vld [vmem:[%s809] sm:$0xff]
      %v851 = vld [vmem:[%s809 + $0x8] sm:$0xff]
      %v852 = vld [vmem:[%s809 + $0x10] sm:$0xff]
      %v853 = vld [vmem:[%s809 + $0x18] sm:$0xff]
      %v854 = vld [vmem:[%s809 + $0x20] sm:$0xff]
      %v855 = vld [vmem:[%s809 + $0x28] sm:$0xff]
      %v856 = vld [vmem:[%s809 + $0x30] sm:$0xff]
      %v857 = vld [vmem:[%s809 + $0x38] sm:$0xff]
      %v858 = vld [vmem:[%s809 + $0x40] sm:$0xff]
      %v859 = vld [vmem:[%s809 + $0x48] sm:$0xff]
      %v860 = vld [vmem:[%s809 + $0x50] sm:$0xff]
      %v861 = vld [vmem:[%s809 + $0x58] sm:$0xff]
      %v862 = vld [vmem:[%s809 + $0x60] sm:$0xff]
      %v863 = vld [vmem:[%s809 + $0x68] sm:$0xff]
      %v864 = vld [vmem:[%s809 + $0x70] sm:$0xff]
      %v865 = vld [vmem:[%s809 + $0x78] sm:$0xff]
      %v866 = vld [vmem:[%s812] sm:$0x1]
      %vm867 = vcmask 261120
      %v868 = vsel %vm867, %v822, 0.0
      %869 = vadd.xlane.f32.xlu0 %v868
      %v870 = vpop.xlane.xlu0 %869
      %v871 = vsel %vm867, %v823, 0.0
      %872 = vadd.xlane.f32.xlu0 %v871
      %v873 = vpop.xlane.xlu0 %872
      %v874 = vrcp.pop 32.0
      %v875 = vmul.f32 %v870, %v874
      %v876 = vmul.f32 %v873, %v874
      %v877 = vsub.f32 %v822, %v875
      %v878 = vsub.f32 %v823, %v876
      %v879 = vmul.f32 %v877, %v877
      %v880 = vmul.f32 %v878, %v878
      %v881 = vsel %vm867, %v879, 0.0
      %882 = vadd.xlane.f32.xlu0 %v881
      %v883 = vpop.xlane.xlu0 %882
      %v884 = vsel %vm867, %v880, 0.0
      %885 = vadd.xlane.f32.xlu0 %v884
      %v886 = vpop.xlane.xlu0 %885
      %v887 = vmul.f32 %v883, %v874
      %v888 = vmul.f32 %v886, %v874
      %v889 = vadd.f32 %v887, 1e-05
      %v890 = vadd.f32 %v888, 1e-05
      %v891 = vrsqrt.pop %v889
      %v892 = vrsqrt.pop %v890
      %v893 = vmul.f32 %v877, %v891
      %v894 = vmul.f32 %v878, %v892
      %v896 = vlaneseq
      %v897 = vshrl.u32 %v896, 7
      %v898 = vsub.s32 0, %v897
      %v899 = vrot.slane %v824, %v898
      %v901 = vmul.f32 %v893, %v899
      %v902 = vmul.f32 %v894, %v899
      %v904 = vlaneseq
      %v905 = vshrl.u32 %v904, 7
      %v906 = vsub.s32 0, %v905
      %v907 = vrot.slane %v825, %v906
      %v909 = vadd.f32 %v901, %v907
      %v910 = vadd.f32 %v902, %v907
      %v912 = vsel %vm867, %v909, 0
      %v915 = vsel %vm867, %v910, 0
      %917 = vmatprep.subr.mxu0 0.0
      %918 = vmatpush1.msra.mxu0 %v826
      %919 = vmatprep.subr.mxu0 0.0
      %920 = vmatpush1.msra.mxu0 %v827
      %921 = vmatprep.subr.mxu0 0.0
      %922 = vmatpush1.msra.mxu0 %v828
      %923 = vmatprep.subr.mxu0 0.0
      %924 = vmatpush1.msra.mxu0 %v829
      %925 = vmatprep.subr.mxu0 0.0
      %926 = vmatpush1.msra.mxu0 0.0
      %927 = vmatprep.subr.mxu0 0.0
      %928 = vmatpush1.msra.mxu0 0.0
      %929 = vmatprep.subr.mxu0 0.0
      %930 = vmatpush1.msra.mxu0 0.0
      %931 = vmatprep.subr.mxu0 0.0
      %932 = vmatpush1.msra.mxu0 0.0
      %933 = vmatprep.subr.mxu0 0.0
      %934 = vmatpush1.msra.mxu0 0.0
      %935 = vmatprep.subr.mxu0 0.0
      %936 = vmatpush1.msra.mxu0 0.0
      %937 = vmatprep.subr.mxu0 0.0
      %938 = vmatpush1.msra.mxu0 0.0
      %939 = vmatprep.subr.mxu0 0.0
      %940 = vmatpush1.msra.mxu0 0.0
      %941 = vmatprep.subr.mxu0 0.0
      %942 = vmatpush1.msra.mxu0 0.0
      %943 = vmatprep.subr.mxu0 0.0
      %944 = vmatpush1.msra.mxu0 0.0
      %945 = vmatprep.subr.mxu0 0.0
      %946 = vmatpush1.msra.mxu0 0.0
      %947 = vmatprep.subr.mxu0 0.0
      %948 = vmatpush1.msra.mxu0 0.0
      %949 = vmatprep.subr.mxu0 0.0
      %950 = vmatpush1.msra.mxu0 0.0
      %951 = vmatprep.subr.mxu0 0.0
      %952 = vmatpush1.msra.mxu0 0.0
      %953 = vmatprep.subr.mxu0 0.0
      %954 = vmatpush1.msra.mxu0 0.0
      %955 = vmatprep.subr.mxu0 0.0
      %956 = vmatpush1.msra.mxu0 0.0
      %957 = vmatprep.subr.mxu0 0.0
      %958 = vmatpush1.msra.mxu0 0.0
      %959 = vmatprep.subr.mxu0 0.0
      %960 = vmatpush1.msra.mxu0 0.0
      %961 = vmatprep.subr.mxu0 0.0
      %962 = vmatpush1.msra.mxu0 0.0
      %963 = vmatprep.subr.mxu0 0.0
      %964 = vmatpush1.msra.mxu0 0.0
      %965 = vmatprep.subr.mxu0 0.0
      %966 = vmatpush1.msra.mxu0 0.0
      %967 = vmatprep.subr.mxu0 0.0
      %968 = vmatpush1.msra.mxu0 0.0
      %969 = vmatprep.subr.mxu0 0.0
      %970 = vmatpush1.msra.mxu0 0.0
      %971 = vmatprep.subr.mxu0 0.0
      %972 = vmatpush1.msra.mxu0 0.0
      %973 = vmatprep.subr.mxu0 0.0
      %974 = vmatpush1.msra.mxu0 0.0
      %975 = vmatprep.subr.mxu0 0.0
      %976 = vmatpush1.msra.mxu0 0.0
      %977 = vmatprep.subr.mxu0 0.0
      %978 = vmatpush1.msra.mxu0 0.0
      %979 = vmatprep.subr.mxu0 0.0
      %980 = vmatpush1.msra.mxu0 0.0
      %981 = vmatprep.mubr.f32.mxu0 0.0
      %982 = vmatmul.mubr.f32.gmra.mrb[0].mxu0 %v912
      %v983 = vpop.f32.mrb[0].mxu0
      %v984 = vadd.f32 0.0, %v983
      %v985 = vpop.f32.mrb[0].mxu0
      %986 = vmatprep.mubr.f32.mxu0 0.0
      %987 = vmatmul.mubr.f32.gmra.mrb[0].mxu0 %v915
      %v988 = vpop.f32.mrb[0].mxu0
      %v989 = vadd.f32 0.0, %v988
      %v990 = vpop.f32.mrb[0].mxu0
      %991 = vdwg.mxu0
      %v992 = vmul.f32 %v984, 0.35355338
      %v993 = vmul.f32 %v989, 0.35355338
      %994 = vmatprep.subr.mxu0 0.0
      %995 = vmatpush1.msra.mxu0 %v830
      %996 = vmatprep.subr.mxu0 0.0
      %997 = vmatpush1.msra.mxu0 %v831
      %998 = vmatprep.subr.mxu0 0.0
      %999 = vmatpush1.msra.mxu0 %v832
      %1000 = vmatprep.subr.mxu0 0.0
      %1001 = vmatpush1.msra.mxu0 %v833
      %1002 = vmatprep.subr.mxu0 0.0
      %1003 = vmatpush1.msra.mxu0 0.0
      %1004 = vmatprep.subr.mxu0 0.0
      %1005 = vmatpush1.msra.mxu0 0.0
      %1006 = vmatprep.subr.mxu0 0.0
      %1007 = vmatpush1.msra.mxu0 0.0
      %1008 = vmatprep.subr.mxu0 0.0
      %1009 = vmatpush1.msra.mxu0 0.0
      %1010 = vmatprep.subr.mxu0 0.0
      %1011 = vmatpush1.msra.mxu0 0.0
      %1012 = vmatprep.subr.mxu0 0.0
      %1013 = vmatpush1.msra.mxu0 0.0
      %1014 = vmatprep.subr.mxu0 0.0
      %1015 = vmatpush1.msra.mxu0 0.0
      %1016 = vmatprep.subr.mxu0 0.0
      %1017 = vmatpush1.msra.mxu0 0.0
      %1018 = vmatprep.subr.mxu0 0.0
      %1019 = vmatpush1.msra.mxu0 0.0
      %1020 = vmatprep.subr.mxu0 0.0
      %1021 = vmatpush1.msra.mxu0 0.0
      %1022 = vmatprep.subr.mxu0 0.0
      %1023 = vmatpush1.msra.mxu0 0.0
      %1024 = vmatprep.subr.mxu0 0.0
      %1025 = vmatpush1.msra.mxu0 0.0
      %1026 = vmatprep.subr.mxu0 0.0
      %1027 = vmatpush1.msra.mxu0 0.0
      %1028 = vmatprep.subr.mxu0 0.0
      %1029 = vmatpush1.msra.mxu0 0.0
      %1030 = vmatprep.subr.mxu0 0.0
      %1031 = vmatpush1.msra.mxu0 0.0
      %1032 = vmatprep.subr.mxu0 0.0
      %1033 = vmatpush1.msra.mxu0 0.0
      %1034 = vmatprep.subr.mxu0 0.0
      %1035 = vmatpush1.msra.mxu0 0.0
      %1036 = vmatprep.subr.mxu0 0.0
      %1037 = vmatpush1.msra.mxu0 0.0
      %1038 = vmatprep.subr.mxu0 0.0
      %1039 = vmatpush1.msra.mxu0 0.0
      %1040 = vmatprep.subr.mxu0 0.0
      %1041 = vmatpush1.msra.mxu0 0.0
      %1042 = vmatprep.subr.mxu0 0.0
      %1043 = vmatpush1.msra.mxu0 0.0
      %1044 = vmatprep.subr.mxu0 0.0
      %1045 = vmatpush1.msra.mxu0 0.0
      %1046 = vmatprep.subr.mxu0 0.0
      %1047 = vmatpush1.msra.mxu0 0.0
      %1048 = vmatprep.subr.mxu0 0.0
      %1049 = vmatpush1.msra.mxu0 0.0
      %1050 = vmatprep.subr.mxu0 0.0
      %1051 = vmatpush1.msra.mxu0 0.0
      %1052 = vmatprep.subr.mxu0 0.0
      %1053 = vmatpush1.msra.mxu0 0.0
      %1054 = vmatprep.subr.mxu0 0.0
      %1055 = vmatpush1.msra.mxu0 0.0
      %1056 = vmatprep.subr.mxu0 0.0
      %1057 = vmatpush1.msra.mxu0 0.0
      %1058 = vmatprep.mubr.f32.mxu0 0.0
      %1059 = vmatmul.mubr.f32.gmra.mrb[0].mxu0 %v912
      %v1060 = vpop.f32.mrb[0].mxu0
      %v1061 = vadd.f32 0.0, %v1060
      %v1062 = vpop.f32.mrb[0].mxu0
      %1063 = vmatprep.mubr.f32.mxu0 0.0
      %1064 = vmatmul.mubr.f32.gmra.mrb[0].mxu0 %v915
      %v1065 = vpop.f32.mrb[0].mxu0
      %v1066 = vadd.f32 0.0, %v1065
      %v1067 = vpop.f32.mrb[0].mxu0
      %1068 = vdwg.mxu0
      %1069 = vmatprep.subr.mxu0 0.0
      %1070 = vmatpush1.msra.mxu0 %v834
      %1071 = vmatprep.subr.mxu0 0.0
      %1072 = vmatpush1.msra.mxu0 %v835
      %1073 = vmatprep.subr.mxu0 0.0
      %1074 = vmatpush1.msra.mxu0 %v836
      %1075 = vmatprep.subr.mxu0 0.0
      %1076 = vmatpush1.msra.mxu0 %v837
      %1077 = vmatprep.subr.mxu0 0.0
      %1078 = vmatpush1.msra.mxu0 0.0
      %1079 = vmatprep.subr.mxu0 0.0
      %1080 = vmatpush1.msra.mxu0 0.0
      %1081 = vmatprep.subr.mxu0 0.0
      %1082 = vmatpush1.msra.mxu0 0.0
      %1083 = vmatprep.subr.mxu0 0.0
      %1084 = vmatpush1.msra.mxu0 0.0
      %1085 = vmatprep.subr.mxu0 0.0
      %1086 = vmatpush1.msra.mxu0 0.0
      %1087 = vmatprep.subr.mxu0 0.0
      %1088 = vmatpush1.msra.mxu0 0.0
      %1089 = vmatprep.subr.mxu0 0.0
      %1090 = vmatpush1.msra.mxu0 0.0
      %1091 = vmatprep.subr.mxu0 0.0
      %1092 = vmatpush1.msra.mxu0 0.0
      %1093 = vmatprep.subr.mxu0 0.0
      %1094 = vmatpush1.msra.mxu0 0.0
      %1095 = vmatprep.subr.mxu0 0.0
      %1096 = vmatpush1.msra.mxu0 0.0
      %1097 = vmatprep.subr.mxu0 0.0
      %1098 = vmatpush1.msra.mxu0 0.0
      %1099 = vmatprep.subr.mxu0 0.0
      %1100 = vmatpush1.msra.mxu0 0.0
      %1101 = vmatprep.subr.mxu0 0.0
      %1102 = vmatpush1.msra.mxu0 0.0
      %1103 = vmatprep.subr.mxu0 0.0
      %1104 = vmatpush1.msra.mxu0 0.0
      %1105 = vmatprep.subr.mxu0 0.0
      %1106 = vmatpush1.msra.mxu0 0.0
      %1107 = vmatprep.subr.mxu0 0.0
      %1108 = vmatpush1.msra.mxu0 0.0
      %1109 = vmatprep.subr.mxu0 0.0
      %1110 = vmatpush1.msra.mxu0 0.0
      %1111 = vmatprep.subr.mxu0 0.0
      %1112 = vmatpush1.msra.mxu0 0.0
      %1113 = vmatprep.subr.mxu0 0.0
      %1114 = vmatpush1.msra.mxu0 0.0
      %1115 = vmatprep.subr.mxu0 0.0
      %1116 = vmatpush1.msra.mxu0 0.0
      %1117 = vmatprep.subr.mxu0 0.0
      %1118 = vmatpush1.msra.mxu0 0.0
      %1119 = vmatprep.subr.mxu0 0.0
      %1120 = vmatpush1.msra.mxu0 0.0
      %1121 = vmatprep.subr.mxu0 0.0
      %1122 = vmatpush1.msra.mxu0 0.0
      %1123 = vmatprep.subr.mxu0 0.0
      %1124 = vmatpush1.msra.mxu0 0.0
      %1125 = vmatprep.subr.mxu0 0.0
      %1126 = vmatpush1.msra.mxu0 0.0
      %1127 = vmatprep.subr.mxu0 0.0
      %1128 = vmatpush1.msra.mxu0 0.0
      %1129 = vmatprep.subr.mxu0 0.0
      %1130 = vmatpush1.msra.mxu0 0.0
      %1131 = vmatprep.subr.mxu0 0.0
      %1132 = vmatpush1.msra.mxu0 0.0
      %1133 = vmatprep.mubr.f32.mxu0 0.0
      %1134 = vmatmul.mubr.f32.gmra.mrb[0].mxu0 %v912
      %v1135 = vpop.f32.mrb[0].mxu0
      %v1136 = vadd.f32 0.0, %v1135
      %v1137 = vpop.f32.mrb[0].mxu0
      %1138 = vmatprep.mubr.f32.mxu0 0.0
      %1139 = vmatmul.mubr.f32.gmra.mrb[0].mxu0 %v915
      %v1140 = vpop.f32.mrb[0].mxu0
      %v1141 = vadd.f32 0.0, %v1140
      %v1142 = vpop.f32.mrb[0].mxu0
      %1143 = vdwg.mxu0
      %vm1144 = vcmask 64512
      %v1146 = vsel %vm1144, %v992, 0
      %v1149 = vsel %vm1144, %v1061, 0
      %1151 = vmatprep.subr.mxu0 0.0
      %1152 = vmatpush1.xpose.msra.mxu0 %v1149
      %1153 = vmatprep.subr.mxu0 0.0
      %1154 = vmatpush1.xpose.msra.mxu0 0.0
      %1155 = vmatprep.subr.mxu0 0.0
      %1156 = vmatpush1.xpose.msra.mxu0 0.0
      %1157 = vmatprep.subr.mxu0 0.0
      %1158 = vmatpush1.xpose.msra.mxu0 0.0
      %1159 = vmatprep.subr.mxu0 0.0
      %1160 = vmatpush1.xpose.msra.mxu0 0.0
      %1161 = vmatprep.subr.mxu0 0.0
      %1162 = vmatpush1.xpose.msra.mxu0 0.0
      %1163 = vmatprep.subr.mxu0 0.0
      %1164 = vmatpush1.xpose.msra.mxu0 0.0
      %1165 = vmatprep.subr.mxu0 0.0
      %1166 = vmatpush1.xpose.msra.mxu0 0.0
      %1167 = vmatprep.subr.mxu0 0.0
      %1168 = vmatpush1.xpose.msra.mxu0 0.0
      %1169 = vmatprep.subr.mxu0 0.0
      %1170 = vmatpush1.xpose.msra.mxu0 0.0
      %1171 = vmatprep.subr.mxu0 0.0
      %1172 = vmatpush1.xpose.msra.mxu0 0.0
      %1173 = vmatprep.subr.mxu0 0.0
      %1174 = vmatpush1.xpose.msra.mxu0 0.0
      %1175 = vmatprep.subr.mxu0 0.0
      %1176 = vmatpush1.xpose.msra.mxu0 0.0
      %1177 = vmatprep.subr.mxu0 0.0
      %1178 = vmatpush1.xpose.msra.mxu0 0.0
      %1179 = vmatprep.subr.mxu0 0.0
      %1180 = vmatpush1.xpose.msra.mxu0 0.0
      %1181 = vmatprep.subr.mxu0 0.0
      %1182 = vmatpush1.xpose.msra.mxu0 0.0
      %1183 = vmatprep.subr.mxu0 0.0
      %1184 = vmatpush1.xpose.msra.mxu0 0.0
      %1185 = vmatprep.subr.mxu0 0.0
      %1186 = vmatpush1.xpose.msra.mxu0 0.0
      %1187 = vmatprep.subr.mxu0 0.0
      %1188 = vmatpush1.xpose.msra.mxu0 0.0
      %1189 = vmatprep.subr.mxu0 0.0
      %1190 = vmatpush1.xpose.msra.mxu0 0.0
      %1191 = vmatprep.subr.mxu0 0.0
      %1192 = vmatpush1.xpose.msra.mxu0 0.0
      %1193 = vmatprep.subr.mxu0 0.0
      %1194 = vmatpush1.xpose.msra.mxu0 0.0
      %1195 = vmatprep.subr.mxu0 0.0
      %1196 = vmatpush1.xpose.msra.mxu0 0.0
      %1197 = vmatprep.subr.mxu0 0.0
      %1198 = vmatpush1.xpose.msra.mxu0 0.0
      %1199 = vmatprep.subr.mxu0 0.0
      %1200 = vmatpush1.xpose.msra.mxu0 0.0
      %1201 = vmatprep.subr.mxu0 0.0
      %1202 = vmatpush1.xpose.msra.mxu0 0.0
      %1203 = vmatprep.subr.mxu0 0.0
      %1204 = vmatpush1.xpose.msra.mxu0 0.0
      %1205 = vmatprep.subr.mxu0 0.0
      %1206 = vmatpush1.xpose.msra.mxu0 0.0
      %1207 = vmatprep.subr.mxu0 0.0
      %1208 = vmatpush1.xpose.msra.mxu0 0.0
      %1209 = vmatprep.subr.mxu0 0.0
      %1210 = vmatpush1.xpose.msra.mxu0 0.0
      %1211 = vmatprep.subr.mxu0 0.0
      %1212 = vmatpush1.xpose.msra.mxu0 0.0
      %1213 = vmatprep.subr.mxu0 0.0
      %1214 = vmatpush1.xpose.msra.mxu0 0.0
      %1215 = vmatprep.mubr.f32.mxu0 0.0
      %1216 = vmatmul.mubr.f32.gmra.mrb[0].mxu0 %v1146
      %v1217 = vpop.f32.mrb[0].mxu0
      %v1218 = vadd.f32 0.0, %v1217
      %v1219 = vpop.f32.mrb[0].mxu0
      %1220 = vdwg.mxu0
      %v1222 = vsel %vm1144, %v993, 0
      %v1225 = vsel %vm1144, %v1066, 0
      %1227 = vmatprep.subr.mxu0 0.0
      %1228 = vmatpush1.xpose.msra.mxu0 %v1225
      %1229 = vmatprep.subr.mxu0 0.0
      %1230 = vmatpush1.xpose.msra.mxu0 0.0
      %1231 = vmatprep.subr.mxu0 0.0
      %1232 = vmatpush1.xpose.msra.mxu0 0.0
      %1233 = vmatprep.subr.mxu0 0.0
      %1234 = vmatpush1.xpose.msra.mxu0 0.0
      %1235 = vmatprep.subr.mxu0 0.0
      %1236 = vmatpush1.xpose.msra.mxu0 0.0
      %1237 = vmatprep.subr.mxu0 0.0
      %1238 = vmatpush1.xpose.msra.mxu0 0.0
      %1239 = vmatprep.subr.mxu0 0.0
      %1240 = vmatpush1.xpose.msra.mxu0 0.0
      %1241 = vmatprep.subr.mxu0 0.0
      %1242 = vmatpush1.xpose.msra.mxu0 0.0
      %1243 = vmatprep.subr.mxu0 0.0
      %1244 = vmatpush1.xpose.msra.mxu0 0.0
      %1245 = vmatprep.subr.mxu0 0.0
      %1246 = vmatpush1.xpose.msra.mxu0 0.0
      %1247 = vmatprep.subr.mxu0 0.0
      %1248 = vmatpush1.xpose.msra.mxu0 0.0
      %1249 = vmatprep.subr.mxu0 0.0
      %1250 = vmatpush1.xpose.msra.mxu0 0.0
      %1251 = vmatprep.subr.mxu0 0.0
      %1252 = vmatpush1.xpose.msra.mxu0 0.0
      %1253 = vmatprep.subr.mxu0 0.0
      %1254 = vmatpush1.xpose.msra.mxu0 0.0
      %1255 = vmatprep.subr.mxu0 0.0
      %1256 = vmatpush1.xpose.msra.mxu0 0.0
      %1257 = vmatprep.subr.mxu0 0.0
      %1258 = vmatpush1.xpose.msra.mxu0 0.0
      %1259 = vmatprep.subr.mxu0 0.0
      %1260 = vmatpush1.xpose.msra.mxu0 0.0
      %1261 = vmatprep.subr.mxu0 0.0
      %1262 = vmatpush1.xpose.msra.mxu0 0.0
      %1263 = vmatprep.subr.mxu0 0.0
      %1264 = vmatpush1.xpose.msra.mxu0 0.0
      %1265 = vmatprep.subr.mxu0 0.0
      %1266 = vmatpush1.xpose.msra.mxu0 0.0
      %1267 = vmatprep.subr.mxu0 0.0
      %1268 = vmatpush1.xpose.msra.mxu0 0.0
      %1269 = vmatprep.subr.mxu0 0.0
      %1270 = vmatpush1.xpose.msra.mxu0 0.0
      %1271 = vmatprep.subr.mxu0 0.0
      %1272 = vmatpush1.xpose.msra.mxu0 0.0
      %1273 = vmatprep.subr.mxu0 0.0
      %1274 = vmatpush1.xpose.msra.mxu0 0.0
      %1275 = vmatprep.subr.mxu0 0.0
      %1276 = vmatpush1.xpose.msra.mxu0 0.0
      %1277 = vmatprep.subr.mxu0 0.0
      %1278 = vmatpush1.xpose.msra.mxu0 0.0
      %1279 = vmatprep.subr.mxu0 0.0
      %1280 = vmatpush1.xpose.msra.mxu0 0.0
      %1281 = vmatprep.subr.mxu0 0.0
      %1282 = vmatpush1.xpose.msra.mxu0 0.0
      %1283 = vmatprep.subr.mxu0 0.0
      %1284 = vmatpush1.xpose.msra.mxu0 0.0
      %1285 = vmatprep.subr.mxu0 0.0
      %1286 = vmatpush1.xpose.msra.mxu0 0.0
      %1287 = vmatprep.subr.mxu0 0.0
      %1288 = vmatpush1.xpose.msra.mxu0 0.0
      %1289 = vmatprep.subr.mxu0 0.0
      %1290 = vmatpush1.xpose.msra.mxu0 0.0
      %1291 = vmatprep.mubr.f32.mxu0 0.0
      %1292 = vmatmul.mubr.f32.gmra.mrb[0].mxu0 %v1222
      %v1293 = vpop.f32.mrb[0].mxu0
      %v1294 = vadd.f32 0.0, %v1293
      %v1295 = vpop.f32.mrb[0].mxu0
      %1296 = vdwg.mxu0
      %v1297 = vsel %vm1144, %v1218, -inf
      %1298 = vmax.xlane.f32.xlu0 %v1297
      %v1299 = vpop.xlane.xlu0 %1298
      %v1300 = vsel %vm1144, %v1294, -inf
      %1301 = vmax.xlane.f32.xlu0 %v1300
      %v1302 = vpop.xlane.xlu0 %1301
      %v1303 = vsub.f32 %v1218, %v1299
      %v1304 = vsub.f32 %v1294, %v1302
      %v1305 = vmul.f32 %v1303, 1.442695
      %v1306 = vpow.pop %v1305
      %v1307 = vmul.f32 %v1304, 1.442695
      %v1308 = vpow.pop %v1307
      %v1309 = vsel %vm1144, %v1306, 0.0
      %1310 = vadd.xlane.f32.xlu0 %v1309
      %v1311 = vpop.xlane.xlu0 %1310
      %v1312 = vsel %vm1144, %v1308, 0.0
      %1313 = vadd.xlane.f32.xlu0 %v1312
      %v1314 = vpop.xlane.xlu0 %1313
      %v1315 = vrcp.pop %v1311
      %v1316 = vmul.f32 %v1306, %v1315
      %v1317 = vrcp.pop %v1314
      %v1318 = vmul.f32 %v1308, %v1317
      %v1320 = vsel %vm1144, %v1316, 0
      %1322 = vmatprep.subr.mxu0 0.0
      %1323 = vmatpush1.msra.mxu0 %v1136
      %1324 = vmatprep.subr.mxu0 0.0
      %1325 = vmatpush1.msra.mxu0 0.0
      %1326 = vmatprep.subr.mxu0 0.0
      %1327 = vmatpush1.msra.mxu0 0.0
      %1328 = vmatprep.subr.mxu0 0.0
      %1329 = vmatpush1.msra.mxu0 0.0
      %1330 = vmatprep.subr.mxu0 0.0
      %1331 = vmatpush1.msra.mxu0 0.0
      %1332 = vmatprep.subr.mxu0 0.0
      %1333 = vmatpush1.msra.mxu0 0.0
      %1334 = vmatprep.subr.mxu0 0.0
      %1335 = vmatpush1.msra.mxu0 0.0
      %1336 = vmatprep.subr.mxu0 0.0
      %1337 = vmatpush1.msra.mxu0 0.0
      %1338 = vmatprep.subr.mxu0 0.0
      %1339 = vmatpush1.msra.mxu0 0.0
      %1340 = vmatprep.subr.mxu0 0.0
      %1341 = vmatpush1.msra.mxu0 0.0
      %1342 = vmatprep.subr.mxu0 0.0
      %1343 = vmatpush1.msra.mxu0 0.0
      %1344 = vmatprep.subr.mxu0 0.0
      %1345 = vmatpush1.msra.mxu0 0.0
      %1346 = vmatprep.subr.mxu0 0.0
      %1347 = vmatpush1.msra.mxu0 0.0
      %1348 = vmatprep.subr.mxu0 0.0
      %1349 = vmatpush1.msra.mxu0 0.0
      %1350 = vmatprep.subr.mxu0 0.0
      %1351 = vmatpush1.msra.mxu0 0.0
      %1352 = vmatprep.subr.mxu0 0.0
      %1353 = vmatpush1.msra.mxu0 0.0
      %1354 = vmatprep.subr.mxu0 0.0
      %1355 = vmatpush1.msra.mxu0 0.0
      %1356 = vmatprep.subr.mxu0 0.0
      %1357 = vmatpush1.msra.mxu0 0.0
      %1358 = vmatprep.subr.mxu0 0.0
      %1359 = vmatpush1.msra.mxu0 0.0
      %1360 = vmatprep.subr.mxu0 0.0
      %1361 = vmatpush1.msra.mxu0 0.0
      %1362 = vmatprep.subr.mxu0 0.0
      %1363 = vmatpush1.msra.mxu0 0.0
      %1364 = vmatprep.subr.mxu0 0.0
      %1365 = vmatpush1.msra.mxu0 0.0
      %1366 = vmatprep.subr.mxu0 0.0
      %1367 = vmatpush1.msra.mxu0 0.0
      %1368 = vmatprep.subr.mxu0 0.0
      %1369 = vmatpush1.msra.mxu0 0.0
      %1370 = vmatprep.subr.mxu0 0.0
      %1371 = vmatpush1.msra.mxu0 0.0
      %1372 = vmatprep.subr.mxu0 0.0
      %1373 = vmatpush1.msra.mxu0 0.0
      %1374 = vmatprep.subr.mxu0 0.0
      %1375 = vmatpush1.msra.mxu0 0.0
      %1376 = vmatprep.subr.mxu0 0.0
      %1377 = vmatpush1.msra.mxu0 0.0
      %1378 = vmatprep.subr.mxu0 0.0
      %1379 = vmatpush1.msra.mxu0 0.0
      %1380 = vmatprep.subr.mxu0 0.0
      %1381 = vmatpush1.msra.mxu0 0.0
      %1382 = vmatprep.subr.mxu0 0.0
      %1383 = vmatpush1.msra.mxu0 0.0
      %1384 = vmatprep.subr.mxu0 0.0
      %1385 = vmatpush1.msra.mxu0 0.0
      %1386 = vmatprep.mubr.f32.mxu0 0.0
      %1387 = vmatmul.mubr.f32.gmra.mrb[0].mxu0 %v1320
      %v1388 = vpop.f32.mrb[0].mxu0
      %v1389 = vadd.f32 0.0, %v1388
      %v1390 = vpop.f32.mrb[0].mxu0
      %1391 = vdwg.mxu0
      %v1393 = vsel %vm1144, %v1318, 0
      %1395 = vmatprep.subr.mxu0 0.0
      %1396 = vmatpush1.msra.mxu0 %v1141
      %1397 = vmatprep.subr.mxu0 0.0
      %1398 = vmatpush1.msra.mxu0 0.0
      %1399 = vmatprep.subr.mxu0 0.0
      %1400 = vmatpush1.msra.mxu0 0.0
      %1401 = vmatprep.subr.mxu0 0.0
      %1402 = vmatpush1.msra.mxu0 0.0
      %1403 = vmatprep.subr.mxu0 0.0
      %1404 = vmatpush1.msra.mxu0 0.0
      %1405 = vmatprep.subr.mxu0 0.0
      %1406 = vmatpush1.msra.mxu0 0.0
      %1407 = vmatprep.subr.mxu0 0.0
      %1408 = vmatpush1.msra.mxu0 0.0
      %1409 = vmatprep.subr.mxu0 0.0
      %1410 = vmatpush1.msra.mxu0 0.0
      %1411 = vmatprep.subr.mxu0 0.0
      %1412 = vmatpush1.msra.mxu0 0.0
      %1413 = vmatprep.subr.mxu0 0.0
      %1414 = vmatpush1.msra.mxu0 0.0
      %1415 = vmatprep.subr.mxu0 0.0
      %1416 = vmatpush1.msra.mxu0 0.0
      %1417 = vmatprep.subr.mxu0 0.0
      %1418 = vmatpush1.msra.mxu0 0.0
      %1419 = vmatprep.subr.mxu0 0.0
      %1420 = vmatpush1.msra.mxu0 0.0
      %1421 = vmatprep.subr.mxu0 0.0
      %1422 = vmatpush1.msra.mxu0 0.0
      %1423 = vmatprep.subr.mxu0 0.0
      %1424 = vmatpush1.msra.mxu0 0.0
      %1425 = vmatprep.subr.mxu0 0.0
      %1426 = vmatpush1.msra.mxu0 0.0
      %1427 = vmatprep.subr.mxu0 0.0
      %1428 = vmatpush1.msra.mxu0 0.0
      %1429 = vmatprep.subr.mxu0 0.0
      %1430 = vmatpush1.msra.mxu0 0.0
      %1431 = vmatprep.subr.mxu0 0.0
      %1432 = vmatpush1.msra.mxu0 0.0
      %1433 = vmatprep.subr.mxu0 0.0
      %1434 = vmatpush1.msra.mxu0 0.0
      %1435 = vmatprep.subr.mxu0 0.0
      %1436 = vmatpush1.msra.mxu0 0.0
      %1437 = vmatprep.subr.mxu0 0.0
      %1438 = vmatpush1.msra.mxu0 0.0
      %1439 = vmatprep.subr.mxu0 0.0
      %1440 = vmatpush1.msra.mxu0 0.0
      %1441 = vmatprep.subr.mxu0 0.0
      %1442 = vmatpush1.msra.mxu0 0.0
      %1443 = vmatprep.subr.mxu0 0.0
      %1444 = vmatpush1.msra.mxu0 0.0
      %1445 = vmatprep.subr.mxu0 0.0
      %1446 = vmatpush1.msra.mxu0 0.0
      %1447 = vmatprep.subr.mxu0 0.0
      %1448 = vmatpush1.msra.mxu0 0.0
      %1449 = vmatprep.subr.mxu0 0.0
      %1450 = vmatpush1.msra.mxu0 0.0
      %1451 = vmatprep.subr.mxu0 0.0
      %1452 = vmatpush1.msra.mxu0 0.0
      %1453 = vmatprep.subr.mxu0 0.0
      %1454 = vmatpush1.msra.mxu0 0.0
      %1455 = vmatprep.subr.mxu0 0.0
      %1456 = vmatpush1.msra.mxu0 0.0
      %1457 = vmatprep.subr.mxu0 0.0
      %1458 = vmatpush1.msra.mxu0 0.0
      %1459 = vmatprep.mubr.f32.mxu0 0.0
      %1460 = vmatmul.mubr.f32.gmra.mrb[0].mxu0 %v1393
      %v1461 = vpop.f32.mrb[0].mxu0
      %v1462 = vadd.f32 0.0, %v1461
      %v1463 = vpop.f32.mrb[0].mxu0
      %1464 = vdwg.mxu0
      %1465 = vrot.lane.b32.xlu0 %v992, 120
      %v1466 = vpop.permute.xlu0 %1465
      %1467 = vrot.lane.b32.xlu0 %v1061, 120
      %v1468 = vpop.permute.xlu0 %1467
      %v1469 = vsel %vm1144, %v1466, 0
      %v1471 = vsel %vm1144, %v1468, 0
      %1473 = vmatprep.subr.mxu0 0.0
      %1474 = vmatpush1.xpose.msra.mxu0 %v1471
      %1475 = vmatprep.subr.mxu0 0.0
      %1476 = vmatpush1.xpose.msra.mxu0 0.0
      %1477 = vmatprep.subr.mxu0 0.0
      %1478 = vmatpush1.xpose.msra.mxu0 0.0
      %1479 = vmatprep.subr.mxu0 0.0
      %1480 = vmatpush1.xpose.msra.mxu0 0.0
      %1481 = vmatprep.subr.mxu0 0.0
      %1482 = vmatpush1.xpose.msra.mxu0 0.0
      %1483 = vmatprep.subr.mxu0 0.0
      %1484 = vmatpush1.xpose.msra.mxu0 0.0
      %1485 = vmatprep.subr.mxu0 0.0
      %1486 = vmatpush1.xpose.msra.mxu0 0.0
      %1487 = vmatprep.subr.mxu0 0.0
      %1488 = vmatpush1.xpose.msra.mxu0 0.0
      %1489 = vmatprep.subr.mxu0 0.0
      %1490 = vmatpush1.xpose.msra.mxu0 0.0
      %1491 = vmatprep.subr.mxu0 0.0
      %1492 = vmatpush1.xpose.msra.mxu0 0.0
      %1493 = vmatprep.subr.mxu0 0.0
      %1494 = vmatpush1.xpose.msra.mxu0 0.0
      %1495 = vmatprep.subr.mxu0 0.0
      %1496 = vmatpush1.xpose.msra.mxu0 0.0
      %1497 = vmatprep.subr.mxu0 0.0
      %1498 = vmatpush1.xpose.msra.mxu0 0.0
      %1499 = vmatprep.subr.mxu0 0.0
      %1500 = vmatpush1.xpose.msra.mxu0 0.0
      %1501 = vmatprep.subr.mxu0 0.0
      %1502 = vmatpush1.xpose.msra.mxu0 0.0
      %1503 = vmatprep.subr.mxu0 0.0
      %1504 = vmatpush1.xpose.msra.mxu0 0.0
      %1505 = vmatprep.subr.mxu0 0.0
      %1506 = vmatpush1.xpose.msra.mxu0 0.0
      %1507 = vmatprep.subr.mxu0 0.0
      %1508 = vmatpush1.xpose.msra.mxu0 0.0
      %1509 = vmatprep.subr.mxu0 0.0
      %1510 = vmatpush1.xpose.msra.mxu0 0.0
      %1511 = vmatprep.subr.mxu0 0.0
      %1512 = vmatpush1.xpose.msra.mxu0 0.0
      %1513 = vmatprep.subr.mxu0 0.0
      %1514 = vmatpush1.xpose.msra.mxu0 0.0
      %1515 = vmatprep.subr.mxu0 0.0
      %1516 = vmatpush1.xpose.msra.mxu0 0.0
      %1517 = vmatprep.subr.mxu0 0.0
      %1518 = vmatpush1.xpose.msra.mxu0 0.0
      %1519 = vmatprep.subr.mxu0 0.0
      %1520 = vmatpush1.xpose.msra.mxu0 0.0
      %1521 = vmatprep.subr.mxu0 0.0
      %1522 = vmatpush1.xpose.msra.mxu0 0.0
      %1523 = vmatprep.subr.mxu0 0.0
      %1524 = vmatpush1.xpose.msra.mxu0 0.0
      %1525 = vmatprep.subr.mxu0 0.0
      %1526 = vmatpush1.xpose.msra.mxu0 0.0
      %1527 = vmatprep.subr.mxu0 0.0
      %1528 = vmatpush1.xpose.msra.mxu0 0.0
      %1529 = vmatprep.subr.mxu0 0.0
      %1530 = vmatpush1.xpose.msra.mxu0 0.0
      %1531 = vmatprep.subr.mxu0 0.0
      %1532 = vmatpush1.xpose.msra.mxu0 0.0
      %1533 = vmatprep.subr.mxu0 0.0
      %1534 = vmatpush1.xpose.msra.mxu0 0.0
      %1535 = vmatprep.subr.mxu0 0.0
      %1536 = vmatpush1.xpose.msra.mxu0 0.0
      %1537 = vmatprep.mubr.f32.mxu0 0.0
      %1538 = vmatmul.mubr.f32.gmra.mrb[0].mxu0 %v1469
      %v1539 = vpop.f32.mrb[0].mxu0
      %v1540 = vadd.f32 0.0, %v1539
      %v1541 = vpop.f32.mrb[0].mxu0
      %1542 = vdwg.mxu0
      %1543 = vrot.lane.b32.xlu0 %v993, 120
      %v1544 = vpop.permute.xlu0 %1543
      %1545 = vrot.lane.b32.xlu0 %v1066, 120
      %v1546 = vpop.permute.xlu0 %1545
      %v1547 = vsel %vm1144, %v1544, 0
      %v1549 = vsel %vm1144, %v1546, 0
      %1551 = vmatprep.subr.mxu0 0.0
      %1552 = vmatpush1.xpose.msra.mxu0 %v1549
      %1553 = vmatprep.subr.mxu0 0.0
      %1554 = vmatpush1.xpose.msra.mxu0 0.0
      %1555 = vmatprep.subr.mxu0 0.0
      %1556 = vmatpush1.xpose.msra.mxu0 0.0
      %1557 = vmatprep.subr.mxu0 0.0
      %1558 = vmatpush1.xpose.msra.mxu0 0.0
      %1559 = vmatprep.subr.mxu0 0.0
      %1560 = vmatpush1.xpose.msra.mxu0 0.0
      %1561 = vmatprep.subr.mxu0 0.0
      %1562 = vmatpush1.xpose.msra.mxu0 0.0
      %1563 = vmatprep.subr.mxu0 0.0
      %1564 = vmatpush1.xpose.msra.mxu0 0.0
      %1565 = vmatprep.subr.mxu0 0.0
      %1566 = vmatpush1.xpose.msra.mxu0 0.0
      %1567 = vmatprep.subr.mxu0 0.0
      %1568 = vmatpush1.xpose.msra.mxu0 0.0
      %1569 = vmatprep.subr.mxu0 0.0
      %1570 = vmatpush1.xpose.msra.mxu0 0.0
      %1571 = vmatprep.subr.mxu0 0.0
      %1572 = vmatpush1.xpose.msra.mxu0 0.0
      %1573 = vmatprep.subr.mxu0 0.0
      %1574 = vmatpush1.xpose.msra.mxu0 0.0
      %1575 = vmatprep.subr.mxu0 0.0
      %1576 = vmatpush1.xpose.msra.mxu0 0.0
      %1577 = vmatprep.subr.mxu0 0.0
      %1578 = vmatpush1.xpose.msra.mxu0 0.0
      %1579 = vmatprep.subr.mxu0 0.0
      %1580 = vmatpush1.xpose.msra.mxu0 0.0
      %1581 = vmatprep.subr.mxu0 0.0
      %1582 = vmatpush1.xpose.msra.mxu0 0.0
      %1583 = vmatprep.subr.mxu0 0.0
      %1584 = vmatpush1.xpose.msra.mxu0 0.0
      %1585 = vmatprep.subr.mxu0 0.0
      %1586 = vmatpush1.xpose.msra.mxu0 0.0
      %1587 = vmatprep.subr.mxu0 0.0
      %1588 = vmatpush1.xpose.msra.mxu0 0.0
      %1589 = vmatprep.subr.mxu0 0.0
      %1590 = vmatpush1.xpose.msra.mxu0 0.0
      %1591 = vmatprep.subr.mxu0 0.0
      %1592 = vmatpush1.xpose.msra.mxu0 0.0
      %1593 = vmatprep.subr.mxu0 0.0
      %1594 = vmatpush1.xpose.msra.mxu0 0.0
      %1595 = vmatprep.subr.mxu0 0.0
      %1596 = vmatpush1.xpose.msra.mxu0 0.0
      %1597 = vmatprep.subr.mxu0 0.0
      %1598 = vmatpush1.xpose.msra.mxu0 0.0
      %1599 = vmatprep.subr.mxu0 0.0
      %1600 = vmatpush1.xpose.msra.mxu0 0.0
      %1601 = vmatprep.subr.mxu0 0.0
      %1602 = vmatpush1.xpose.msra.mxu0 0.0
      %1603 = vmatprep.subr.mxu0 0.0
      %1604 = vmatpush1.xpose.msra.mxu0 0.0
      %1605 = vmatprep.subr.mxu0 0.0
      %1606 = vmatpush1.xpose.msra.mxu0 0.0
      %1607 = vmatprep.subr.mxu0 0.0
      %1608 = vmatpush1.xpose.msra.mxu0 0.0
      %1609 = vmatprep.subr.mxu0 0.0
      %1610 = vmatpush1.xpose.msra.mxu0 0.0
      %1611 = vmatprep.subr.mxu0 0.0
      %1612 = vmatpush1.xpose.msra.mxu0 0.0
      %1613 = vmatprep.subr.mxu0 0.0
      %1614 = vmatpush1.xpose.msra.mxu0 0.0
      %1615 = vmatprep.mubr.f32.mxu0 0.0
      %1616 = vmatmul.mubr.f32.gmra.mrb[0].mxu0 %v1547
      %v1617 = vpop.f32.mrb[0].mxu0
      %v1618 = vadd.f32 0.0, %v1617
      %v1619 = vpop.f32.mrb[0].mxu0
      %1620 = vdwg.mxu0
      %v1621 = vsel %vm1144, %v1540, -inf
      %1622 = vmax.xlane.f32.xlu0 %v1621
      %v1623 = vpop.xlane.xlu0 %1622
      %v1624 = vsel %vm1144, %v1618, -inf
      %1625 = vmax.xlane.f32.xlu0 %v1624
      %v1626 = vpop.xlane.xlu0 %1625
      %v1627 = vsub.f32 %v1540, %v1623
      %v1628 = vsub.f32 %v1618, %v1626
      %v1629 = vmul.f32 %v1627, 1.442695
      %v1630 = vpow.pop %v1629
      %v1631 = vmul.f32 %v1628, 1.442695
      %v1632 = vpow.pop %v1631
      %v1633 = vsel %vm1144, %v1630, 0.0
      %1634 = vadd.xlane.f32.xlu0 %v1633
      %v1635 = vpop.xlane.xlu0 %1634
      %v1636 = vsel %vm1144, %v1632, 0.0
      %1637 = vadd.xlane.f32.xlu0 %v1636
      %v1638 = vpop.xlane.xlu0 %1637
      %v1639 = vrcp.pop %v1635
      %v1640 = vmul.f32 %v1630, %v1639
      %v1641 = vrcp.pop %v1638
      %v1642 = vmul.f32 %v1632, %v1641
      %1644 = vrot.lane.b32.xlu0 %v1136, 120
      %v1645 = vpop.permute.xlu0 %1644
      %v1648 = vsel %vm1144, %v1640, 0
      %1650 = vmatprep.subr.mxu0 0.0
      %1651 = vmatpush1.msra.mxu0 %v1645
      %1652 = vmatprep.subr.mxu0 0.0
      %1653 = vmatpush1.msra.mxu0 0.0
      %1654 = vmatprep.subr.mxu0 0.0
      %1655 = vmatpush1.msra.mxu0 0.0
      %1656 = vmatprep.subr.mxu0 0.0
      %1657 = vmatpush1.msra.mxu0 0.0
      %1658 = vmatprep.subr.mxu0 0.0
      %1659 = vmatpush1.msra.mxu0 0.0
      %1660 = vmatprep.subr.mxu0 0.0
      %1661 = vmatpush1.msra.mxu0 0.0
      %1662 = vmatprep.subr.mxu0 0.0
      %1663 = vmatpush1.msra.mxu0 0.0
      %1664 = vmatprep.subr.mxu0 0.0
      %1665 = vmatpush1.msra.mxu0 0.0
      %1666 = vmatprep.subr.mxu0 0.0
      %1667 = vmatpush1.msra.mxu0 0.0
      %1668 = vmatprep.subr.mxu0 0.0
      %1669 = vmatpush1.msra.mxu0 0.0
      %1670 = vmatprep.subr.mxu0 0.0
      %1671 = vmatpush1.msra.mxu0 0.0
      %1672 = vmatprep.subr.mxu0 0.0
      %1673 = vmatpush1.msra.mxu0 0.0
      %1674 = vmatprep.subr.mxu0 0.0
      %1675 = vmatpush1.msra.mxu0 0.0
      %1676 = vmatprep.subr.mxu0 0.0
      %1677 = vmatpush1.msra.mxu0 0.0
      %1678 = vmatprep.subr.mxu0 0.0
      %1679 = vmatpush1.msra.mxu0 0.0
      %1680 = vmatprep.subr.mxu0 0.0
      %1681 = vmatpush1.msra.mxu0 0.0
      %1682 = vmatprep.subr.mxu0 0.0
      %1683 = vmatpush1.msra.mxu0 0.0
      %1684 = vmatprep.subr.mxu0 0.0
      %1685 = vmatpush1.msra.mxu0 0.0
      %1686 = vmatprep.subr.mxu0 0.0
      %1687 = vmatpush1.msra.mxu0 0.0
      %1688 = vmatprep.subr.mxu0 0.0
      %1689 = vmatpush1.msra.mxu0 0.0
      %1690 = vmatprep.subr.mxu0 0.0
      %1691 = vmatpush1.msra.mxu0 0.0
      %1692 = vmatprep.subr.mxu0 0.0
      %1693 = vmatpush1.msra.mxu0 0.0
      %1694 = vmatprep.subr.mxu0 0.0
      %1695 = vmatpush1.msra.mxu0 0.0
      %1696 = vmatprep.subr.mxu0 0.0
      %1697 = vmatpush1.msra.mxu0 0.0
      %1698 = vmatprep.subr.mxu0 0.0
      %1699 = vmatpush1.msra.mxu0 0.0
      %1700 = vmatprep.subr.mxu0 0.0
      %1701 = vmatpush1.msra.mxu0 0.0
      %1702 = vmatprep.subr.mxu0 0.0
      %1703 = vmatpush1.msra.mxu0 0.0
      %1704 = vmatprep.subr.mxu0 0.0
      %1705 = vmatpush1.msra.mxu0 0.0
      %1706 = vmatprep.subr.mxu0 0.0
      %1707 = vmatpush1.msra.mxu0 0.0
      %1708 = vmatprep.subr.mxu0 0.0
      %1709 = vmatpush1.msra.mxu0 0.0
      %1710 = vmatprep.subr.mxu0 0.0
      %1711 = vmatpush1.msra.mxu0 0.0
      %1712 = vmatprep.subr.mxu0 0.0
      %1713 = vmatpush1.msra.mxu0 0.0
      %1714 = vmatprep.mubr.f32.mxu0 0.0
      %1715 = vmatmul.mubr.f32.gmra.mrb[0].mxu0 %v1648
      %v1716 = vpop.f32.mrb[0].mxu0
      %v1717 = vadd.f32 0.0, %v1716
      %v1718 = vpop.f32.mrb[0].mxu0
      %1719 = vdwg.mxu0
      %1721 = vrot.lane.b32.xlu0 %v1141, 120
      %v1722 = vpop.permute.xlu0 %1721
      %v1725 = vsel %vm1144, %v1642, 0
      %1727 = vmatprep.subr.mxu0 0.0
      %1728 = vmatpush1.msra.mxu0 %v1722
      %1729 = vmatprep.subr.mxu0 0.0
      %1730 = vmatpush1.msra.mxu0 0.0
      %1731 = vmatprep.subr.mxu0 0.0
      %1732 = vmatpush1.msra.mxu0 0.0
      %1733 = vmatprep.subr.mxu0 0.0
      %1734 = vmatpush1.msra.mxu0 0.0
      %1735 = vmatprep.subr.mxu0 0.0
      %1736 = vmatpush1.msra.mxu0 0.0
      %1737 = vmatprep.subr.mxu0 0.0
      %1738 = vmatpush1.msra.mxu0 0.0
      %1739 = vmatprep.subr.mxu0 0.0
      %1740 = vmatpush1.msra.mxu0 0.0
      %1741 = vmatprep.subr.mxu0 0.0
      %1742 = vmatpush1.msra.mxu0 0.0
      %1743 = vmatprep.subr.mxu0 0.0
      %1744 = vmatpush1.msra.mxu0 0.0
      %1745 = vmatprep.subr.mxu0 0.0
      %1746 = vmatpush1.msra.mxu0 0.0
      %1747 = vmatprep.subr.mxu0 0.0
      %1748 = vmatpush1.msra.mxu0 0.0
      %1749 = vmatprep.subr.mxu0 0.0
      %1750 = vmatpush1.msra.mxu0 0.0
      %1751 = vmatprep.subr.mxu0 0.0
      %1752 = vmatpush1.msra.mxu0 0.0
      %1753 = vmatprep.subr.mxu0 0.0
      %1754 = vmatpush1.msra.mxu0 0.0
      %1755 = vmatprep.subr.mxu0 0.0
      %1756 = vmatpush1.msra.mxu0 0.0
      %1757 = vmatprep.subr.mxu0 0.0
      %1758 = vmatpush1.msra.mxu0 0.0
      %1759 = vmatprep.subr.mxu0 0.0
      %1760 = vmatpush1.msra.mxu0 0.0
      %1761 = vmatprep.subr.mxu0 0.0
      %1762 = vmatpush1.msra.mxu0 0.0
      %1763 = vmatprep.subr.mxu0 0.0
      %1764 = vmatpush1.msra.mxu0 0.0
      %1765 = vmatprep.subr.mxu0 0.0
      %1766 = vmatpush1.msra.mxu0 0.0
      %1767 = vmatprep.subr.mxu0 0.0
      %1768 = vmatpush1.msra.mxu0 0.0
      %1769 = vmatprep.subr.mxu0 0.0
      %1770 = vmatpush1.msra.mxu0 0.0
      %1771 = vmatprep.subr.mxu0 0.0
      %1772 = vmatpush1.msra.mxu0 0.0
      %1773 = vmatprep.subr.mxu0 0.0
      %1774 = vmatpush1.msra.mxu0 0.0
      %1775 = vmatprep.subr.mxu0 0.0
      %1776 = vmatpush1.msra.mxu0 0.0
      %1777 = vmatprep.subr.mxu0 0.0
      %1778 = vmatpush1.msra.mxu0 0.0
      %1779 = vmatprep.subr.mxu0 0.0
      %1780 = vmatpush1.msra.mxu0 0.0
      %1781 = vmatprep.subr.mxu0 0.0
      %1782 = vmatpush1.msra.mxu0 0.0
      %1783 = vmatprep.subr.mxu0 0.0
      %1784 = vmatpush1.msra.mxu0 0.0
      %1785 = vmatprep.subr.mxu0 0.0
      %1786 = vmatpush1.msra.mxu0 0.0
      %1787 = vmatprep.subr.mxu0 0.0
      %1788 = vmatpush1.msra.mxu0 0.0
      %1789 = vmatprep.subr.mxu0 0.0
      %1790 = vmatpush1.msra.mxu0 0.0
      %1791 = vmatprep.mubr.f32.mxu0 0.0
      %1792 = vmatmul.mubr.f32.gmra.mrb[0].mxu0 %v1725
      %v1793 = vpop.f32.mrb[0].mxu0
      %v1794 = vadd.f32 0.0, %v1793
      %v1795 = vpop.f32.mrb[0].mxu0
      %1796 = vdwg.mxu0
      %1797 = vrot.lane.b32.xlu0 %v992, 112
      %v1798 = vpop.permute.xlu0 %1797
      %1799 = vrot.lane.b32.xlu0 %v1061, 112
      %v1800 = vpop.permute.xlu0 %1799
      %v1801 = vsel %vm1144, %v1798, 0
      %v1803 = vsel %vm1144, %v1800, 0
      %1805 = vmatprep.subr.mxu0 0.0
      %1806 = vmatpush1.xpose.msra.mxu0 %v1803
      %1807 = vmatprep.subr.mxu0 0.0
      %1808 = vmatpush1.xpose.msra.mxu0 0.0
      %1809 = vmatprep.subr.mxu0 0.0
      %1810 = vmatpush1.xpose.msra.mxu0 0.0
      %1811 = vmatprep.subr.mxu0 0.0
      %1812 = vmatpush1.xpose.msra.mxu0 0.0
      %1813 = vmatprep.subr.mxu0 0.0
      %1814 = vmatpush1.xpose.msra.mxu0 0.0
      %1815 = vmatprep.subr.mxu0 0.0
      %1816 = vmatpush1.xpose.msra.mxu0 0.0
      %1817 = vmatprep.subr.mxu0 0.0
      %1818 = vmatpush1.xpose.msra.mxu0 0.0
      %1819 = vmatprep.subr.mxu0 0.0
      %1820 = vmatpush1.xpose.msra.mxu0 0.0
      %1821 = vmatprep.subr.mxu0 0.0
      %1822 = vmatpush1.xpose.msra.mxu0 0.0
      %1823 = vmatprep.subr.mxu0 0.0
      %1824 = vmatpush1.xpose.msra.mxu0 0.0
      %1825 = vmatprep.subr.mxu0 0.0
      %1826 = vmatpush1.xpose.msra.mxu0 0.0
      %1827 = vmatprep.subr.mxu0 0.0
      %1828 = vmatpush1.xpose.msra.mxu0 0.0
      %1829 = vmatprep.subr.mxu0 0.0
      %1830 = vmatpush1.xpose.msra.mxu0 0.0
      %1831 = vmatprep.subr.mxu0 0.0
      %1832 = vmatpush1.xpose.msra.mxu0 0.0
      %1833 = vmatprep.subr.mxu0 0.0
      %1834 = vmatpush1.xpose.msra.mxu0 0.0
      %1835 = vmatprep.subr.mxu0 0.0
      %1836 = vmatpush1.xpose.msra.mxu0 0.0
      %1837 = vmatprep.subr.mxu0 0.0
      %1838 = vmatpush1.xpose.msra.mxu0 0.0
      %1839 = vmatprep.subr.mxu0 0.0
      %1840 = vmatpush1.xpose.msra.mxu0 0.0
      %1841 = vmatprep.subr.mxu0 0.0
      %1842 = vmatpush1.xpose.msra.mxu0 0.0
      %1843 = vmatprep.subr.mxu0 0.0
      %1844 = vmatpush1.xpose.msra.mxu0 0.0
      %1845 = vmatprep.subr.mxu0 0.0
      %1846 = vmatpush1.xpose.msra.mxu0 0.0
      %1847 = vmatprep.subr.mxu0 0.0
      %1848 = vmatpush1.xpose.msra.mxu0 0.0
      %1849 = vmatprep.subr.mxu0 0.0
      %1850 = vmatpush1.xpose.msra.mxu0 0.0
      %1851 = vmatprep.subr.mxu0 0.0
      %1852 = vmatpush1.xpose.msra.mxu0 0.0
      %1853 = vmatprep.subr.mxu0 0.0
      %1854 = vmatpush1.xpose.msra.mxu0 0.0
      %1855 = vmatprep.subr.mxu0 0.0
      %1856 = vmatpush1.xpose.msra.mxu0 0.0
      %1857 = vmatprep.subr.mxu0 0.0
      %1858 = vmatpush1.xpose.msra.mxu0 0.0
      %1859 = vmatprep.subr.mxu0 0.0
      %1860 = vmatpush1.xpose.msra.mxu0 0.0
      %1861 = vmatprep.subr.mxu0 0.0
      %1862 = vmatpush1.xpose.msra.mxu0 0.0
      %1863 = vmatprep.subr.mxu0 0.0
      %1864 = vmatpush1.xpose.msra.mxu0 0.0
      %1865 = vmatprep.subr.mxu0 0.0
      %1866 = vmatpush1.xpose.msra.mxu0 0.0
      %1867 = vmatprep.subr.mxu0 0.0
      %1868 = vmatpush1.xpose.msra.mxu0 0.0
      %1869 = vmatprep.mubr.f32.mxu0 0.0
      %1870 = vmatmul.mubr.f32.gmra.mrb[0].mxu0 %v1801
      %v1871 = vpop.f32.mrb[0].mxu0
      %v1872 = vadd.f32 0.0, %v1871
      %v1873 = vpop.f32.mrb[0].mxu0
      %1874 = vdwg.mxu0
      %1875 = vrot.lane.b32.xlu0 %v993, 112
      %v1876 = vpop.permute.xlu0 %1875
      %1877 = vrot.lane.b32.xlu0 %v1066, 112
      %v1878 = vpop.permute.xlu0 %1877
      %v1879 = vsel %vm1144, %v1876, 0
      %v1881 = vsel %vm1144, %v1878, 0
      %1883 = vmatprep.subr.mxu0 0.0
      %1884 = vmatpush1.xpose.msra.mxu0 %v1881
      %1885 = vmatprep.subr.mxu0 0.0
      %1886 = vmatpush1.xpose.msra.mxu0 0.0
      %1887 = vmatprep.subr.mxu0 0.0
      %1888 = vmatpush1.xpose.msra.mxu0 0.0
      %1889 = vmatprep.subr.mxu0 0.0
      %1890 = vmatpush1.xpose.msra.mxu0 0.0
      %1891 = vmatprep.subr.mxu0 0.0
      %1892 = vmatpush1.xpose.msra.mxu0 0.0
      %1893 = vmatprep.subr.mxu0 0.0
      %1894 = vmatpush1.xpose.msra.mxu0 0.0
      %1895 = vmatprep.subr.mxu0 0.0
      %1896 = vmatpush1.xpose.msra.mxu0 0.0
      %1897 = vmatprep.subr.mxu0 0.0
      %1898 = vmatpush1.xpose.msra.mxu0 0.0
      %1899 = vmatprep.subr.mxu0 0.0
      %1900 = vmatpush1.xpose.msra.mxu0 0.0
      %1901 = vmatprep.subr.mxu0 0.0
      %1902 = vmatpush1.xpose.msra.mxu0 0.0
      %1903 = vmatprep.subr.mxu0 0.0
      %1904 = vmatpush1.xpose.msra.mxu0 0.0
      %1905 = vmatprep.subr.mxu0 0.0
      %1906 = vmatpush1.xpose.msra.mxu0 0.0
      %1907 = vmatprep.subr.mxu0 0.0
      %1908 = vmatpush1.xpose.msra.mxu0 0.0
      %1909 = vmatprep.subr.mxu0 0.0
      %1910 = vmatpush1.xpose.msra.mxu0 0.0
      %1911 = vmatprep.subr.mxu0 0.0
      %1912 = vmatpush1.xpose.msra.mxu0 0.0
      %1913 = vmatprep.subr.mxu0 0.0
      %1914 = vmatpush1.xpose.msra.mxu0 0.0
      %1915 = vmatprep.subr.mxu0 0.0
      %1916 = vmatpush1.xpose.msra.mxu0 0.0
      %1917 = vmatprep.subr.mxu0 0.0
      %1918 = vmatpush1.xpose.msra.mxu0 0.0
      %1919 = vmatprep.subr.mxu0 0.0
      %1920 = vmatpush1.xpose.msra.mxu0 0.0
      %1921 = vmatprep.subr.mxu0 0.0
      %1922 = vmatpush1.xpose.msra.mxu0 0.0
      %1923 = vmatprep.subr.mxu0 0.0
      %1924 = vmatpush1.xpose.msra.mxu0 0.0
      %1925 = vmatprep.subr.mxu0 0.0
      %1926 = vmatpush1.xpose.msra.mxu0 0.0
      %1927 = vmatprep.subr.mxu0 0.0
      %1928 = vmatpush1.xpose.msra.mxu0 0.0
      %1929 = vmatprep.subr.mxu0 0.0
      %1930 = vmatpush1.xpose.msra.mxu0 0.0
      %1931 = vmatprep.subr.mxu0 0.0
      %1932 = vmatpush1.xpose.msra.mxu0 0.0
      %1933 = vmatprep.subr.mxu0 0.0
      %1934 = vmatpush1.xpose.msra.mxu0 0.0
      %1935 = vmatprep.subr.mxu0 0.0
      %1936 = vmatpush1.xpose.msra.mxu0 0.0
      %1937 = vmatprep.subr.mxu0 0.0
      %1938 = vmatpush1.xpose.msra.mxu0 0.0
      %1939 = vmatprep.subr.mxu0 0.0
      %1940 = vmatpush1.xpose.msra.mxu0 0.0
      %1941 = vmatprep.subr.mxu0 0.0
      %1942 = vmatpush1.xpose.msra.mxu0 0.0
      %1943 = vmatprep.subr.mxu0 0.0
      %1944 = vmatpush1.xpose.msra.mxu0 0.0
      %1945 = vmatprep.subr.mxu0 0.0
      %1946 = vmatpush1.xpose.msra.mxu0 0.0
      %1947 = vmatprep.mubr.f32.mxu0 0.0
      %1948 = vmatmul.mubr.f32.gmra.mrb[0].mxu0 %v1879
      %v1949 = vpop.f32.mrb[0].mxu0
      %v1950 = vadd.f32 0.0, %v1949
      %v1951 = vpop.f32.mrb[0].mxu0
      %1952 = vdwg.mxu0
      %v1953 = vsel %vm1144, %v1872, -inf
      %1954 = vmax.xlane.f32.xlu0 %v1953
      %v1955 = vpop.xlane.xlu0 %1954
      %v1956 = vsel %vm1144, %v1950, -inf
      %1957 = vmax.xlane.f32.xlu0 %v1956
      %v1958 = vpop.xlane.xlu0 %1957
      %v1959 = vsub.f32 %v1872, %v1955
      %v1960 = vsub.f32 %v1950, %v1958
      %v1961 = vmul.f32 %v1959, 1.442695
      %v1962 = vpow.pop %v1961
      %v1963 = vmul.f32 %v1960, 1.442695
      %v1964 = vpow.pop %v1963
      %v1965 = vsel %vm1144, %v1962, 0.0
      %1966 = vadd.xlane.f32.xlu0 %v1965
      %v1967 = vpop.xlane.xlu0 %1966
      %v1968 = vsel %vm1144, %v1964, 0.0
      %1969 = vadd.xlane.f32.xlu0 %v1968
      %v1970 = vpop.xlane.xlu0 %1969
      %v1971 = vrcp.pop %v1967
      %v1972 = vmul.f32 %v1962, %v1971
      %v1973 = vrcp.pop %v1970
      %v1974 = vmul.f32 %v1964, %v1973
      %1975 = vrot.lane.b32.xlu0 %v1136, 112
      %v1976 = vpop.permute.xlu0 %1975
      %v1979 = vsel %vm1144, %v1972, 0
      %1981 = vmatprep.subr.mxu0 0.0
      %1982 = vmatpush1.msra.mxu0 %v1976
      %1983 = vmatprep.subr.mxu0 0.0
      %1984 = vmatpush1.msra.mxu0 0.0
      %1985 = vmatprep.subr.mxu0 0.0
      %1986 = vmatpush1.msra.mxu0 0.0
      %1987 = vmatprep.subr.mxu0 0.0
      %1988 = vmatpush1.msra.mxu0 0.0
      %1989 = vmatprep.subr.mxu0 0.0
      %1990 = vmatpush1.msra.mxu0 0.0
      %1991 = vmatprep.subr.mxu0 0.0
      %1992 = vmatpush1.msra.mxu0 0.0
      %1993 = vmatprep.subr.mxu0 0.0
      %1994 = vmatpush1.msra.mxu0 0.0
      %1995 = vmatprep.subr.mxu0 0.0
      %1996 = vmatpush1.msra.mxu0 0.0
      %1997 = vmatprep.subr.mxu0 0.0
      %1998 = vmatpush1.msra.mxu0 0.0
      %1999 = vmatprep.subr.mxu0 0.0
      %2000 = vmatpush1.msra.mxu0 0.0
      %2001 = vmatprep.subr.mxu0 0.0
      %2002 = vmatpush1.msra.mxu0 0.0
      %2003 = vmatprep.subr.mxu0 0.0
      %2004 = vmatpush1.msra.mxu0 0.0
      %2005 = vmatprep.subr.mxu0 0.0
      %2006 = vmatpush1.msra.mxu0 0.0
      %2007 = vmatprep.subr.mxu0 0.0
      %2008 = vmatpush1.msra.mxu0 0.0
      %2009 = vmatprep.subr.mxu0 0.0
      %2010 = vmatpush1.msra.mxu0 0.0
      %2011 = vmatprep.subr.mxu0 0.0
      %2012 = vmatpush1.msra.mxu0 0.0
      %2013 = vmatprep.subr.mxu0 0.0
      %2014 = vmatpush1.msra.mxu0 0.0
      %2015 = vmatprep.subr.mxu0 0.0
      %2016 = vmatpush1.msra.mxu0 0.0
      %2017 = vmatprep.subr.mxu0 0.0
      %2018 = vmatpush1.msra.mxu0 0.0
      %2019 = vmatprep.subr.mxu0 0.0
      %2020 = vmatpush1.msra.mxu0 0.0
      %2021 = vmatprep.subr.mxu0 0.0
      %2022 = vmatpush1.msra.mxu0 0.0
      %2023 = vmatprep.subr.mxu0 0.0
      %2024 = vmatpush1.msra.mxu0 0.0
      %2025 = vmatprep.subr.mxu0 0.0
      %2026 = vmatpush1.msra.mxu0 0.0
      %2027 = vmatprep.subr.mxu0 0.0
      %2028 = vmatpush1.msra.mxu0 0.0
      %2029 = vmatprep.subr.mxu0 0.0
      %2030 = vmatpush1.msra.mxu0 0.0
      %2031 = vmatprep.subr.mxu0 0.0
      %2032 = vmatpush1.msra.mxu0 0.0
      %2033 = vmatprep.subr.mxu0 0.0
      %2034 = vmatpush1.msra.mxu0 0.0
      %2035 = vmatprep.subr.mxu0 0.0
      %2036 = vmatpush1.msra.mxu0 0.0
      %2037 = vmatprep.subr.mxu0 0.0
      %2038 = vmatpush1.msra.mxu0 0.0
      %2039 = vmatprep.subr.mxu0 0.0
      %2040 = vmatpush1.msra.mxu0 0.0
      %2041 = vmatprep.subr.mxu0 0.0
      %2042 = vmatpush1.msra.mxu0 0.0
      %2043 = vmatprep.subr.mxu0 0.0
      %2044 = vmatpush1.msra.mxu0 0.0
      %2045 = vmatprep.mubr.f32.mxu0 0.0
      %2046 = vmatmul.mubr.f32.gmra.mrb[0].mxu0 %v1979
      %v2047 = vpop.f32.mrb[0].mxu0
      %v2048 = vadd.f32 0.0, %v2047
      %v2049 = vpop.f32.mrb[0].mxu0
      %2050 = vdwg.mxu0
      %2051 = vrot.lane.b32.xlu0 %v1141, 112
      %v2052 = vpop.permute.xlu0 %2051
      %v2055 = vsel %vm1144, %v1974, 0
      %2057 = vmatprep.subr.mxu0 0.0
      %2058 = vmatpush1.msra.mxu0 %v2052
      %2059 = vmatprep.subr.mxu0 0.0
      %2060 = vmatpush1.msra.mxu0 0.0
      %2061 = vmatprep.subr.mxu0 0.0
      %2062 = vmatpush1.msra.mxu0 0.0
      %2063 = vmatprep.subr.mxu0 0.0
      %2064 = vmatpush1.msra.mxu0 0.0
      %2065 = vmatprep.subr.mxu0 0.0
      %2066 = vmatpush1.msra.mxu0 0.0
      %2067 = vmatprep.subr.mxu0 0.0
      %2068 = vmatpush1.msra.mxu0 0.0
      %2069 = vmatprep.subr.mxu0 0.0
      %2070 = vmatpush1.msra.mxu0 0.0
      %2071 = vmatprep.subr.mxu0 0.0
      %2072 = vmatpush1.msra.mxu0 0.0
      %2073 = vmatprep.subr.mxu0 0.0
      %2074 = vmatpush1.msra.mxu0 0.0
      %2075 = vmatprep.subr.mxu0 0.0
      %2076 = vmatpush1.msra.mxu0 0.0
      %2077 = vmatprep.subr.mxu0 0.0
      %2078 = vmatpush1.msra.mxu0 0.0
      %2079 = vmatprep.subr.mxu0 0.0
      %2080 = vmatpush1.msra.mxu0 0.0
      %2081 = vmatprep.subr.mxu0 0.0
      %2082 = vmatpush1.msra.mxu0 0.0
      %2083 = vmatprep.subr.mxu0 0.0
      %2084 = vmatpush1.msra.mxu0 0.0
      %2085 = vmatprep.subr.mxu0 0.0
      %2086 = vmatpush1.msra.mxu0 0.0
      %2087 = vmatprep.subr.mxu0 0.0
      %2088 = vmatpush1.msra.mxu0 0.0
      %2089 = vmatprep.subr.mxu0 0.0
      %2090 = vmatpush1.msra.mxu0 0.0
      %2091 = vmatprep.subr.mxu0 0.0
      %2092 = vmatpush1.msra.mxu0 0.0
      %2093 = vmatprep.subr.mxu0 0.0
      %2094 = vmatpush1.msra.mxu0 0.0
      %2095 = vmatprep.subr.mxu0 0.0
      %2096 = vmatpush1.msra.mxu0 0.0
      %2097 = vmatprep.subr.mxu0 0.0
      %2098 = vmatpush1.msra.mxu0 0.0
      %2099 = vmatprep.subr.mxu0 0.0
      %2100 = vmatpush1.msra.mxu0 0.0
      %2101 = vmatprep.subr.mxu0 0.0
      %2102 = vmatpush1.msra.mxu0 0.0
      %2103 = vmatprep.subr.mxu0 0.0
      %2104 = vmatpush1.msra.mxu0 0.0
      %2105 = vmatprep.subr.mxu0 0.0
      %2106 = vmatpush1.msra.mxu0 0.0
      %2107 = vmatprep.subr.mxu0 0.0
      %2108 = vmatpush1.msra.mxu0 0.0
      %2109 = vmatprep.subr.mxu0 0.0
      %2110 = vmatpush1.msra.mxu0 0.0
      %2111 = vmatprep.subr.mxu0 0.0
      %2112 = vmatpush1.msra.mxu0 0.0
      %2113 = vmatprep.subr.mxu0 0.0
      %2114 = vmatpush1.msra.mxu0 0.0
      %2115 = vmatprep.subr.mxu0 0.0
      %2116 = vmatpush1.msra.mxu0 0.0
      %2117 = vmatprep.subr.mxu0 0.0
      %2118 = vmatpush1.msra.mxu0 0.0
      %2119 = vmatprep.subr.mxu0 0.0
      %2120 = vmatpush1.msra.mxu0 0.0
      %2121 = vmatprep.mubr.f32.mxu0 0.0
      %2122 = vmatmul.mubr.f32.gmra.mrb[0].mxu0 %v2055
      %v2123 = vpop.f32.mrb[0].mxu0
      %v2124 = vadd.f32 0.0, %v2123
      %v2125 = vpop.f32.mrb[0].mxu0
      %2126 = vdwg.mxu0
      %2127 = vrot.lane.b32.xlu0 %v992, 104
      %v2128 = vpop.permute.xlu0 %2127
      %2129 = vrot.lane.b32.xlu0 %v1061, 104
      %v2130 = vpop.permute.xlu0 %2129
      %v2131 = vsel %vm1144, %v2128, 0
      %v2133 = vsel %vm1144, %v2130, 0
      %2135 = vmatprep.subr.mxu0 0.0
      %2136 = vmatpush1.xpose.msra.mxu0 %v2133
      %2137 = vmatprep.subr.mxu0 0.0
      %2138 = vmatpush1.xpose.msra.mxu0 0.0
      %2139 = vmatprep.subr.mxu0 0.0
      %2140 = vmatpush1.xpose.msra.mxu0 0.0
      %2141 = vmatprep.subr.mxu0 0.0
      %2142 = vmatpush1.xpose.msra.mxu0 0.0
      %2143 = vmatprep.subr.mxu0 0.0
      %2144 = vmatpush1.xpose.msra.mxu0 0.0
      %2145 = vmatprep.subr.mxu0 0.0
      %2146 = vmatpush1.xpose.msra.mxu0 0.0
      %2147 = vmatprep.subr.mxu0 0.0
      %2148 = vmatpush1.xpose.msra.mxu0 0.0
      %2149 = vmatprep.subr.mxu0 0.0
      %2150 = vmatpush1.xpose.msra.mxu0 0.0
      %2151 = vmatprep.subr.mxu0 0.0
      %2152 = vmatpush1.xpose.msra.mxu0 0.0
      %2153 = vmatprep.subr.mxu0 0.0
      %2154 = vmatpush1.xpose.msra.mxu0 0.0
      %2155 = vmatprep.subr.mxu0 0.0
      %2156 = vmatpush1.xpose.msra.mxu0 0.0
      %2157 = vmatprep.subr.mxu0 0.0
      %2158 = vmatpush1.xpose.msra.mxu0 0.0
      %2159 = vmatprep.subr.mxu0 0.0
      %2160 = vmatpush1.xpose.msra.mxu0 0.0
      %2161 = vmatprep.subr.mxu0 0.0
      %2162 = vmatpush1.xpose.msra.mxu0 0.0
      %2163 = vmatprep.subr.mxu0 0.0
      %2164 = vmatpush1.xpose.msra.mxu0 0.0
      %2165 = vmatprep.subr.mxu0 0.0
      %2166 = vmatpush1.xpose.msra.mxu0 0.0
      %2167 = vmatprep.subr.mxu0 0.0
      %2168 = vmatpush1.xpose.msra.mxu0 0.0
      %2169 = vmatprep.subr.mxu0 0.0
      %2170 = vmatpush1.xpose.msra.mxu0 0.0
      %2171 = vmatprep.subr.mxu0 0.0
      %2172 = vmatpush1.xpose.msra.mxu0 0.0
      %2173 = vmatprep.subr.mxu0 0.0
      %2174 = vmatpush1.xpose.msra.mxu0 0.0
      %2175 = vmatprep.subr.mxu0 0.0
      %2176 = vmatpush1.xpose.msra.mxu0 0.0
      %2177 = vmatprep.subr.mxu0 0.0
      %2178 = vmatpush1.xpose.msra.mxu0 0.0
      %2179 = vmatprep.subr.mxu0 0.0
      %2180 = vmatpush1.xpose.msra.mxu0 0.0
      %2181 = vmatprep.subr.mxu0 0.0
      %2182 = vmatpush1.xpose.msra.mxu0 0.0
      %2183 = vmatprep.subr.mxu0 0.0
      %2184 = vmatpush1.xpose.msra.mxu0 0.0
      %2185 = vmatprep.subr.mxu0 0.0
      %2186 = vmatpush1.xpose.msra.mxu0 0.0
      %2187 = vmatprep.subr.mxu0 0.0
      %2188 = vmatpush1.xpose.msra.mxu0 0.0
      %2189 = vmatprep.subr.mxu0 0.0
      %2190 = vmatpush1.xpose.msra.mxu0 0.0
      %2191 = vmatprep.subr.mxu0 0.0
      %2192 = vmatpush1.xpose.msra.mxu0 0.0
      %2193 = vmatprep.subr.mxu0 0.0
      %2194 = vmatpush1.xpose.msra.mxu0 0.0
      %2195 = vmatprep.subr.mxu0 0.0
      %2196 = vmatpush1.xpose.msra.mxu0 0.0
      %2197 = vmatprep.subr.mxu0 0.0
      %2198 = vmatpush1.xpose.msra.mxu0 0.0
      %2199 = vmatprep.mubr.f32.mxu0 0.0
      %2200 = vmatmul.mubr.f32.gmra.mrb[0].mxu0 %v2131
      %v2201 = vpop.f32.mrb[0].mxu0
      %v2202 = vadd.f32 0.0, %v2201
      %v2203 = vpop.f32.mrb[0].mxu0
      %2204 = vdwg.mxu0
      %2205 = vrot.lane.b32.xlu0 %v993, 104
      %v2206 = vpop.permute.xlu0 %2205
      %2207 = vrot.lane.b32.xlu0 %v1066, 104
      %v2208 = vpop.permute.xlu0 %2207
      %v2209 = vsel %vm1144, %v2206, 0
      %v2211 = vsel %vm1144, %v2208, 0
      %2213 = vmatprep.subr.mxu0 0.0
      %2214 = vmatpush1.xpose.msra.mxu0 %v2211
      %2215 = vmatprep.subr.mxu0 0.0
      %2216 = vmatpush1.xpose.msra.mxu0 0.0
      %2217 = vmatprep.subr.mxu0 0.0
      %2218 = vmatpush1.xpose.msra.mxu0 0.0
      %2219 = vmatprep.subr.mxu0 0.0
      %2220 = vmatpush1.xpose.msra.mxu0 0.0
      %2221 = vmatprep.subr.mxu0 0.0
      %2222 = vmatpush1.xpose.msra.mxu0 0.0
      %2223 = vmatprep.subr.mxu0 0.0
      %2224 = vmatpush1.xpose.msra.mxu0 0.0
      %2225 = vmatprep.subr.mxu0 0.0
      %2226 = vmatpush1.xpose.msra.mxu0 0.0
      %2227 = vmatprep.subr.mxu0 0.0
      %2228 = vmatpush1.xpose.msra.mxu0 0.0
      %2229 = vmatprep.subr.mxu0 0.0
      %2230 = vmatpush1.xpose.msra.mxu0 0.0
      %2231 = vmatprep.subr.mxu0 0.0
      %2232 = vmatpush1.xpose.msra.mxu0 0.0
      %2233 = vmatprep.subr.mxu0 0.0
      %2234 = vmatpush1.xpose.msra.mxu0 0.0
      %2235 = vmatprep.subr.mxu0 0.0
      %2236 = vmatpush1.xpose.msra.mxu0 0.0
      %2237 = vmatprep.subr.mxu0 0.0
      %2238 = vmatpush1.xpose.msra.mxu0 0.0
      %2239 = vmatprep.subr.mxu0 0.0
      %2240 = vmatpush1.xpose.msra.mxu0 0.0
      %2241 = vmatprep.subr.mxu0 0.0
      %2242 = vmatpush1.xpose.msra.mxu0 0.0
      %2243 = vmatprep.subr.mxu0 0.0
      %2244 = vmatpush1.xpose.msra.mxu0 0.0
      %2245 = vmatprep.subr.mxu0 0.0
      %2246 = vmatpush1.xpose.msra.mxu0 0.0
      %2247 = vmatprep.subr.mxu0 0.0
      %2248 = vmatpush1.xpose.msra.mxu0 0.0
      %2249 = vmatprep.subr.mxu0 0.0
      %2250 = vmatpush1.xpose.msra.mxu0 0.0
      %2251 = vmatprep.subr.mxu0 0.0
      %2252 = vmatpush1.xpose.msra.mxu0 0.0
      %2253 = vmatprep.subr.mxu0 0.0
      %2254 = vmatpush1.xpose.msra.mxu0 0.0
      %2255 = vmatprep.subr.mxu0 0.0
      %2256 = vmatpush1.xpose.msra.mxu0 0.0
      %2257 = vmatprep.subr.mxu0 0.0
      %2258 = vmatpush1.xpose.msra.mxu0 0.0
      %2259 = vmatprep.subr.mxu0 0.0
      %2260 = vmatpush1.xpose.msra.mxu0 0.0
      %2261 = vmatprep.subr.mxu0 0.0
      %2262 = vmatpush1.xpose.msra.mxu0 0.0
      %2263 = vmatprep.subr.mxu0 0.0
      %2264 = vmatpush1.xpose.msra.mxu0 0.0
      %2265 = vmatprep.subr.mxu0 0.0
      %2266 = vmatpush1.xpose.msra.mxu0 0.0
      %2267 = vmatprep.subr.mxu0 0.0
      %2268 = vmatpush1.xpose.msra.mxu0 0.0
      %2269 = vmatprep.subr.mxu0 0.0
      %2270 = vmatpush1.xpose.msra.mxu0 0.0
      %2271 = vmatprep.subr.mxu0 0.0
      %2272 = vmatpush1.xpose.msra.mxu0 0.0
      %2273 = vmatprep.subr.mxu0 0.0
      %2274 = vmatpush1.xpose.msra.mxu0 0.0
      %2275 = vmatprep.subr.mxu0 0.0
      %2276 = vmatpush1.xpose.msra.mxu0 0.0
      %2277 = vmatprep.mubr.f32.mxu0 0.0
      %2278 = vmatmul.mubr.f32.gmra.mrb[0].mxu0 %v2209
      %v2279 = vpop.f32.mrb[0].mxu0
      %v2280 = vadd.f32 0.0, %v2279
      %v2281 = vpop.f32.mrb[0].mxu0
      %2282 = vdwg.mxu0
      %v2283 = vsel %vm1144, %v2202, -inf
      %2284 = vmax.xlane.f32.xlu0 %v2283
      %v2285 = vpop.xlane.xlu0 %2284
      %v2286 = vsel %vm1144, %v2280, -inf
      %2287 = vmax.xlane.f32.xlu0 %v2286
      %v2288 = vpop.xlane.xlu0 %2287
      %v2289 = vsub.f32 %v2202, %v2285
      %v2290 = vsub.f32 %v2280, %v2288
      %v2291 = vmul.f32 %v2289, 1.442695
      %v2292 = vpow.pop %v2291
      %v2293 = vmul.f32 %v2290, 1.442695
      %v2294 = vpow.pop %v2293
      %v2295 = vsel %vm1144, %v2292, 0.0
      %2296 = vadd.xlane.f32.xlu0 %v2295
      %v2297 = vpop.xlane.xlu0 %2296
      %v2298 = vsel %vm1144, %v2294, 0.0
      %2299 = vadd.xlane.f32.xlu0 %v2298
      %v2300 = vpop.xlane.xlu0 %2299
      %v2301 = vrcp.pop %v2297
      %v2302 = vmul.f32 %v2292, %v2301
      %v2303 = vrcp.pop %v2300
      %v2304 = vmul.f32 %v2294, %v2303
      %2305 = vrot.lane.b32.xlu0 %v1136, 104
      %v2306 = vpop.permute.xlu0 %2305
      %v2309 = vsel %vm1144, %v2302, 0
      %2311 = vmatprep.subr.mxu0 0.0
      %2312 = vmatpush1.msra.mxu0 %v2306
      %2313 = vmatprep.subr.mxu0 0.0
      %2314 = vmatpush1.msra.mxu0 0.0
      %2315 = vmatprep.subr.mxu0 0.0
      %2316 = vmatpush1.msra.mxu0 0.0
      %2317 = vmatprep.subr.mxu0 0.0
      %2318 = vmatpush1.msra.mxu0 0.0
      %2319 = vmatprep.subr.mxu0 0.0
      %2320 = vmatpush1.msra.mxu0 0.0
      %2321 = vmatprep.subr.mxu0 0.0
      %2322 = vmatpush1.msra.mxu0 0.0
      %2323 = vmatprep.subr.mxu0 0.0
      %2324 = vmatpush1.msra.mxu0 0.0
      %2325 = vmatprep.subr.mxu0 0.0
      %2326 = vmatpush1.msra.mxu0 0.0
      %2327 = vmatprep.subr.mxu0 0.0
      %2328 = vmatpush1.msra.mxu0 0.0
      %2329 = vmatprep.subr.mxu0 0.0
      %2330 = vmatpush1.msra.mxu0 0.0
      %2331 = vmatprep.subr.mxu0 0.0
      %2332 = vmatpush1.msra.mxu0 0.0
      %2333 = vmatprep.subr.mxu0 0.0
      %2334 = vmatpush1.msra.mxu0 0.0
      %2335 = vmatprep.subr.mxu0 0.0
      %2336 = vmatpush1.msra.mxu0 0.0
      %2337 = vmatprep.subr.mxu0 0.0
      %2338 = vmatpush1.msra.mxu0 0.0
      %2339 = vmatprep.subr.mxu0 0.0
      %2340 = vmatpush1.msra.mxu0 0.0
      %2341 = vmatprep.subr.mxu0 0.0
      %2342 = vmatpush1.msra.mxu0 0.0
      %2343 = vmatprep.subr.mxu0 0.0
      %2344 = vmatpush1.msra.mxu0 0.0
      %2345 = vmatprep.subr.mxu0 0.0
      %2346 = vmatpush1.msra.mxu0 0.0
      %2347 = vmatprep.subr.mxu0 0.0
      %2348 = vmatpush1.msra.mxu0 0.0
      %2349 = vmatprep.subr.mxu0 0.0
      %2350 = vmatpush1.msra.mxu0 0.0
      %2351 = vmatprep.subr.mxu0 0.0
      %2352 = vmatpush1.msra.mxu0 0.0
      %2353 = vmatprep.subr.mxu0 0.0
      %2354 = vmatpush1.msra.mxu0 0.0
      %2355 = vmatprep.subr.mxu0 0.0
      %2356 = vmatpush1.msra.mxu0 0.0
      %2357 = vmatprep.subr.mxu0 0.0
      %2358 = vmatpush1.msra.mxu0 0.0
      %2359 = vmatprep.subr.mxu0 0.0
      %2360 = vmatpush1.msra.mxu0 0.0
      %2361 = vmatprep.subr.mxu0 0.0
      %2362 = vmatpush1.msra.mxu0 0.0
      %2363 = vmatprep.subr.mxu0 0.0
      %2364 = vmatpush1.msra.mxu0 0.0
      %2365 = vmatprep.subr.mxu0 0.0
      %2366 = vmatpush1.msra.mxu0 0.0
      %2367 = vmatprep.subr.mxu0 0.0
      %2368 = vmatpush1.msra.mxu0 0.0
      %2369 = vmatprep.subr.mxu0 0.0
      %2370 = vmatpush1.msra.mxu0 0.0
      %2371 = vmatprep.subr.mxu0 0.0
      %2372 = vmatpush1.msra.mxu0 0.0
      %2373 = vmatprep.subr.mxu0 0.0
      %2374 = vmatpush1.msra.mxu0 0.0
      %2375 = vmatprep.mubr.f32.mxu0 0.0
      %2376 = vmatmul.mubr.f32.gmra.mrb[0].mxu0 %v2309
      %v2377 = vpop.f32.mrb[0].mxu0
      %v2378 = vadd.f32 0.0, %v2377
      %v2379 = vpop.f32.mrb[0].mxu0
      %2380 = vdwg.mxu0
      %2381 = vrot.lane.b32.xlu0 %v1141, 104
      %v2382 = vpop.permute.xlu0 %2381
      %v2385 = vsel %vm1144, %v2304, 0
      %2387 = vmatprep.subr.mxu0 0.0
      %2388 = vmatpush1.msra.mxu0 %v2382
      %2389 = vmatprep.subr.mxu0 0.0
      %2390 = vmatpush1.msra.mxu0 0.0
      %2391 = vmatprep.subr.mxu0 0.0
      %2392 = vmatpush1.msra.mxu0 0.0
      %2393 = vmatprep.subr.mxu0 0.0
      %2394 = vmatpush1.msra.mxu0 0.0
      %2395 = vmatprep.subr.mxu0 0.0
      %2396 = vmatpush1.msra.mxu0 0.0
      %2397 = vmatprep.subr.mxu0 0.0
      %2398 = vmatpush1.msra.mxu0 0.0
      %2399 = vmatprep.subr.mxu0 0.0
      %2400 = vmatpush1.msra.mxu0 0.0
      %2401 = vmatprep.subr.mxu0 0.0
      %2402 = vmatpush1.msra.mxu0 0.0
      %2403 = vmatprep.subr.mxu0 0.0
      %2404 = vmatpush1.msra.mxu0 0.0
      %2405 = vmatprep.subr.mxu0 0.0
      %2406 = vmatpush1.msra.mxu0 0.0
      %2407 = vmatprep.subr.mxu0 0.0
      %2408 = vmatpush1.msra.mxu0 0.0
      %2409 = vmatprep.subr.mxu0 0.0
      %2410 = vmatpush1.msra.mxu0 0.0
      %2411 = vmatprep.subr.mxu0 0.0
      %2412 = vmatpush1.msra.mxu0 0.0
      %2413 = vmatprep.subr.mxu0 0.0
      %2414 = vmatpush1.msra.mxu0 0.0
      %2415 = vmatprep.subr.mxu0 0.0
      %2416 = vmatpush1.msra.mxu0 0.0
      %2417 = vmatprep.subr.mxu0 0.0
      %2418 = vmatpush1.msra.mxu0 0.0
      %2419 = vmatprep.subr.mxu0 0.0
      %2420 = vmatpush1.msra.mxu0 0.0
      %2421 = vmatprep.subr.mxu0 0.0
      %2422 = vmatpush1.msra.mxu0 0.0
      %2423 = vmatprep.subr.mxu0 0.0
      %2424 = vmatpush1.msra.mxu0 0.0
      %2425 = vmatprep.subr.mxu0 0.0
      %2426 = vmatpush1.msra.mxu0 0.0
      %2427 = vmatprep.subr.mxu0 0.0
      %2428 = vmatpush1.msra.mxu0 0.0
      %2429 = vmatprep.subr.mxu0 0.0
      %2430 = vmatpush1.msra.mxu0 0.0
      %2431 = vmatprep.subr.mxu0 0.0
      %2432 = vmatpush1.msra.mxu0 0.0
      %2433 = vmatprep.subr.mxu0 0.0
      %2434 = vmatpush1.msra.mxu0 0.0
      %2435 = vmatprep.subr.mxu0 0.0
      %2436 = vmatpush1.msra.mxu0 0.0
      %2437 = vmatprep.subr.mxu0 0.0
      %2438 = vmatpush1.msra.mxu0 0.0
      %2439 = vmatprep.subr.mxu0 0.0
      %2440 = vmatpush1.msra.mxu0 0.0
      %2441 = vmatprep.subr.mxu0 0.0
      %2442 = vmatpush1.msra.mxu0 0.0
      %2443 = vmatprep.subr.mxu0 0.0
      %2444 = vmatpush1.msra.mxu0 0.0
      %2445 = vmatprep.subr.mxu0 0.0
      %2446 = vmatpush1.msra.mxu0 0.0
      %2447 = vmatprep.subr.mxu0 0.0
      %2448 = vmatpush1.msra.mxu0 0.0
      %2449 = vmatprep.subr.mxu0 0.0
      %2450 = vmatpush1.msra.mxu0 0.0
      %2451 = vmatprep.mubr.f32.mxu0 0.0
      %2452 = vmatmul.mubr.f32.gmra.mrb[0].mxu0 %v2385
      %v2453 = vpop.f32.mrb[0].mxu0
      %v2454 = vadd.f32 0.0, %v2453
      %v2455 = vpop.f32.mrb[0].mxu0
      %2456 = vdwg.mxu0
      %2459 = vrot.lane.b32.xlu0 %v1717, 8
      %v2460 = vpop.permute.xlu0 %2459
      %2461 = vrot.lane.b32.xlu0 %v1794, 8
      %v2462 = vpop.permute.xlu0 %2461
      %2467 = vrot.lane.b32.xlu0 %v2048, 16
      %v2468 = vpop.permute.xlu0 %2467
      %2469 = vrot.lane.b32.xlu0 %v2124, 16
      %v2470 = vpop.permute.xlu0 %2469
      %2475 = vrot.lane.b32.xlu0 %v2378, 24
      %v2476 = vpop.permute.xlu0 %2475
      %2477 = vrot.lane.b32.xlu0 %v2454, 24
      %v2478 = vpop.permute.xlu0 %2477
      %v2481 = vsel %vm1144, %v1389, %v2460
      %v2482 = vsel %vm1144, %v1462, %v2462
      %vm2483 = vcmask 130048
      %v2484 = vsel %vm2483, %v2481, %v2468
      %v2485 = vsel %vm2483, %v2482, %v2470
      %vm2486 = vcmask 195584
      %v2487 = vsel %vm2486, %v2484, %v2476
      %v2488 = vsel %vm2486, %v2485, %v2478
      %v2490 = vsel %vm867, %v2487, 0
      %v2493 = vsel %vm867, %v2488, 0
      %2495 = vmatprep.subr.mxu0 0.0
      %2496 = vmatpush1.msra.mxu0 %v838
      %2497 = vmatprep.subr.mxu0 0.0
      %2498 = vmatpush1.msra.mxu0 %v839
      %2499 = vmatprep.subr.mxu0 0.0
      %2500 = vmatpush1.msra.mxu0 %v840
      %2501 = vmatprep.subr.mxu0 0.0
      %2502 = vmatpush1.msra.mxu0 %v841
      %2503 = vmatprep.subr.mxu0 0.0
      %2504 = vmatpush1.msra.mxu0 0.0
      %2505 = vmatprep.subr.mxu0 0.0
      %2506 = vmatpush1.msra.mxu0 0.0
      %2507 = vmatprep.subr.mxu0 0.0
      %2508 = vmatpush1.msra.mxu0 0.0
      %2509 = vmatprep.subr.mxu0 0.0
      %2510 = vmatpush1.msra.mxu0 0.0
      %2511 = vmatprep.subr.mxu0 0.0
      %2512 = vmatpush1.msra.mxu0 0.0
      %2513 = vmatprep.subr.mxu0 0.0
      %2514 = vmatpush1.msra.mxu0 0.0
      %2515 = vmatprep.subr.mxu0 0.0
      %2516 = vmatpush1.msra.mxu0 0.0
      %2517 = vmatprep.subr.mxu0 0.0
      %2518 = vmatpush1.msra.mxu0 0.0
      %2519 = vmatprep.subr.mxu0 0.0
      %2520 = vmatpush1.msra.mxu0 0.0
      %2521 = vmatprep.subr.mxu0 0.0
      %2522 = vmatpush1.msra.mxu0 0.0
      %2523 = vmatprep.subr.mxu0 0.0
      %2524 = vmatpush1.msra.mxu0 0.0
      %2525 = vmatprep.subr.mxu0 0.0
      %2526 = vmatpush1.msra.mxu0 0.0
      %2527 = vmatprep.subr.mxu0 0.0
      %2528 = vmatpush1.msra.mxu0 0.0
      %2529 = vmatprep.subr.mxu0 0.0
      %2530 = vmatpush1.msra.mxu0 0.0
      %2531 = vmatprep.subr.mxu0 0.0
      %2532 = vmatpush1.msra.mxu0 0.0
      %2533 = vmatprep.subr.mxu0 0.0
      %2534 = vmatpush1.msra.mxu0 0.0
      %2535 = vmatprep.subr.mxu0 0.0
      %2536 = vmatpush1.msra.mxu0 0.0
      %2537 = vmatprep.subr.mxu0 0.0
      %2538 = vmatpush1.msra.mxu0 0.0
      %2539 = vmatprep.subr.mxu0 0.0
      %2540 = vmatpush1.msra.mxu0 0.0
      %2541 = vmatprep.subr.mxu0 0.0
      %2542 = vmatpush1.msra.mxu0 0.0
      %2543 = vmatprep.subr.mxu0 0.0
      %2544 = vmatpush1.msra.mxu0 0.0
      %2545 = vmatprep.subr.mxu0 0.0
      %2546 = vmatpush1.msra.mxu0 0.0
      %2547 = vmatprep.subr.mxu0 0.0
      %2548 = vmatpush1.msra.mxu0 0.0
      %2549 = vmatprep.subr.mxu0 0.0
      %2550 = vmatpush1.msra.mxu0 0.0
      %2551 = vmatprep.subr.mxu0 0.0
      %2552 = vmatpush1.msra.mxu0 0.0
      %2553 = vmatprep.subr.mxu0 0.0
      %2554 = vmatpush1.msra.mxu0 0.0
      %2555 = vmatprep.subr.mxu0 0.0
      %2556 = vmatpush1.msra.mxu0 0.0
      %2557 = vmatprep.subr.mxu0 0.0
      %2558 = vmatpush1.msra.mxu0 0.0
      %2559 = vmatprep.mubr.f32.mxu0 0.0
      %2560 = vmatmul.mubr.f32.gmra.mrb[0].mxu0 %v2490
      %v2561 = vpop.f32.mrb[0].mxu0
      %v2562 = vadd.f32 0.0, %v2561
      %v2563 = vpop.f32.mrb[0].mxu0
      %2564 = vmatprep.mubr.f32.mxu0 0.0
      %2565 = vmatmul.mubr.f32.gmra.mrb[0].mxu0 %v2493
      %v2566 = vpop.f32.mrb[0].mxu0
      %v2567 = vadd.f32 0.0, %v2566
      %v2568 = vpop.f32.mrb[0].mxu0
      %2569 = vdwg.mxu0
      %v2570 = vadd.f32 %v822, %v2562
      %v2571 = vadd.f32 %v823, %v2567
      %v2573 = vlaneseq
      %v2574 = vshrl.u32 %v2573, 7
      %v2575 = vsub.s32 0, %v2574
      %v2576 = vrot.slane %v842, %v2575
      %v2578 = vadd.f32 %v2570, %v2576
      %v2579 = vadd.f32 %v2571, %v2576
      %v2580 = vsel %vm867, %v2578, 0.0
      %2581 = vadd.xlane.f32.xlu0 %v2580
      %v2582 = vpop.xlane.xlu0 %2581
      %v2583 = vsel %vm867, %v2579, 0.0
      %2584 = vadd.xlane.f32.xlu0 %v2583
      %v2585 = vpop.xlane.xlu0 %2584
      %v2586 = vmul.f32 %v2582, %v874
      %v2587 = vmul.f32 %v2585, %v874
      %v2588 = vsub.f32 %v2578, %v2586
      %v2589 = vsub.f32 %v2579, %v2587
      %v2590 = vmul.f32 %v2588, %v2588
      %v2591 = vmul.f32 %v2589, %v2589
      %v2592 = vsel %vm867, %v2590, 0.0
      %2593 = vadd.xlane.f32.xlu0 %v2592
      %v2594 = vpop.xlane.xlu0 %2593
      %v2595 = vsel %vm867, %v2591, 0.0
      %2596 = vadd.xlane.f32.xlu0 %v2595
      %v2597 = vpop.xlane.xlu0 %2596
      %v2598 = vmul.f32 %v2594, %v874
      %v2599 = vmul.f32 %v2597, %v874
      %v2600 = vadd.f32 %v2598, 1e-05
      %v2601 = vadd.f32 %v2599, 1e-05
      %v2602 = vrsqrt.pop %v2600
      %v2603 = vrsqrt.pop %v2601
      %v2604 = vmul.f32 %v2588, %v2602
      %v2605 = vmul.f32 %v2589, %v2603
      %v2607 = vlaneseq
      %v2608 = vshrl.u32 %v2607, 7
      %v2609 = vsub.s32 0, %v2608
      %v2610 = vrot.slane %v843, %v2609
      %v2612 = vmul.f32 %v2604, %v2610
      %v2613 = vmul.f32 %v2605, %v2610
      %v2615 = vlaneseq
      %v2616 = vshrl.u32 %v2615, 7
      %v2617 = vsub.s32 0, %v2616
      %v2618 = vrot.slane %v844, %v2617
      %v2620 = vadd.f32 %v2612, %v2618
      %v2621 = vadd.f32 %v2613, %v2618
      %v2623 = vlaneseq
      %v2624 = vshrl.u32 %v2623, 7
      %v2625 = vsub.s32 0, %v2624
      %v2626 = vrot.slane %v849, %v2625
      %v2629 = vsel %vm867, %v2620, 0
      %v2632 = vsel %vm867, %v2621, 0
      %2634 = vmatprep.subr.mxu0 0.0
      %2635 = vmatpush1.msra.mxu0 %v845
      %2636 = vmatprep.subr.mxu0 0.0
      %2637 = vmatpush1.msra.mxu0 %v846
      %2638 = vmatprep.subr.mxu0 0.0
      %2639 = vmatpush1.msra.mxu0 %v847
      %2640 = vmatprep.subr.mxu0 0.0
      %2641 = vmatpush1.msra.mxu0 %v848
      %2642 = vmatprep.subr.mxu0 0.0
      %2643 = vmatpush1.msra.mxu0 0.0
      %2644 = vmatprep.subr.mxu0 0.0
      %2645 = vmatpush1.msra.mxu0 0.0
      %2646 = vmatprep.subr.mxu0 0.0
      %2647 = vmatpush1.msra.mxu0 0.0
      %2648 = vmatprep.subr.mxu0 0.0
      %2649 = vmatpush1.msra.mxu0 0.0
      %2650 = vmatprep.subr.mxu0 0.0
      %2651 = vmatpush1.msra.mxu0 0.0
      %2652 = vmatprep.subr.mxu0 0.0
      %2653 = vmatpush1.msra.mxu0 0.0
      %2654 = vmatprep.subr.mxu0 0.0
      %2655 = vmatpush1.msra.mxu0 0.0
      %2656 = vmatprep.subr.mxu0 0.0
      %2657 = vmatpush1.msra.mxu0 0.0
      %2658 = vmatprep.subr.mxu0 0.0
      %2659 = vmatpush1.msra.mxu0 0.0
      %2660 = vmatprep.subr.mxu0 0.0
      %2661 = vmatpush1.msra.mxu0 0.0
      %2662 = vmatprep.subr.mxu0 0.0
      %2663 = vmatpush1.msra.mxu0 0.0
      %2664 = vmatprep.subr.mxu0 0.0
      %2665 = vmatpush1.msra.mxu0 0.0
      %2666 = vmatprep.subr.mxu0 0.0
      %2667 = vmatpush1.msra.mxu0 0.0
      %2668 = vmatprep.subr.mxu0 0.0
      %2669 = vmatpush1.msra.mxu0 0.0
      %2670 = vmatprep.subr.mxu0 0.0
      %2671 = vmatpush1.msra.mxu0 0.0
      %2672 = vmatprep.subr.mxu0 0.0
      %2673 = vmatpush1.msra.mxu0 0.0
      %2674 = vmatprep.subr.mxu0 0.0
      %2675 = vmatpush1.msra.mxu0 0.0
      %2676 = vmatprep.subr.mxu0 0.0
      %2677 = vmatpush1.msra.mxu0 0.0
      %2678 = vmatprep.subr.mxu0 0.0
      %2679 = vmatpush1.msra.mxu0 0.0
      %2680 = vmatprep.subr.mxu0 0.0
      %2681 = vmatpush1.msra.mxu0 0.0
      %2682 = vmatprep.subr.mxu0 0.0
      %2683 = vmatpush1.msra.mxu0 0.0
      %2684 = vmatprep.subr.mxu0 0.0
      %2685 = vmatpush1.msra.mxu0 0.0
      %2686 = vmatprep.subr.mxu0 0.0
      %2687 = vmatpush1.msra.mxu0 0.0
      %2688 = vmatprep.subr.mxu0 0.0
      %2689 = vmatpush1.msra.mxu0 0.0
      %2690 = vmatprep.subr.mxu0 0.0
      %2691 = vmatpush1.msra.mxu0 0.0
      %2692 = vmatprep.subr.mxu0 0.0
      %2693 = vmatpush1.msra.mxu0 0.0
      %2694 = vmatprep.subr.mxu0 0.0
      %2695 = vmatpush1.msra.mxu0 0.0
      %2696 = vmatprep.subr.mxu0 0.0
      %2697 = vmatpush1.msra.mxu0 0.0
      %2698 = vmatprep.mubr.f32.mxu0 0.0
      %2699 = vmatmul.mubr.f32.gmra.mrb[0].mxu0 %v2629
      %v2700 = vpop.f32.mrb[0].mxu0
      %v2701 = vadd.f32 %v2626, %v2700
      %v2702 = vpop.f32.mrb[0].mxu0
      %2703 = vmatprep.mubr.f32.mxu0 0.0
      %2704 = vmatmul.mubr.f32.gmra.mrb[0].mxu0 %v2632
      %v2705 = vpop.f32.mrb[0].mxu0
      %v2706 = vadd.f32 %v2626, %v2705
      %v2707 = vpop.f32.mrb[0].mxu0
      %2708 = vdwg.mxu0
      %v2709 = vmul.f32 %v2701, 0.5
      %v2710 = vmul.f32 %v2706, 0.5
      %v2711 = vmul.f32 %v2701, 0.70710677
      %v2712 = vmul.f32 %v2706, 0.70710677
      %v2713 = vand.u32 2147483647, %v2711
      %v2714 = vand.u32 2147483647, %v2712
      %v2715 = vmul.f32 %v2713, 0.3275911
      %v2716 = vmul.f32 %v2714, 0.3275911
      %v2717 = vadd.f32 %v2715, 1.0
      %v2718 = vadd.f32 %v2716, 1.0
      %v2719 = vrcp.pop %v2717
      %v2720 = vmul.f32 1.0, %v2719
      %v2721 = vrcp.pop %v2718
      %v2722 = vmul.f32 1.0, %v2721
      %v2723 = vmul.f32 %v2720, 1.0614054
      %v2724 = vmul.f32 %v2722, 1.0614054
      %v2725 = vadd.f32 %v2723, -1.4531521
      %v2726 = vadd.f32 %v2724, -1.4531521
      %v2727 = vmul.f32 %v2725, %v2720
      %v2728 = vmul.f32 %v2726, %v2722
      %v2729 = vadd.f32 %v2727, 1.4214138
      %v2730 = vadd.f32 %v2728, 1.4214138
      %v2731 = vmul.f32 %v2729, %v2720
      %v2732 = vmul.f32 %v2730, %v2722
      %v2733 = vadd.f32 %v2731, -0.28449672
      %v2734 = vadd.f32 %v2732, -0.28449672
      %v2735 = vmul.f32 %v2733, %v2720
      %v2736 = vmul.f32 %v2734, %v2722
      %v2737 = vadd.f32 %v2735, 0.2548296
      %v2738 = vadd.f32 %v2736, 0.2548296
      %v2739 = vmul.f32 %v2737, %v2720
      %v2740 = vmul.f32 %v2738, %v2722
      %v2741 = vsub.f32 0.0, %v2713
      %v2742 = vsub.f32 0.0, %v2714
      %v2743 = vmul.f32 %v2741, %v2713
      %v2744 = vmul.f32 %v2742, %v2714
      %v2745 = vmul.f32 %v2743, 1.442695
      %v2746 = vpow.pop %v2745
      %v2747 = vmul.f32 %v2744, 1.442695
      %v2748 = vpow.pop %v2747
      %v2749 = vmul.f32 %v2739, %v2746
      %v2750 = vmul.f32 %v2740, %v2748
      %v2751 = vsub.f32 1.0, %v2749
      %v2752 = vsub.f32 1.0, %v2750
      %vm2753 = vcmp.ge.f32.partialorder %v2711, 0.0
      %vm2754 = vcmp.ge.f32.partialorder %v2712, 0.0
      %v2755 = vsub.f32 0.0, %v2751
      %v2756 = vsub.f32 0.0, %v2752
      %v2757 = vsel %vm2753, %v2751, %v2755
      %v2758 = vsel %vm2754, %v2752, %v2756
      %v2759 = vadd.f32 %v2757, 1.0
      %v2760 = vadd.f32 %v2758, 1.0
      %v2761 = vmul.f32 %v2709, %v2759
      %v2762 = vmul.f32 %v2710, %v2760
      %v2764 = vlaneseq
      %v2765 = vshrl.u32 %v2764, 7
      %v2766 = vsub.s32 0, %v2765
      %v2767 = vrot.slane %v866, %v2766
      %2769 = vmatprep.subr.mxu0 0.0
      %2770 = vmatpush1.msra.mxu0 %v850
      %2771 = vmatprep.subr.mxu0 0.0
      %2772 = vmatpush1.msra.mxu0 %v851
      %2773 = vmatprep.subr.mxu0 0.0
      %2774 = vmatpush1.msra.mxu0 %v852
      %2775 = vmatprep.subr.mxu0 0.0
      %2776 = vmatpush1.msra.mxu0 %v853
      %2777 = vmatprep.subr.mxu0 0.0
      %2778 = vmatpush1.msra.mxu0 %v854
      %2779 = vmatprep.subr.mxu0 0.0
      %2780 = vmatpush1.msra.mxu0 %v855
      %2781 = vmatprep.subr.mxu0 0.0
      %2782 = vmatpush1.msra.mxu0 %v856
      %2783 = vmatprep.subr.mxu0 0.0
      %2784 = vmatpush1.msra.mxu0 %v857
      %2785 = vmatprep.subr.mxu0 0.0
      %2786 = vmatpush1.msra.mxu0 %v858
      %2787 = vmatprep.subr.mxu0 0.0
      %2788 = vmatpush1.msra.mxu0 %v859
      %2789 = vmatprep.subr.mxu0 0.0
      %2790 = vmatpush1.msra.mxu0 %v860
      %2791 = vmatprep.subr.mxu0 0.0
      %2792 = vmatpush1.msra.mxu0 %v861
      %2793 = vmatprep.subr.mxu0 0.0
      %2794 = vmatpush1.msra.mxu0 %v862
      %2795 = vmatprep.subr.mxu0 0.0
      %2796 = vmatpush1.msra.mxu0 %v863
      %2797 = vmatprep.subr.mxu0 0.0
      %2798 = vmatpush1.msra.mxu0 %v864
      %2799 = vmatprep.subr.mxu0 0.0
      %2800 = vmatpush1.msra.mxu0 %v865
      %2801 = vmatprep.subr.mxu0 0.0
      %2802 = vmatpush1.msra.mxu0 0.0
      %2803 = vmatprep.subr.mxu0 0.0
      %2804 = vmatpush1.msra.mxu0 0.0
      %2805 = vmatprep.subr.mxu0 0.0
      %2806 = vmatpush1.msra.mxu0 0.0
      %2807 = vmatprep.subr.mxu0 0.0
      %2808 = vmatpush1.msra.mxu0 0.0
      %2809 = vmatprep.subr.mxu0 0.0
      %2810 = vmatpush1.msra.mxu0 0.0
      %2811 = vmatprep.subr.mxu0 0.0
      %2812 = vmatpush1.msra.mxu0 0.0
      %2813 = vmatprep.subr.mxu0 0.0
      %2814 = vmatpush1.msra.mxu0 0.0
      %2815 = vmatprep.subr.mxu0 0.0
      %2816 = vmatpush1.msra.mxu0 0.0
      %2817 = vmatprep.subr.mxu0 0.0
      %2818 = vmatpush1.msra.mxu0 0.0
      %2819 = vmatprep.subr.mxu0 0.0
      %2820 = vmatpush1.msra.mxu0 0.0
      %2821 = vmatprep.subr.mxu0 0.0
      %2822 = vmatpush1.msra.mxu0 0.0
      %2823 = vmatprep.subr.mxu0 0.0
      %2824 = vmatpush1.msra.mxu0 0.0
      %2825 = vmatprep.subr.mxu0 0.0
      %2826 = vmatpush1.msra.mxu0 0.0
      %2827 = vmatprep.subr.mxu0 0.0
      %2828 = vmatpush1.msra.mxu0 0.0
      %2829 = vmatprep.subr.mxu0 0.0
      %2830 = vmatpush1.msra.mxu0 0.0
      %2831 = vmatprep.subr.mxu0 0.0
      %2832 = vmatpush1.msra.mxu0 0.0
      %2833 = vmatprep.mubr.f32.mxu0 0.0
      %2834 = vmatmul.mubr.f32.gmra.mrb[0].mxu0 %v2761
      %v2835 = vpop.f32.mrb[0].mxu0
      %v2836 = vadd.f32 %v2767, %v2835
      %v2837 = vpop.f32.mrb[0].mxu0
      %2838 = vmatprep.mubr.f32.mxu0 0.0
      %2839 = vmatmul.mubr.f32.gmra.mrb[0].mxu0 %v2762
      %v2840 = vpop.f32.mrb[0].mxu0
      %v2841 = vadd.f32 %v2767, %v2840
      %v2842 = vpop.f32.mrb[0].mxu0
      %2843 = vdwg.mxu0
      %v2844 = vadd.f32 %v2578, %v2836
      %v2845 = vadd.f32 %v2579, %v2841
      %2846 = vst.msk [vmem:[#allocation2] sm:$0xff] %vm867, %v2844
      %2847 = vst.msk [vmem:[#allocation2 + $0x8] sm:$0xff] %vm867, %v2845
      %p2848 = scmp.eq.s32.totalorder %s31, 1
      // Predicated region
      $region105: #{_lambda_.3} parent=99 // pred_check
        %p2849 = pneg %p2848
      $region106: #{_lambda_.3} parent=99 // pred_check_branch
        %2851 = sbr.rel (%p2849) target = $region108
      $region107: #{_lambda_.3} parent=99 // pred_region
        %v2852 = vld [vmem:[%s14] sm:$0x1]
        %v2853 = vld [vmem:[%s15] sm:$0x1]
        %v2854 = vsel %vm867, %v2844, 0.0
        %2855 = vadd.xlane.f32.xlu0 %v2854
        %v2856 = vpop.xlane.xlu0 %2855
        %v2857 = vsel %vm867, %v2845, 0.0
        %2858 = vadd.xlane.f32.xlu0 %v2857
        %v2859 = vpop.xlane.xlu0 %2858
        %v2860 = vmul.f32 %v2856, %v874
        %v2861 = vmul.f32 %v2859, %v874
        %v2862 = vsub.f32 %v2844, %v2860
        %v2863 = vsub.f32 %v2845, %v2861
        %v2864 = vmul.f32 %v2862, %v2862
        %v2865 = vmul.f32 %v2863, %v2863
        %v2866 = vsel %vm867, %v2864, 0.0
        %2867 = vadd.xlane.f32.xlu0 %v2866
        %v2868 = vpop.xlane.xlu0 %2867
        %v2869 = vsel %vm867, %v2865, 0.0
        %2870 = vadd.xlane.f32.xlu0 %v2869
        %v2871 = vpop.xlane.xlu0 %2870
        %v2872 = vmul.f32 %v2868, %v874
        %v2873 = vmul.f32 %v2871, %v874
        %v2874 = vadd.f32 %v2872, 1e-05
        %v2875 = vadd.f32 %v2873, 1e-05
        %v2876 = vrsqrt.pop %v2874
        %v2877 = vrsqrt.pop %v2875
        %v2878 = vmul.f32 %v2862, %v2876
        %v2879 = vmul.f32 %v2863, %v2877
        %v2881 = vlaneseq
        %v2882 = vshrl.u32 %v2881, 7
        %v2883 = vsub.s32 0, %v2882
        %v2884 = vrot.slane %v2852, %v2883
        %v2886 = vmul.f32 %v2878, %v2884
        %v2887 = vmul.f32 %v2879, %v2884
        %v2889 = vlaneseq
        %v2890 = vshrl.u32 %v2889, 7
        %v2891 = vsub.s32 0, %v2890
        %v2892 = vrot.slane %v2853, %v2891
        %v2894 = vadd.f32 %v2886, %v2892
        %v2895 = vadd.f32 %v2887, %v2892
        %v2896 = vld [vmem:[%s16] sm:$0xff]
        %v2897 = vld [vmem:[%s16 + $0x8] sm:$0xff]
        %v2898 = vld [vmem:[%s16 + $0x10] sm:$0xff]
        %v2899 = vld [vmem:[%s16 + $0x18] sm:$0xff]
        %v2900 = vld [vmem:[%s17] sm:$0x1]
        %v2902 = vlaneseq
        %v2903 = vshrl.u32 %v2902, 7
        %v2904 = vsub.s32 0, %v2903
        %v2905 = vrot.slane %v2900, %v2904
        %v2908 = vsel %vm867, %v2894, 0
        %v2911 = vsel %vm867, %v2895, 0
        %2913 = vmatprep.subr.mxu0 0.0
        %2914 = vmatpush1.msra.mxu0 %v2896
        %2915 = vmatprep.subr.mxu0 0.0
        %2916 = vmatpush1.msra.mxu0 %v2897
        %2917 = vmatprep.subr.mxu0 0.0
        %2918 = vmatpush1.msra.mxu0 %v2898
        %2919 = vmatprep.subr.mxu0 0.0
        %2920 = vmatpush1.msra.mxu0 %v2899
        %2921 = vmatprep.subr.mxu0 0.0
        %2922 = vmatpush1.msra.mxu0 0.0
        %2923 = vmatprep.subr.mxu0 0.0
        %2924 = vmatpush1.msra.mxu0 0.0
        %2925 = vmatprep.subr.mxu0 0.0
        %2926 = vmatpush1.msra.mxu0 0.0
        %2927 = vmatprep.subr.mxu0 0.0
        %2928 = vmatpush1.msra.mxu0 0.0
        %2929 = vmatprep.subr.mxu0 0.0
        %2930 = vmatpush1.msra.mxu0 0.0
        %2931 = vmatprep.subr.mxu0 0.0
        %2932 = vmatpush1.msra.mxu0 0.0
        %2933 = vmatprep.subr.mxu0 0.0
        %2934 = vmatpush1.msra.mxu0 0.0
        %2935 = vmatprep.subr.mxu0 0.0
        %2936 = vmatpush1.msra.mxu0 0.0
        %2937 = vmatprep.subr.mxu0 0.0
        %2938 = vmatpush1.msra.mxu0 0.0
        %2939 = vmatprep.subr.mxu0 0.0
        %2940 = vmatpush1.msra.mxu0 0.0
        %2941 = vmatprep.subr.mxu0 0.0
        %2942 = vmatpush1.msra.mxu0 0.0
        %2943 = vmatprep.subr.mxu0 0.0
        %2944 = vmatpush1.msra.mxu0 0.0
        %2945 = vmatprep.subr.mxu0 0.0
        %2946 = vmatpush1.msra.mxu0 0.0
        %2947 = vmatprep.subr.mxu0 0.0
        %2948 = vmatpush1.msra.mxu0 0.0
        %2949 = vmatprep.subr.mxu0 0.0
        %2950 = vmatpush1.msra.mxu0 0.0
        %2951 = vmatprep.subr.mxu0 0.0
        %2952 = vmatpush1.msra.mxu0 0.0
        %2953 = vmatprep.subr.mxu0 0.0
        %2954 = vmatpush1.msra.mxu0 0.0
        %2955 = vmatprep.subr.mxu0 0.0
        %2956 = vmatpush1.msra.mxu0 0.0
        %2957 = vmatprep.subr.mxu0 0.0
        %2958 = vmatpush1.msra.mxu0 0.0
        %2959 = vmatprep.subr.mxu0 0.0
        %2960 = vmatpush1.msra.mxu0 0.0
        %2961 = vmatprep.subr.mxu0 0.0
        %2962 = vmatpush1.msra.mxu0 0.0
        %2963 = vmatprep.subr.mxu0 0.0
        %2964 = vmatpush1.msra.mxu0 0.0
        %2965 = vmatprep.subr.mxu0 0.0
        %2966 = vmatpush1.msra.mxu0 0.0
        %2967 = vmatprep.subr.mxu0 0.0
        %2968 = vmatpush1.msra.mxu0 0.0
        %2969 = vmatprep.subr.mxu0 0.0
        %2970 = vmatpush1.msra.mxu0 0.0
        %2971 = vmatprep.subr.mxu0 0.0
        %2972 = vmatpush1.msra.mxu0 0.0
        %2973 = vmatprep.subr.mxu0 0.0
        %2974 = vmatpush1.msra.mxu0 0.0
        %2975 = vmatprep.subr.mxu0 0.0
        %2976 = vmatpush1.msra.mxu0 0.0
        %2977 = vmatprep.mubr.f32.mxu0 0.0
        %2978 = vmatmul.mubr.f32.gmra.mrb[0].mxu0 %v2908
        %v2979 = vpop.f32.mrb[0].mxu0
        %v2980 = vadd.f32 %v2905, %v2979
        %v2981 = vpop.f32.mrb[0].mxu0
        %2982 = vmatprep.mubr.f32.mxu0 0.0
        %2983 = vmatmul.mubr.f32.gmra.mrb[0].mxu0 %v2911
        %v2984 = vpop.f32.mrb[0].mxu0
        %v2985 = vadd.f32 %v2905, %v2984
        %v2986 = vpop.f32.mrb[0].mxu0
        %2987 = vdwg.mxu0
        %v2988 = vld [vmem:[%s18] sm:$0x1]
        %v2989 = vld [vmem:[%s18 + $0x1] sm:$0x1]
        %v2992 = vlaneseq
        %v2993 = vshrl.u32 %v2992, 7
        %v2994 = vsub.s32 0, %v2993
        %v2995 = vrot.slane %v2988, %v2994
        %v2996 = vlaneseq
        %v2997 = vshrl.u32 %v2996, 7
        %v2998 = vsub.s32 0, %v2997
        %v2999 = vrot.slane %v2989, %v2998
        %v3002 = vmul.f32 %v2980, %v2995
        %v3003 = vmul.f32 %v2985, %v2999
        %v3004 = vld [vmem:[%s19] sm:$0x1]
        %v3005 = vld [vmem:[%s19 + $0x1] sm:$0x1]
        %v3008 = vlaneseq
        %v3009 = vshrl.u32 %v3008, 7
        %v3010 = vsub.s32 0, %v3009
        %v3011 = vrot.slane %v3004, %v3010
        %v3012 = vlaneseq
        %v3013 = vshrl.u32 %v3012, 7
        %v3014 = vsub.s32 0, %v3013
        %v3015 = vrot.slane %v3005, %v3014
        %v3018 = vadd.f32 %v3002, %v3011
        %v3019 = vadd.f32 %v3003, %v3015
        %3020 = vst [vmem:[%s20] sm:$0xff] %v3018
        %3021 = vst [vmem:[%s20 + $0x8] sm:$0xff] %v3019
      $region108: #{_lambda_.3} parent=99 // pred_fallthru
        _
      // Predicated region
      $region109: #{_lambda_.3} parent=99 // pred_check
        %p3022 = pneg %p529
      $region110: #{_lambda_.3} parent=99 // pred_check_branch
        %3024 = sbr.rel (%p3022) target = $region112
      $region111: #{_lambda_.3} parent=99 // pred_region
        _
      $region112: #{_lambda_.3} parent=99 // pred_fallthru
        _
      // Predicated region
      $region113: #{_lambda_.3} parent=99 // pred_check
        %p3025 = pneg %p529
      $region114: #{_lambda_.3} parent=99 // pred_check_branch
        %3027 = sbr.rel (%p3025) target = $region116
      $region115: #{_lambda_.3} parent=99 // pred_region
        _
      $region116: #{_lambda_.3} parent=99 // pred_fallthru
        _
    $region100: #{_lambda_.3} parent=5 // pred_fallthru
      _
    %p3028 = scmp.le.s32.totalorder 2, %s26
    // Predicated region
    $region117: #{_lambda_.3} parent=5 // pred_check
      %p3029 = pneg %p3028
    $region118: #{_lambda_.3} parent=5 // pred_check_branch
      %3031 = sbr.rel (%p3029) target = $region120
    $region119: #{_lambda_.3} parent=5 // pred_region
      %s3032 = ssub.s32 %s26, 2
    $region120: #{_lambda_.3} parent=5 // pred_fallthru
      _
  $region6: #{_lambda_.3} parent=0 // loop_footer
    %s30 = sadd.s32 1, %s26
  $region7: #{_lambda_.3} parent=0 // loop_footer_branch
    %25 = sbr.rel target = $region3
  $region8: #{_lambda_.3} parent=0 // loop_exit
    _

// kernel: _lambda_.2
$region0: #{_lambda_.2}
  #allocation0 [shape = 'u32[]', space=smem, size = 0x4, offset = 0x4, fixed_abs, tag = 'smem constant byte address 0x4 - core index']
  #allocation1 [shape = 'u32[144,128]{1,0:T(1,128)}', space=vmem, size = 0x12000, scoped, tag = 'internal scratch']
  #allocation2 [shape = 'f32[16,32]{1,0:T(8,128)}', space=vmem, size = 0x2000, scoped, tag = 'scratch operand']
  %s0 = inlined_call_operand.vmem [shape: f32[2,8,256], index: 0, kind: input, shape index: {}]
  %s1 = inlined_call_operand.vmem [shape: f32[256,32], index: 1, kind: input, shape index: {}]
  %s2 = inlined_call_operand.vmem [shape: f32[1,32], index: 2, kind: input, shape index: {}]
  %s3 = inlined_call_operand.vmem [shape: f32[8,32], index: 3, kind: input, shape index: {}]
  %s4 = inlined_call_operand.vmem [shape: f32[2,1,32], index: 4, kind: input, shape index: {}, may-alias: {4,11}]
  %s5 = inlined_call_operand.vmem [shape: f32[2,1,32], index: 5, kind: input, shape index: {}, may-alias: {5,10,12,16}]
  %s6 = inlined_call_operand.vmem [shape: f32[2,32,32], index: 6, kind: input, shape index: {}]
  %s7 = inlined_call_operand.vmem [shape: f32[2,32,32], index: 7, kind: input, shape index: {}]
  %s8 = inlined_call_operand.vmem [shape: f32[2,32,32], index: 8, kind: input, shape index: {}]
  %s9 = inlined_call_operand.vmem [shape: f32[2,32,32], index: 9, kind: input, shape index: {}]
  %s10 = inlined_call_operand.vmem [shape: f32[2,1,32], index: 10, kind: input, shape index: {}, may-alias: {5,10,12,16}]
  %s11 = inlined_call_operand.vmem [shape: f32[2,1,32], index: 11, kind: input, shape index: {}, may-alias: {4,11}]
  %s12 = inlined_call_operand.vmem [shape: f32[2,1,32], index: 12, kind: input, shape index: {}, may-alias: {5,10,12,16}]
  %s13 = inlined_call_operand.vmem [shape: f32[2,32,128], index: 13, kind: input, shape index: {}]
  %s14 = inlined_call_operand.vmem [shape: f32[2,1,128], index: 14, kind: input, shape index: {}]
  %s15 = inlined_call_operand.vmem [shape: f32[2,128,32], index: 15, kind: input, shape index: {}]
  %s16 = inlined_call_operand.vmem [shape: f32[2,1,32], index: 16, kind: input, shape index: {}, may-alias: {5,10,12,16}]
  %s17 = inlined_call_operand.vmem [shape: f32[1,32], index: 17, kind: input, shape index: {}]
  %s18 = inlined_call_operand.vmem [shape: f32[1,32], index: 18, kind: input, shape index: {}]
  %s19 = inlined_call_operand.vmem [shape: f32[32,32], index: 19, kind: input, shape index: {}]
  %s20 = inlined_call_operand.vmem [shape: f32[16,32], index: 20, kind: output, shape index: {0}]
  %s21 = inlined_call_operand.vmem [shape: f32[2,1,2], index: 21, kind: output, shape index: {1}]
  %s22 = inlined_call_operand.vmem [shape: f32[2,1,2], index: 22, kind: output, shape index: {2}]
  %23 = xla_tuple %s20, %s21, %s22
  %s24 = sld [smem:[#allocation0]]
  $region137: #{_lambda_.2} parent=0
    _
  %s26 = ssub.s32 1, %s24
  %s27 = scalar_select 0, %s26, %s24
  loop: start=0, step=1, limit=4
  $region2: #{_lambda_.2} parent=0 // loop_pre_header
    _
  $region3: #{_lambda_.2} parent=0 // loop_header
    %s29 = sphi 0, %s33
    %p30 = scmp.ge.s32.totalorder %s29, 4
    %s37 = sphi 0, %s37
    %s39 = sphi 0, %s37
    %s40 = sphi 0, %s39
    %s54 = sphi 0, %s40
    %s58 = sphi 0, %s58
    %s60 = sphi 0, %s58
    %s61 = sphi 0, %s60
    %s75 = sphi 0, %s61
    %s79 = sphi 0, %s79
    %s81 = sphi 0, %s79
    %s82 = sphi 0, %s81
    %s96 = sphi 0, %s82
    %s100 = sphi 0, %s100
    %s102 = sphi 0, %s100
    %s103 = sphi 0, %s102
    %s117 = sphi 0, %s103
    %s123 = sphi 0, %s125
    %s126 = sphi 0, %s123
    %s127 = sphi 0, %s126
    %s143 = sphi 0, %s127
    %s149 = sphi 0, %s151
    %s152 = sphi 0, %s149
    %s153 = sphi 0, %s152
    %s169 = sphi 0, %s153
    %s175 = sphi 0, %s177
    %s178 = sphi 0, %s175
    %s179 = sphi 0, %s178
    %s195 = sphi 0, %s179
    %s201 = sphi 0, %s203
    %s204 = sphi 0, %s201
    %s205 = sphi 0, %s204
    %s221 = sphi 0, %s205
    %s227 = sphi 0, %s229
    %s230 = sphi 0, %s227
    %s231 = sphi 0, %s230
    %s247 = sphi 0, %s231
    %s253 = sphi 0, %s255
    %s256 = sphi 0, %s253
    %s257 = sphi 0, %s256
    %s273 = sphi 0, %s257
    %s279 = sphi 0, %s281
    %s282 = sphi 0, %s279
    %s283 = sphi 0, %s282
    %s299 = sphi 0, %s283
    %s305 = sphi 0, %s307
    %s308 = sphi 0, %s305
    %s309 = sphi 0, %s308
    %s325 = sphi 0, %s309
    %s331 = sphi 0, %s333
    %s334 = sphi 0, %s331
    %s335 = sphi 0, %s334
    %s351 = sphi 0, %s335
    %s357 = sphi 0, %s359
    %s360 = sphi 0, %s357
    %s361 = sphi 0, %s360
    %s377 = sphi 0, %s361
    %s383 = sphi 0, %s385
    %s386 = sphi 0, %s383
    %s387 = sphi 0, %s386
    %s403 = sphi 0, %s387
    %s409 = sphi 0, %s411
    %s412 = sphi 0, %s409
    %s413 = sphi 0, %s412
    %s429 = sphi 0, %s413
    %s435 = sphi 0, %s437
    %s438 = sphi 0, %s435
    %s439 = sphi 0, %s438
    %s455 = sphi 0, %s439
    %s459 = sphi 0, %s459
    %s461 = sphi 0, %s459
    %s462 = sphi 0, %s461
    %s476 = sphi 0, %s462
    %s480 = sphi 0, %s480
    %s482 = sphi 0, %s480
    %s483 = sphi 0, %s482
    %s497 = sphi 0, %s483
    %s501 = sphi 0, %s501
    %s503 = sphi 0, %s501
    %s504 = sphi 0, %s503
    %s518 = sphi 0, %s504
    %s522 = sphi 0, %s522
    %s524 = sphi 0, %s522
    %s525 = sphi 0, %s524
    %s539 = sphi 0, %s525
    %s543 = sphi 0, %s543
    %s545 = sphi 0, %s543
    %s546 = sphi 0, %s545
    %s560 = sphi 0, %s546
    %s564 = sphi 0, %s564
    %s566 = sphi 0, %s564
    %s567 = sphi 0, %s566
    %s581 = sphi 0, %s567
  $region4: #{_lambda_.2} parent=0 // loop_header_branch
    %32 = sbr.rel (%p30) target = $region8
  $region5: #{_lambda_.2} parent=0 // loop_body
    %s34 = ssub.s32 %s29, 1
    %s35 = ssub.s32 %s29, 2
    %s36 = sadd.s32 %s29, 1
    %s38 = sadd.s32 %s37, 1
    %p41 = scmp.eq.s32.totalorder %s29, 1
    %p42 = scmp.ne.s32.totalorder %s37, %s39
    %p43 = scmp.eq.s32.totalorder %s29, 0
    %p44 = por %p42, %p43
    %p45 = scmp.ne.s32.totalorder %s37, %s39
    %p46 = scmp.eq.s32.totalorder %s34, 1
    %p47 = por %p45, %p46
    %p48 = scmp.ne.s32.totalorder %s39, %s40
    %p49 = scmp.eq.s32.totalorder %s34, 0
    %p50 = por %p48, %p49
    %p51 = scmp.ne.s32.totalorder %s39, %s40
    %p52 = scmp.eq.s32.totalorder %s35, 1
    %p53 = por %p51, %p52
    %p55 = scmp.ne.s32.totalorder %s40, %s54
    %p56 = scmp.eq.s32.totalorder %s35, 0
    %p57 = por %p55, %p56
    %s59 = sadd.s32 %s58, 1
    %p62 = scmp.eq.s32.totalorder %s29, 1
    %p63 = scmp.ne.s32.totalorder %s58, %s60
    %p64 = scmp.eq.s32.totalorder %s29, 0
    %p65 = por %p63, %p64
    %p66 = scmp.ne.s32.totalorder %s58, %s60
    %p67 = scmp.eq.s32.totalorder %s34, 1
    %p68 = por %p66, %p67
    %p69 = scmp.ne.s32.totalorder %s60, %s61
    %p70 = scmp.eq.s32.totalorder %s34, 0
    %p71 = por %p69, %p70
    %p72 = scmp.ne.s32.totalorder %s60, %s61
    %p73 = scmp.eq.s32.totalorder %s35, 1
    %p74 = por %p72, %p73
    %p76 = scmp.ne.s32.totalorder %s61, %s75
    %p77 = scmp.eq.s32.totalorder %s35, 0
    %p78 = por %p76, %p77
    %s80 = sadd.s32 %s79, 1
    %p83 = scmp.eq.s32.totalorder %s29, 1
    %p84 = scmp.ne.s32.totalorder %s79, %s81
    %p85 = scmp.eq.s32.totalorder %s29, 0
    %p86 = por %p84, %p85
    %p87 = scmp.ne.s32.totalorder %s79, %s81
    %p88 = scmp.eq.s32.totalorder %s34, 1
    %p89 = por %p87, %p88
    %p90 = scmp.ne.s32.totalorder %s81, %s82
    %p91 = scmp.eq.s32.totalorder %s34, 0
    %p92 = por %p90, %p91
    %p93 = scmp.ne.s32.totalorder %s81, %s82
    %p94 = scmp.eq.s32.totalorder %s35, 1
    %p95 = por %p93, %p94
    %p97 = scmp.ne.s32.totalorder %s82, %s96
    %p98 = scmp.eq.s32.totalorder %s35, 0
    %p99 = por %p97, %p98
    %s101 = sadd.s32 %s100, 1
    %p104 = scmp.eq.s32.totalorder %s29, 1
    %p105 = scmp.ne.s32.totalorder %s100, %s102
    %p106 = scmp.eq.s32.totalorder %s29, 0
    %p107 = por %p105, %p106
    %p108 = scmp.ne.s32.totalorder %s100, %s102
    %p109 = scmp.eq.s32.totalorder %s34, 1
    %p110 = por %p108, %p109
    %p111 = scmp.ne.s32.totalorder %s102, %s103
    %p112 = scmp.eq.s32.totalorder %s34, 0
    %p113 = por %p111, %p112
    %p114 = scmp.ne.s32.totalorder %s102, %s103
    %p115 = scmp.eq.s32.totalorder %s35, 1
    %p116 = por %p114, %p115
    %p118 = scmp.ne.s32.totalorder %s103, %s117
    %p119 = scmp.eq.s32.totalorder %s35, 0
    %p120 = por %p118, %p119
    %s121 = ssub.s32 %s29, %s36
    %p122 = scmp.eq.s32.totalorder %s121, 0
    %s124 = sadd.s32 %s123, 1
    %s125 = scalar_select %p122, %s123, %s124
    %p128 = pneg %p122
    %p129 = scmp.eq.s32.totalorder %s29, 1
    %p130 = por %p128, %p129
    %p131 = scmp.ne.s32.totalorder %s123, %s126
    %p132 = scmp.eq.s32.totalorder %s29, 0
    %p133 = por %p131, %p132
    %p134 = scmp.ne.s32.totalorder %s123, %s126
    %p135 = scmp.eq.s32.totalorder %s34, 1
    %p136 = por %p134, %p135
    %p137 = scmp.ne.s32.totalorder %s126, %s127
    %p138 = scmp.eq.s32.totalorder %s34, 0
    %p139 = por %p137, %p138
    %p140 = scmp.ne.s32.totalorder %s126, %s127
    %p141 = scmp.eq.s32.totalorder %s35, 1
    %p142 = por %p140, %p141
    %p144 = scmp.ne.s32.totalorder %s127, %s143
    %p145 = scmp.eq.s32.totalorder %s35, 0
    %p146 = por %p144, %p145
    %s147 = ssub.s32 %s29, %s36
    %p148 = scmp.eq.s32.totalorder %s147, 0
    %s150 = sadd.s32 %s149, 1
    %s151 = scalar_select %p148, %s149, %s150
    %p154 = pneg %p148
    %p155 = scmp.eq.s32.totalorder %s29, 1
    %p156 = por %p154, %p155
    %p157 = scmp.ne.s32.totalorder %s149, %s152
    %p158 = scmp.eq.s32.totalorder %s29, 0
    %p159 = por %p157, %p158
    %p160 = scmp.ne.s32.totalorder %s149, %s152
    %p161 = scmp.eq.s32.totalorder %s34, 1
    %p162 = por %p160, %p161
    %p163 = scmp.ne.s32.totalorder %s152, %s153
    %p164 = scmp.eq.s32.totalorder %s34, 0
    %p165 = por %p163, %p164
    %p166 = scmp.ne.s32.totalorder %s152, %s153
    %p167 = scmp.eq.s32.totalorder %s35, 1
    %p168 = por %p166, %p167
    %p170 = scmp.ne.s32.totalorder %s153, %s169
    %p171 = scmp.eq.s32.totalorder %s35, 0
    %p172 = por %p170, %p171
    %s173 = ssub.s32 %s29, %s36
    %p174 = scmp.eq.s32.totalorder %s173, 0
    %s176 = sadd.s32 %s175, 1
    %s177 = scalar_select %p174, %s175, %s176
    %p180 = pneg %p174
    %p181 = scmp.eq.s32.totalorder %s29, 1
    %p182 = por %p180, %p181
    %p183 = scmp.ne.s32.totalorder %s175, %s178
    %p184 = scmp.eq.s32.totalorder %s29, 0
    %p185 = por %p183, %p184
    %p186 = scmp.ne.s32.totalorder %s175, %s178
    %p187 = scmp.eq.s32.totalorder %s34, 1
    %p188 = por %p186, %p187
    %p189 = scmp.ne.s32.totalorder %s178, %s179
    %p190 = scmp.eq.s32.totalorder %s34, 0
    %p191 = por %p189, %p190
    %p192 = scmp.ne.s32.totalorder %s178, %s179
    %p193 = scmp.eq.s32.totalorder %s35, 1
    %p194 = por %p192, %p193
    %p196 = scmp.ne.s32.totalorder %s179, %s195
    %p197 = scmp.eq.s32.totalorder %s35, 0
    %p198 = por %p196, %p197
    %s199 = ssub.s32 %s29, %s36
    %p200 = scmp.eq.s32.totalorder %s199, 0
    %s202 = sadd.s32 %s201, 1
    %s203 = scalar_select %p200, %s201, %s202
    %p206 = pneg %p200
    %p207 = scmp.eq.s32.totalorder %s29, 1
    %p208 = por %p206, %p207
    %p209 = scmp.ne.s32.totalorder %s201, %s204
    %p210 = scmp.eq.s32.totalorder %s29, 0
    %p211 = por %p209, %p210
    %p212 = scmp.ne.s32.totalorder %s201, %s204
    %p213 = scmp.eq.s32.totalorder %s34, 1
    %p214 = por %p212, %p213
    %p215 = scmp.ne.s32.totalorder %s204, %s205
    %p216 = scmp.eq.s32.totalorder %s34, 0
    %p217 = por %p215, %p216
    %p218 = scmp.ne.s32.totalorder %s204, %s205
    %p219 = scmp.eq.s32.totalorder %s35, 1
    %p220 = por %p218, %p219
    %p222 = scmp.ne.s32.totalorder %s205, %s221
    %p223 = scmp.eq.s32.totalorder %s35, 0
    %p224 = por %p222, %p223
    %s225 = ssub.s32 %s29, %s36
    %p226 = scmp.eq.s32.totalorder %s225, 0
    %s228 = sadd.s32 %s227, 1
    %s229 = scalar_select %p226, %s227, %s228
    %p232 = pneg %p226
    %p233 = scmp.eq.s32.totalorder %s29, 1
    %p234 = por %p232, %p233
    %p235 = scmp.ne.s32.totalorder %s227, %s230
    %p236 = scmp.eq.s32.totalorder %s29, 0
    %p237 = por %p235, %p236
    %p238 = scmp.ne.s32.totalorder %s227, %s230
    %p239 = scmp.eq.s32.totalorder %s34, 1
    %p240 = por %p238, %p239
    %p241 = scmp.ne.s32.totalorder %s230, %s231
    %p242 = scmp.eq.s32.totalorder %s34, 0
    %p243 = por %p241, %p242
    %p244 = scmp.ne.s32.totalorder %s230, %s231
    %p245 = scmp.eq.s32.totalorder %s35, 1
    %p246 = por %p244, %p245
    %p248 = scmp.ne.s32.totalorder %s231, %s247
    %p249 = scmp.eq.s32.totalorder %s35, 0
    %p250 = por %p248, %p249
    %s251 = ssub.s32 %s29, %s36
    %p252 = scmp.eq.s32.totalorder %s251, 0
    %s254 = sadd.s32 %s253, 1
    %s255 = scalar_select %p252, %s253, %s254
    %p258 = pneg %p252
    %p259 = scmp.eq.s32.totalorder %s29, 1
    %p260 = por %p258, %p259
    %p261 = scmp.ne.s32.totalorder %s253, %s256
    %p262 = scmp.eq.s32.totalorder %s29, 0
    %p263 = por %p261, %p262
    %p264 = scmp.ne.s32.totalorder %s253, %s256
    %p265 = scmp.eq.s32.totalorder %s34, 1
    %p266 = por %p264, %p265
    %p267 = scmp.ne.s32.totalorder %s256, %s257
    %p268 = scmp.eq.s32.totalorder %s34, 0
    %p269 = por %p267, %p268
    %p270 = scmp.ne.s32.totalorder %s256, %s257
    %p271 = scmp.eq.s32.totalorder %s35, 1
    %p272 = por %p270, %p271
    %p274 = scmp.ne.s32.totalorder %s257, %s273
    %p275 = scmp.eq.s32.totalorder %s35, 0
    %p276 = por %p274, %p275
    %s277 = ssub.s32 %s29, %s36
    %p278 = scmp.eq.s32.totalorder %s277, 0
    %s280 = sadd.s32 %s279, 1
    %s281 = scalar_select %p278, %s279, %s280
    %p284 = pneg %p278
    %p285 = scmp.eq.s32.totalorder %s29, 1
    %p286 = por %p284, %p285
    %p287 = scmp.ne.s32.totalorder %s279, %s282
    %p288 = scmp.eq.s32.totalorder %s29, 0
    %p289 = por %p287, %p288
    %p290 = scmp.ne.s32.totalorder %s279, %s282
    %p291 = scmp.eq.s32.totalorder %s34, 1
    %p292 = por %p290, %p291
    %p293 = scmp.ne.s32.totalorder %s282, %s283
    %p294 = scmp.eq.s32.totalorder %s34, 0
    %p295 = por %p293, %p294
    %p296 = scmp.ne.s32.totalorder %s282, %s283
    %p297 = scmp.eq.s32.totalorder %s35, 1
    %p298 = por %p296, %p297
    %p300 = scmp.ne.s32.totalorder %s283, %s299
    %p301 = scmp.eq.s32.totalorder %s35, 0
    %p302 = por %p300, %p301
    %s303 = ssub.s32 %s29, %s36
    %p304 = scmp.eq.s32.totalorder %s303, 0
    %s306 = sadd.s32 %s305, 1
    %s307 = scalar_select %p304, %s305, %s306
    %p310 = pneg %p304
    %p311 = scmp.eq.s32.totalorder %s29, 1
    %p312 = por %p310, %p311
    %p313 = scmp.ne.s32.totalorder %s305, %s308
    %p314 = scmp.eq.s32.totalorder %s29, 0
    %p315 = por %p313, %p314
    %p316 = scmp.ne.s32.totalorder %s305, %s308
    %p317 = scmp.eq.s32.totalorder %s34, 1
    %p318 = por %p316, %p317
    %p319 = scmp.ne.s32.totalorder %s308, %s309
    %p320 = scmp.eq.s32.totalorder %s34, 0
    %p321 = por %p319, %p320
    %p322 = scmp.ne.s32.totalorder %s308, %s309
    %p323 = scmp.eq.s32.totalorder %s35, 1
    %p324 = por %p322, %p323
    %p326 = scmp.ne.s32.totalorder %s309, %s325
    %p327 = scmp.eq.s32.totalorder %s35, 0
    %p328 = por %p326, %p327
    %s329 = ssub.s32 %s29, %s36
    %p330 = scmp.eq.s32.totalorder %s329, 0
    %s332 = sadd.s32 %s331, 1
    %s333 = scalar_select %p330, %s331, %s332
    %p336 = pneg %p330
    %p337 = scmp.eq.s32.totalorder %s29, 1
    %p338 = por %p336, %p337
    %p339 = scmp.ne.s32.totalorder %s331, %s334
    %p340 = scmp.eq.s32.totalorder %s29, 0
    %p341 = por %p339, %p340
    %p342 = scmp.ne.s32.totalorder %s331, %s334
    %p343 = scmp.eq.s32.totalorder %s34, 1
    %p344 = por %p342, %p343
    %p345 = scmp.ne.s32.totalorder %s334, %s335
    %p346 = scmp.eq.s32.totalorder %s34, 0
    %p347 = por %p345, %p346
    %p348 = scmp.ne.s32.totalorder %s334, %s335
    %p349 = scmp.eq.s32.totalorder %s35, 1
    %p350 = por %p348, %p349
    %p352 = scmp.ne.s32.totalorder %s335, %s351
    %p353 = scmp.eq.s32.totalorder %s35, 0
    %p354 = por %p352, %p353
    %s355 = ssub.s32 %s29, %s36
    %p356 = scmp.eq.s32.totalorder %s355, 0
    %s358 = sadd.s32 %s357, 1
    %s359 = scalar_select %p356, %s357, %s358
    %p362 = pneg %p356
    %p363 = scmp.eq.s32.totalorder %s29, 1
    %p364 = por %p362, %p363
    %p365 = scmp.ne.s32.totalorder %s357, %s360
    %p366 = scmp.eq.s32.totalorder %s29, 0
    %p367 = por %p365, %p366
    %p368 = scmp.ne.s32.totalorder %s357, %s360
    %p369 = scmp.eq.s32.totalorder %s34, 1
    %p370 = por %p368, %p369
    %p371 = scmp.ne.s32.totalorder %s360, %s361
    %p372 = scmp.eq.s32.totalorder %s34, 0
    %p373 = por %p371, %p372
    %p374 = scmp.ne.s32.totalorder %s360, %s361
    %p375 = scmp.eq.s32.totalorder %s35, 1
    %p376 = por %p374, %p375
    %p378 = scmp.ne.s32.totalorder %s361, %s377
    %p379 = scmp.eq.s32.totalorder %s35, 0
    %p380 = por %p378, %p379
    %s381 = ssub.s32 %s29, %s36
    %p382 = scmp.eq.s32.totalorder %s381, 0
    %s384 = sadd.s32 %s383, 1
    %s385 = scalar_select %p382, %s383, %s384
    %p388 = pneg %p382
    %p389 = scmp.eq.s32.totalorder %s29, 1
    %p390 = por %p388, %p389
    %p391 = scmp.ne.s32.totalorder %s383, %s386
    %p392 = scmp.eq.s32.totalorder %s29, 0
    %p393 = por %p391, %p392
    %p394 = scmp.ne.s32.totalorder %s383, %s386
    %p395 = scmp.eq.s32.totalorder %s34, 1
    %p396 = por %p394, %p395
    %p397 = scmp.ne.s32.totalorder %s386, %s387
    %p398 = scmp.eq.s32.totalorder %s34, 0
    %p399 = por %p397, %p398
    %p400 = scmp.ne.s32.totalorder %s386, %s387
    %p401 = scmp.eq.s32.totalorder %s35, 1
    %p402 = por %p400, %p401
    %p404 = scmp.ne.s32.totalorder %s387, %s403
    %p405 = scmp.eq.s32.totalorder %s35, 0
    %p406 = por %p404, %p405
    %s407 = ssub.s32 %s29, %s36
    %p408 = scmp.eq.s32.totalorder %s407, 0
    %s410 = sadd.s32 %s409, 1
    %s411 = scalar_select %p408, %s409, %s410
    %p414 = pneg %p408
    %p415 = scmp.eq.s32.totalorder %s29, 1
    %p416 = por %p414, %p415
    %p417 = scmp.ne.s32.totalorder %s409, %s412
    %p418 = scmp.eq.s32.totalorder %s29, 0
    %p419 = por %p417, %p418
    %p420 = scmp.ne.s32.totalorder %s409, %s412
    %p421 = scmp.eq.s32.totalorder %s34, 1
    %p422 = por %p420, %p421
    %p423 = scmp.ne.s32.totalorder %s412, %s413
    %p424 = scmp.eq.s32.totalorder %s34, 0
    %p425 = por %p423, %p424
    %p426 = scmp.ne.s32.totalorder %s412, %s413
    %p427 = scmp.eq.s32.totalorder %s35, 1
    %p428 = por %p426, %p427
    %p430 = scmp.ne.s32.totalorder %s413, %s429
    %p431 = scmp.eq.s32.totalorder %s35, 0
    %p432 = por %p430, %p431
    %s433 = ssub.s32 %s29, %s36
    %p434 = scmp.eq.s32.totalorder %s433, 0
    %s436 = sadd.s32 %s435, 1
    %s437 = scalar_select %p434, %s435, %s436
    %p440 = pneg %p434
    %p441 = scmp.eq.s32.totalorder %s29, 1
    %p442 = por %p440, %p441
    %p443 = scmp.ne.s32.totalorder %s435, %s438
    %p444 = scmp.eq.s32.totalorder %s29, 0
    %p445 = por %p443, %p444
    %p446 = scmp.ne.s32.totalorder %s435, %s438
    %p447 = scmp.eq.s32.totalorder %s34, 1
    %p448 = por %p446, %p447
    %p449 = scmp.ne.s32.totalorder %s438, %s439
    %p450 = scmp.eq.s32.totalorder %s34, 0
    %p451 = por %p449, %p450
    %p452 = scmp.ne.s32.totalorder %s438, %s439
    %p453 = scmp.eq.s32.totalorder %s35, 1
    %p454 = por %p452, %p453
    %p456 = scmp.ne.s32.totalorder %s439, %s455
    %p457 = scmp.eq.s32.totalorder %s35, 0
    %p458 = por %p456, %p457
    %s460 = sadd.s32 %s459, 1
    %p463 = scmp.eq.s32.totalorder %s29, 1
    %p464 = scmp.ne.s32.totalorder %s459, %s461
    %p465 = scmp.eq.s32.totalorder %s29, 0
    %p466 = por %p464, %p465
    %p467 = scmp.ne.s32.totalorder %s459, %s461
    %p468 = scmp.eq.s32.totalorder %s34, 1
    %p469 = por %p467, %p468
    %p470 = scmp.ne.s32.totalorder %s461, %s462
    %p471 = scmp.eq.s32.totalorder %s34, 0
    %p472 = por %p470, %p471
    %p473 = scmp.ne.s32.totalorder %s461, %s462
    %p474 = scmp.eq.s32.totalorder %s35, 1
    %p475 = por %p473, %p474
    %p477 = scmp.ne.s32.totalorder %s462, %s476
    %p478 = scmp.eq.s32.totalorder %s35, 0
    %p479 = por %p477, %p478
    %s481 = sadd.s32 %s480, 1
    %p484 = scmp.eq.s32.totalorder %s29, 1
    %p485 = scmp.ne.s32.totalorder %s480, %s482
    %p486 = scmp.eq.s32.totalorder %s29, 0
    %p487 = por %p485, %p486
    %p488 = scmp.ne.s32.totalorder %s480, %s482
    %p489 = scmp.eq.s32.totalorder %s34, 1
    %p490 = por %p488, %p489
    %p491 = scmp.ne.s32.totalorder %s482, %s483
    %p492 = scmp.eq.s32.totalorder %s34, 0
    %p493 = por %p491, %p492
    %p494 = scmp.ne.s32.totalorder %s482, %s483
    %p495 = scmp.eq.s32.totalorder %s35, 1
    %p496 = por %p494, %p495
    %p498 = scmp.ne.s32.totalorder %s483, %s497
    %p499 = scmp.eq.s32.totalorder %s35, 0
    %p500 = por %p498, %p499
    %s502 = sadd.s32 %s501, 1
    %p505 = scmp.eq.s32.totalorder %s29, 1
    %p506 = scmp.ne.s32.totalorder %s501, %s503
    %p507 = scmp.eq.s32.totalorder %s29, 0
    %p508 = por %p506, %p507
    %p509 = scmp.ne.s32.totalorder %s501, %s503
    %p510 = scmp.eq.s32.totalorder %s34, 1
    %p511 = por %p509, %p510
    %p512 = scmp.ne.s32.totalorder %s503, %s504
    %p513 = scmp.eq.s32.totalorder %s34, 0
    %p514 = por %p512, %p513
    %p515 = scmp.ne.s32.totalorder %s503, %s504
    %p516 = scmp.eq.s32.totalorder %s35, 1
    %p517 = por %p515, %p516
    %p519 = scmp.ne.s32.totalorder %s504, %s518
    %p520 = scmp.eq.s32.totalorder %s35, 0
    %p521 = por %p519, %p520
    %s523 = sadd.s32 %s522, 1
    %p526 = scmp.eq.s32.totalorder %s29, 1
    %p527 = scmp.ne.s32.totalorder %s522, %s524
    %p528 = scmp.eq.s32.totalorder %s29, 0
    %p529 = por %p527, %p528
    %p530 = scmp.ne.s32.totalorder %s522, %s524
    %p531 = scmp.eq.s32.totalorder %s34, 1
    %p532 = por %p530, %p531
    %p533 = scmp.ne.s32.totalorder %s524, %s525
    %p534 = scmp.eq.s32.totalorder %s34, 0
    %p535 = por %p533, %p534
    %p536 = scmp.ne.s32.totalorder %s524, %s525
    %p537 = scmp.eq.s32.totalorder %s35, 1
    %p538 = por %p536, %p537
    %p540 = scmp.ne.s32.totalorder %s525, %s539
    %p541 = scmp.eq.s32.totalorder %s35, 0
    %p542 = por %p540, %p541
    %s544 = sadd.s32 %s543, 1
    %p547 = scmp.eq.s32.totalorder %s29, 1
    %p548 = scmp.ne.s32.totalorder %s543, %s545
    %p549 = scmp.eq.s32.totalorder %s29, 0
    %p550 = por %p548, %p549
    %p551 = scmp.ne.s32.totalorder %s543, %s545
    %p552 = scmp.eq.s32.totalorder %s34, 1
    %p553 = por %p551, %p552
    %p554 = scmp.ne.s32.totalorder %s545, %s546
    %p555 = scmp.eq.s32.totalorder %s34, 0
    %p556 = por %p554, %p555
    %p557 = scmp.ne.s32.totalorder %s545, %s546
    %p558 = scmp.eq.s32.totalorder %s35, 1
    %p559 = por %p557, %p558
    %p561 = scmp.ne.s32.totalorder %s546, %s560
    %p562 = scmp.eq.s32.totalorder %s35, 0
    %p563 = por %p561, %p562
    %s565 = sadd.s32 %s564, 1
    %p568 = scmp.eq.s32.totalorder %s29, 1
    %p569 = scmp.ne.s32.totalorder %s564, %s566
    %p570 = scmp.eq.s32.totalorder %s29, 0
    %p571 = por %p569, %p570
    %p572 = scmp.ne.s32.totalorder %s564, %s566
    %p573 = scmp.eq.s32.totalorder %s34, 1
    %p574 = por %p572, %p573
    %p575 = scmp.ne.s32.totalorder %s566, %s567
    %p576 = scmp.eq.s32.totalorder %s34, 0
    %p577 = por %p575, %p576
    %p578 = scmp.ne.s32.totalorder %s566, %s567
    %p579 = scmp.eq.s32.totalorder %s35, 1
    %p580 = por %p578, %p579
    %p582 = scmp.ne.s32.totalorder %s567, %s581
    %p583 = scmp.eq.s32.totalorder %s35, 0
    %p584 = por %p582, %p583
    %p585 = scmp.le.s32.totalorder 1, %s29
    %p586 = scmp.lt.s32.totalorder %s29, 3
    %p587 = pnand %p585, %p586
    %p588 = pneg %p587
    // Predicated region
    $region9: #{_lambda_.2} parent=5 // pred_check
      _
    $region10: #{_lambda_.2} parent=5 // pred_check_branch
      %590 = sbr.rel (%p587) target = $region12
    $region11: #{_lambda_.2} parent=5 // pred_region
      %s591 = ssub.s32 %s29, 1
      // Predicated region
      $region13: #{_lambda_.2} parent=11 // pred_check
        %p592 = pneg %p50
      $region14: #{_lambda_.2} parent=11 // pred_check_branch
        %594 = sbr.rel (%p592) target = $region16
      $region15: #{_lambda_.2} parent=11 // pred_region
        _
      $region16: #{_lambda_.2} parent=11 // pred_fallthru
        _
      // Predicated region
      $region17: #{_lambda_.2} parent=11 // pred_check
        %p595 = pneg %p71
      $region18: #{_lambda_.2} parent=11 // pred_check_branch
        %597 = sbr.rel (%p595) target = $region20
      $region19: #{_lambda_.2} parent=11 // pred_region
        _
      $region20: #{_lambda_.2} parent=11 // pred_fallthru
        _
      // Predicated region
      $region21: #{_lambda_.2} parent=11 // pred_check
        %p598 = pneg %p92
      $region22: #{_lambda_.2} parent=11 // pred_check_branch
        %600 = sbr.rel (%p598) target = $region24
      $region23: #{_lambda_.2} parent=11 // pred_region
        _
      $region24: #{_lambda_.2} parent=11 // pred_fallthru
        _
      // Predicated region
      $region25: #{_lambda_.2} parent=11 // pred_check
        %p601 = pneg %p113
      $region26: #{_lambda_.2} parent=11 // pred_check_branch
        %603 = sbr.rel (%p601) target = $region28
      $region27: #{_lambda_.2} parent=11 // pred_region
        _
      $region28: #{_lambda_.2} parent=11 // pred_fallthru
        _
      // Predicated region
      $region29: #{_lambda_.2} parent=11 // pred_check
        %p604 = pneg %p472
      $region30: #{_lambda_.2} parent=11 // pred_check_branch
        %606 = sbr.rel (%p604) target = $region32
      $region31: #{_lambda_.2} parent=11 // pred_region
        _
      $region32: #{_lambda_.2} parent=11 // pred_fallthru
        _
      // Predicated region
      $region33: #{_lambda_.2} parent=11 // pred_check
        %p607 = pneg %p493
      $region34: #{_lambda_.2} parent=11 // pred_check_branch
        %609 = sbr.rel (%p607) target = $region36
      $region35: #{_lambda_.2} parent=11 // pred_region
        _
      $region36: #{_lambda_.2} parent=11 // pred_fallthru
        _
      // Predicated region
      $region37: #{_lambda_.2} parent=11 // pred_check
        %p610 = pneg %p514
      $region38: #{_lambda_.2} parent=11 // pred_check_branch
        %612 = sbr.rel (%p610) target = $region40
      $region39: #{_lambda_.2} parent=11 // pred_region
        _
      $region40: #{_lambda_.2} parent=11 // pred_fallthru
        _
    $region12: #{_lambda_.2} parent=5 // pred_fallthru
      _
    %p613 = scmp.lt.s32.totalorder %s29, 2
    // Predicated region
    $region41: #{_lambda_.2} parent=5 // pred_check
      %p614 = pneg %p613
    $region42: #{_lambda_.2} parent=5 // pred_check_branch
      %616 = sbr.rel (%p614) target = $region44
    $region43: #{_lambda_.2} parent=5 // pred_region
      // Predicated region
      $region45: #{_lambda_.2} parent=43 // pred_check
        %p617 = pneg %p133
      $region46: #{_lambda_.2} parent=43 // pred_check_branch
        %619 = sbr.rel (%p617) target = $region48
      $region47: #{_lambda_.2} parent=43 // pred_region
        %p620 = scmp.lt.s32.totalorder %s29, 1
        %s621 = scalar_select %p620, %s29, 1
        %s622 = scalar_lea.vmem %s4, %s621
      $region48: #{_lambda_.2} parent=43 // pred_fallthru
        _
      // Predicated region
      $region49: #{_lambda_.2} parent=43 // pred_check
        %p623 = pneg %p159
      $region50: #{_lambda_.2} parent=43 // pred_check_branch
        %625 = sbr.rel (%p623) target = $region52
      $region51: #{_lambda_.2} parent=43 // pred_region
        %p626 = scmp.lt.s32.totalorder %s29, 1
        %s627 = scalar_select %p626, %s29, 1
        %s628 = scalar_lea.vmem %s5, %s627
      $region52: #{_lambda_.2} parent=43 // pred_fallthru
        _
      // Predicated region
      $region53: #{_lambda_.2} parent=43 // pred_check
        %p629 = pneg %p185
      $region54: #{_lambda_.2} parent=43 // pred_check_branch
        %631 = sbr.rel (%p629) target = $region56
      $region55: #{_lambda_.2} parent=43 // pred_region
        %p632 = scmp.lt.s32.totalorder %s29, 1
        %s633 = scalar_select %p632, %s29, 1
        %s634 = smul.addr %s633, 4
        %s635 = smul.addr %s634, 8
        %s636 = scalar_lea.vmem %s6, %s635
      $region56: #{_lambda_.2} parent=43 // pred_fallthru
        _
      // Predicated region
      $region57: #{_lambda_.2} parent=43 // pred_check
        %p637 = pneg %p211
      $region58: #{_lambda_.2} parent=43 // pred_check_branch
        %639 = sbr.rel (%p637) target = $region60
      $region59: #{_lambda_.2} parent=43 // pred_region
        %p640 = scmp.lt.s32.totalorder %s29, 1
        %s641 = scalar_select %p640, %s29, 1
        %s642 = smul.addr %s641, 4
        %s643 = smul.addr %s642, 8
        %s644 = scalar_lea.vmem %s7, %s643
      $region60: #{_lambda_.2} parent=43 // pred_fallthru
        _
      // Predicated region
      $region61: #{_lambda_.2} parent=43 // pred_check
        %p645 = pneg %p237
      $region62: #{_lambda_.2} parent=43 // pred_check_branch
        %647 = sbr.rel (%p645) target = $region64
      $region63: #{_lambda_.2} parent=43 // pred_region
        %p648 = scmp.lt.s32.totalorder %s29, 1
        %s649 = scalar_select %p648, %s29, 1
        %s650 = smul.addr %s649, 4
        %s651 = smul.addr %s650, 8
        %s652 = scalar_lea.vmem %s8, %s651
      $region64: #{_lambda_.2} parent=43 // pred_fallthru
        _
      // Predicated region
      $region65: #{_lambda_.2} parent=43 // pred_check
        %p653 = pneg %p263
      $region66: #{_lambda_.2} parent=43 // pred_check_branch
        %655 = sbr.rel (%p653) target = $region68
      $region67: #{_lambda_.2} parent=43 // pred_region
        %p656 = scmp.lt.s32.totalorder %s29, 1
        %s657 = scalar_select %p656, %s29, 1
        %s658 = smul.addr %s657, 4
        %s659 = smul.addr %s658, 8
        %s660 = scalar_lea.vmem %s9, %s659
      $region68: #{_lambda_.2} parent=43 // pred_fallthru
        _
      // Predicated region
      $region69: #{_lambda_.2} parent=43 // pred_check
        %p661 = pneg %p289
      $region70: #{_lambda_.2} parent=43 // pred_check_branch
        %663 = sbr.rel (%p661) target = $region72
      $region71: #{_lambda_.2} parent=43 // pred_region
        %p664 = scmp.lt.s32.totalorder %s29, 1
        %s665 = scalar_select %p664, %s29, 1
        %s666 = scalar_lea.vmem %s10, %s665
      $region72: #{_lambda_.2} parent=43 // pred_fallthru
        _
      // Predicated region
      $region73: #{_lambda_.2} parent=43 // pred_check
        %p667 = pneg %p315
      $region74: #{_lambda_.2} parent=43 // pred_check_branch
        %669 = sbr.rel (%p667) target = $region76
      $region75: #{_lambda_.2} parent=43 // pred_region
        %p670 = scmp.lt.s32.totalorder %s29, 1
        %s671 = scalar_select %p670, %s29, 1
        %s672 = scalar_lea.vmem %s11, %s671
      $region76: #{_lambda_.2} parent=43 // pred_fallthru
        _
      // Predicated region
      $region77: #{_lambda_.2} parent=43 // pred_check
        %p673 = pneg %p341
      $region78: #{_lambda_.2} parent=43 // pred_check_branch
        %675 = sbr.rel (%p673) target = $region80
      $region79: #{_lambda_.2} parent=43 // pred_region
        %p676 = scmp.lt.s32.totalorder %s29, 1
        %s677 = scalar_select %p676, %s29, 1
        %s678 = scalar_lea.vmem %s12, %s677
      $region80: #{_lambda_.2} parent=43 // pred_fallthru
        _
      // Predicated region
      $region81: #{_lambda_.2} parent=43 // pred_check
        %p679 = pneg %p367
      $region82: #{_lambda_.2} parent=43 // pred_check_branch
        %681 = sbr.rel (%p679) target = $region84
      $region83: #{_lambda_.2} parent=43 // pred_region
        %p682 = scmp.lt.s32.totalorder %s29, 1
        %s683 = scalar_select %p682, %s29, 1
        %s684 = smul.addr %s683, 4
        %s685 = smul.addr %s684, 8
        %s686 = scalar_lea.vmem %s13, %s685
      $region84: #{_lambda_.2} parent=43 // pred_fallthru
        _
      // Predicated region
      $region85: #{_lambda_.2} parent=43 // pred_check
        %p687 = pneg %p393
      $region86: #{_lambda_.2} parent=43 // pred_check_branch
        %689 = sbr.rel (%p687) target = $region88
      $region87: #{_lambda_.2} parent=43 // pred_region
        %p690 = scmp.lt.s32.totalorder %s29, 1
        %s691 = scalar_select %p690, %s29, 1
        %s692 = scalar_lea.vmem %s14, %s691
      $region88: #{_lambda_.2} parent=43 // pred_fallthru
        _
      // Predicated region
      $region89: #{_lambda_.2} parent=43 // pred_check
        %p693 = pneg %p419
      $region90: #{_lambda_.2} parent=43 // pred_check_branch
        %695 = sbr.rel (%p693) target = $region92
      $region91: #{_lambda_.2} parent=43 // pred_region
        %p696 = scmp.lt.s32.totalorder %s29, 1
        %s697 = scalar_select %p696, %s29, 1
        %s698 = smul.addr %s697, 16
        %s699 = smul.addr %s698, 8
        %s700 = scalar_lea.vmem %s15, %s699
      $region92: #{_lambda_.2} parent=43 // pred_fallthru
        _
      // Predicated region
      $region93: #{_lambda_.2} parent=43 // pred_check
        %p701 = pneg %p445
      $region94: #{_lambda_.2} parent=43 // pred_check_branch
        %703 = sbr.rel (%p701) target = $region96
      $region95: #{_lambda_.2} parent=43 // pred_region
        %p704 = scmp.lt.s32.totalorder %s29, 1
        %s705 = scalar_select %p704, %s29, 1
        %s706 = scalar_lea.vmem %s16, %s705
      $region96: #{_lambda_.2} parent=43 // pred_fallthru
        _
    $region44: #{_lambda_.2} parent=5 // pred_fallthru
      _
    %p707 = scmp.le.s32.totalorder 1, %s29
    %p708 = scmp.lt.s32.totalorder %s29, 3
    %p709 = pnand %p707, %p708
    %p710 = pneg %p709
    // Predicated region
    $region97: #{_lambda_.2} parent=5 // pred_check
      _
    $region98: #{_lambda_.2} parent=5 // pred_check_branch
      %712 = sbr.rel (%p709) target = $region100
    $region99: #{_lambda_.2} parent=5 // pred_region
      %s713 = ssub.s32 %s29, 1
      %p714 = pneg %p50
      %p715 = pneg %p47
      %p716 = pneg %p71
      %p717 = pneg %p68
      %p718 = pneg %p92
      %p719 = pneg %p89
      %p720 = pneg %p113
      %p721 = pneg %p110
      %p722 = scmp.lt.s32.totalorder %s34, 1
      %s723 = scalar_select %p722, %s34, 1
      %s724 = scalar_lea.vmem %s4, %s723
      %p725 = pneg %p139
      %p726 = pneg %p136
      %p727 = scmp.lt.s32.totalorder %s34, 1
      %s728 = scalar_select %p727, %s34, 1
      %s729 = scalar_lea.vmem %s5, %s728
      %p730 = pneg %p165
      %p731 = pneg %p162
      %p732 = scmp.lt.s32.totalorder %s34, 1
      %s733 = scalar_select %p732, %s34, 1
      %s734 = smul.addr %s733, 4
      %s735 = smul.addr %s734, 8
      %s736 = scalar_lea.vmem %s6, %s735
      %p737 = pneg %p191
      %p738 = pneg %p188
      %p739 = scmp.lt.s32.totalorder %s34, 1
      %s740 = scalar_select %p739, %s34, 1
      %s741 = smul.addr %s740, 4
      %s742 = smul.addr %s741, 8
      %s743 = scalar_lea.vmem %s7, %s742
      %p744 = pneg %p217
      %p745 = pneg %p214
      %p746 = scmp.lt.s32.totalorder %s34, 1
      %s747 = scalar_select %p746, %s34, 1
      %s748 = smul.addr %s747, 4
      %s749 = smul.addr %s748, 8
      %s750 = scalar_lea.vmem %s8, %s749
      %p751 = pneg %p243
      %p752 = pneg %p240
      %p753 = scmp.lt.s32.totalorder %s34, 1
      %s754 = scalar_select %p753, %s34, 1
      %s755 = smul.addr %s754, 4
      %s756 = smul.addr %s755, 8
      %s757 = scalar_lea.vmem %s9, %s756
      %p758 = pneg %p269
      %p759 = pneg %p266
      %p760 = scmp.lt.s32.totalorder %s34, 1
      %s761 = scalar_select %p760, %s34, 1
      %s762 = scalar_lea.vmem %s10, %s761
      %p763 = pneg %p295
      %p764 = pneg %p292
      %p765 = scmp.lt.s32.totalorder %s34, 1
      %s766 = scalar_select %p765, %s34, 1
      %s767 = scalar_lea.vmem %s11, %s766
      %p768 = pneg %p321
      %p769 = pneg %p318
      %p770 = scmp.lt.s32.totalorder %s34, 1
      %s771 = scalar_select %p770, %s34, 1
      %s772 = scalar_lea.vmem %s12, %s771
      %p773 = pneg %p347
      %p774 = pneg %p344
      %p775 = scmp.lt.s32.totalorder %s34, 1
      %s776 = scalar_select %p775, %s34, 1
      %s777 = smul.addr %s776, 4
      %s778 = smul.addr %s777, 8
      %s779 = scalar_lea.vmem %s13, %s778
      %p780 = pneg %p373
      %p781 = pneg %p370
      %p782 = scmp.lt.s32.totalorder %s34, 1
      %s783 = scalar_select %p782, %s34, 1
      %s784 = scalar_lea.vmem %s14, %s783
      %p785 = pneg %p399
      %p786 = pneg %p396
      %p787 = scmp.lt.s32.totalorder %s34, 1
      %s788 = scalar_select %p787, %s34, 1
      %s789 = smul.addr %s788, 16
      %s790 = smul.addr %s789, 8
      %s791 = scalar_lea.vmem %s15, %s790
      %p792 = pneg %p425
      %p793 = pneg %p422
      %p794 = scmp.lt.s32.totalorder %s34, 1
      %s795 = scalar_select %p794, %s34, 1
      %s796 = scalar_lea.vmem %s16, %s795
      %p797 = pneg %p451
      %p798 = pneg %p448
      %p799 = pneg %p472
      %p800 = pneg %p469
      %p801 = pneg %p493
      %p802 = pneg %p490
      %p803 = pneg %p514
      %p804 = pneg %p511
      %p805 = pneg %p535
      %p806 = pneg %p532
      %p807 = pneg %p556
      %p808 = pneg %p553
      %p809 = pneg %p577
      %p810 = pneg %p574
      %p811 = scmp.lt.s32.totalorder %s34, 1
      %s812 = scalar_select %p811, %s34, 1
      %s813 = scalar_lea.vmem %s4, %s812
      %p814 = scmp.lt.s32.totalorder %s34, 1
      %s815 = scalar_select %p814, %s34, 1
      %s816 = scalar_lea.vmem %s5, %s815
      %p817 = scmp.lt.s32.totalorder %s34, 1
      %s818 = scalar_select %p817, %s34, 1
      %s819 = smul.addr %s818, 4
      %s820 = smul.addr %s819, 8
      %s821 = scalar_lea.vmem %s6, %s820
      %p822 = scmp.lt.s32.totalorder %s34, 1
      %s823 = scalar_select %p822, %s34, 1
      %s824 = smul.addr %s823, 4
      %s825 = smul.addr %s824, 8
      %s826 = scalar_lea.vmem %s7, %s825
      %p827 = scmp.lt.s32.totalorder %s34, 1
      %s828 = scalar_select %p827, %s34, 1
      %s829 = smul.addr %s828, 4
      %s830 = smul.addr %s829, 8
      %s831 = scalar_lea.vmem %s8, %s830
      %p832 = scmp.lt.s32.totalorder %s34, 1
      %s833 = scalar_select %p832, %s34, 1
      %s834 = smul.addr %s833, 4
      %s835 = smul.addr %s834, 8
      %s836 = scalar_lea.vmem %s9, %s835
      %p837 = scmp.lt.s32.totalorder %s34, 1
      %s838 = scalar_select %p837, %s34, 1
      %s839 = scalar_lea.vmem %s10, %s838
      %p840 = scmp.lt.s32.totalorder %s34, 1
      %s841 = scalar_select %p840, %s34, 1
      %s842 = scalar_lea.vmem %s11, %s841
      %p843 = scmp.lt.s32.totalorder %s34, 1
      %s844 = scalar_select %p843, %s34, 1
      %s845 = scalar_lea.vmem %s12, %s844
      %p846 = scmp.lt.s32.totalorder %s34, 1
      %s847 = scalar_select %p846, %s34, 1
      %s848 = smul.addr %s847, 4
      %s849 = smul.addr %s848, 8
      %s850 = scalar_lea.vmem %s13, %s849
      %p851 = scmp.lt.s32.totalorder %s34, 1
      %s852 = scalar_select %p851, %s34, 1
      %s853 = scalar_lea.vmem %s14, %s852
      %p854 = scmp.lt.s32.totalorder %s34, 1
      %s855 = scalar_select %p854, %s34, 1
      %s856 = smul.addr %s855, 16
      %s857 = smul.addr %s856, 8
      %s858 = scalar_lea.vmem %s15, %s857
      %p859 = scmp.lt.s32.totalorder %s34, 1
      %s860 = scalar_select %p859, %s34, 1
      %s861 = scalar_lea.vmem %s16, %s860
      %p862 = scmp.eq.s32.totalorder %s34, 0
      // Predicated region
      $region101: #{_lambda_.2} parent=99 // pred_check
        %p863 = pneg %p862
      $region102: #{_lambda_.2} parent=99 // pred_check_branch
        %865 = sbr.rel (%p863) target = $region104
      $region103: #{_lambda_.2} parent=99 // pred_region
        %v866 = vlaneseq
        %v867 = vand.u32 %v866, 127
        %v868 = vld [vmem:[%s0] sm:$0xff]
        %869 = vadd.xlane.f32.xlu0 %v868
        %v870 = vpop.xlane.xlu0 %869
        %v871 = vrot.slane %v870, 4
        %v872 = vadd.f32 %v870, %v871
        %v873 = vrot.slane %v872, 2
        %v874 = vadd.f32 %v872, %v873
        %v875 = vrot.slane %v874, 1
        %v876 = vadd.f32 %v874, %v875
        %v877 = vmul.f32 %v876, 0.0009765625
        %v878 = vsub.f32 %v868, %v877
        %v879 = vmul.f32 %v878, %v878
        %880 = vadd.xlane.f32.xlu0 %v879
        %v881 = vpop.xlane.xlu0 %880
        %v882 = vrot.slane %v881, 4
        %v883 = vadd.f32 %v881, %v882
        %v884 = vrot.slane %v883, 2
        %v885 = vadd.f32 %v883, %v884
        %v886 = vrot.slane %v885, 1
        %v887 = vadd.f32 %v885, %v886
        %v888 = vmul.f32 %v887, 0.0009775171
        %v889 = vrsqrt.pop %v888
        %v890 = vmul.f32 %v888, %v889
        %vm891 = vcmp.eq.f32.partialorder %v888, inf
        %v892 = vsel %vm891, %v888, %v890
        %vm893 = vcmp.eq.f32.partialorder %v888, 0.0
        %v894 = vand.u32 %v888, 2147483648
        %v895 = vsel %vm893, %v894, %v892
        %v896 = vadd.f32 %v895, 1e-07
        %v897 = vrcp.pop %v896
        %v898 = vmul.f32 1.0, %v897
        %v899 = vmul.f32 %v878, %v898
        %v900 = vld [vmem:[%s1] sm:$0xff]
        %v901 = vld [vmem:[%s1 + $0x8] sm:$0xff]
        %v902 = vld [vmem:[%s1 + $0x10] sm:$0xff]
        %v903 = vld [vmem:[%s1 + $0x18] sm:$0xff]
        %v904 = vld [vmem:[%s1 + $0x20] sm:$0xff]
        %v905 = vld [vmem:[%s1 + $0x28] sm:$0xff]
        %v906 = vld [vmem:[%s1 + $0x30] sm:$0xff]
        %v907 = vld [vmem:[%s1 + $0x38] sm:$0xff]
        %v908 = vld [vmem:[%s1 + $0x40] sm:$0xff]
        %v909 = vld [vmem:[%s1 + $0x48] sm:$0xff]
        %v910 = vld [vmem:[%s1 + $0x50] sm:$0xff]
        %v911 = vld [vmem:[%s1 + $0x58] sm:$0xff]
        %v912 = vld [vmem:[%s1 + $0x60] sm:$0xff]
        %v913 = vld [vmem:[%s1 + $0x68] sm:$0xff]
        %v914 = vld [vmem:[%s1 + $0x70] sm:$0xff]
        %v915 = vld [vmem:[%s1 + $0x78] sm:$0xff]
        %vm916 = vcmp.eq.s32.totalorder %v867, 0
        %v917 = vsel %vm916, 1, 0
        %v918 = vcvt.s32.f32 %v917
        %v919 = vmul.f32 %v877, %v918
        %v920 = vadd.f32 %v919, 0.0
        %v921 = vmul.f32 %v896, %v918
        %v922 = vadd.f32 %v921, 0.0
        %v923 = vld [vmem:[%s0 + $0x8] sm:$0xff]
        %924 = vadd.xlane.f32.xlu0 %v923
        %v925 = vpop.xlane.xlu0 %924
        %v926 = vrot.slane %v925, 4
        %v927 = vadd.f32 %v925, %v926
        %v928 = vrot.slane %v927, 2
        %v929 = vadd.f32 %v927, %v928
        %v930 = vrot.slane %v929, 1
        %v931 = vadd.f32 %v929, %v930
        %v932 = vmul.f32 %v931, 0.0009765625
        %v933 = vsub.f32 %v923, %v932
        %v934 = vmul.f32 %v933, %v933
        %935 = vadd.xlane.f32.xlu0 %v934
        %v936 = vpop.xlane.xlu0 %935
        %v937 = vrot.slane %v936, 4
        %v938 = vadd.f32 %v936, %v937
        %v939 = vrot.slane %v938, 2
        %v940 = vadd.f32 %v938, %v939
        %v941 = vrot.slane %v940, 1
        %v942 = vadd.f32 %v940, %v941
        %v943 = vmul.f32 %v942, 0.0009775171
        %v944 = vrsqrt.pop %v943
        %v945 = vmul.f32 %v943, %v944
        %vm946 = vcmp.eq.f32.partialorder %v943, inf
        %v947 = vsel %vm946, %v943, %v945
        %vm948 = vcmp.eq.f32.partialorder %v943, 0.0
        %v949 = vand.u32 %v943, 2147483648
        %v950 = vsel %vm948, %v949, %v947
        %v951 = vadd.f32 %v950, 1e-07
        %v952 = vrcp.pop %v951
        %v953 = vmul.f32 1.0, %v952
        %v954 = vmul.f32 %v933, %v953
        %v955 = vld [vmem:[%s1 + $0x80] sm:$0xff]
        %v956 = vld [vmem:[%s1 + $0x88] sm:$0xff]
        %v957 = vld [vmem:[%s1 + $0x90] sm:$0xff]
        %v958 = vld [vmem:[%s1 + $0x98] sm:$0xff]
        %v959 = vld [vmem:[%s1 + $0xa0] sm:$0xff]
        %v960 = vld [vmem:[%s1 + $0xa8] sm:$0xff]
        %v961 = vld [vmem:[%s1 + $0xb0] sm:$0xff]
        %v962 = vld [vmem:[%s1 + $0xb8] sm:$0xff]
        %v963 = vld [vmem:[%s1 + $0xc0] sm:$0xff]
        %v964 = vld [vmem:[%s1 + $0xc8] sm:$0xff]
        %v965 = vld [vmem:[%s1 + $0xd0] sm:$0xff]
        %v966 = vld [vmem:[%s1 + $0xd8] sm:$0xff]
        %v967 = vld [vmem:[%s1 + $0xe0] sm:$0xff]
        %v968 = vld [vmem:[%s1 + $0xe8] sm:$0xff]
        %v969 = vld [vmem:[%s1 + $0xf0] sm:$0xff]
        %v970 = vld [vmem:[%s1 + $0xf8] sm:$0xff]
        %971 = vmatprep.subr.mxu0 0.0
        %972 = vmatpush1.msra.mxu0 %v955
        %973 = vmatprep.subr.mxu0 0.0
        %974 = vmatpush1.msra.mxu0 %v956
        %975 = vmatprep.subr.mxu0 0.0
        %976 = vmatpush1.msra.mxu0 %v957
        %977 = vmatprep.subr.mxu0 0.0
        %978 = vmatpush1.msra.mxu0 %v958
        %979 = vmatprep.subr.mxu0 0.0
        %980 = vmatpush1.msra.mxu0 %v959
        %981 = vmatprep.subr.mxu0 0.0
        %982 = vmatpush1.msra.mxu0 %v960
        %983 = vmatprep.subr.mxu0 0.0
        %984 = vmatpush1.msra.mxu0 %v961
        %985 = vmatprep.subr.mxu0 0.0
        %986 = vmatpush1.msra.mxu0 %v962
        %987 = vmatprep.subr.mxu0 0.0
        %988 = vmatpush1.msra.mxu0 %v963
        %989 = vmatprep.subr.mxu0 0.0
        %990 = vmatpush1.msra.mxu0 %v964
        %991 = vmatprep.subr.mxu0 0.0
        %992 = vmatpush1.msra.mxu0 %v965
        %993 = vmatprep.subr.mxu0 0.0
        %994 = vmatpush1.msra.mxu0 %v966
        %995 = vmatprep.subr.mxu0 0.0
        %996 = vmatpush1.msra.mxu0 %v967
        %997 = vmatprep.subr.mxu0 0.0
        %998 = vmatpush1.msra.mxu0 %v968
        %999 = vmatprep.subr.mxu0 0.0
        %1000 = vmatpush1.msra.mxu0 %v969
        %1001 = vmatprep.subr.mxu0 0.0
        %1002 = vmatpush1.msra.mxu0 %v970
        %1003 = vmatprep.subr.mxu0 0.0
        %1004 = vmatpush1.msra.mxu0 0.0
        %1005 = vmatprep.subr.mxu0 0.0
        %1006 = vmatpush1.msra.mxu0 0.0
        %1007 = vmatprep.subr.mxu0 0.0
        %1008 = vmatpush1.msra.mxu0 0.0
        %1009 = vmatprep.subr.mxu0 0.0
        %1010 = vmatpush1.msra.mxu0 0.0
        %1011 = vmatprep.subr.mxu0 0.0
        %1012 = vmatpush1.msra.mxu0 0.0
        %1013 = vmatprep.subr.mxu0 0.0
        %1014 = vmatpush1.msra.mxu0 0.0
        %1015 = vmatprep.subr.mxu0 0.0
        %1016 = vmatpush1.msra.mxu0 0.0
        %1017 = vmatprep.subr.mxu0 0.0
        %1018 = vmatpush1.msra.mxu0 0.0
        %1019 = vmatprep.subr.mxu0 0.0
        %1020 = vmatpush1.msra.mxu0 0.0
        %1021 = vmatprep.subr.mxu0 0.0
        %1022 = vmatpush1.msra.mxu0 0.0
        %1023 = vmatprep.subr.mxu0 0.0
        %1024 = vmatpush1.msra.mxu0 0.0
        %1025 = vmatprep.subr.mxu0 0.0
        %1026 = vmatpush1.msra.mxu0 0.0
        %1027 = vmatprep.subr.mxu0 0.0
        %1028 = vmatpush1.msra.mxu0 0.0
        %1029 = vmatprep.subr.mxu0 0.0
        %1030 = vmatpush1.msra.mxu0 0.0
        %1031 = vmatprep.subr.mxu0 0.0
        %1032 = vmatpush1.msra.mxu0 0.0
        %1033 = vmatprep.subr.mxu0 0.0
        %1034 = vmatpush1.msra.mxu0 0.0
        %1035 = vmatprep.mubr.f32.mxu0 0.0
        %1036 = vmatmul.mubr.f32.gmra.mrb[0].mxu0 %v954
        %v1037 = vpop.f32.mrb[0].mxu0
        %v1038 = vadd.f32 0.0, %v1037
        %v1039 = vpop.f32.mrb[0].mxu0
        %1040 = vdwg.mxu0
        %1041 = vmatprep.subr.mxu0 0.0
        %1042 = vmatpush1.msra.mxu0 %v900
        %1043 = vmatprep.subr.mxu0 0.0
        %1044 = vmatpush1.msra.mxu0 %v901
        %1045 = vmatprep.subr.mxu0 0.0
        %1046 = vmatpush1.msra.mxu0 %v902
        %1047 = vmatprep.subr.mxu0 0.0
        %1048 = vmatpush1.msra.mxu0 %v903
        %1049 = vmatprep.subr.mxu0 0.0
        %1050 = vmatpush1.msra.mxu0 %v904
        %1051 = vmatprep.subr.mxu0 0.0
        %1052 = vmatpush1.msra.mxu0 %v905
        %1053 = vmatprep.subr.mxu0 0.0
        %1054 = vmatpush1.msra.mxu0 %v906
        %1055 = vmatprep.subr.mxu0 0.0
        %1056 = vmatpush1.msra.mxu0 %v907
        %1057 = vmatprep.subr.mxu0 0.0
        %1058 = vmatpush1.msra.mxu0 %v908
        %1059 = vmatprep.subr.mxu0 0.0
        %1060 = vmatpush1.msra.mxu0 %v909
        %1061 = vmatprep.subr.mxu0 0.0
        %1062 = vmatpush1.msra.mxu0 %v910
        %1063 = vmatprep.subr.mxu0 0.0
        %1064 = vmatpush1.msra.mxu0 %v911
        %1065 = vmatprep.subr.mxu0 0.0
        %1066 = vmatpush1.msra.mxu0 %v912
        %1067 = vmatprep.subr.mxu0 0.0
        %1068 = vmatpush1.msra.mxu0 %v913
        %1069 = vmatprep.subr.mxu0 0.0
        %1070 = vmatpush1.msra.mxu0 %v914
        %1071 = vmatprep.subr.mxu0 0.0
        %1072 = vmatpush1.msra.mxu0 %v915
        %1073 = vmatprep.subr.mxu0 0.0
        %1074 = vmatpush1.msra.mxu0 0.0
        %1075 = vmatprep.subr.mxu0 0.0
        %1076 = vmatpush1.msra.mxu0 0.0
        %1077 = vmatprep.subr.mxu0 0.0
        %1078 = vmatpush1.msra.mxu0 0.0
        %1079 = vmatprep.subr.mxu0 0.0
        %1080 = vmatpush1.msra.mxu0 0.0
        %1081 = vmatprep.subr.mxu0 0.0
        %1082 = vmatpush1.msra.mxu0 0.0
        %1083 = vmatprep.subr.mxu0 0.0
        %1084 = vmatpush1.msra.mxu0 0.0
        %1085 = vmatprep.subr.mxu0 0.0
        %1086 = vmatpush1.msra.mxu0 0.0
        %1087 = vmatprep.subr.mxu0 0.0
        %1088 = vmatpush1.msra.mxu0 0.0
        %1089 = vmatprep.subr.mxu0 0.0
        %1090 = vmatpush1.msra.mxu0 0.0
        %1091 = vmatprep.subr.mxu0 0.0
        %1092 = vmatpush1.msra.mxu0 0.0
        %1093 = vmatprep.subr.mxu0 0.0
        %1094 = vmatpush1.msra.mxu0 0.0
        %1095 = vmatprep.subr.mxu0 0.0
        %1096 = vmatpush1.msra.mxu0 0.0
        %1097 = vmatprep.subr.mxu0 0.0
        %1098 = vmatpush1.msra.mxu0 0.0
        %1099 = vmatprep.subr.mxu0 0.0
        %1100 = vmatpush1.msra.mxu0 0.0
        %1101 = vmatprep.subr.mxu0 0.0
        %1102 = vmatpush1.msra.mxu0 0.0
        %1103 = vmatprep.subr.mxu0 0.0
        %1104 = vmatpush1.msra.mxu0 0.0
        %1105 = vmatprep.mubr.f32.mxu0 0.0
        %1106 = vmatmul.mubr.f32.gmra.mrb[0].mxu0 %v899
        %v1107 = vpop.f32.mrb[0].mxu0
        %v1108 = vadd.f32 %v1038, %v1107
        %v1109 = vpop.f32.mrb[0].mxu0
        %1110 = vdwg.mxu0
        %vm1111 = vcmp.eq.s32.totalorder %v867, 1
        %v1112 = vsel %vm1111, 1, 0
        %v1113 = vcvt.s32.f32 %v1112
        %v1114 = vmul.f32 %v932, %v1113
        %v1115 = vadd.f32 %v920, %v1114
        %v1116 = vmul.f32 %v951, %v1113
        %v1117 = vadd.f32 %v922, %v1116
        %v1118 = vld [vmem:[%s2] sm:$0x1]
        %v1120 = vlaneseq
        %v1121 = vshrl.u32 %v1120, 7
        %v1122 = vsub.s32 0, %v1121
        %v1123 = vrot.slane %v1118, %v1122
        %v1125 = vadd.f32 %v1108, %v1123
        %v1126 = vld [vmem:[%s3] sm:$0xff]
        %v1127 = vadd.f32 %v1125, %v1126
        %vm1128 = vcmask 261120
        %1129 = vst.msk [vmem:[#allocation2] sm:$0xff] %vm1128, %v1127
        %vm1130 = vcmask 8192
        %1131 = vst.msk [vmem:[%s21] sm:$0x1] %vm1130, %v1115
        %1132 = vst.msk [vmem:[%s22] sm:$0x1] %vm1130, %v1117
        %s1133 = scalar_lea.vmem %s0, 16
        %v1134 = vld [vmem:[%s1133] sm:$0xff]
        %1135 = vadd.xlane.f32.xlu0 %v1134
        %v1136 = vpop.xlane.xlu0 %1135
        %v1137 = vrot.slane %v1136, 4
        %v1138 = vadd.f32 %v1136, %v1137
        %v1139 = vrot.slane %v1138, 2
        %v1140 = vadd.f32 %v1138, %v1139
        %v1141 = vrot.slane %v1140, 1
        %v1142 = vadd.f32 %v1140, %v1141
        %v1143 = vmul.f32 %v1142, 0.0009765625
        %v1144 = vsub.f32 %v1134, %v1143
        %v1145 = vmul.f32 %v1144, %v1144
        %1146 = vadd.xlane.f32.xlu0 %v1145
        %v1147 = vpop.xlane.xlu0 %1146
        %v1148 = vrot.slane %v1147, 4
        %v1149 = vadd.f32 %v1147, %v1148
        %v1150 = vrot.slane %v1149, 2
        %v1151 = vadd.f32 %v1149, %v1150
        %v1152 = vrot.slane %v1151, 1
        %v1153 = vadd.f32 %v1151, %v1152
        %v1154 = vmul.f32 %v1153, 0.0009775171
        %v1155 = vrsqrt.pop %v1154
        %v1156 = vmul.f32 %v1154, %v1155
        %vm1157 = vcmp.eq.f32.partialorder %v1154, inf
        %v1158 = vsel %vm1157, %v1154, %v1156
        %vm1159 = vcmp.eq.f32.partialorder %v1154, 0.0
        %v1160 = vand.u32 %v1154, 2147483648
        %v1161 = vsel %vm1159, %v1160, %v1158
        %v1162 = vadd.f32 %v1161, 1e-07
        %v1163 = vrcp.pop %v1162
        %v1164 = vmul.f32 1.0, %v1163
        %v1165 = vmul.f32 %v1144, %v1164
        %v1166 = vld [vmem:[%s1] sm:$0xff]
        %v1167 = vld [vmem:[%s1 + $0x8] sm:$0xff]
        %v1168 = vld [vmem:[%s1 + $0x10] sm:$0xff]
        %v1169 = vld [vmem:[%s1 + $0x18] sm:$0xff]
        %v1170 = vld [vmem:[%s1 + $0x20] sm:$0xff]
        %v1171 = vld [vmem:[%s1 + $0x28] sm:$0xff]
        %v1172 = vld [vmem:[%s1 + $0x30] sm:$0xff]
        %v1173 = vld [vmem:[%s1 + $0x38] sm:$0xff]
        %v1174 = vld [vmem:[%s1 + $0x40] sm:$0xff]
        %v1175 = vld [vmem:[%s1 + $0x48] sm:$0xff]
        %v1176 = vld [vmem:[%s1 + $0x50] sm:$0xff]
        %v1177 = vld [vmem:[%s1 + $0x58] sm:$0xff]
        %v1178 = vld [vmem:[%s1 + $0x60] sm:$0xff]
        %v1179 = vld [vmem:[%s1 + $0x68] sm:$0xff]
        %v1180 = vld [vmem:[%s1 + $0x70] sm:$0xff]
        %v1181 = vld [vmem:[%s1 + $0x78] sm:$0xff]
        %v1182 = vmul.f32 %v1143, %v918
        %v1183 = vadd.f32 %v1182, 0.0
        %v1184 = vmul.f32 %v1162, %v918
        %v1185 = vadd.f32 %v1184, 0.0
        %v1186 = vld [vmem:[%s1133 + $0x8] sm:$0xff]
        %1187 = vadd.xlane.f32.xlu0 %v1186
        %v1188 = vpop.xlane.xlu0 %1187
        %v1189 = vrot.slane %v1188, 4
        %v1190 = vadd.f32 %v1188, %v1189
        %v1191 = vrot.slane %v1190, 2
        %v1192 = vadd.f32 %v1190, %v1191
        %v1193 = vrot.slane %v1192, 1
        %v1194 = vadd.f32 %v1192, %v1193
        %v1195 = vmul.f32 %v1194, 0.0009765625
        %v1196 = vsub.f32 %v1186, %v1195
        %v1197 = vmul.f32 %v1196, %v1196
        %1198 = vadd.xlane.f32.xlu0 %v1197
        %v1199 = vpop.xlane.xlu0 %1198
        %v1200 = vrot.slane %v1199, 4
        %v1201 = vadd.f32 %v1199, %v1200
        %v1202 = vrot.slane %v1201, 2
        %v1203 = vadd.f32 %v1201, %v1202
        %v1204 = vrot.slane %v1203, 1
        %v1205 = vadd.f32 %v1203, %v1204
        %v1206 = vmul.f32 %v1205, 0.0009775171
        %v1207 = vrsqrt.pop %v1206
        %v1208 = vmul.f32 %v1206, %v1207
        %vm1209 = vcmp.eq.f32.partialorder %v1206, inf
        %v1210 = vsel %vm1209, %v1206, %v1208
        %vm1211 = vcmp.eq.f32.partialorder %v1206, 0.0
        %v1212 = vand.u32 %v1206, 2147483648
        %v1213 = vsel %vm1211, %v1212, %v1210
        %v1214 = vadd.f32 %v1213, 1e-07
        %v1215 = vrcp.pop %v1214
        %v1216 = vmul.f32 1.0, %v1215
        %v1217 = vmul.f32 %v1196, %v1216
        %v1218 = vld [vmem:[%s1 + $0x80] sm:$0xff]
        %v1219 = vld [vmem:[%s1 + $0x88] sm:$0xff]
        %v1220 = vld [vmem:[%s1 + $0x90] sm:$0xff]
        %v1221 = vld [vmem:[%s1 + $0x98] sm:$0xff]
        %v1222 = vld [vmem:[%s1 + $0xa0] sm:$0xff]
        %v1223 = vld [vmem:[%s1 + $0xa8] sm:$0xff]
        %v1224 = vld [vmem:[%s1 + $0xb0] sm:$0xff]
        %v1225 = vld [vmem:[%s1 + $0xb8] sm:$0xff]
        %v1226 = vld [vmem:[%s1 + $0xc0] sm:$0xff]
        %v1227 = vld [vmem:[%s1 + $0xc8] sm:$0xff]
        %v1228 = vld [vmem:[%s1 + $0xd0] sm:$0xff]
        %v1229 = vld [vmem:[%s1 + $0xd8] sm:$0xff]
        %v1230 = vld [vmem:[%s1 + $0xe0] sm:$0xff]
        %v1231 = vld [vmem:[%s1 + $0xe8] sm:$0xff]
        %v1232 = vld [vmem:[%s1 + $0xf0] sm:$0xff]
        %v1233 = vld [vmem:[%s1 + $0xf8] sm:$0xff]
        %1234 = vmatprep.subr.mxu0 0.0
        %1235 = vmatpush1.msra.mxu0 %v1218
        %1236 = vmatprep.subr.mxu0 0.0
        %1237 = vmatpush1.msra.mxu0 %v1219
        %1238 = vmatprep.subr.mxu0 0.0
        %1239 = vmatpush1.msra.mxu0 %v1220
        %1240 = vmatprep.subr.mxu0 0.0
        %1241 = vmatpush1.msra.mxu0 %v1221
        %1242 = vmatprep.subr.mxu0 0.0
        %1243 = vmatpush1.msra.mxu0 %v1222
        %1244 = vmatprep.subr.mxu0 0.0
        %1245 = vmatpush1.msra.mxu0 %v1223
        %1246 = vmatprep.subr.mxu0 0.0
        %1247 = vmatpush1.msra.mxu0 %v1224
        %1248 = vmatprep.subr.mxu0 0.0
        %1249 = vmatpush1.msra.mxu0 %v1225
        %1250 = vmatprep.subr.mxu0 0.0
        %1251 = vmatpush1.msra.mxu0 %v1226
        %1252 = vmatprep.subr.mxu0 0.0
        %1253 = vmatpush1.msra.mxu0 %v1227
        %1254 = vmatprep.subr.mxu0 0.0
        %1255 = vmatpush1.msra.mxu0 %v1228
        %1256 = vmatprep.subr.mxu0 0.0
        %1257 = vmatpush1.msra.mxu0 %v1229
        %1258 = vmatprep.subr.mxu0 0.0
        %1259 = vmatpush1.msra.mxu0 %v1230
        %1260 = vmatprep.subr.mxu0 0.0
        %1261 = vmatpush1.msra.mxu0 %v1231
        %1262 = vmatprep.subr.mxu0 0.0
        %1263 = vmatpush1.msra.mxu0 %v1232
        %1264 = vmatprep.subr.mxu0 0.0
        %1265 = vmatpush1.msra.mxu0 %v1233
        %1266 = vmatprep.subr.mxu0 0.0
        %1267 = vmatpush1.msra.mxu0 0.0
        %1268 = vmatprep.subr.mxu0 0.0
        %1269 = vmatpush1.msra.mxu0 0.0
        %1270 = vmatprep.subr.mxu0 0.0
        %1271 = vmatpush1.msra.mxu0 0.0
        %1272 = vmatprep.subr.mxu0 0.0
        %1273 = vmatpush1.msra.mxu0 0.0
        %1274 = vmatprep.subr.mxu0 0.0
        %1275 = vmatpush1.msra.mxu0 0.0
        %1276 = vmatprep.subr.mxu0 0.0
        %1277 = vmatpush1.msra.mxu0 0.0
        %1278 = vmatprep.subr.mxu0 0.0
        %1279 = vmatpush1.msra.mxu0 0.0
        %1280 = vmatprep.subr.mxu0 0.0
        %1281 = vmatpush1.msra.mxu0 0.0
        %1282 = vmatprep.subr.mxu0 0.0
        %1283 = vmatpush1.msra.mxu0 0.0
        %1284 = vmatprep.subr.mxu0 0.0
        %1285 = vmatpush1.msra.mxu0 0.0
        %1286 = vmatprep.subr.mxu0 0.0
        %1287 = vmatpush1.msra.mxu0 0.0
        %1288 = vmatprep.subr.mxu0 0.0
        %1289 = vmatpush1.msra.mxu0 0.0
        %1290 = vmatprep.subr.mxu0 0.0
        %1291 = vmatpush1.msra.mxu0 0.0
        %1292 = vmatprep.subr.mxu0 0.0
        %1293 = vmatpush1.msra.mxu0 0.0
        %1294 = vmatprep.subr.mxu0 0.0
        %1295 = vmatpush1.msra.mxu0 0.0
        %1296 = vmatprep.subr.mxu0 0.0
        %1297 = vmatpush1.msra.mxu0 0.0
        %1298 = vmatprep.mubr.f32.mxu0 0.0
        %1299 = vmatmul.mubr.f32.gmra.mrb[0].mxu0 %v1217
        %v1300 = vpop.f32.mrb[0].mxu0
        %v1301 = vadd.f32 0.0, %v1300
        %v1302 = vpop.f32.mrb[0].mxu0
        %1303 = vdwg.mxu0
        %1304 = vmatprep.subr.mxu0 0.0
        %1305 = vmatpush1.msra.mxu0 %v1166
        %1306 = vmatprep.subr.mxu0 0.0
        %1307 = vmatpush1.msra.mxu0 %v1167
        %1308 = vmatprep.subr.mxu0 0.0
        %1309 = vmatpush1.msra.mxu0 %v1168
        %1310 = vmatprep.subr.mxu0 0.0
        %1311 = vmatpush1.msra.mxu0 %v1169
        %1312 = vmatprep.subr.mxu0 0.0
        %1313 = vmatpush1.msra.mxu0 %v1170
        %1314 = vmatprep.subr.mxu0 0.0
        %1315 = vmatpush1.msra.mxu0 %v1171
        %1316 = vmatprep.subr.mxu0 0.0
        %1317 = vmatpush1.msra.mxu0 %v1172
        %1318 = vmatprep.subr.mxu0 0.0
        %1319 = vmatpush1.msra.mxu0 %v1173
        %1320 = vmatprep.subr.mxu0 0.0
        %1321 = vmatpush1.msra.mxu0 %v1174
        %1322 = vmatprep.subr.mxu0 0.0
        %1323 = vmatpush1.msra.mxu0 %v1175
        %1324 = vmatprep.subr.mxu0 0.0
        %1325 = vmatpush1.msra.mxu0 %v1176
        %1326 = vmatprep.subr.mxu0 0.0
        %1327 = vmatpush1.msra.mxu0 %v1177
        %1328 = vmatprep.subr.mxu0 0.0
        %1329 = vmatpush1.msra.mxu0 %v1178
        %1330 = vmatprep.subr.mxu0 0.0
        %1331 = vmatpush1.msra.mxu0 %v1179
        %1332 = vmatprep.subr.mxu0 0.0
        %1333 = vmatpush1.msra.mxu0 %v1180
        %1334 = vmatprep.subr.mxu0 0.0
        %1335 = vmatpush1.msra.mxu0 %v1181
        %1336 = vmatprep.subr.mxu0 0.0
        %1337 = vmatpush1.msra.mxu0 0.0
        %1338 = vmatprep.subr.mxu0 0.0
        %1339 = vmatpush1.msra.mxu0 0.0
        %1340 = vmatprep.subr.mxu0 0.0
        %1341 = vmatpush1.msra.mxu0 0.0
        %1342 = vmatprep.subr.mxu0 0.0
        %1343 = vmatpush1.msra.mxu0 0.0
        %1344 = vmatprep.subr.mxu0 0.0
        %1345 = vmatpush1.msra.mxu0 0.0
        %1346 = vmatprep.subr.mxu0 0.0
        %1347 = vmatpush1.msra.mxu0 0.0
        %1348 = vmatprep.subr.mxu0 0.0
        %1349 = vmatpush1.msra.mxu0 0.0
        %1350 = vmatprep.subr.mxu0 0.0
        %1351 = vmatpush1.msra.mxu0 0.0
        %1352 = vmatprep.subr.mxu0 0.0
        %1353 = vmatpush1.msra.mxu0 0.0
        %1354 = vmatprep.subr.mxu0 0.0
        %1355 = vmatpush1.msra.mxu0 0.0
        %1356 = vmatprep.subr.mxu0 0.0
        %1357 = vmatpush1.msra.mxu0 0.0
        %1358 = vmatprep.subr.mxu0 0.0
        %1359 = vmatpush1.msra.mxu0 0.0
        %1360 = vmatprep.subr.mxu0 0.0
        %1361 = vmatpush1.msra.mxu0 0.0
        %1362 = vmatprep.subr.mxu0 0.0
        %1363 = vmatpush1.msra.mxu0 0.0
        %1364 = vmatprep.subr.mxu0 0.0
        %1365 = vmatpush1.msra.mxu0 0.0
        %1366 = vmatprep.subr.mxu0 0.0
        %1367 = vmatpush1.msra.mxu0 0.0
        %1368 = vmatprep.mubr.f32.mxu0 0.0
        %1369 = vmatmul.mubr.f32.gmra.mrb[0].mxu0 %v1165
        %v1370 = vpop.f32.mrb[0].mxu0
        %v1371 = vadd.f32 %v1301, %v1370
        %v1372 = vpop.f32.mrb[0].mxu0
        %1373 = vdwg.mxu0
        %v1374 = vmul.f32 %v1195, %v1113
        %v1375 = vadd.f32 %v1183, %v1374
        %v1376 = vmul.f32 %v1214, %v1113
        %v1377 = vadd.f32 %v1185, %v1376
        %v1378 = vld [vmem:[%s2] sm:$0x1]
        %v1380 = vlaneseq
        %v1381 = vshrl.u32 %v1380, 7
        %v1382 = vsub.s32 0, %v1381
        %v1383 = vrot.slane %v1378, %v1382
        %v1385 = vadd.f32 %v1371, %v1383
        %v1386 = vld [vmem:[%s3] sm:$0xff]
        %v1387 = vadd.f32 %v1385, %v1386
        %1388 = vst.msk [vmem:[#allocation2 + $0x8] sm:$0xff] %vm1128, %v1387
        %s1389 = scalar_lea.vmem %s21, 1
        %1390 = vst.msk [vmem:[%s1389] sm:$0x1] %vm1130, %v1375
        %s1391 = scalar_lea.vmem %s22, 1
        %1392 = vst.msk [vmem:[%s1391] sm:$0x1] %vm1130, %v1377
      $region104: #{_lambda_.2} parent=99 // pred_fallthru
        _
      %v1393 = vld [vmem:[#allocation2] sm:$0xff]
      %v1394 = vld [vmem:[#allocation2 + $0x8] sm:$0xff]
      %v1395 = vld [vmem:[%s813] sm:$0x1]
      %v1396 = vld [vmem:[%s816] sm:$0x1]
      %v1397 = vld [vmem:[%s821] sm:$0xff]
      %v1398 = vld [vmem:[%s821 + $0x8] sm:$0xff]
      %v1399 = vld [vmem:[%s821 + $0x10] sm:$0xff]
      %v1400 = vld [vmem:[%s821 + $0x18] sm:$0xff]
      %v1401 = vld [vmem:[%s826] sm:$0xff]
      %v1402 = vld [vmem:[%s826 + $0x8] sm:$0xff]
      %v1403 = vld [vmem:[%s826 + $0x10] sm:$0xff]
      %v1404 = vld [vmem:[%s826 + $0x18] sm:$0xff]
      %v1405 = vld [vmem:[%s831] sm:$0xff]
      %v1406 = vld [vmem:[%s831 + $0x8] sm:$0xff]
      %v1407 = vld [vmem:[%s831 + $0x10] sm:$0xff]
      %v1408 = vld [vmem:[%s831 + $0x18] sm:$0xff]
      %v1409 = vld [vmem:[%s836] sm:$0xff]
      %v1410 = vld [vmem:[%s836 + $0x8] sm:$0xff]
      %v1411 = vld [vmem:[%s836 + $0x10] sm:$0xff]
      %v1412 = vld [vmem:[%s836 + $0x18] sm:$0xff]
      %v1413 = vld [vmem:[%s839] sm:$0x1]
      %v1414 = vld [vmem:[%s842] sm:$0x1]
      %v1415 = vld [vmem:[%s845] sm:$0x1]
      %v1416 = vld [vmem:[%s850] sm:$0xff]
      %v1417 = vld [vmem:[%s850 + $0x8] sm:$0xff]
      %v1418 = vld [vmem:[%s850 + $0x10] sm:$0xff]
      %v1419 = vld [vmem:[%s850 + $0x18] sm:$0xff]
      %v1420 = vld [vmem:[%s853] sm:$0x1]
      %v1421 = vld [vmem:[%s858] sm:$0xff]
      %v1422 = vld [vmem:[%s858 + $0x8] sm:$0xff]
      %v1423 = vld [vmem:[%s858 + $0x10] sm:$0xff]
      %v1424 = vld [vmem:[%s858 + $0x18] sm:$0xff]
      %v1425 = vld [vmem:[%s858 + $0x20] sm:$0xff]
      %v1426 = vld [vmem:[%s858 + $0x28] sm:$0xff]
      %v1427 = vld [vmem:[%s858 + $0x30] sm:$0xff]
      %v1428 = vld [vmem:[%s858 + $0x38] sm:$0xff]
      %v1429 = vld [vmem:[%s858 + $0x40] sm:$0xff]
      %v1430 = vld [vmem:[%s858 + $0x48] sm:$0xff]
      %v1431 = vld [vmem:[%s858 + $0x50] sm:$0xff]
      %v1432 = vld [vmem:[%s858 + $0x58] sm:$0xff]
      %v1433 = vld [vmem:[%s858 + $0x60] sm:$0xff]
      %v1434 = vld [vmem:[%s858 + $0x68] sm:$0xff]
      %v1435 = vld [vmem:[%s858 + $0x70] sm:$0xff]
      %v1436 = vld [vmem:[%s858 + $0x78] sm:$0xff]
      %v1437 = vld [vmem:[%s861] sm:$0x1]
      %vm1438 = vcmask 261120
      %v1439 = vsel %vm1438, %v1393, 0.0
      %1440 = vadd.xlane.f32.xlu0 %v1439
      %v1441 = vpop.xlane.xlu0 %1440
      %v1442 = vsel %vm1438, %v1394, 0.0
      %1443 = vadd.xlane.f32.xlu0 %v1442
      %v1444 = vpop.xlane.xlu0 %1443
      %v1445 = vrcp.pop 32.0
      %v1446 = vmul.f32 %v1441, %v1445
      %v1447 = vmul.f32 %v1444, %v1445
      %v1448 = vsub.f32 %v1393, %v1446
      %v1449 = vsub.f32 %v1394, %v1447
      %v1450 = vmul.f32 %v1448, %v1448
      %v1451 = vmul.f32 %v1449, %v1449
      %v1452 = vsel %vm1438, %v1450, 0.0
      %1453 = vadd.xlane.f32.xlu0 %v1452
      %v1454 = vpop.xlane.xlu0 %1453
      %v1455 = vsel %vm1438, %v1451, 0.0
      %1456 = vadd.xlane.f32.xlu0 %v1455
      %v1457 = vpop.xlane.xlu0 %1456
      %v1458 = vmul.f32 %v1454, %v1445
      %v1459 = vmul.f32 %v1457, %v1445
      %v1460 = vadd.f32 %v1458, 1e-05
      %v1461 = vadd.f32 %v1459, 1e-05
      %v1462 = vrsqrt.pop %v1460
      %v1463 = vrsqrt.pop %v1461
      %v1464 = vmul.f32 %v1448, %v1462
      %v1465 = vmul.f32 %v1449, %v1463
      %v1467 = vlaneseq
      %v1468 = vshrl.u32 %v1467, 7
      %v1469 = vsub.s32 0, %v1468
      %v1470 = vrot.slane %v1395, %v1469
      %v1472 = vmul.f32 %v1464, %v1470
      %v1473 = vmul.f32 %v1465, %v1470
      %v1475 = vlaneseq
      %v1476 = vshrl.u32 %v1475, 7
      %v1477 = vsub.s32 0, %v1476
      %v1478 = vrot.slane %v1396, %v1477
      %v1480 = vadd.f32 %v1472, %v1478
      %v1481 = vadd.f32 %v1473, %v1478
      %v1483 = vsel %vm1438, %v1480, 0
      %v1486 = vsel %vm1438, %v1481, 0
      %1488 = vmatprep.subr.mxu0 0.0
      %1489 = vmatpush1.msra.mxu0 %v1397
      %1490 = vmatprep.subr.mxu0 0.0
      %1491 = vmatpush1.msra.mxu0 %v1398
      %1492 = vmatprep.subr.mxu0 0.0
      %1493 = vmatpush1.msra.mxu0 %v1399
      %1494 = vmatprep.subr.mxu0 0.0
      %1495 = vmatpush1.msra.mxu0 %v1400
      %1496 = vmatprep.subr.mxu0 0.0
      %1497 = vmatpush1.msra.mxu0 0.0
      %1498 = vmatprep.subr.mxu0 0.0
      %1499 = vmatpush1.msra.mxu0 0.0
      %1500 = vmatprep.subr.mxu0 0.0
      %1501 = vmatpush1.msra.mxu0 0.0
      %1502 = vmatprep.subr.mxu0 0.0
      %1503 = vmatpush1.msra.mxu0 0.0
      %1504 = vmatprep.subr.mxu0 0.0
      %1505 = vmatpush1.msra.mxu0 0.0
      %1506 = vmatprep.subr.mxu0 0.0
      %1507 = vmatpush1.msra.mxu0 0.0
      %1508 = vmatprep.subr.mxu0 0.0
      %1509 = vmatpush1.msra.mxu0 0.0
      %1510 = vmatprep.subr.mxu0 0.0
      %1511 = vmatpush1.msra.mxu0 0.0
      %1512 = vmatprep.subr.mxu0 0.0
      %1513 = vmatpush1.msra.mxu0 0.0
      %1514 = vmatprep.subr.mxu0 0.0
      %1515 = vmatpush1.msra.mxu0 0.0
      %1516 = vmatprep.subr.mxu0 0.0
      %1517 = vmatpush1.msra.mxu0 0.0
      %1518 = vmatprep.subr.mxu0 0.0
      %1519 = vmatpush1.msra.mxu0 0.0
      %1520 = vmatprep.subr.mxu0 0.0
      %1521 = vmatpush1.msra.mxu0 0.0
      %1522 = vmatprep.subr.mxu0 0.0
      %1523 = vmatpush1.msra.mxu0 0.0
      %1524 = vmatprep.subr.mxu0 0.0
      %1525 = vmatpush1.msra.mxu0 0.0
      %1526 = vmatprep.subr.mxu0 0.0
      %1527 = vmatpush1.msra.mxu0 0.0
      %1528 = vmatprep.subr.mxu0 0.0
      %1529 = vmatpush1.msra.mxu0 0.0
      %1530 = vmatprep.subr.mxu0 0.0
      %1531 = vmatpush1.msra.mxu0 0.0
      %1532 = vmatprep.subr.mxu0 0.0
      %1533 = vmatpush1.msra.mxu0 0.0
      %1534 = vmatprep.subr.mxu0 0.0
      %1535 = vmatpush1.msra.mxu0 0.0
      %1536 = vmatprep.subr.mxu0 0.0
      %1537 = vmatpush1.msra.mxu0 0.0
      %1538 = vmatprep.subr.mxu0 0.0
      %1539 = vmatpush1.msra.mxu0 0.0
      %1540 = vmatprep.subr.mxu0 0.0
      %1541 = vmatpush1.msra.mxu0 0.0
      %1542 = vmatprep.subr.mxu0 0.0
      %1543 = vmatpush1.msra.mxu0 0.0
      %1544 = vmatprep.subr.mxu0 0.0
      %1545 = vmatpush1.msra.mxu0 0.0
      %1546 = vmatprep.subr.mxu0 0.0
      %1547 = vmatpush1.msra.mxu0 0.0
      %1548 = vmatprep.subr.mxu0 0.0
      %1549 = vmatpush1.msra.mxu0 0.0
      %1550 = vmatprep.subr.mxu0 0.0
      %1551 = vmatpush1.msra.mxu0 0.0
      %1552 = vmatprep.mubr.f32.mxu0 0.0
      %1553 = vmatmul.mubr.f32.gmra.mrb[0].mxu0 %v1483
      %v1554 = vpop.f32.mrb[0].mxu0
      %v1555 = vadd.f32 0.0, %v1554
      %v1556 = vpop.f32.mrb[0].mxu0
      %1557 = vmatprep.mubr.f32.mxu0 0.0
      %1558 = vmatmul.mubr.f32.gmra.mrb[0].mxu0 %v1486
      %v1559 = vpop.f32.mrb[0].mxu0
      %v1560 = vadd.f32 0.0, %v1559
      %v1561 = vpop.f32.mrb[0].mxu0
      %1562 = vdwg.mxu0
      %v1563 = vmul.f32 %v1555, 0.35355338
      %v1564 = vmul.f32 %v1560, 0.35355338
      %1565 = vmatprep.subr.mxu0 0.0
      %1566 = vmatpush1.msra.mxu0 %v1401
      %1567 = vmatprep.subr.mxu0 0.0
      %1568 = vmatpush1.msra.mxu0 %v1402
      %1569 = vmatprep.subr.mxu0 0.0
      %1570 = vmatpush1.msra.mxu0 %v1403
      %1571 = vmatprep.subr.mxu0 0.0
      %1572 = vmatpush1.msra.mxu0 %v1404
      %1573 = vmatprep.subr.mxu0 0.0
      %1574 = vmatpush1.msra.mxu0 0.0
      %1575 = vmatprep.subr.mxu0 0.0
      %1576 = vmatpush1.msra.mxu0 0.0
      %1577 = vmatprep.subr.mxu0 0.0
      %1578 = vmatpush1.msra.mxu0 0.0
      %1579 = vmatprep.subr.mxu0 0.0
      %1580 = vmatpush1.msra.mxu0 0.0
      %1581 = vmatprep.subr.mxu0 0.0
      %1582 = vmatpush1.msra.mxu0 0.0
      %1583 = vmatprep.subr.mxu0 0.0
      %1584 = vmatpush1.msra.mxu0 0.0
      %1585 = vmatprep.subr.mxu0 0.0
      %1586 = vmatpush1.msra.mxu0 0.0
      %1587 = vmatprep.subr.mxu0 0.0
      %1588 = vmatpush1.msra.mxu0 0.0
      %1589 = vmatprep.subr.mxu0 0.0
      %1590 = vmatpush1.msra.mxu0 0.0
      %1591 = vmatprep.subr.mxu0 0.0
      %1592 = vmatpush1.msra.mxu0 0.0
      %1593 = vmatprep.subr.mxu0 0.0
      %1594 = vmatpush1.msra.mxu0 0.0
      %1595 = vmatprep.subr.mxu0 0.0
      %1596 = vmatpush1.msra.mxu0 0.0
      %1597 = vmatprep.subr.mxu0 0.0
      %1598 = vmatpush1.msra.mxu0 0.0
      %1599 = vmatprep.subr.mxu0 0.0
      %1600 = vmatpush1.msra.mxu0 0.0
      %1601 = vmatprep.subr.mxu0 0.0
      %1602 = vmatpush1.msra.mxu0 0.0
      %1603 = vmatprep.subr.mxu0 0.0
      %1604 = vmatpush1.msra.mxu0 0.0
      %1605 = vmatprep.subr.mxu0 0.0
      %1606 = vmatpush1.msra.mxu0 0.0
      %1607 = vmatprep.subr.mxu0 0.0
      %1608 = vmatpush1.msra.mxu0 0.0
      %1609 = vmatprep.subr.mxu0 0.0
      %1610 = vmatpush1.msra.mxu0 0.0
      %1611 = vmatprep.subr.mxu0 0.0
      %1612 = vmatpush1.msra.mxu0 0.0
      %1613 = vmatprep.subr.mxu0 0.0
      %1614 = vmatpush1.msra.mxu0 0.0
      %1615 = vmatprep.subr.mxu0 0.0
      %1616 = vmatpush1.msra.mxu0 0.0
      %1617 = vmatprep.subr.mxu0 0.0
      %1618 = vmatpush1.msra.mxu0 0.0
      %1619 = vmatprep.subr.mxu0 0.0
      %1620 = vmatpush1.msra.mxu0 0.0
      %1621 = vmatprep.subr.mxu0 0.0
      %1622 = vmatpush1.msra.mxu0 0.0
      %1623 = vmatprep.subr.mxu0 0.0
      %1624 = vmatpush1.msra.mxu0 0.0
      %1625 = vmatprep.subr.mxu0 0.0
      %1626 = vmatpush1.msra.mxu0 0.0
      %1627 = vmatprep.subr.mxu0 0.0
      %1628 = vmatpush1.msra.mxu0 0.0
      %1629 = vmatprep.mubr.f32.mxu0 0.0
      %1630 = vmatmul.mubr.f32.gmra.mrb[0].mxu0 %v1483
      %v1631 = vpop.f32.mrb[0].mxu0
      %v1632 = vadd.f32 0.0, %v1631
      %v1633 = vpop.f32.mrb[0].mxu0
      %1634 = vmatprep.mubr.f32.mxu0 0.0
      %1635 = vmatmul.mubr.f32.gmra.mrb[0].mxu0 %v1486
      %v1636 = vpop.f32.mrb[0].mxu0
      %v1637 = vadd.f32 0.0, %v1636
      %v1638 = vpop.f32.mrb[0].mxu0
      %1639 = vdwg.mxu0
      %1640 = vmatprep.subr.mxu0 0.0
      %1641 = vmatpush1.msra.mxu0 %v1405
      %1642 = vmatprep.subr.mxu0 0.0
      %1643 = vmatpush1.msra.mxu0 %v1406
      %1644 = vmatprep.subr.mxu0 0.0
      %1645 = vmatpush1.msra.mxu0 %v1407
      %1646 = vmatprep.subr.mxu0 0.0
      %1647 = vmatpush1.msra.mxu0 %v1408
      %1648 = vmatprep.subr.mxu0 0.0
      %1649 = vmatpush1.msra.mxu0 0.0
      %1650 = vmatprep.subr.mxu0 0.0
      %1651 = vmatpush1.msra.mxu0 0.0
      %1652 = vmatprep.subr.mxu0 0.0
      %1653 = vmatpush1.msra.mxu0 0.0
      %1654 = vmatprep.subr.mxu0 0.0
      %1655 = vmatpush1.msra.mxu0 0.0
      %1656 = vmatprep.subr.mxu0 0.0
      %1657 = vmatpush1.msra.mxu0 0.0
      %1658 = vmatprep.subr.mxu0 0.0
      %1659 = vmatpush1.msra.mxu0 0.0
      %1660 = vmatprep.subr.mxu0 0.0
      %1661 = vmatpush1.msra.mxu0 0.0
      %1662 = vmatprep.subr.mxu0 0.0
      %1663 = vmatpush1.msra.mxu0 0.0
      %1664 = vmatprep.subr.mxu0 0.0
      %1665 = vmatpush1.msra.mxu0 0.0
      %1666 = vmatprep.subr.mxu0 0.0
      %1667 = vmatpush1.msra.mxu0 0.0
      %1668 = vmatprep.subr.mxu0 0.0
      %1669 = vmatpush1.msra.mxu0 0.0
      %1670 = vmatprep.subr.mxu0 0.0
      %1671 = vmatpush1.msra.mxu0 0.0
      %1672 = vmatprep.subr.mxu0 0.0
      %1673 = vmatpush1.msra.mxu0 0.0
      %1674 = vmatprep.subr.mxu0 0.0
      %1675 = vmatpush1.msra.mxu0 0.0
      %1676 = vmatprep.subr.mxu0 0.0
      %1677 = vmatpush1.msra.mxu0 0.0
      %1678 = vmatprep.subr.mxu0 0.0
      %1679 = vmatpush1.msra.mxu0 0.0
      %1680 = vmatprep.subr.mxu0 0.0
      %1681 = vmatpush1.msra.mxu0 0.0
      %1682 = vmatprep.subr.mxu0 0.0
      %1683 = vmatpush1.msra.mxu0 0.0
      %1684 = vmatprep.subr.mxu0 0.0
      %1685 = vmatpush1.msra.mxu0 0.0
      %1686 = vmatprep.subr.mxu0 0.0
      %1687 = vmatpush1.msra.mxu0 0.0
      %1688 = vmatprep.subr.mxu0 0.0
      %1689 = vmatpush1.msra.mxu0 0.0
      %1690 = vmatprep.subr.mxu0 0.0
      %1691 = vmatpush1.msra.mxu0 0.0
      %1692 = vmatprep.subr.mxu0 0.0
      %1693 = vmatpush1.msra.mxu0 0.0
      %1694 = vmatprep.subr.mxu0 0.0
      %1695 = vmatpush1.msra.mxu0 0.0
      %1696 = vmatprep.subr.mxu0 0.0
      %1697 = vmatpush1.msra.mxu0 0.0
      %1698 = vmatprep.subr.mxu0 0.0
      %1699 = vmatpush1.msra.mxu0 0.0
      %1700 = vmatprep.subr.mxu0 0.0
      %1701 = vmatpush1.msra.mxu0 0.0
      %1702 = vmatprep.subr.mxu0 0.0
      %1703 = vmatpush1.msra.mxu0 0.0
      %1704 = vmatprep.mubr.f32.mxu0 0.0
      %1705 = vmatmul.mubr.f32.gmra.mrb[0].mxu0 %v1483
      %v1706 = vpop.f32.mrb[0].mxu0
      %v1707 = vadd.f32 0.0, %v1706
      %v1708 = vpop.f32.mrb[0].mxu0
      %1709 = vmatprep.mubr.f32.mxu0 0.0
      %1710 = vmatmul.mubr.f32.gmra.mrb[0].mxu0 %v1486
      %v1711 = vpop.f32.mrb[0].mxu0
      %v1712 = vadd.f32 0.0, %v1711
      %v1713 = vpop.f32.mrb[0].mxu0
      %1714 = vdwg.mxu0
      %vm1715 = vcmask 64512
      %v1717 = vsel %vm1715, %v1563, 0
      %v1720 = vsel %vm1715, %v1632, 0
      %1722 = vmatprep.subr.mxu0 0.0
      %1723 = vmatpush1.xpose.msra.mxu0 %v1720
      %1724 = vmatprep.subr.mxu0 0.0
      %1725 = vmatpush1.xpose.msra.mxu0 0.0
      %1726 = vmatprep.subr.mxu0 0.0
      %1727 = vmatpush1.xpose.msra.mxu0 0.0
      %1728 = vmatprep.subr.mxu0 0.0
      %1729 = vmatpush1.xpose.msra.mxu0 0.0
      %1730 = vmatprep.subr.mxu0 0.0
      %1731 = vmatpush1.xpose.msra.mxu0 0.0
      %1732 = vmatprep.subr.mxu0 0.0
      %1733 = vmatpush1.xpose.msra.mxu0 0.0
      %1734 = vmatprep.subr.mxu0 0.0
      %1735 = vmatpush1.xpose.msra.mxu0 0.0
      %1736 = vmatprep.subr.mxu0 0.0
      %1737 = vmatpush1.xpose.msra.mxu0 0.0
      %1738 = vmatprep.subr.mxu0 0.0
      %1739 = vmatpush1.xpose.msra.mxu0 0.0
      %1740 = vmatprep.subr.mxu0 0.0
      %1741 = vmatpush1.xpose.msra.mxu0 0.0
      %1742 = vmatprep.subr.mxu0 0.0
      %1743 = vmatpush1.xpose.msra.mxu0 0.0
      %1744 = vmatprep.subr.mxu0 0.0
      %1745 = vmatpush1.xpose.msra.mxu0 0.0
      %1746 = vmatprep.subr.mxu0 0.0
      %1747 = vmatpush1.xpose.msra.mxu0 0.0
      %1748 = vmatprep.subr.mxu0 0.0
      %1749 = vmatpush1.xpose.msra.mxu0 0.0
      %1750 = vmatprep.subr.mxu0 0.0
      %1751 = vmatpush1.xpose.msra.mxu0 0.0
      %1752 = vmatprep.subr.mxu0 0.0
      %1753 = vmatpush1.xpose.msra.mxu0 0.0
      %1754 = vmatprep.subr.mxu0 0.0
      %1755 = vmatpush1.xpose.msra.mxu0 0.0
      %1756 = vmatprep.subr.mxu0 0.0
      %1757 = vmatpush1.xpose.msra.mxu0 0.0
      %1758 = vmatprep.subr.mxu0 0.0
      %1759 = vmatpush1.xpose.msra.mxu0 0.0
      %1760 = vmatprep.subr.mxu0 0.0
      %1761 = vmatpush1.xpose.msra.mxu0 0.0
      %1762 = vmatprep.subr.mxu0 0.0
      %1763 = vmatpush1.xpose.msra.mxu0 0.0
      %1764 = vmatprep.subr.mxu0 0.0
      %1765 = vmatpush1.xpose.msra.mxu0 0.0
      %1766 = vmatprep.subr.mxu0 0.0
      %1767 = vmatpush1.xpose.msra.mxu0 0.0
      %1768 = vmatprep.subr.mxu0 0.0
      %1769 = vmatpush1.xpose.msra.mxu0 0.0
      %1770 = vmatprep.subr.mxu0 0.0
      %1771 = vmatpush1.xpose.msra.mxu0 0.0
      %1772 = vmatprep.subr.mxu0 0.0
      %1773 = vmatpush1.xpose.msra.mxu0 0.0
      %1774 = vmatprep.subr.mxu0 0.0
      %1775 = vmatpush1.xpose.msra.mxu0 0.0
      %1776 = vmatprep.subr.mxu0 0.0
      %1777 = vmatpush1.xpose.msra.mxu0 0.0
      %1778 = vmatprep.subr.mxu0 0.0
      %1779 = vmatpush1.xpose.msra.mxu0 0.0
      %1780 = vmatprep.subr.mxu0 0.0
      %1781 = vmatpush1.xpose.msra.mxu0 0.0
      %1782 = vmatprep.subr.mxu0 0.0
      %1783 = vmatpush1.xpose.msra.mxu0 0.0
      %1784 = vmatprep.subr.mxu0 0.0
      %1785 = vmatpush1.xpose.msra.mxu0 0.0
      %1786 = vmatprep.mubr.f32.mxu0 0.0
      %1787 = vmatmul.mubr.f32.gmra.mrb[0].mxu0 %v1717
      %v1788 = vpop.f32.mrb[0].mxu0
      %v1789 = vadd.f32 0.0, %v1788
      %v1790 = vpop.f32.mrb[0].mxu0
      %1791 = vdwg.mxu0
      %v1793 = vsel %vm1715, %v1564, 0
      %v1796 = vsel %vm1715, %v1637, 0
      %1798 = vmatprep.subr.mxu0 0.0
      %1799 = vmatpush1.xpose.msra.mxu0 %v1796
      %1800 = vmatprep.subr.mxu0 0.0
      %1801 = vmatpush1.xpose.msra.mxu0 0.0
      %1802 = vmatprep.subr.mxu0 0.0
      %1803 = vmatpush1.xpose.msra.mxu0 0.0
      %1804 = vmatprep.subr.mxu0 0.0
      %1805 = vmatpush1.xpose.msra.mxu0 0.0
      %1806 = vmatprep.subr.mxu0 0.0
      %1807 = vmatpush1.xpose.msra.mxu0 0.0
      %1808 = vmatprep.subr.mxu0 0.0
      %1809 = vmatpush1.xpose.msra.mxu0 0.0
      %1810 = vmatprep.subr.mxu0 0.0
      %1811 = vmatpush1.xpose.msra.mxu0 0.0
      %1812 = vmatprep.subr.mxu0 0.0
      %1813 = vmatpush1.xpose.msra.mxu0 0.0
      %1814 = vmatprep.subr.mxu0 0.0
      %1815 = vmatpush1.xpose.msra.mxu0 0.0
      %1816 = vmatprep.subr.mxu0 0.0
      %1817 = vmatpush1.xpose.msra.mxu0 0.0
      %1818 = vmatprep.subr.mxu0 0.0
      %1819 = vmatpush1.xpose.msra.mxu0 0.0
      %1820 = vmatprep.subr.mxu0 0.0
      %1821 = vmatpush1.xpose.msra.mxu0 0.0
      %1822 = vmatprep.subr.mxu0 0.0
      %1823 = vmatpush1.xpose.msra.mxu0 0.0
      %1824 = vmatprep.subr.mxu0 0.0
      %1825 = vmatpush1.xpose.msra.mxu0 0.0
      %1826 = vmatprep.subr.mxu0 0.0
      %1827 = vmatpush1.xpose.msra.mxu0 0.0
      %1828 = vmatprep.subr.mxu0 0.0
      %1829 = vmatpush1.xpose.msra.mxu0 0.0
      %1830 = vmatprep.subr.mxu0 0.0
      %1831 = vmatpush1.xpose.msra.mxu0 0.0
      %1832 = vmatprep.subr.mxu0 0.0
      %1833 = vmatpush1.xpose.msra.mxu0 0.0
      %1834 = vmatprep.subr.mxu0 0.0
      %1835 = vmatpush1.xpose.msra.mxu0 0.0
      %1836 = vmatprep.subr.mxu0 0.0
      %1837 = vmatpush1.xpose.msra.mxu0 0.0
      %1838 = vmatprep.subr.mxu0 0.0
      %1839 = vmatpush1.xpose.msra.mxu0 0.0
      %1840 = vmatprep.subr.mxu0 0.0
      %1841 = vmatpush1.xpose.msra.mxu0 0.0
      %1842 = vmatprep.subr.mxu0 0.0
      %1843 = vmatpush1.xpose.msra.mxu0 0.0
      %1844 = vmatprep.subr.mxu0 0.0
      %1845 = vmatpush1.xpose.msra.mxu0 0.0
      %1846 = vmatprep.subr.mxu0 0.0
      %1847 = vmatpush1.xpose.msra.mxu0 0.0
      %1848 = vmatprep.subr.mxu0 0.0
      %1849 = vmatpush1.xpose.msra.mxu0 0.0
      %1850 = vmatprep.subr.mxu0 0.0
      %1851 = vmatpush1.xpose.msra.mxu0 0.0
      %1852 = vmatprep.subr.mxu0 0.0
      %1853 = vmatpush1.xpose.msra.mxu0 0.0
      %1854 = vmatprep.subr.mxu0 0.0
      %1855 = vmatpush1.xpose.msra.mxu0 0.0
      %1856 = vmatprep.subr.mxu0 0.0
      %1857 = vmatpush1.xpose.msra.mxu0 0.0
      %1858 = vmatprep.subr.mxu0 0.0
      %1859 = vmatpush1.xpose.msra.mxu0 0.0
      %1860 = vmatprep.subr.mxu0 0.0
      %1861 = vmatpush1.xpose.msra.mxu0 0.0
      %1862 = vmatprep.mubr.f32.mxu0 0.0
      %1863 = vmatmul.mubr.f32.gmra.mrb[0].mxu0 %v1793
      %v1864 = vpop.f32.mrb[0].mxu0
      %v1865 = vadd.f32 0.0, %v1864
      %v1866 = vpop.f32.mrb[0].mxu0
      %1867 = vdwg.mxu0
      %v1868 = vsel %vm1715, %v1789, -inf
      %1869 = vmax.xlane.f32.xlu0 %v1868
      %v1870 = vpop.xlane.xlu0 %1869
      %v1871 = vsel %vm1715, %v1865, -inf
      %1872 = vmax.xlane.f32.xlu0 %v1871
      %v1873 = vpop.xlane.xlu0 %1872
      %v1874 = vsub.f32 %v1789, %v1870
      %v1875 = vsub.f32 %v1865, %v1873
      %v1876 = vmul.f32 %v1874, 1.442695
      %v1877 = vpow.pop %v1876
      %v1878 = vmul.f32 %v1875, 1.442695
      %v1879 = vpow.pop %v1878
      %v1880 = vsel %vm1715, %v1877, 0.0
      %1881 = vadd.xlane.f32.xlu0 %v1880
      %v1882 = vpop.xlane.xlu0 %1881
      %v1883 = vsel %vm1715, %v1879, 0.0
      %1884 = vadd.xlane.f32.xlu0 %v1883
      %v1885 = vpop.xlane.xlu0 %1884
      %v1886 = vrcp.pop %v1882
      %v1887 = vmul.f32 %v1877, %v1886
      %v1888 = vrcp.pop %v1885
      %v1889 = vmul.f32 %v1879, %v1888
      %v1891 = vsel %vm1715, %v1887, 0
      %1893 = vmatprep.subr.mxu0 0.0
      %1894 = vmatpush1.msra.mxu0 %v1707
      %1895 = vmatprep.subr.mxu0 0.0
      %1896 = vmatpush1.msra.mxu0 0.0
      %1897 = vmatprep.subr.mxu0 0.0
      %1898 = vmatpush1.msra.mxu0 0.0
      %1899 = vmatprep.subr.mxu0 0.0
      %1900 = vmatpush1.msra.mxu0 0.0
      %1901 = vmatprep.subr.mxu0 0.0
      %1902 = vmatpush1.msra.mxu0 0.0
      %1903 = vmatprep.subr.mxu0 0.0
      %1904 = vmatpush1.msra.mxu0 0.0
      %1905 = vmatprep.subr.mxu0 0.0
      %1906 = vmatpush1.msra.mxu0 0.0
      %1907 = vmatprep.subr.mxu0 0.0
      %1908 = vmatpush1.msra.mxu0 0.0
      %1909 = vmatprep.subr.mxu0 0.0
      %1910 = vmatpush1.msra.mxu0 0.0
      %1911 = vmatprep.subr.mxu0 0.0
      %1912 = vmatpush1.msra.mxu0 0.0
      %1913 = vmatprep.subr.mxu0 0.0
      %1914 = vmatpush1.msra.mxu0 0.0
      %1915 = vmatprep.subr.mxu0 0.0
      %1916 = vmatpush1.msra.mxu0 0.0
      %1917 = vmatprep.subr.mxu0 0.0
      %1918 = vmatpush1.msra.mxu0 0.0
      %1919 = vmatprep.subr.mxu0 0.0
      %1920 = vmatpush1.msra.mxu0 0.0
      %1921 = vmatprep.subr.mxu0 0.0
      %1922 = vmatpush1.msra.mxu0 0.0
      %1923 = vmatprep.subr.mxu0 0.0
      %1924 = vmatpush1.msra.mxu0 0.0
      %1925 = vmatprep.subr.mxu0 0.0
      %1926 = vmatpush1.msra.mxu0 0.0
      %1927 = vmatprep.subr.mxu0 0.0
      %1928 = vmatpush1.msra.mxu0 0.0
      %1929 = vmatprep.subr.mxu0 0.0
      %1930 = vmatpush1.msra.mxu0 0.0
      %1931 = vmatprep.subr.mxu0 0.0
      %1932 = vmatpush1.msra.mxu0 0.0
      %1933 = vmatprep.subr.mxu0 0.0
      %1934 = vmatpush1.msra.mxu0 0.0
      %1935 = vmatprep.subr.mxu0 0.0
      %1936 = vmatpush1.msra.mxu0 0.0
      %1937 = vmatprep.subr.mxu0 0.0
      %1938 = vmatpush1.msra.mxu0 0.0
      %1939 = vmatprep.subr.mxu0 0.0
      %1940 = vmatpush1.msra.mxu0 0.0
      %1941 = vmatprep.subr.mxu0 0.0
      %1942 = vmatpush1.msra.mxu0 0.0
      %1943 = vmatprep.subr.mxu0 0.0
      %1944 = vmatpush1.msra.mxu0 0.0
      %1945 = vmatprep.subr.mxu0 0.0
      %1946 = vmatpush1.msra.mxu0 0.0
      %1947 = vmatprep.subr.mxu0 0.0
      %1948 = vmatpush1.msra.mxu0 0.0
      %1949 = vmatprep.subr.mxu0 0.0
      %1950 = vmatpush1.msra.mxu0 0.0
      %1951 = vmatprep.subr.mxu0 0.0
      %1952 = vmatpush1.msra.mxu0 0.0
      %1953 = vmatprep.subr.mxu0 0.0
      %1954 = vmatpush1.msra.mxu0 0.0
      %1955 = vmatprep.subr.mxu0 0.0
      %1956 = vmatpush1.msra.mxu0 0.0
      %1957 = vmatprep.mubr.f32.mxu0 0.0
      %1958 = vmatmul.mubr.f32.gmra.mrb[0].mxu0 %v1891
      %v1959 = vpop.f32.mrb[0].mxu0
      %v1960 = vadd.f32 0.0, %v1959
      %v1961 = vpop.f32.mrb[0].mxu0
      %1962 = vdwg.mxu0
      %v1964 = vsel %vm1715, %v1889, 0
      %1966 = vmatprep.subr.mxu0 0.0
      %1967 = vmatpush1.msra.mxu0 %v1712
      %1968 = vmatprep.subr.mxu0 0.0
      %1969 = vmatpush1.msra.mxu0 0.0
      %1970 = vmatprep.subr.mxu0 0.0
      %1971 = vmatpush1.msra.mxu0 0.0
      %1972 = vmatprep.subr.mxu0 0.0
      %1973 = vmatpush1.msra.mxu0 0.0
      %1974 = vmatprep.subr.mxu0 0.0
      %1975 = vmatpush1.msra.mxu0 0.0
      %1976 = vmatprep.subr.mxu0 0.0
      %1977 = vmatpush1.msra.mxu0 0.0
      %1978 = vmatprep.subr.mxu0 0.0
      %1979 = vmatpush1.msra.mxu0 0.0
      %1980 = vmatprep.subr.mxu0 0.0
      %1981 = vmatpush1.msra.mxu0 0.0
      %1982 = vmatprep.subr.mxu0 0.0
      %1983 = vmatpush1.msra.mxu0 0.0
      %1984 = vmatprep.subr.mxu0 0.0
      %1985 = vmatpush1.msra.mxu0 0.0
      %1986 = vmatprep.subr.mxu0 0.0
      %1987 = vmatpush1.msra.mxu0 0.0
      %1988 = vmatprep.subr.mxu0 0.0
      %1989 = vmatpush1.msra.mxu0 0.0
      %1990 = vmatprep.subr.mxu0 0.0
      %1991 = vmatpush1.msra.mxu0 0.0
      %1992 = vmatprep.subr.mxu0 0.0
      %1993 = vmatpush1.msra.mxu0 0.0
      %1994 = vmatprep.subr.mxu0 0.0
      %1995 = vmatpush1.msra.mxu0 0.0
      %1996 = vmatprep.subr.mxu0 0.0
      %1997 = vmatpush1.msra.mxu0 0.0
      %1998 = vmatprep.subr.mxu0 0.0
      %1999 = vmatpush1.msra.mxu0 0.0
      %2000 = vmatprep.subr.mxu0 0.0
      %2001 = vmatpush1.msra.mxu0 0.0
      %2002 = vmatprep.subr.mxu0 0.0
      %2003 = vmatpush1.msra.mxu0 0.0
      %2004 = vmatprep.subr.mxu0 0.0
      %2005 = vmatpush1.msra.mxu0 0.0
      %2006 = vmatprep.subr.mxu0 0.0
      %2007 = vmatpush1.msra.mxu0 0.0
      %2008 = vmatprep.subr.mxu0 0.0
      %2009 = vmatpush1.msra.mxu0 0.0
      %2010 = vmatprep.subr.mxu0 0.0
      %2011 = vmatpush1.msra.mxu0 0.0
      %2012 = vmatprep.subr.mxu0 0.0
      %2013 = vmatpush1.msra.mxu0 0.0
      %2014 = vmatprep.subr.mxu0 0.0
      %2015 = vmatpush1.msra.mxu0 0.0
      %2016 = vmatprep.subr.mxu0 0.0
      %2017 = vmatpush1.msra.mxu0 0.0
      %2018 = vmatprep.subr.mxu0 0.0
      %2019 = vmatpush1.msra.mxu0 0.0
      %2020 = vmatprep.subr.mxu0 0.0
      %2021 = vmatpush1.msra.mxu0 0.0
      %2022 = vmatprep.subr.mxu0 0.0
      %2023 = vmatpush1.msra.mxu0 0.0
      %2024 = vmatprep.subr.mxu0 0.0
      %2025 = vmatpush1.msra.mxu0 0.0
      %2026 = vmatprep.subr.mxu0 0.0
      %2027 = vmatpush1.msra.mxu0 0.0
      %2028 = vmatprep.subr.mxu0 0.0
      %2029 = vmatpush1.msra.mxu0 0.0
      %2030 = vmatprep.mubr.f32.mxu0 0.0
      %2031 = vmatmul.mubr.f32.gmra.mrb[0].mxu0 %v1964
      %v2032 = vpop.f32.mrb[0].mxu0
      %v2033 = vadd.f32 0.0, %v2032
      %v2034 = vpop.f32.mrb[0].mxu0
      %2035 = vdwg.mxu0
      %2036 = vrot.lane.b32.xlu0 %v1563, 120
      %v2037 = vpop.permute.xlu0 %2036
      %2038 = vrot.lane.b32.xlu0 %v1632, 120
      %v2039 = vpop.permute.xlu0 %2038
      %v2040 = vsel %vm1715, %v2037, 0
      %v2042 = vsel %vm1715, %v2039, 0
      %2044 = vmatprep.subr.mxu0 0.0
      %2045 = vmatpush1.xpose.msra.mxu0 %v2042
      %2046 = vmatprep.subr.mxu0 0.0
      %2047 = vmatpush1.xpose.msra.mxu0 0.0
      %2048 = vmatprep.subr.mxu0 0.0
      %2049 = vmatpush1.xpose.msra.mxu0 0.0
      %2050 = vmatprep.subr.mxu0 0.0
      %2051 = vmatpush1.xpose.msra.mxu0 0.0
      %2052 = vmatprep.subr.mxu0 0.0
      %2053 = vmatpush1.xpose.msra.mxu0 0.0
      %2054 = vmatprep.subr.mxu0 0.0
      %2055 = vmatpush1.xpose.msra.mxu0 0.0
      %2056 = vmatprep.subr.mxu0 0.0
      %2057 = vmatpush1.xpose.msra.mxu0 0.0
      %2058 = vmatprep.subr.mxu0 0.0
      %2059 = vmatpush1.xpose.msra.mxu0 0.0
      %2060 = vmatprep.subr.mxu0 0.0
      %2061 = vmatpush1.xpose.msra.mxu0 0.0
      %2062 = vmatprep.subr.mxu0 0.0
      %2063 = vmatpush1.xpose.msra.mxu0 0.0
      %2064 = vmatprep.subr.mxu0 0.0
      %2065 = vmatpush1.xpose.msra.mxu0 0.0
      %2066 = vmatprep.subr.mxu0 0.0
      %2067 = vmatpush1.xpose.msra.mxu0 0.0
      %2068 = vmatprep.subr.mxu0 0.0
      %2069 = vmatpush1.xpose.msra.mxu0 0.0
      %2070 = vmatprep.subr.mxu0 0.0
      %2071 = vmatpush1.xpose.msra.mxu0 0.0
      %2072 = vmatprep.subr.mxu0 0.0
      %2073 = vmatpush1.xpose.msra.mxu0 0.0
      %2074 = vmatprep.subr.mxu0 0.0
      %2075 = vmatpush1.xpose.msra.mxu0 0.0
      %2076 = vmatprep.subr.mxu0 0.0
      %2077 = vmatpush1.xpose.msra.mxu0 0.0
      %2078 = vmatprep.subr.mxu0 0.0
      %2079 = vmatpush1.xpose.msra.mxu0 0.0
      %2080 = vmatprep.subr.mxu0 0.0
      %2081 = vmatpush1.xpose.msra.mxu0 0.0
      %2082 = vmatprep.subr.mxu0 0.0
      %2083 = vmatpush1.xpose.msra.mxu0 0.0
      %2084 = vmatprep.subr.mxu0 0.0
      %2085 = vmatpush1.xpose.msra.mxu0 0.0
      %2086 = vmatprep.subr.mxu0 0.0
      %2087 = vmatpush1.xpose.msra.mxu0 0.0
      %2088 = vmatprep.subr.mxu0 0.0
      %2089 = vmatpush1.xpose.msra.mxu0 0.0
      %2090 = vmatprep.subr.mxu0 0.0
      %2091 = vmatpush1.xpose.msra.mxu0 0.0
      %2092 = vmatprep.subr.mxu0 0.0
      %2093 = vmatpush1.xpose.msra.mxu0 0.0
      %2094 = vmatprep.subr.mxu0 0.0
      %2095 = vmatpush1.xpose.msra.mxu0 0.0
      %2096 = vmatprep.subr.mxu0 0.0
      %2097 = vmatpush1.xpose.msra.mxu0 0.0
      %2098 = vmatprep.subr.mxu0 0.0
      %2099 = vmatpush1.xpose.msra.mxu0 0.0
      %2100 = vmatprep.subr.mxu0 0.0
      %2101 = vmatpush1.xpose.msra.mxu0 0.0
      %2102 = vmatprep.subr.mxu0 0.0
      %2103 = vmatpush1.xpose.msra.mxu0 0.0
      %2104 = vmatprep.subr.mxu0 0.0
      %2105 = vmatpush1.xpose.msra.mxu0 0.0
      %2106 = vmatprep.subr.mxu0 0.0
      %2107 = vmatpush1.xpose.msra.mxu0 0.0
      %2108 = vmatprep.mubr.f32.mxu0 0.0
      %2109 = vmatmul.mubr.f32.gmra.mrb[0].mxu0 %v2040
      %v2110 = vpop.f32.mrb[0].mxu0
      %v2111 = vadd.f32 0.0, %v2110
      %v2112 = vpop.f32.mrb[0].mxu0
      %2113 = vdwg.mxu0
      %2114 = vrot.lane.b32.xlu0 %v1564, 120
      %v2115 = vpop.permute.xlu0 %2114
      %2116 = vrot.lane.b32.xlu0 %v1637, 120
      %v2117 = vpop.permute.xlu0 %2116
      %v2118 = vsel %vm1715, %v2115, 0
      %v2120 = vsel %vm1715, %v2117, 0
      %2122 = vmatprep.subr.mxu0 0.0
      %2123 = vmatpush1.xpose.msra.mxu0 %v2120
      %2124 = vmatprep.subr.mxu0 0.0
      %2125 = vmatpush1.xpose.msra.mxu0 0.0
      %2126 = vmatprep.subr.mxu0 0.0
      %2127 = vmatpush1.xpose.msra.mxu0 0.0
      %2128 = vmatprep.subr.mxu0 0.0
      %2129 = vmatpush1.xpose.msra.mxu0 0.0
      %2130 = vmatprep.subr.mxu0 0.0
      %2131 = vmatpush1.xpose.msra.mxu0 0.0
      %2132 = vmatprep.subr.mxu0 0.0
      %2133 = vmatpush1.xpose.msra.mxu0 0.0
      %2134 = vmatprep.subr.mxu0 0.0
      %2135 = vmatpush1.xpose.msra.mxu0 0.0
      %2136 = vmatprep.subr.mxu0 0.0
      %2137 = vmatpush1.xpose.msra.mxu0 0.0
      %2138 = vmatprep.subr.mxu0 0.0
      %2139 = vmatpush1.xpose.msra.mxu0 0.0
      %2140 = vmatprep.subr.mxu0 0.0
      %2141 = vmatpush1.xpose.msra.mxu0 0.0
      %2142 = vmatprep.subr.mxu0 0.0
      %2143 = vmatpush1.xpose.msra.mxu0 0.0
      %2144 = vmatprep.subr.mxu0 0.0
      %2145 = vmatpush1.xpose.msra.mxu0 0.0
      %2146 = vmatprep.subr.mxu0 0.0
      %2147 = vmatpush1.xpose.msra.mxu0 0.0
      %2148 = vmatprep.subr.mxu0 0.0
      %2149 = vmatpush1.xpose.msra.mxu0 0.0
      %2150 = vmatprep.subr.mxu0 0.0
      %2151 = vmatpush1.xpose.msra.mxu0 0.0
      %2152 = vmatprep.subr.mxu0 0.0
      %2153 = vmatpush1.xpose.msra.mxu0 0.0
      %2154 = vmatprep.subr.mxu0 0.0
      %2155 = vmatpush1.xpose.msra.mxu0 0.0
      %2156 = vmatprep.subr.mxu0 0.0
      %2157 = vmatpush1.xpose.msra.mxu0 0.0
      %2158 = vmatprep.subr.mxu0 0.0
      %2159 = vmatpush1.xpose.msra.mxu0 0.0
      %2160 = vmatprep.subr.mxu0 0.0
      %2161 = vmatpush1.xpose.msra.mxu0 0.0
      %2162 = vmatprep.subr.mxu0 0.0
      %2163 = vmatpush1.xpose.msra.mxu0 0.0
      %2164 = vmatprep.subr.mxu0 0.0
      %2165 = vmatpush1.xpose.msra.mxu0 0.0
      %2166 = vmatprep.subr.mxu0 0.0
      %2167 = vmatpush1.xpose.msra.mxu0 0.0
      %2168 = vmatprep.subr.mxu0 0.0
      %2169 = vmatpush1.xpose.msra.mxu0 0.0
      %2170 = vmatprep.subr.mxu0 0.0
      %2171 = vmatpush1.xpose.msra.mxu0 0.0
      %2172 = vmatprep.subr.mxu0 0.0
      %2173 = vmatpush1.xpose.msra.mxu0 0.0
      %2174 = vmatprep.subr.mxu0 0.0
      %2175 = vmatpush1.xpose.msra.mxu0 0.0
      %2176 = vmatprep.subr.mxu0 0.0
      %2177 = vmatpush1.xpose.msra.mxu0 0.0
      %2178 = vmatprep.subr.mxu0 0.0
      %2179 = vmatpush1.xpose.msra.mxu0 0.0
      %2180 = vmatprep.subr.mxu0 0.0
      %2181 = vmatpush1.xpose.msra.mxu0 0.0
      %2182 = vmatprep.subr.mxu0 0.0
      %2183 = vmatpush1.xpose.msra.mxu0 0.0
      %2184 = vmatprep.subr.mxu0 0.0
      %2185 = vmatpush1.xpose.msra.mxu0 0.0
      %2186 = vmatprep.mubr.f32.mxu0 0.0
      %2187 = vmatmul.mubr.f32.gmra.mrb[0].mxu0 %v2118
      %v2188 = vpop.f32.mrb[0].mxu0
      %v2189 = vadd.f32 0.0, %v2188
      %v2190 = vpop.f32.mrb[0].mxu0
      %2191 = vdwg.mxu0
      %v2192 = vsel %vm1715, %v2111, -inf
      %2193 = vmax.xlane.f32.xlu0 %v2192
      %v2194 = vpop.xlane.xlu0 %2193
      %v2195 = vsel %vm1715, %v2189, -inf
      %2196 = vmax.xlane.f32.xlu0 %v2195
      %v2197 = vpop.xlane.xlu0 %2196
      %v2198 = vsub.f32 %v2111, %v2194
      %v2199 = vsub.f32 %v2189, %v2197
      %v2200 = vmul.f32 %v2198, 1.442695
      %v2201 = vpow.pop %v2200
      %v2202 = vmul.f32 %v2199, 1.442695
      %v2203 = vpow.pop %v2202
      %v2204 = vsel %vm1715, %v2201, 0.0
      %2205 = vadd.xlane.f32.xlu0 %v2204
      %v2206 = vpop.xlane.xlu0 %2205
      %v2207 = vsel %vm1715, %v2203, 0.0
      %2208 = vadd.xlane.f32.xlu0 %v2207
      %v2209 = vpop.xlane.xlu0 %2208
      %v2210 = vrcp.pop %v2206
      %v2211 = vmul.f32 %v2201, %v2210
      %v2212 = vrcp.pop %v2209
      %v2213 = vmul.f32 %v2203, %v2212
      %2215 = vrot.lane.b32.xlu0 %v1707, 120
      %v2216 = vpop.permute.xlu0 %2215
      %v2219 = vsel %vm1715, %v2211, 0
      %2221 = vmatprep.subr.mxu0 0.0
      %2222 = vmatpush1.msra.mxu0 %v2216
      %2223 = vmatprep.subr.mxu0 0.0
      %2224 = vmatpush1.msra.mxu0 0.0
      %2225 = vmatprep.subr.mxu0 0.0
      %2226 = vmatpush1.msra.mxu0 0.0
      %2227 = vmatprep.subr.mxu0 0.0
      %2228 = vmatpush1.msra.mxu0 0.0
      %2229 = vmatprep.subr.mxu0 0.0
      %2230 = vmatpush1.msra.mxu0 0.0
      %2231 = vmatprep.subr.mxu0 0.0
      %2232 = vmatpush1.msra.mxu0 0.0
      %2233 = vmatprep.subr.mxu0 0.0
      %2234 = vmatpush1.msra.mxu0 0.0
      %2235 = vmatprep.subr.mxu0 0.0
      %2236 = vmatpush1.msra.mxu0 0.0
      %2237 = vmatprep.subr.mxu0 0.0
      %2238 = vmatpush1.msra.mxu0 0.0
      %2239 = vmatprep.subr.mxu0 0.0
      %2240 = vmatpush1.msra.mxu0 0.0
      %2241 = vmatprep.subr.mxu0 0.0
      %2242 = vmatpush1.msra.mxu0 0.0
      %2243 = vmatprep.subr.mxu0 0.0
      %2244 = vmatpush1.msra.mxu0 0.0
      %2245 = vmatprep.subr.mxu0 0.0
      %2246 = vmatpush1.msra.mxu0 0.0
      %2247 = vmatprep.subr.mxu0 0.0
      %2248 = vmatpush1.msra.mxu0 0.0
      %2249 = vmatprep.subr.mxu0 0.0
      %2250 = vmatpush1.msra.mxu0 0.0
      %2251 = vmatprep.subr.mxu0 0.0
      %2252 = vmatpush1.msra.mxu0 0.0
      %2253 = vmatprep.subr.mxu0 0.0
      %2254 = vmatpush1.msra.mxu0 0.0
      %2255 = vmatprep.subr.mxu0 0.0
      %2256 = vmatpush1.msra.mxu0 0.0
      %2257 = vmatprep.subr.mxu0 0.0
      %2258 = vmatpush1.msra.mxu0 0.0
      %2259 = vmatprep.subr.mxu0 0.0
      %2260 = vmatpush1.msra.mxu0 0.0
      %2261 = vmatprep.subr.mxu0 0.0
      %2262 = vmatpush1.msra.mxu0 0.0
      %2263 = vmatprep.subr.mxu0 0.0
      %2264 = vmatpush1.msra.mxu0 0.0
      %2265 = vmatprep.subr.mxu0 0.0
      %2266 = vmatpush1.msra.mxu0 0.0
      %2267 = vmatprep.subr.mxu0 0.0
      %2268 = vmatpush1.msra.mxu0 0.0
      %2269 = vmatprep.subr.mxu0 0.0
      %2270 = vmatpush1.msra.mxu0 0.0
      %2271 = vmatprep.subr.mxu0 0.0
      %2272 = vmatpush1.msra.mxu0 0.0
      %2273 = vmatprep.subr.mxu0 0.0
      %2274 = vmatpush1.msra.mxu0 0.0
      %2275 = vmatprep.subr.mxu0 0.0
      %2276 = vmatpush1.msra.mxu0 0.0
      %2277 = vmatprep.subr.mxu0 0.0
      %2278 = vmatpush1.msra.mxu0 0.0
      %2279 = vmatprep.subr.mxu0 0.0
      %2280 = vmatpush1.msra.mxu0 0.0
      %2281 = vmatprep.subr.mxu0 0.0
      %2282 = vmatpush1.msra.mxu0 0.0
      %2283 = vmatprep.subr.mxu0 0.0
      %2284 = vmatpush1.msra.mxu0 0.0
      %2285 = vmatprep.mubr.f32.mxu0 0.0
      %2286 = vmatmul.mubr.f32.gmra.mrb[0].mxu0 %v2219
      %v2287 = vpop.f32.mrb[0].mxu0
      %v2288 = vadd.f32 0.0, %v2287
      %v2289 = vpop.f32.mrb[0].mxu0
      %2290 = vdwg.mxu0
      %2292 = vrot.lane.b32.xlu0 %v1712, 120
      %v2293 = vpop.permute.xlu0 %2292
      %v2296 = vsel %vm1715, %v2213, 0
      %2298 = vmatprep.subr.mxu0 0.0
      %2299 = vmatpush1.msra.mxu0 %v2293
      %2300 = vmatprep.subr.mxu0 0.0
      %2301 = vmatpush1.msra.mxu0 0.0
      %2302 = vmatprep.subr.mxu0 0.0
      %2303 = vmatpush1.msra.mxu0 0.0
      %2304 = vmatprep.subr.mxu0 0.0
      %2305 = vmatpush1.msra.mxu0 0.0
      %2306 = vmatprep.subr.mxu0 0.0
      %2307 = vmatpush1.msra.mxu0 0.0
      %2308 = vmatprep.subr.mxu0 0.0
      %2309 = vmatpush1.msra.mxu0 0.0
      %2310 = vmatprep.subr.mxu0 0.0
      %2311 = vmatpush1.msra.mxu0 0.0
      %2312 = vmatprep.subr.mxu0 0.0
      %2313 = vmatpush1.msra.mxu0 0.0
      %2314 = vmatprep.subr.mxu0 0.0
      %2315 = vmatpush1.msra.mxu0 0.0
      %2316 = vmatprep.subr.mxu0 0.0
      %2317 = vmatpush1.msra.mxu0 0.0
      %2318 = vmatprep.subr.mxu0 0.0
      %2319 = vmatpush1.msra.mxu0 0.0
      %2320 = vmatprep.subr.mxu0 0.0
      %2321 = vmatpush1.msra.mxu0 0.0
      %2322 = vmatprep.subr.mxu0 0.0
      %2323 = vmatpush1.msra.mxu0 0.0
      %2324 = vmatprep.subr.mxu0 0.0
      %2325 = vmatpush1.msra.mxu0 0.0
      %2326 = vmatprep.subr.mxu0 0.0
      %2327 = vmatpush1.msra.mxu0 0.0
      %2328 = vmatprep.subr.mxu0 0.0
      %2329 = vmatpush1.msra.mxu0 0.0
      %2330 = vmatprep.subr.mxu0 0.0
      %2331 = vmatpush1.msra.mxu0 0.0
      %2332 = vmatprep.subr.mxu0 0.0
      %2333 = vmatpush1.msra.mxu0 0.0
      %2334 = vmatprep.subr.mxu0 0.0
      %2335 = vmatpush1.msra.mxu0 0.0
      %2336 = vmatprep.subr.mxu0 0.0
      %2337 = vmatpush1.msra.mxu0 0.0
      %2338 = vmatprep.subr.mxu0 0.0
      %2339 = vmatpush1.msra.mxu0 0.0
      %2340 = vmatprep.subr.mxu0 0.0
      %2341 = vmatpush1.msra.mxu0 0.0
      %2342 = vmatprep.subr.mxu0 0.0
      %2343 = vmatpush1.msra.mxu0 0.0
      %2344 = vmatprep.subr.mxu0 0.0
      %2345 = vmatpush1.msra.mxu0 0.0
      %2346 = vmatprep.subr.mxu0 0.0
      %2347 = vmatpush1.msra.mxu0 0.0
      %2348 = vmatprep.subr.mxu0 0.0
      %2349 = vmatpush1.msra.mxu0 0.0
      %2350 = vmatprep.subr.mxu0 0.0
      %2351 = vmatpush1.msra.mxu0 0.0
      %2352 = vmatprep.subr.mxu0 0.0
      %2353 = vmatpush1.msra.mxu0 0.0
      %2354 = vmatprep.subr.mxu0 0.0
      %2355 = vmatpush1.msra.mxu0 0.0
      %2356 = vmatprep.subr.mxu0 0.0
      %2357 = vmatpush1.msra.mxu0 0.0
      %2358 = vmatprep.subr.mxu0 0.0
      %2359 = vmatpush1.msra.mxu0 0.0
      %2360 = vmatprep.subr.mxu0 0.0
      %2361 = vmatpush1.msra.mxu0 0.0
      %2362 = vmatprep.mubr.f32.mxu0 0.0
      %2363 = vmatmul.mubr.f32.gmra.mrb[0].mxu0 %v2296
      %v2364 = vpop.f32.mrb[0].mxu0
      %v2365 = vadd.f32 0.0, %v2364
      %v2366 = vpop.f32.mrb[0].mxu0
      %2367 = vdwg.mxu0
      %2368 = vrot.lane.b32.xlu0 %v1563, 112
      %v2369 = vpop.permute.xlu0 %2368
      %2370 = vrot.lane.b32.xlu0 %v1632, 112
      %v2371 = vpop.permute.xlu0 %2370
      %v2372 = vsel %vm1715, %v2369, 0
      %v2374 = vsel %vm1715, %v2371, 0
      %2376 = vmatprep.subr.mxu0 0.0
      %2377 = vmatpush1.xpose.msra.mxu0 %v2374
      %2378 = vmatprep.subr.mxu0 0.0
      %2379 = vmatpush1.xpose.msra.mxu0 0.0
      %2380 = vmatprep.subr.mxu0 0.0
      %2381 = vmatpush1.xpose.msra.mxu0 0.0
      %2382 = vmatprep.subr.mxu0 0.0
      %2383 = vmatpush1.xpose.msra.mxu0 0.0
      %2384 = vmatprep.subr.mxu0 0.0
      %2385 = vmatpush1.xpose.msra.mxu0 0.0
      %2386 = vmatprep.subr.mxu0 0.0
      %2387 = vmatpush1.xpose.msra.mxu0 0.0
      %2388 = vmatprep.subr.mxu0 0.0
      %2389 = vmatpush1.xpose.msra.mxu0 0.0
      %2390 = vmatprep.subr.mxu0 0.0
      %2391 = vmatpush1.xpose.msra.mxu0 0.0
      %2392 = vmatprep.subr.mxu0 0.0
      %2393 = vmatpush1.xpose.msra.mxu0 0.0
      %2394 = vmatprep.subr.mxu0 0.0
      %2395 = vmatpush1.xpose.msra.mxu0 0.0
      %2396 = vmatprep.subr.mxu0 0.0
      %2397 = vmatpush1.xpose.msra.mxu0 0.0
      %2398 = vmatprep.subr.mxu0 0.0
      %2399 = vmatpush1.xpose.msra.mxu0 0.0
      %2400 = vmatprep.subr.mxu0 0.0
      %2401 = vmatpush1.xpose.msra.mxu0 0.0
      %2402 = vmatprep.subr.mxu0 0.0
      %2403 = vmatpush1.xpose.msra.mxu0 0.0
      %2404 = vmatprep.subr.mxu0 0.0
      %2405 = vmatpush1.xpose.msra.mxu0 0.0
      %2406 = vmatprep.subr.mxu0 0.0
      %2407 = vmatpush1.xpose.msra.mxu0 0.0
      %2408 = vmatprep.subr.mxu0 0.0
      %2409 = vmatpush1.xpose.msra.mxu0 0.0
      %2410 = vmatprep.subr.mxu0 0.0
      %2411 = vmatpush1.xpose.msra.mxu0 0.0
      %2412 = vmatprep.subr.mxu0 0.0
      %2413 = vmatpush1.xpose.msra.mxu0 0.0
      %2414 = vmatprep.subr.mxu0 0.0
      %2415 = vmatpush1.xpose.msra.mxu0 0.0
      %2416 = vmatprep.subr.mxu0 0.0
      %2417 = vmatpush1.xpose.msra.mxu0 0.0
      %2418 = vmatprep.subr.mxu0 0.0
      %2419 = vmatpush1.xpose.msra.mxu0 0.0
      %2420 = vmatprep.subr.mxu0 0.0
      %2421 = vmatpush1.xpose.msra.mxu0 0.0
      %2422 = vmatprep.subr.mxu0 0.0
      %2423 = vmatpush1.xpose.msra.mxu0 0.0
      %2424 = vmatprep.subr.mxu0 0.0
      %2425 = vmatpush1.xpose.msra.mxu0 0.0
      %2426 = vmatprep.subr.mxu0 0.0
      %2427 = vmatpush1.xpose.msra.mxu0 0.0
      %2428 = vmatprep.subr.mxu0 0.0
      %2429 = vmatpush1.xpose.msra.mxu0 0.0
      %2430 = vmatprep.subr.mxu0 0.0
      %2431 = vmatpush1.xpose.msra.mxu0 0.0
      %2432 = vmatprep.subr.mxu0 0.0
      %2433 = vmatpush1.xpose.msra.mxu0 0.0
      %2434 = vmatprep.subr.mxu0 0.0
      %2435 = vmatpush1.xpose.msra.mxu0 0.0
      %2436 = vmatprep.subr.mxu0 0.0
      %2437 = vmatpush1.xpose.msra.mxu0 0.0
      %2438 = vmatprep.subr.mxu0 0.0
      %2439 = vmatpush1.xpose.msra.mxu0 0.0
      %2440 = vmatprep.mubr.f32.mxu0 0.0
      %2441 = vmatmul.mubr.f32.gmra.mrb[0].mxu0 %v2372
      %v2442 = vpop.f32.mrb[0].mxu0
      %v2443 = vadd.f32 0.0, %v2442
      %v2444 = vpop.f32.mrb[0].mxu0
      %2445 = vdwg.mxu0
      %2446 = vrot.lane.b32.xlu0 %v1564, 112
      %v2447 = vpop.permute.xlu0 %2446
      %2448 = vrot.lane.b32.xlu0 %v1637, 112
      %v2449 = vpop.permute.xlu0 %2448
      %v2450 = vsel %vm1715, %v2447, 0
      %v2452 = vsel %vm1715, %v2449, 0
      %2454 = vmatprep.subr.mxu0 0.0
      %2455 = vmatpush1.xpose.msra.mxu0 %v2452
      %2456 = vmatprep.subr.mxu0 0.0
      %2457 = vmatpush1.xpose.msra.mxu0 0.0
      %2458 = vmatprep.subr.mxu0 0.0
      %2459 = vmatpush1.xpose.msra.mxu0 0.0
      %2460 = vmatprep.subr.mxu0 0.0
      %2461 = vmatpush1.xpose.msra.mxu0 0.0
      %2462 = vmatprep.subr.mxu0 0.0
      %2463 = vmatpush1.xpose.msra.mxu0 0.0
      %2464 = vmatprep.subr.mxu0 0.0
      %2465 = vmatpush1.xpose.msra.mxu0 0.0
      %2466 = vmatprep.subr.mxu0 0.0
      %2467 = vmatpush1.xpose.msra.mxu0 0.0
      %2468 = vmatprep.subr.mxu0 0.0
      %2469 = vmatpush1.xpose.msra.mxu0 0.0
      %2470 = vmatprep.subr.mxu0 0.0
      %2471 = vmatpush1.xpose.msra.mxu0 0.0
      %2472 = vmatprep.subr.mxu0 0.0
      %2473 = vmatpush1.xpose.msra.mxu0 0.0
      %2474 = vmatprep.subr.mxu0 0.0
      %2475 = vmatpush1.xpose.msra.mxu0 0.0
      %2476 = vmatprep.subr.mxu0 0.0
      %2477 = vmatpush1.xpose.msra.mxu0 0.0
      %2478 = vmatprep.subr.mxu0 0.0
      %2479 = vmatpush1.xpose.msra.mxu0 0.0
      %2480 = vmatprep.subr.mxu0 0.0
      %2481 = vmatpush1.xpose.msra.mxu0 0.0
      %2482 = vmatprep.subr.mxu0 0.0
      %2483 = vmatpush1.xpose.msra.mxu0 0.0
      %2484 = vmatprep.subr.mxu0 0.0
      %2485 = vmatpush1.xpose.msra.mxu0 0.0
      %2486 = vmatprep.subr.mxu0 0.0
      %2487 = vmatpush1.xpose.msra.mxu0 0.0
      %2488 = vmatprep.subr.mxu0 0.0
      %2489 = vmatpush1.xpose.msra.mxu0 0.0
      %2490 = vmatprep.subr.mxu0 0.0
      %2491 = vmatpush1.xpose.msra.mxu0 0.0
      %2492 = vmatprep.subr.mxu0 0.0
      %2493 = vmatpush1.xpose.msra.mxu0 0.0
      %2494 = vmatprep.subr.mxu0 0.0
      %2495 = vmatpush1.xpose.msra.mxu0 0.0
      %2496 = vmatprep.subr.mxu0 0.0
      %2497 = vmatpush1.xpose.msra.mxu0 0.0
      %2498 = vmatprep.subr.mxu0 0.0
      %2499 = vmatpush1.xpose.msra.mxu0 0.0
      %2500 = vmatprep.subr.mxu0 0.0
      %2501 = vmatpush1.xpose.msra.mxu0 0.0
      %2502 = vmatprep.subr.mxu0 0.0
      %2503 = vmatpush1.xpose.msra.mxu0 0.0
      %2504 = vmatprep.subr.mxu0 0.0
      %2505 = vmatpush1.xpose.msra.mxu0 0.0
      %2506 = vmatprep.subr.mxu0 0.0
      %2507 = vmatpush1.xpose.msra.mxu0 0.0
      %2508 = vmatprep.subr.mxu0 0.0
      %2509 = vmatpush1.xpose.msra.mxu0 0.0
      %2510 = vmatprep.subr.mxu0 0.0
      %2511 = vmatpush1.xpose.msra.mxu0 0.0
      %2512 = vmatprep.subr.mxu0 0.0
      %2513 = vmatpush1.xpose.msra.mxu0 0.0
      %2514 = vmatprep.subr.mxu0 0.0
      %2515 = vmatpush1.xpose.msra.mxu0 0.0
      %2516 = vmatprep.subr.mxu0 0.0
      %2517 = vmatpush1.xpose.msra.mxu0 0.0
      %2518 = vmatprep.mubr.f32.mxu0 0.0
      %2519 = vmatmul.mubr.f32.gmra.mrb[0].mxu0 %v2450
      %v2520 = vpop.f32.mrb[0].mxu0
      %v2521 = vadd.f32 0.0, %v2520
      %v2522 = vpop.f32.mrb[0].mxu0
      %2523 = vdwg.mxu0
      %v2524 = vsel %vm1715, %v2443, -inf
      %2525 = vmax.xlane.f32.xlu0 %v2524
      %v2526 = vpop.xlane.xlu0 %2525
      %v2527 = vsel %vm1715, %v2521, -inf
      %2528 = vmax.xlane.f32.xlu0 %v2527
      %v2529 = vpop.xlane.xlu0 %2528
      %v2530 = vsub.f32 %v2443, %v2526
      %v2531 = vsub.f32 %v2521, %v2529
      %v2532 = vmul.f32 %v2530, 1.442695
      %v2533 = vpow.pop %v2532
      %v2534 = vmul.f32 %v2531, 1.442695
      %v2535 = vpow.pop %v2534
      %v2536 = vsel %vm1715, %v2533, 0.0
      %2537 = vadd.xlane.f32.xlu0 %v2536
      %v2538 = vpop.xlane.xlu0 %2537
      %v2539 = vsel %vm1715, %v2535, 0.0
      %2540 = vadd.xlane.f32.xlu0 %v2539
      %v2541 = vpop.xlane.xlu0 %2540
      %v2542 = vrcp.pop %v2538
      %v2543 = vmul.f32 %v2533, %v2542
      %v2544 = vrcp.pop %v2541
      %v2545 = vmul.f32 %v2535, %v2544
      %2546 = vrot.lane.b32.xlu0 %v1707, 112
      %v2547 = vpop.permute.xlu0 %2546
      %v2550 = vsel %vm1715, %v2543, 0
      %2552 = vmatprep.subr.mxu0 0.0
      %2553 = vmatpush1.msra.mxu0 %v2547
      %2554 = vmatprep.subr.mxu0 0.0
      %2555 = vmatpush1.msra.mxu0 0.0
      %2556 = vmatprep.subr.mxu0 0.0
      %2557 = vmatpush1.msra.mxu0 0.0
      %2558 = vmatprep.subr.mxu0 0.0
      %2559 = vmatpush1.msra.mxu0 0.0
      %2560 = vmatprep.subr.mxu0 0.0
      %2561 = vmatpush1.msra.mxu0 0.0
      %2562 = vmatprep.subr.mxu0 0.0
      %2563 = vmatpush1.msra.mxu0 0.0
      %2564 = vmatprep.subr.mxu0 0.0
      %2565 = vmatpush1.msra.mxu0 0.0
      %2566 = vmatprep.subr.mxu0 0.0
      %2567 = vmatpush1.msra.mxu0 0.0
      %2568 = vmatprep.subr.mxu0 0.0
      %2569 = vmatpush1.msra.mxu0 0.0
      %2570 = vmatprep.subr.mxu0 0.0
      %2571 = vmatpush1.msra.mxu0 0.0
      %2572 = vmatprep.subr.mxu0 0.0
      %2573 = vmatpush1.msra.mxu0 0.0
      %2574 = vmatprep.subr.mxu0 0.0
      %2575 = vmatpush1.msra.mxu0 0.0
      %2576 = vmatprep.subr.mxu0 0.0
      %2577 = vmatpush1.msra.mxu0 0.0
      %2578 = vmatprep.subr.mxu0 0.0
      %2579 = vmatpush1.msra.mxu0 0.0
      %2580 = vmatprep.subr.mxu0 0.0
      %2581 = vmatpush1.msra.mxu0 0.0
      %2582 = vmatprep.subr.mxu0 0.0
      %2583 = vmatpush1.msra.mxu0 0.0
      %2584 = vmatprep.subr.mxu0 0.0
      %2585 = vmatpush1.msra.mxu0 0.0
      %2586 = vmatprep.subr.mxu0 0.0
      %2587 = vmatpush1.msra.mxu0 0.0
      %2588 = vmatprep.subr.mxu0 0.0
      %2589 = vmatpush1.msra.mxu0 0.0
      %2590 = vmatprep.subr.mxu0 0.0
      %2591 = vmatpush1.msra.mxu0 0.0
      %2592 = vmatprep.subr.mxu0 0.0
      %2593 = vmatpush1.msra.mxu0 0.0
      %2594 = vmatprep.subr.mxu0 0.0
      %2595 = vmatpush1.msra.mxu0 0.0
      %2596 = vmatprep.subr.mxu0 0.0
      %2597 = vmatpush1.msra.mxu0 0.0
      %2598 = vmatprep.subr.mxu0 0.0
      %2599 = vmatpush1.msra.mxu0 0.0
      %2600 = vmatprep.subr.mxu0 0.0
      %2601 = vmatpush1.msra.mxu0 0.0
      %2602 = vmatprep.subr.mxu0 0.0
      %2603 = vmatpush1.msra.mxu0 0.0
      %2604 = vmatprep.subr.mxu0 0.0
      %2605 = vmatpush1.msra.mxu0 0.0
      %2606 = vmatprep.subr.mxu0 0.0
      %2607 = vmatpush1.msra.mxu0 0.0
      %2608 = vmatprep.subr.mxu0 0.0
      %2609 = vmatpush1.msra.mxu0 0.0
      %2610 = vmatprep.subr.mxu0 0.0
      %2611 = vmatpush1.msra.mxu0 0.0
      %2612 = vmatprep.subr.mxu0 0.0
      %2613 = vmatpush1.msra.mxu0 0.0
      %2614 = vmatprep.subr.mxu0 0.0
      %2615 = vmatpush1.msra.mxu0 0.0
      %2616 = vmatprep.mubr.f32.mxu0 0.0
      %2617 = vmatmul.mubr.f32.gmra.mrb[0].mxu0 %v2550
      %v2618 = vpop.f32.mrb[0].mxu0
      %v2619 = vadd.f32 0.0, %v2618
      %v2620 = vpop.f32.mrb[0].mxu0
      %2621 = vdwg.mxu0
      %2622 = vrot.lane.b32.xlu0 %v1712, 112
      %v2623 = vpop.permute.xlu0 %2622
      %v2626 = vsel %vm1715, %v2545, 0
      %2628 = vmatprep.subr.mxu0 0.0
      %2629 = vmatpush1.msra.mxu0 %v2623
      %2630 = vmatprep.subr.mxu0 0.0
      %2631 = vmatpush1.msra.mxu0 0.0
      %2632 = vmatprep.subr.mxu0 0.0
      %2633 = vmatpush1.msra.mxu0 0.0
      %2634 = vmatprep.subr.mxu0 0.0
      %2635 = vmatpush1.msra.mxu0 0.0
      %2636 = vmatprep.subr.mxu0 0.0
      %2637 = vmatpush1.msra.mxu0 0.0
      %2638 = vmatprep.subr.mxu0 0.0
      %2639 = vmatpush1.msra.mxu0 0.0
      %2640 = vmatprep.subr.mxu0 0.0
      %2641 = vmatpush1.msra.mxu0 0.0
      %2642 = vmatprep.subr.mxu0 0.0
      %2643 = vmatpush1.msra.mxu0 0.0
      %2644 = vmatprep.subr.mxu0 0.0
      %2645 = vmatpush1.msra.mxu0 0.0
      %2646 = vmatprep.subr.mxu0 0.0
      %2647 = vmatpush1.msra.mxu0 0.0
      %2648 = vmatprep.subr.mxu0 0.0
      %2649 = vmatpush1.msra.mxu0 0.0
      %2650 = vmatprep.subr.mxu0 0.0
      %2651 = vmatpush1.msra.mxu0 0.0
      %2652 = vmatprep.subr.mxu0 0.0
      %2653 = vmatpush1.msra.mxu0 0.0
      %2654 = vmatprep.subr.mxu0 0.0
      %2655 = vmatpush1.msra.mxu0 0.0
      %2656 = vmatprep.subr.mxu0 0.0
      %2657 = vmatpush1.msra.mxu0 0.0
      %2658 = vmatprep.subr.mxu0 0.0
      %2659 = vmatpush1.msra.mxu0 0.0
      %2660 = vmatprep.subr.mxu0 0.0
      %2661 = vmatpush1.msra.mxu0 0.0
      %2662 = vmatprep.subr.mxu0 0.0
      %2663 = vmatpush1.msra.mxu0 0.0
      %2664 = vmatprep.subr.mxu0 0.0
      %2665 = vmatpush1.msra.mxu0 0.0
      %2666 = vmatprep.subr.mxu0 0.0
      %2667 = vmatpush1.msra.mxu0 0.0
      %2668 = vmatprep.subr.mxu0 0.0
      %2669 = vmatpush1.msra.mxu0 0.0
      %2670 = vmatprep.subr.mxu0 0.0
      %2671 = vmatpush1.msra.mxu0 0.0
      %2672 = vmatprep.subr.mxu0 0.0
      %2673 = vmatpush1.msra.mxu0 0.0
      %2674 = vmatprep.subr.mxu0 0.0
      %2675 = vmatpush1.msra.mxu0 0.0
      %2676 = vmatprep.subr.mxu0 0.0
      %2677 = vmatpush1.msra.mxu0 0.0
      %2678 = vmatprep.subr.mxu0 0.0
      %2679 = vmatpush1.msra.mxu0 0.0
      %2680 = vmatprep.subr.mxu0 0.0
      %2681 = vmatpush1.msra.mxu0 0.0
      %2682 = vmatprep.subr.mxu0 0.0
      %2683 = vmatpush1.msra.mxu0 0.0
      %2684 = vmatprep.subr.mxu0 0.0
      %2685 = vmatpush1.msra.mxu0 0.0
      %2686 = vmatprep.subr.mxu0 0.0
      %2687 = vmatpush1.msra.mxu0 0.0
      %2688 = vmatprep.subr.mxu0 0.0
      %2689 = vmatpush1.msra.mxu0 0.0
      %2690 = vmatprep.subr.mxu0 0.0
      %2691 = vmatpush1.msra.mxu0 0.0
      %2692 = vmatprep.mubr.f32.mxu0 0.0
      %2693 = vmatmul.mubr.f32.gmra.mrb[0].mxu0 %v2626
      %v2694 = vpop.f32.mrb[0].mxu0
      %v2695 = vadd.f32 0.0, %v2694
      %v2696 = vpop.f32.mrb[0].mxu0
      %2697 = vdwg.mxu0
      %2698 = vrot.lane.b32.xlu0 %v1563, 104
      %v2699 = vpop.permute.xlu0 %2698
      %2700 = vrot.lane.b32.xlu0 %v1632, 104
      %v2701 = vpop.permute.xlu0 %2700
      %v2702 = vsel %vm1715, %v2699, 0
      %v2704 = vsel %vm1715, %v2701, 0
      %2706 = vmatprep.subr.mxu0 0.0
      %2707 = vmatpush1.xpose.msra.mxu0 %v2704
      %2708 = vmatprep.subr.mxu0 0.0
      %2709 = vmatpush1.xpose.msra.mxu0 0.0
      %2710 = vmatprep.subr.mxu0 0.0
      %2711 = vmatpush1.xpose.msra.mxu0 0.0
      %2712 = vmatprep.subr.mxu0 0.0
      %2713 = vmatpush1.xpose.msra.mxu0 0.0
      %2714 = vmatprep.subr.mxu0 0.0
      %2715 = vmatpush1.xpose.msra.mxu0 0.0
      %2716 = vmatprep.subr.mxu0 0.0
      %2717 = vmatpush1.xpose.msra.mxu0 0.0
      %2718 = vmatprep.subr.mxu0 0.0
      %2719 = vmatpush1.xpose.msra.mxu0 0.0
      %2720 = vmatprep.subr.mxu0 0.0
      %2721 = vmatpush1.xpose.msra.mxu0 0.0
      %2722 = vmatprep.subr.mxu0 0.0
      %2723 = vmatpush1.xpose.msra.mxu0 0.0
      %2724 = vmatprep.subr.mxu0 0.0
      %2725 = vmatpush1.xpose.msra.mxu0 0.0
      %2726 = vmatprep.subr.mxu0 0.0
      %2727 = vmatpush1.xpose.msra.mxu0 0.0
      %2728 = vmatprep.subr.mxu0 0.0
      %2729 = vmatpush1.xpose.msra.mxu0 0.0
      %2730 = vmatprep.subr.mxu0 0.0
      %2731 = vmatpush1.xpose.msra.mxu0 0.0
      %2732 = vmatprep.subr.mxu0 0.0
      %2733 = vmatpush1.xpose.msra.mxu0 0.0
      %2734 = vmatprep.subr.mxu0 0.0
      %2735 = vmatpush1.xpose.msra.mxu0 0.0
      %2736 = vmatprep.subr.mxu0 0.0
      %2737 = vmatpush1.xpose.msra.mxu0 0.0
      %2738 = vmatprep.subr.mxu0 0.0
      %2739 = vmatpush1.xpose.msra.mxu0 0.0
      %2740 = vmatprep.subr.mxu0 0.0
      %2741 = vmatpush1.xpose.msra.mxu0 0.0
      %2742 = vmatprep.subr.mxu0 0.0
      %2743 = vmatpush1.xpose.msra.mxu0 0.0
      %2744 = vmatprep.subr.mxu0 0.0
      %2745 = vmatpush1.xpose.msra.mxu0 0.0
      %2746 = vmatprep.subr.mxu0 0.0
      %2747 = vmatpush1.xpose.msra.mxu0 0.0
      %2748 = vmatprep.subr.mxu0 0.0
      %2749 = vmatpush1.xpose.msra.mxu0 0.0
      %2750 = vmatprep.subr.mxu0 0.0
      %2751 = vmatpush1.xpose.msra.mxu0 0.0
      %2752 = vmatprep.subr.mxu0 0.0
      %2753 = vmatpush1.xpose.msra.mxu0 0.0
      %2754 = vmatprep.subr.mxu0 0.0
      %2755 = vmatpush1.xpose.msra.mxu0 0.0
      %2756 = vmatprep.subr.mxu0 0.0
      %2757 = vmatpush1.xpose.msra.mxu0 0.0
      %2758 = vmatprep.subr.mxu0 0.0
      %2759 = vmatpush1.xpose.msra.mxu0 0.0
      %2760 = vmatprep.subr.mxu0 0.0
      %2761 = vmatpush1.xpose.msra.mxu0 0.0
      %2762 = vmatprep.subr.mxu0 0.0
      %2763 = vmatpush1.xpose.msra.mxu0 0.0
      %2764 = vmatprep.subr.mxu0 0.0
      %2765 = vmatpush1.xpose.msra.mxu0 0.0
      %2766 = vmatprep.subr.mxu0 0.0
      %2767 = vmatpush1.xpose.msra.mxu0 0.0
      %2768 = vmatprep.subr.mxu0 0.0
      %2769 = vmatpush1.xpose.msra.mxu0 0.0
      %2770 = vmatprep.mubr.f32.mxu0 0.0
      %2771 = vmatmul.mubr.f32.gmra.mrb[0].mxu0 %v2702
      %v2772 = vpop.f32.mrb[0].mxu0
      %v2773 = vadd.f32 0.0, %v2772
      %v2774 = vpop.f32.mrb[0].mxu0
      %2775 = vdwg.mxu0
      %2776 = vrot.lane.b32.xlu0 %v1564, 104
      %v2777 = vpop.permute.xlu0 %2776
      %2778 = vrot.lane.b32.xlu0 %v1637, 104
      %v2779 = vpop.permute.xlu0 %2778
      %v2780 = vsel %vm1715, %v2777, 0
      %v2782 = vsel %vm1715, %v2779, 0
      %2784 = vmatprep.subr.mxu0 0.0
      %2785 = vmatpush1.xpose.msra.mxu0 %v2782
      %2786 = vmatprep.subr.mxu0 0.0
      %2787 = vmatpush1.xpose.msra.mxu0 0.0
      %2788 = vmatprep.subr.mxu0 0.0
      %2789 = vmatpush1.xpose.msra.mxu0 0.0
      %2790 = vmatprep.subr.mxu0 0.0
      %2791 = vmatpush1.xpose.msra.mxu0 0.0
      %2792 = vmatprep.subr.mxu0 0.0
      %2793 = vmatpush1.xpose.msra.mxu0 0.0
      %2794 = vmatprep.subr.mxu0 0.0
      %2795 = vmatpush1.xpose.msra.mxu0 0.0
      %2796 = vmatprep.subr.mxu0 0.0
      %2797 = vmatpush1.xpose.msra.mxu0 0.0
      %2798 = vmatprep.subr.mxu0 0.0
      %2799 = vmatpush1.xpose.msra.mxu0 0.0
      %2800 = vmatprep.subr.mxu0 0.0
      %2801 = vmatpush1.xpose.msra.mxu0 0.0
      %2802 = vmatprep.subr.mxu0 0.0
      %2803 = vmatpush1.xpose.msra.mxu0 0.0
      %2804 = vmatprep.subr.mxu0 0.0
      %2805 = vmatpush1.xpose.msra.mxu0 0.0
      %2806 = vmatprep.subr.mxu0 0.0
      %2807 = vmatpush1.xpose.msra.mxu0 0.0
      %2808 = vmatprep.subr.mxu0 0.0
      %2809 = vmatpush1.xpose.msra.mxu0 0.0
      %2810 = vmatprep.subr.mxu0 0.0
      %2811 = vmatpush1.xpose.msra.mxu0 0.0
      %2812 = vmatprep.subr.mxu0 0.0
      %2813 = vmatpush1.xpose.msra.mxu0 0.0
      %2814 = vmatprep.subr.mxu0 0.0
      %2815 = vmatpush1.xpose.msra.mxu0 0.0
      %2816 = vmatprep.subr.mxu0 0.0
      %2817 = vmatpush1.xpose.msra.mxu0 0.0
      %2818 = vmatprep.subr.mxu0 0.0
      %2819 = vmatpush1.xpose.msra.mxu0 0.0
      %2820 = vmatprep.subr.mxu0 0.0
      %2821 = vmatpush1.xpose.msra.mxu0 0.0
      %2822 = vmatprep.subr.mxu0 0.0
      %2823 = vmatpush1.xpose.msra.mxu0 0.0
      %2824 = vmatprep.subr.mxu0 0.0
      %2825 = vmatpush1.xpose.msra.mxu0 0.0
      %2826 = vmatprep.subr.mxu0 0.0
      %2827 = vmatpush1.xpose.msra.mxu0 0.0
      %2828 = vmatprep.subr.mxu0 0.0
      %2829 = vmatpush1.xpose.msra.mxu0 0.0
      %2830 = vmatprep.subr.mxu0 0.0
      %2831 = vmatpush1.xpose.msra.mxu0 0.0
      %2832 = vmatprep.subr.mxu0 0.0
      %2833 = vmatpush1.xpose.msra.mxu0 0.0
      %2834 = vmatprep.subr.mxu0 0.0
      %2835 = vmatpush1.xpose.msra.mxu0 0.0
      %2836 = vmatprep.subr.mxu0 0.0
      %2837 = vmatpush1.xpose.msra.mxu0 0.0
      %2838 = vmatprep.subr.mxu0 0.0
      %2839 = vmatpush1.xpose.msra.mxu0 0.0
      %2840 = vmatprep.subr.mxu0 0.0
      %2841 = vmatpush1.xpose.msra.mxu0 0.0
      %2842 = vmatprep.subr.mxu0 0.0
      %2843 = vmatpush1.xpose.msra.mxu0 0.0
      %2844 = vmatprep.subr.mxu0 0.0
      %2845 = vmatpush1.xpose.msra.mxu0 0.0
      %2846 = vmatprep.subr.mxu0 0.0
      %2847 = vmatpush1.xpose.msra.mxu0 0.0
      %2848 = vmatprep.mubr.f32.mxu0 0.0
      %2849 = vmatmul.mubr.f32.gmra.mrb[0].mxu0 %v2780
      %v2850 = vpop.f32.mrb[0].mxu0
      %v2851 = vadd.f32 0.0, %v2850
      %v2852 = vpop.f32.mrb[0].mxu0
      %2853 = vdwg.mxu0
      %v2854 = vsel %vm1715, %v2773, -inf
      %2855 = vmax.xlane.f32.xlu0 %v2854
      %v2856 = vpop.xlane.xlu0 %2855
      %v2857 = vsel %vm1715, %v2851, -inf
      %2858 = vmax.xlane.f32.xlu0 %v2857
      %v2859 = vpop.xlane.xlu0 %2858
      %v2860 = vsub.f32 %v2773, %v2856
      %v2861 = vsub.f32 %v2851, %v2859
      %v2862 = vmul.f32 %v2860, 1.442695
      %v2863 = vpow.pop %v2862
      %v2864 = vmul.f32 %v2861, 1.442695
      %v2865 = vpow.pop %v2864
      %v2866 = vsel %vm1715, %v2863, 0.0
      %2867 = vadd.xlane.f32.xlu0 %v2866
      %v2868 = vpop.xlane.xlu0 %2867
      %v2869 = vsel %vm1715, %v2865, 0.0
      %2870 = vadd.xlane.f32.xlu0 %v2869
      %v2871 = vpop.xlane.xlu0 %2870
      %v2872 = vrcp.pop %v2868
      %v2873 = vmul.f32 %v2863, %v2872
      %v2874 = vrcp.pop %v2871
      %v2875 = vmul.f32 %v2865, %v2874
      %2876 = vrot.lane.b32.xlu0 %v1707, 104
      %v2877 = vpop.permute.xlu0 %2876
      %v2880 = vsel %vm1715, %v2873, 0
      %2882 = vmatprep.subr.mxu0 0.0
      %2883 = vmatpush1.msra.mxu0 %v2877
      %2884 = vmatprep.subr.mxu0 0.0
      %2885 = vmatpush1.msra.mxu0 0.0
      %2886 = vmatprep.subr.mxu0 0.0
      %2887 = vmatpush1.msra.mxu0 0.0
      %2888 = vmatprep.subr.mxu0 0.0
      %2889 = vmatpush1.msra.mxu0 0.0
      %2890 = vmatprep.subr.mxu0 0.0
      %2891 = vmatpush1.msra.mxu0 0.0
      %2892 = vmatprep.subr.mxu0 0.0
      %2893 = vmatpush1.msra.mxu0 0.0
      %2894 = vmatprep.subr.mxu0 0.0
      %2895 = vmatpush1.msra.mxu0 0.0
      %2896 = vmatprep.subr.mxu0 0.0
      %2897 = vmatpush1.msra.mxu0 0.0
      %2898 = vmatprep.subr.mxu0 0.0
      %2899 = vmatpush1.msra.mxu0 0.0
      %2900 = vmatprep.subr.mxu0 0.0
      %2901 = vmatpush1.msra.mxu0 0.0
      %2902 = vmatprep.subr.mxu0 0.0
      %2903 = vmatpush1.msra.mxu0 0.0
      %2904 = vmatprep.subr.mxu0 0.0
      %2905 = vmatpush1.msra.mxu0 0.0
      %2906 = vmatprep.subr.mxu0 0.0
      %2907 = vmatpush1.msra.mxu0 0.0
      %2908 = vmatprep.subr.mxu0 0.0
      %2909 = vmatpush1.msra.mxu0 0.0
      %2910 = vmatprep.subr.mxu0 0.0
      %2911 = vmatpush1.msra.mxu0 0.0
      %2912 = vmatprep.subr.mxu0 0.0
      %2913 = vmatpush1.msra.mxu0 0.0
      %2914 = vmatprep.subr.mxu0 0.0
      %2915 = vmatpush1.msra.mxu0 0.0
      %2916 = vmatprep.subr.mxu0 0.0
      %2917 = vmatpush1.msra.mxu0 0.0
      %2918 = vmatprep.subr.mxu0 0.0
      %2919 = vmatpush1.msra.mxu0 0.0
      %2920 = vmatprep.subr.mxu0 0.0
      %2921 = vmatpush1.msra.mxu0 0.0
      %2922 = vmatprep.subr.mxu0 0.0
      %2923 = vmatpush1.msra.mxu0 0.0
      %2924 = vmatprep.subr.mxu0 0.0
      %2925 = vmatpush1.msra.mxu0 0.0
      %2926 = vmatprep.subr.mxu0 0.0
      %2927 = vmatpush1.msra.mxu0 0.0
      %2928 = vmatprep.subr.mxu0 0.0
      %2929 = vmatpush1.msra.mxu0 0.0
      %2930 = vmatprep.subr.mxu0 0.0
      %2931 = vmatpush1.msra.mxu0 0.0
      %2932 = vmatprep.subr.mxu0 0.0
      %2933 = vmatpush1.msra.mxu0 0.0
      %2934 = vmatprep.subr.mxu0 0.0
      %2935 = vmatpush1.msra.mxu0 0.0
      %2936 = vmatprep.subr.mxu0 0.0
      %2937 = vmatpush1.msra.mxu0 0.0
      %2938 = vmatprep.subr.mxu0 0.0
      %2939 = vmatpush1.msra.mxu0 0.0
      %2940 = vmatprep.subr.mxu0 0.0
      %2941 = vmatpush1.msra.mxu0 0.0
      %2942 = vmatprep.subr.mxu0 0.0
      %2943 = vmatpush1.msra.mxu0 0.0
      %2944 = vmatprep.subr.mxu0 0.0
      %2945 = vmatpush1.msra.mxu0 0.0
      %2946 = vmatprep.mubr.f32.mxu0 0.0
      %2947 = vmatmul.mubr.f32.gmra.mrb[0].mxu0 %v2880
      %v2948 = vpop.f32.mrb[0].mxu0
      %v2949 = vadd.f32 0.0, %v2948
      %v2950 = vpop.f32.mrb[0].mxu0
      %2951 = vdwg.mxu0
      %2952 = vrot.lane.b32.xlu0 %v1712, 104
      %v2953 = vpop.permute.xlu0 %2952
      %v2956 = vsel %vm1715, %v2875, 0
      %2958 = vmatprep.subr.mxu0 0.0
      %2959 = vmatpush1.msra.mxu0 %v2953
      %2960 = vmatprep.subr.mxu0 0.0
      %2961 = vmatpush1.msra.mxu0 0.0
      %2962 = vmatprep.subr.mxu0 0.0
      %2963 = vmatpush1.msra.mxu0 0.0
      %2964 = vmatprep.subr.mxu0 0.0
      %2965 = vmatpush1.msra.mxu0 0.0
      %2966 = vmatprep.subr.mxu0 0.0
      %2967 = vmatpush1.msra.mxu0 0.0
      %2968 = vmatprep.subr.mxu0 0.0
      %2969 = vmatpush1.msra.mxu0 0.0
      %2970 = vmatprep.subr.mxu0 0.0
      %2971 = vmatpush1.msra.mxu0 0.0
      %2972 = vmatprep.subr.mxu0 0.0
      %2973 = vmatpush1.msra.mxu0 0.0
      %2974 = vmatprep.subr.mxu0 0.0
      %2975 = vmatpush1.msra.mxu0 0.0
      %2976 = vmatprep.subr.mxu0 0.0
      %2977 = vmatpush1.msra.mxu0 0.0
      %2978 = vmatprep.subr.mxu0 0.0
      %2979 = vmatpush1.msra.mxu0 0.0
      %2980 = vmatprep.subr.mxu0 0.0
      %2981 = vmatpush1.msra.mxu0 0.0
      %2982 = vmatprep.subr.mxu0 0.0
      %2983 = vmatpush1.msra.mxu0 0.0
      %2984 = vmatprep.subr.mxu0 0.0
      %2985 = vmatpush1.msra.mxu0 0.0
      %2986 = vmatprep.subr.mxu0 0.0
      %2987 = vmatpush1.msra.mxu0 0.0
      %2988 = vmatprep.subr.mxu0 0.0
      %2989 = vmatpush1.msra.mxu0 0.0
      %2990 = vmatprep.subr.mxu0 0.0
      %2991 = vmatpush1.msra.mxu0 0.0
      %2992 = vmatprep.subr.mxu0 0.0
      %2993 = vmatpush1.msra.mxu0 0.0
      %2994 = vmatprep.subr.mxu0 0.0
      %2995 = vmatpush1.msra.mxu0 0.0
      %2996 = vmatprep.subr.mxu0 0.0
      %2997 = vmatpush1.msra.mxu0 0.0
      %2998 = vmatprep.subr.mxu0 0.0
      %2999 = vmatpush1.msra.mxu0 0.0
      %3000 = vmatprep.subr.mxu0 0.0
      %3001 = vmatpush1.msra.mxu0 0.0
      %3002 = vmatprep.subr.mxu0 0.0
      %3003 = vmatpush1.msra.mxu0 0.0
      %3004 = vmatprep.subr.mxu0 0.0
      %3005 = vmatpush1.msra.mxu0 0.0
      %3006 = vmatprep.subr.mxu0 0.0
      %3007 = vmatpush1.msra.mxu0 0.0
      %3008 = vmatprep.subr.mxu0 0.0
      %3009 = vmatpush1.msra.mxu0 0.0
      %3010 = vmatprep.subr.mxu0 0.0
      %3011 = vmatpush1.msra.mxu0 0.0
      %3012 = vmatprep.subr.mxu0 0.0
      %3013 = vmatpush1.msra.mxu0 0.0
      %3014 = vmatprep.subr.mxu0 0.0
      %3015 = vmatpush1.msra.mxu0 0.0
      %3016 = vmatprep.subr.mxu0 0.0
      %3017 = vmatpush1.msra.mxu0 0.0
      %3018 = vmatprep.subr.mxu0 0.0
      %3019 = vmatpush1.msra.mxu0 0.0
      %3020 = vmatprep.subr.mxu0 0.0
      %3021 = vmatpush1.msra.mxu0 0.0
      %3022 = vmatprep.mubr.f32.mxu0 0.0
      %3023 = vmatmul.mubr.f32.gmra.mrb[0].mxu0 %v2956
      %v3024 = vpop.f32.mrb[0].mxu0
      %v3025 = vadd.f32 0.0, %v3024
      %v3026 = vpop.f32.mrb[0].mxu0
      %3027 = vdwg.mxu0
      %3030 = vrot.lane.b32.xlu0 %v2288, 8
      %v3031 = vpop.permute.xlu0 %3030
      %3032 = vrot.lane.b32.xlu0 %v2365, 8
      %v3033 = vpop.permute.xlu0 %3032
      %3038 = vrot.lane.b32.xlu0 %v2619, 16
      %v3039 = vpop.permute.xlu0 %3038
      %3040 = vrot.lane.b32.xlu0 %v2695, 16
      %v3041 = vpop.permute.xlu0 %3040
      %3046 = vrot.lane.b32.xlu0 %v2949, 24
      %v3047 = vpop.permute.xlu0 %3046
      %3048 = vrot.lane.b32.xlu0 %v3025, 24
      %v3049 = vpop.permute.xlu0 %3048
      %v3052 = vsel %vm1715, %v1960, %v3031
      %v3053 = vsel %vm1715, %v2033, %v3033
      %vm3054 = vcmask 130048
      %v3055 = vsel %vm3054, %v3052, %v3039
      %v3056 = vsel %vm3054, %v3053, %v3041
      %vm3057 = vcmask 195584
      %v3058 = vsel %vm3057, %v3055, %v3047
      %v3059 = vsel %vm3057, %v3056, %v3049
      %v3061 = vsel %vm1438, %v3058, 0
      %v3064 = vsel %vm1438, %v3059, 0
      %3066 = vmatprep.subr.mxu0 0.0
      %3067 = vmatpush1.msra.mxu0 %v1409
      %3068 = vmatprep.subr.mxu0 0.0
      %3069 = vmatpush1.msra.mxu0 %v1410
      %3070 = vmatprep.subr.mxu0 0.0
      %3071 = vmatpush1.msra.mxu0 %v1411
      %3072 = vmatprep.subr.mxu0 0.0
      %3073 = vmatpush1.msra.mxu0 %v1412
      %3074 = vmatprep.subr.mxu0 0.0
      %3075 = vmatpush1.msra.mxu0 0.0
      %3076 = vmatprep.subr.mxu0 0.0
      %3077 = vmatpush1.msra.mxu0 0.0
      %3078 = vmatprep.subr.mxu0 0.0
      %3079 = vmatpush1.msra.mxu0 0.0
      %3080 = vmatprep.subr.mxu0 0.0
      %3081 = vmatpush1.msra.mxu0 0.0
      %3082 = vmatprep.subr.mxu0 0.0
      %3083 = vmatpush1.msra.mxu0 0.0
      %3084 = vmatprep.subr.mxu0 0.0
      %3085 = vmatpush1.msra.mxu0 0.0
      %3086 = vmatprep.subr.mxu0 0.0
      %3087 = vmatpush1.msra.mxu0 0.0
      %3088 = vmatprep.subr.mxu0 0.0
      %3089 = vmatpush1.msra.mxu0 0.0
      %3090 = vmatprep.subr.mxu0 0.0
      %3091 = vmatpush1.msra.mxu0 0.0
      %3092 = vmatprep.subr.mxu0 0.0
      %3093 = vmatpush1.msra.mxu0 0.0
      %3094 = vmatprep.subr.mxu0 0.0
      %3095 = vmatpush1.msra.mxu0 0.0
      %3096 = vmatprep.subr.mxu0 0.0
      %3097 = vmatpush1.msra.mxu0 0.0
      %3098 = vmatprep.subr.mxu0 0.0
      %3099 = vmatpush1.msra.mxu0 0.0
      %3100 = vmatprep.subr.mxu0 0.0
      %3101 = vmatpush1.msra.mxu0 0.0
      %3102 = vmatprep.subr.mxu0 0.0
      %3103 = vmatpush1.msra.mxu0 0.0
      %3104 = vmatprep.subr.mxu0 0.0
      %3105 = vmatpush1.msra.mxu0 0.0
      %3106 = vmatprep.subr.mxu0 0.0
      %3107 = vmatpush1.msra.mxu0 0.0
      %3108 = vmatprep.subr.mxu0 0.0
      %3109 = vmatpush1.msra.mxu0 0.0
      %3110 = vmatprep.subr.mxu0 0.0
      %3111 = vmatpush1.msra.mxu0 0.0
      %3112 = vmatprep.subr.mxu0 0.0
      %3113 = vmatpush1.msra.mxu0 0.0
      %3114 = vmatprep.subr.mxu0 0.0
      %3115 = vmatpush1.msra.mxu0 0.0
      %3116 = vmatprep.subr.mxu0 0.0
      %3117 = vmatpush1.msra.mxu0 0.0
      %3118 = vmatprep.subr.mxu0 0.0
      %3119 = vmatpush1.msra.mxu0 0.0
      %3120 = vmatprep.subr.mxu0 0.0
      %3121 = vmatpush1.msra.mxu0 0.0
      %3122 = vmatprep.subr.mxu0 0.0
      %3123 = vmatpush1.msra.mxu0 0.0
      %3124 = vmatprep.subr.mxu0 0.0
      %3125 = vmatpush1.msra.mxu0 0.0
      %3126 = vmatprep.subr.mxu0 0.0
      %3127 = vmatpush1.msra.mxu0 0.0
      %3128 = vmatprep.subr.mxu0 0.0
      %3129 = vmatpush1.msra.mxu0 0.0
      %3130 = vmatprep.mubr.f32.mxu0 0.0
      %3131 = vmatmul.mubr.f32.gmra.mrb[0].mxu0 %v3061
      %v3132 = vpop.f32.mrb[0].mxu0
      %v3133 = vadd.f32 0.0, %v3132
      %v3134 = vpop.f32.mrb[0].mxu0
      %3135 = vmatprep.mubr.f32.mxu0 0.0
      %3136 = vmatmul.mubr.f32.gmra.mrb[0].mxu0 %v3064
      %v3137 = vpop.f32.mrb[0].mxu0
      %v3138 = vadd.f32 0.0, %v3137
      %v3139 = vpop.f32.mrb[0].mxu0
      %3140 = vdwg.mxu0
      %v3141 = vadd.f32 %v1393, %v3133
      %v3142 = vadd.f32 %v1394, %v3138
      %v3144 = vlaneseq
      %v3145 = vshrl.u32 %v3144, 7
      %v3146 = vsub.s32 0, %v3145
      %v3147 = vrot.slane %v1413, %v3146
      %v3149 = vadd.f32 %v3141, %v3147
      %v3150 = vadd.f32 %v3142, %v3147
      %v3151 = vsel %vm1438, %v3149, 0.0
      %3152 = vadd.xlane.f32.xlu0 %v3151
      %v3153 = vpop.xlane.xlu0 %3152
      %v3154 = vsel %vm1438, %v3150, 0.0
      %3155 = vadd.xlane.f32.xlu0 %v3154
      %v3156 = vpop.xlane.xlu0 %3155
      %v3157 = vmul.f32 %v3153, %v1445
      %v3158 = vmul.f32 %v3156, %v1445
      %v3159 = vsub.f32 %v3149, %v3157
      %v3160 = vsub.f32 %v3150, %v3158
      %v3161 = vmul.f32 %v3159, %v3159
      %v3162 = vmul.f32 %v3160, %v3160
      %v3163 = vsel %vm1438, %v3161, 0.0
      %3164 = vadd.xlane.f32.xlu0 %v3163
      %v3165 = vpop.xlane.xlu0 %3164
      %v3166 = vsel %vm1438, %v3162, 0.0
      %3167 = vadd.xlane.f32.xlu0 %v3166
      %v3168 = vpop.xlane.xlu0 %3167
      %v3169 = vmul.f32 %v3165, %v1445
      %v3170 = vmul.f32 %v3168, %v1445
      %v3171 = vadd.f32 %v3169, 1e-05
      %v3172 = vadd.f32 %v3170, 1e-05
      %v3173 = vrsqrt.pop %v3171
      %v3174 = vrsqrt.pop %v3172
      %v3175 = vmul.f32 %v3159, %v3173
      %v3176 = vmul.f32 %v3160, %v3174
      %v3178 = vlaneseq
      %v3179 = vshrl.u32 %v3178, 7
      %v3180 = vsub.s32 0, %v3179
      %v3181 = vrot.slane %v1414, %v3180
      %v3183 = vmul.f32 %v3175, %v3181
      %v3184 = vmul.f32 %v3176, %v3181
      %v3186 = vlaneseq
      %v3187 = vshrl.u32 %v3186, 7
      %v3188 = vsub.s32 0, %v3187
      %v3189 = vrot.slane %v1415, %v3188
      %v3191 = vadd.f32 %v3183, %v3189
      %v3192 = vadd.f32 %v3184, %v3189
      %v3194 = vlaneseq
      %v3195 = vshrl.u32 %v3194, 7
      %v3196 = vsub.s32 0, %v3195
      %v3197 = vrot.slane %v1420, %v3196
      %v3200 = vsel %vm1438, %v3191, 0
      %v3203 = vsel %vm1438, %v3192, 0
      %3205 = vmatprep.subr.mxu0 0.0
      %3206 = vmatpush1.msra.mxu0 %v1416
      %3207 = vmatprep.subr.mxu0 0.0
      %3208 = vmatpush1.msra.mxu0 %v1417
      %3209 = vmatprep.subr.mxu0 0.0
      %3210 = vmatpush1.msra.mxu0 %v1418
      %3211 = vmatprep.subr.mxu0 0.0
      %3212 = vmatpush1.msra.mxu0 %v1419
      %3213 = vmatprep.subr.mxu0 0.0
      %3214 = vmatpush1.msra.mxu0 0.0
      %3215 = vmatprep.subr.mxu0 0.0
      %3216 = vmatpush1.msra.mxu0 0.0
      %3217 = vmatprep.subr.mxu0 0.0
      %3218 = vmatpush1.msra.mxu0 0.0
      %3219 = vmatprep.subr.mxu0 0.0
      %3220 = vmatpush1.msra.mxu0 0.0
      %3221 = vmatprep.subr.mxu0 0.0
      %3222 = vmatpush1.msra.mxu0 0.0
      %3223 = vmatprep.subr.mxu0 0.0
      %3224 = vmatpush1.msra.mxu0 0.0
      %3225 = vmatprep.subr.mxu0 0.0
      %3226 = vmatpush1.msra.mxu0 0.0
      %3227 = vmatprep.subr.mxu0 0.0
      %3228 = vmatpush1.msra.mxu0 0.0
      %3229 = vmatprep.subr.mxu0 0.0
      %3230 = vmatpush1.msra.mxu0 0.0
      %3231 = vmatprep.subr.mxu0 0.0
      %3232 = vmatpush1.msra.mxu0 0.0
      %3233 = vmatprep.subr.mxu0 0.0
      %3234 = vmatpush1.msra.mxu0 0.0
      %3235 = vmatprep.subr.mxu0 0.0
      %3236 = vmatpush1.msra.mxu0 0.0
      %3237 = vmatprep.subr.mxu0 0.0
      %3238 = vmatpush1.msra.mxu0 0.0
      %3239 = vmatprep.subr.mxu0 0.0
      %3240 = vmatpush1.msra.mxu0 0.0
      %3241 = vmatprep.subr.mxu0 0.0
      %3242 = vmatpush1.msra.mxu0 0.0
      %3243 = vmatprep.subr.mxu0 0.0
      %3244 = vmatpush1.msra.mxu0 0.0
      %3245 = vmatprep.subr.mxu0 0.0
      %3246 = vmatpush1.msra.mxu0 0.0
      %3247 = vmatprep.subr.mxu0 0.0
      %3248 = vmatpush1.msra.mxu0 0.0
      %3249 = vmatprep.subr.mxu0 0.0
      %3250 = vmatpush1.msra.mxu0 0.0
      %3251 = vmatprep.subr.mxu0 0.0
      %3252 = vmatpush1.msra.mxu0 0.0
      %3253 = vmatprep.subr.mxu0 0.0
      %3254 = vmatpush1.msra.mxu0 0.0
      %3255 = vmatprep.subr.mxu0 0.0
      %3256 = vmatpush1.msra.mxu0 0.0
      %3257 = vmatprep.subr.mxu0 0.0
      %3258 = vmatpush1.msra.mxu0 0.0
      %3259 = vmatprep.subr.mxu0 0.0
      %3260 = vmatpush1.msra.mxu0 0.0
      %3261 = vmatprep.subr.mxu0 0.0
      %3262 = vmatpush1.msra.mxu0 0.0
      %3263 = vmatprep.subr.mxu0 0.0
      %3264 = vmatpush1.msra.mxu0 0.0
      %3265 = vmatprep.subr.mxu0 0.0
      %3266 = vmatpush1.msra.mxu0 0.0
      %3267 = vmatprep.subr.mxu0 0.0
      %3268 = vmatpush1.msra.mxu0 0.0
      %3269 = vmatprep.mubr.f32.mxu0 0.0
      %3270 = vmatmul.mubr.f32.gmra.mrb[0].mxu0 %v3200
      %v3271 = vpop.f32.mrb[0].mxu0
      %v3272 = vadd.f32 %v3197, %v3271
      %v3273 = vpop.f32.mrb[0].mxu0
      %3274 = vmatprep.mubr.f32.mxu0 0.0
      %3275 = vmatmul.mubr.f32.gmra.mrb[0].mxu0 %v3203
      %v3276 = vpop.f32.mrb[0].mxu0
      %v3277 = vadd.f32 %v3197, %v3276
      %v3278 = vpop.f32.mrb[0].mxu0
      %3279 = vdwg.mxu0
      %v3280 = vmul.f32 %v3272, 0.5
      %v3281 = vmul.f32 %v3277, 0.5
      %v3282 = vmul.f32 %v3272, 0.70710677
      %v3283 = vmul.f32 %v3277, 0.70710677
      %v3284 = vand.u32 2147483647, %v3282
      %v3285 = vand.u32 2147483647, %v3283
      %v3286 = vmul.f32 %v3284, 0.3275911
      %v3287 = vmul.f32 %v3285, 0.3275911
      %v3288 = vadd.f32 %v3286, 1.0
      %v3289 = vadd.f32 %v3287, 1.0
      %v3290 = vrcp.pop %v3288
      %v3291 = vmul.f32 1.0, %v3290
      %v3292 = vrcp.pop %v3289
      %v3293 = vmul.f32 1.0, %v3292
      %v3294 = vmul.f32 %v3291, 1.0614054
      %v3295 = vmul.f32 %v3293, 1.0614054
      %v3296 = vadd.f32 %v3294, -1.4531521
      %v3297 = vadd.f32 %v3295, -1.4531521
      %v3298 = vmul.f32 %v3296, %v3291
      %v3299 = vmul.f32 %v3297, %v3293
      %v3300 = vadd.f32 %v3298, 1.4214138
      %v3301 = vadd.f32 %v3299, 1.4214138
      %v3302 = vmul.f32 %v3300, %v3291
      %v3303 = vmul.f32 %v3301, %v3293
      %v3304 = vadd.f32 %v3302, -0.28449672
      %v3305 = vadd.f32 %v3303, -0.28449672
      %v3306 = vmul.f32 %v3304, %v3291
      %v3307 = vmul.f32 %v3305, %v3293
      %v3308 = vadd.f32 %v3306, 0.2548296
      %v3309 = vadd.f32 %v3307, 0.2548296
      %v3310 = vmul.f32 %v3308, %v3291
      %v3311 = vmul.f32 %v3309, %v3293
      %v3312 = vsub.f32 0.0, %v3284
      %v3313 = vsub.f32 0.0, %v3285
      %v3314 = vmul.f32 %v3312, %v3284
      %v3315 = vmul.f32 %v3313, %v3285
      %v3316 = vmul.f32 %v3314, 1.442695
      %v3317 = vpow.pop %v3316
      %v3318 = vmul.f32 %v3315, 1.442695
      %v3319 = vpow.pop %v3318
      %v3320 = vmul.f32 %v3310, %v3317
      %v3321 = vmul.f32 %v3311, %v3319
      %v3322 = vsub.f32 1.0, %v3320
      %v3323 = vsub.f32 1.0, %v3321
      %vm3324 = vcmp.ge.f32.partialorder %v3282, 0.0
      %vm3325 = vcmp.ge.f32.partialorder %v3283, 0.0
      %v3326 = vsub.f32 0.0, %v3322
      %v3327 = vsub.f32 0.0, %v3323
      %v3328 = vsel %vm3324, %v3322, %v3326
      %v3329 = vsel %vm3325, %v3323, %v3327
      %v3330 = vadd.f32 %v3328, 1.0
      %v3331 = vadd.f32 %v3329, 1.0
      %v3332 = vmul.f32 %v3280, %v3330
      %v3333 = vmul.f32 %v3281, %v3331
      %v3335 = vlaneseq
      %v3336 = vshrl.u32 %v3335, 7
      %v3337 = vsub.s32 0, %v3336
      %v3338 = vrot.slane %v1437, %v3337
      %3340 = vmatprep.subr.mxu0 0.0
      %3341 = vmatpush1.msra.mxu0 %v1421
      %3342 = vmatprep.subr.mxu0 0.0
      %3343 = vmatpush1.msra.mxu0 %v1422
      %3344 = vmatprep.subr.mxu0 0.0
      %3345 = vmatpush1.msra.mxu0 %v1423
      %3346 = vmatprep.subr.mxu0 0.0
      %3347 = vmatpush1.msra.mxu0 %v1424
      %3348 = vmatprep.subr.mxu0 0.0
      %3349 = vmatpush1.msra.mxu0 %v1425
      %3350 = vmatprep.subr.mxu0 0.0
      %3351 = vmatpush1.msra.mxu0 %v1426
      %3352 = vmatprep.subr.mxu0 0.0
      %3353 = vmatpush1.msra.mxu0 %v1427
      %3354 = vmatprep.subr.mxu0 0.0
      %3355 = vmatpush1.msra.mxu0 %v1428
      %3356 = vmatprep.subr.mxu0 0.0
      %3357 = vmatpush1.msra.mxu0 %v1429
      %3358 = vmatprep.subr.mxu0 0.0
      %3359 = vmatpush1.msra.mxu0 %v1430
      %3360 = vmatprep.subr.mxu0 0.0
      %3361 = vmatpush1.msra.mxu0 %v1431
      %3362 = vmatprep.subr.mxu0 0.0
      %3363 = vmatpush1.msra.mxu0 %v1432
      %3364 = vmatprep.subr.mxu0 0.0
      %3365 = vmatpush1.msra.mxu0 %v1433
      %3366 = vmatprep.subr.mxu0 0.0
      %3367 = vmatpush1.msra.mxu0 %v1434
      %3368 = vmatprep.subr.mxu0 0.0
      %3369 = vmatpush1.msra.mxu0 %v1435
      %3370 = vmatprep.subr.mxu0 0.0
      %3371 = vmatpush1.msra.mxu0 %v1436
      %3372 = vmatprep.subr.mxu0 0.0
      %3373 = vmatpush1.msra.mxu0 0.0
      %3374 = vmatprep.subr.mxu0 0.0
      %3375 = vmatpush1.msra.mxu0 0.0
      %3376 = vmatprep.subr.mxu0 0.0
      %3377 = vmatpush1.msra.mxu0 0.0
      %3378 = vmatprep.subr.mxu0 0.0
      %3379 = vmatpush1.msra.mxu0 0.0
      %3380 = vmatprep.subr.mxu0 0.0
      %3381 = vmatpush1.msra.mxu0 0.0
      %3382 = vmatprep.subr.mxu0 0.0
      %3383 = vmatpush1.msra.mxu0 0.0
      %3384 = vmatprep.subr.mxu0 0.0
      %3385 = vmatpush1.msra.mxu0 0.0
      %3386 = vmatprep.subr.mxu0 0.0
      %3387 = vmatpush1.msra.mxu0 0.0
      %3388 = vmatprep.subr.mxu0 0.0
      %3389 = vmatpush1.msra.mxu0 0.0
      %3390 = vmatprep.subr.mxu0 0.0
      %3391 = vmatpush1.msra.mxu0 0.0
      %3392 = vmatprep.subr.mxu0 0.0
      %3393 = vmatpush1.msra.mxu0 0.0
      %3394 = vmatprep.subr.mxu0 0.0
      %3395 = vmatpush1.msra.mxu0 0.0
      %3396 = vmatprep.subr.mxu0 0.0
      %3397 = vmatpush1.msra.mxu0 0.0
      %3398 = vmatprep.subr.mxu0 0.0
      %3399 = vmatpush1.msra.mxu0 0.0
      %3400 = vmatprep.subr.mxu0 0.0
      %3401 = vmatpush1.msra.mxu0 0.0
      %3402 = vmatprep.subr.mxu0 0.0
      %3403 = vmatpush1.msra.mxu0 0.0
      %3404 = vmatprep.mubr.f32.mxu0 0.0
      %3405 = vmatmul.mubr.f32.gmra.mrb[0].mxu0 %v3332
      %v3406 = vpop.f32.mrb[0].mxu0
      %v3407 = vadd.f32 %v3338, %v3406
      %v3408 = vpop.f32.mrb[0].mxu0
      %3409 = vmatprep.mubr.f32.mxu0 0.0
      %3410 = vmatmul.mubr.f32.gmra.mrb[0].mxu0 %v3333
      %v3411 = vpop.f32.mrb[0].mxu0
      %v3412 = vadd.f32 %v3338, %v3411
      %v3413 = vpop.f32.mrb[0].mxu0
      %3414 = vdwg.mxu0
      %v3415 = vadd.f32 %v3149, %v3407
      %v3416 = vadd.f32 %v3150, %v3412
      %3417 = vst.msk [vmem:[#allocation2] sm:$0xff] %vm1438, %v3415
      %3418 = vst.msk [vmem:[#allocation2 + $0x8] sm:$0xff] %vm1438, %v3416
      %p3419 = scmp.eq.s32.totalorder %s34, 1
      // Predicated region
      $region105: #{_lambda_.2} parent=99 // pred_check
        %p3420 = pneg %p3419
      $region106: #{_lambda_.2} parent=99 // pred_check_branch
        %3422 = sbr.rel (%p3420) target = $region108
      $region107: #{_lambda_.2} parent=99 // pred_region
        %v3423 = vld [vmem:[%s17] sm:$0x1]
        %v3424 = vld [vmem:[%s18] sm:$0x1]
        %v3425 = vsel %vm1438, %v3415, 0.0
        %3426 = vadd.xlane.f32.xlu0 %v3425
        %v3427 = vpop.xlane.xlu0 %3426
        %v3428 = vsel %vm1438, %v3416, 0.0
        %3429 = vadd.xlane.f32.xlu0 %v3428
        %v3430 = vpop.xlane.xlu0 %3429
        %v3431 = vmul.f32 %v3427, %v1445
        %v3432 = vmul.f32 %v3430, %v1445
        %v3433 = vsub.f32 %v3415, %v3431
        %v3434 = vsub.f32 %v3416, %v3432
        %v3435 = vmul.f32 %v3433, %v3433
        %v3436 = vmul.f32 %v3434, %v3434
        %v3437 = vsel %vm1438, %v3435, 0.0
        %3438 = vadd.xlane.f32.xlu0 %v3437
        %v3439 = vpop.xlane.xlu0 %3438
        %v3440 = vsel %vm1438, %v3436, 0.0
        %3441 = vadd.xlane.f32.xlu0 %v3440
        %v3442 = vpop.xlane.xlu0 %3441
        %v3443 = vmul.f32 %v3439, %v1445
        %v3444 = vmul.f32 %v3442, %v1445
        %v3445 = vadd.f32 %v3443, 1e-05
        %v3446 = vadd.f32 %v3444, 1e-05
        %v3447 = vrsqrt.pop %v3445
        %v3448 = vrsqrt.pop %v3446
        %v3449 = vmul.f32 %v3433, %v3447
        %v3450 = vmul.f32 %v3434, %v3448
        %v3452 = vlaneseq
        %v3453 = vshrl.u32 %v3452, 7
        %v3454 = vsub.s32 0, %v3453
        %v3455 = vrot.slane %v3423, %v3454
        %v3457 = vmul.f32 %v3449, %v3455
        %v3458 = vmul.f32 %v3450, %v3455
        %v3460 = vlaneseq
        %v3461 = vshrl.u32 %v3460, 7
        %v3462 = vsub.s32 0, %v3461
        %v3463 = vrot.slane %v3424, %v3462
        %v3465 = vadd.f32 %v3457, %v3463
        %v3466 = vadd.f32 %v3458, %v3463
        %v3467 = vld [vmem:[%s19] sm:$0xff]
        %v3468 = vld [vmem:[%s19 + $0x8] sm:$0xff]
        %v3469 = vld [vmem:[%s19 + $0x10] sm:$0xff]
        %v3470 = vld [vmem:[%s19 + $0x18] sm:$0xff]
        %v3472 = vsel %vm1438, %v3465, 0
        %v3475 = vsel %vm1438, %v3466, 0
        %3477 = vmatprep.subr.mxu0 0.0
        %3478 = vmatpush1.msra.mxu0 %v3467
        %3479 = vmatprep.subr.mxu0 0.0
        %3480 = vmatpush1.msra.mxu0 %v3468
        %3481 = vmatprep.subr.mxu0 0.0
        %3482 = vmatpush1.msra.mxu0 %v3469
        %3483 = vmatprep.subr.mxu0 0.0
        %3484 = vmatpush1.msra.mxu0 %v3470
        %3485 = vmatprep.subr.mxu0 0.0
        %3486 = vmatpush1.msra.mxu0 0.0
        %3487 = vmatprep.subr.mxu0 0.0
        %3488 = vmatpush1.msra.mxu0 0.0
        %3489 = vmatprep.subr.mxu0 0.0
        %3490 = vmatpush1.msra.mxu0 0.0
        %3491 = vmatprep.subr.mxu0 0.0
        %3492 = vmatpush1.msra.mxu0 0.0
        %3493 = vmatprep.subr.mxu0 0.0
        %3494 = vmatpush1.msra.mxu0 0.0
        %3495 = vmatprep.subr.mxu0 0.0
        %3496 = vmatpush1.msra.mxu0 0.0
        %3497 = vmatprep.subr.mxu0 0.0
        %3498 = vmatpush1.msra.mxu0 0.0
        %3499 = vmatprep.subr.mxu0 0.0
        %3500 = vmatpush1.msra.mxu0 0.0
        %3501 = vmatprep.subr.mxu0 0.0
        %3502 = vmatpush1.msra.mxu0 0.0
        %3503 = vmatprep.subr.mxu0 0.0
        %3504 = vmatpush1.msra.mxu0 0.0
        %3505 = vmatprep.subr.mxu0 0.0
        %3506 = vmatpush1.msra.mxu0 0.0
        %3507 = vmatprep.subr.mxu0 0.0
        %3508 = vmatpush1.msra.mxu0 0.0
        %3509 = vmatprep.subr.mxu0 0.0
        %3510 = vmatpush1.msra.mxu0 0.0
        %3511 = vmatprep.subr.mxu0 0.0
        %3512 = vmatpush1.msra.mxu0 0.0
        %3513 = vmatprep.subr.mxu0 0.0
        %3514 = vmatpush1.msra.mxu0 0.0
        %3515 = vmatprep.subr.mxu0 0.0
        %3516 = vmatpush1.msra.mxu0 0.0
        %3517 = vmatprep.subr.mxu0 0.0
        %3518 = vmatpush1.msra.mxu0 0.0
        %3519 = vmatprep.subr.mxu0 0.0
        %3520 = vmatpush1.msra.mxu0 0.0
        %3521 = vmatprep.subr.mxu0 0.0
        %3522 = vmatpush1.msra.mxu0 0.0
        %3523 = vmatprep.subr.mxu0 0.0
        %3524 = vmatpush1.msra.mxu0 0.0
        %3525 = vmatprep.subr.mxu0 0.0
        %3526 = vmatpush1.msra.mxu0 0.0
        %3527 = vmatprep.subr.mxu0 0.0
        %3528 = vmatpush1.msra.mxu0 0.0
        %3529 = vmatprep.subr.mxu0 0.0
        %3530 = vmatpush1.msra.mxu0 0.0
        %3531 = vmatprep.subr.mxu0 0.0
        %3532 = vmatpush1.msra.mxu0 0.0
        %3533 = vmatprep.subr.mxu0 0.0
        %3534 = vmatpush1.msra.mxu0 0.0
        %3535 = vmatprep.subr.mxu0 0.0
        %3536 = vmatpush1.msra.mxu0 0.0
        %3537 = vmatprep.subr.mxu0 0.0
        %3538 = vmatpush1.msra.mxu0 0.0
        %3539 = vmatprep.subr.mxu0 0.0
        %3540 = vmatpush1.msra.mxu0 0.0
        %3541 = vmatprep.mubr.f32.mxu0 0.0
        %3542 = vmatmul.mubr.f32.gmra.mrb[0].mxu0 %v3472
        %v3543 = vpop.f32.mrb[0].mxu0
        %v3544 = vadd.f32 0.0, %v3543
        %v3545 = vpop.f32.mrb[0].mxu0
        %3546 = vmatprep.mubr.f32.mxu0 0.0
        %3547 = vmatmul.mubr.f32.gmra.mrb[0].mxu0 %v3475
        %v3548 = vpop.f32.mrb[0].mxu0
        %v3549 = vadd.f32 0.0, %v3548
        %v3550 = vpop.f32.mrb[0].mxu0
        %3551 = vdwg.mxu0
        %3552 = vst.msk [vmem:[%s20] sm:$0xff] %vm1438, %v3544
        %3553 = vst.msk [vmem:[%s20 + $0x8] sm:$0xff] %vm1438, %v3549
      $region108: #{_lambda_.2} parent=99 // pred_fallthru
        _
      // Predicated region
      $region109: #{_lambda_.2} parent=99 // pred_check
        %p3554 = pneg %p532
      $region110: #{_lambda_.2} parent=99 // pred_check_branch
        %3556 = sbr.rel (%p3554) target = $region112
      $region111: #{_lambda_.2} parent=99 // pred_region
        _
      $region112: #{_lambda_.2} parent=99 // pred_fallthru
        _
      // Predicated region
      $region113: #{_lambda_.2} parent=99 // pred_check
        %p3557 = pneg %p553
      $region114: #{_lambda_.2} parent=99 // pred_check_branch
        %3559 = sbr.rel (%p3557) target = $region116
      $region115: #{_lambda_.2} parent=99 // pred_region
        _
      $region116: #{_lambda_.2} parent=99 // pred_fallthru
        _
      // Predicated region
      $region117: #{_lambda_.2} parent=99 // pred_check
        %p3560 = pneg %p574
      $region118: #{_lambda_.2} parent=99 // pred_check_branch
        %3562 = sbr.rel (%p3560) target = $region120
      $region119: #{_lambda_.2} parent=99 // pred_region
        _
      $region120: #{_lambda_.2} parent=99 // pred_fallthru
        _
      // Predicated region
      $region121: #{_lambda_.2} parent=99 // pred_check
        %p3563 = pneg %p532
      $region122: #{_lambda_.2} parent=99 // pred_check_branch
        %3565 = sbr.rel (%p3563) target = $region124
      $region123: #{_lambda_.2} parent=99 // pred_region
        _
      $region124: #{_lambda_.2} parent=99 // pred_fallthru
        _
      // Predicated region
      $region125: #{_lambda_.2} parent=99 // pred_check
        %p3566 = pneg %p553
      $region126: #{_lambda_.2} parent=99 // pred_check_branch
        %3568 = sbr.rel (%p3566) target = $region128
      $region127: #{_lambda_.2} parent=99 // pred_region
        _
      $region128: #{_lambda_.2} parent=99 // pred_fallthru
        _
      // Predicated region
      $region129: #{_lambda_.2} parent=99 // pred_check
        %p3569 = pneg %p574
      $region130: #{_lambda_.2} parent=99 // pred_check_branch
        %3571 = sbr.rel (%p3569) target = $region132
      $region131: #{_lambda_.2} parent=99 // pred_region
        _
      $region132: #{_lambda_.2} parent=99 // pred_fallthru
        _
    $region100: #{_lambda_.2} parent=5 // pred_fallthru
      _
    %p3572 = scmp.le.s32.totalorder 2, %s29
    // Predicated region
    $region133: #{_lambda_.2} parent=5 // pred_check
      %p3573 = pneg %p3572
    $region134: #{_lambda_.2} parent=5 // pred_check_branch
      %3575 = sbr.rel (%p3573) target = $region136
    $region135: #{_lambda_.2} parent=5 // pred_region
      %s3576 = ssub.s32 %s29, 2
    $region136: #{_lambda_.2} parent=5 // pred_fallthru
      _
  $region6: #{_lambda_.2} parent=0 // loop_footer
    %s33 = sadd.s32 1, %s29
  $region7: #{_lambda_.2} parent=0 // loop_footer_branch
    %28 = sbr.rel target = $region3
  $region8: #{_lambda_.2} parent=0 // loop_exit
    _

</llo_original>
